<compile_context>
chip_gen: v6e
topology: v6e:2x2x1
jax: 0.10.0
libtpu: 0.0.40
codegen_flags: <defaults>
</compile_context>

<pallas_src>
import functools
import math

import jax
import jax.numpy as jnp
from jax import lax
from jax.experimental import pallas as pl
from jax.experimental.pallas import tpu as pltpu

EPS = 1e-5  # nn.GroupNorm default eps


# ----------------------------- kernel helpers -------------------------------

def _resblock(xf, gamma, beta, gmat, bsum, cmask, wconv, bconv, *, W):
    """conv3x3(relu(groupnorm(x))) + x on a flat (Ls, C) activation.

    Matches the PyTorch ResBlock dataflow: the conv1/gnorm1 branch of the
    reference module is overwritten before use, so only gnorm2/conv2 reach the
    output and only those parameters are used here (dropout = eval mode).

      bsum[l, m]   = 1 when rows l, m belong to the same image
      gmat[c1, c2] = 1/(group_size*H*W) when c1, c2 share a group
    so  bsum @ x @ gmat  is the per-(image, group) mean broadcast to rows and
    channels -- GroupNorm stats as two plain MXU matmuls (f32, two-pass).
    """
    Ls, C = xf.shape

    mean = jnp.dot(jnp.dot(bsum, xf, preferred_element_type=jnp.float32),
                   gmat, preferred_element_type=jnp.float32)            # (Ls, C)
    xc = xf - mean
    var = jnp.dot(jnp.dot(bsum, xc * xc, preferred_element_type=jnp.float32),
                  gmat, preferred_element_type=jnp.float32)             # (Ls, C)
    a = jnp.maximum(xc * lax.rsqrt(var + EPS) * gamma + beta, 0.0)      # ReLU
    a = a.astype(jnp.bfloat16)                                          # bf16 for MXU

    # 3x3 "same" conv as ONE im2col matmul (K = 9*C).  The 9 shifted copies
    # are static row-slices of a flat 1-D zero-padded activation; per-offset
    # boundary masks (cmask, built once on the host) zero the taps that would
    # wrap across an image row/edge.  Row j*C + i of wconv holds
    # w[:, i, dy, dx] with j = dy*3 + dx, matching the column order here.
    P = W + 1
    pad = jnp.zeros((P, C), dtype=a.dtype)
    aext = jnp.concatenate([pad, a, pad], axis=0)                       # (Ls+2P, C)
    cols = []
    for dy in range(3):
        for dx in range(3):
            j = dy * 3 + dx
            start = dy * W + dx                  # == P + (dy-1)*W + (dx-1)
            cols.append(aext[start:start + Ls, :] * cmask[:, j:j + 1])
    im2col = jnp.concatenate(cols, axis=-1)                             # (Ls, 9C) bf16
    out = jnp.dot(im2col, wconv, preferred_element_type=jnp.float32)    # f32 accum
    return out + bconv + xf                                             # bias + residual


def fused_res_attention_kernel(*refs, num_heads, H, W, batch_block):
    """ResBlock1 -> multi-head attention -> ResBlock2 for batch_block images."""
    (x_ref,
     gmat_ref, bsum_ref, cmask_ref,
     g1_ref, be1_ref, wc1_ref, bc1_ref,
     wq_ref, wk_ref, wv_ref, bq_ref, bk_ref, bv_ref,
     mhc_ref, hsum_ref, hexp_ref,
     w2a_ref, b2a_ref,
     g2_ref, be2_ref, wc2_ref, bc2_ref,
     o_ref) = refs

    bt = batch_block
    L = H * W
    C = x_ref.shape[-1]
    Ls = bt * L
    hd = C // num_heads
    scale = 1.0 / math.sqrt(hd)

    xf = x_ref[...].reshape(Ls, C)          # merge leading dims (free reshape)
    gmat = gmat_ref[...]
    bsum = bsum_ref[...]
    cmask = cmask_ref[...]

    # ---------------- ResBlock 1 (batch-stacked, M = Ls) ----------------
    h1 = _resblock(xf, g1_ref[...], be1_ref[...], gmat, bsum, cmask,
                   wc1_ref[...], bc1_ref[...], W=W)

    # ---------------- Attention ----------------
    # q/k/v projections run batch-stacked on the MXU (bf16 in, f32 accum).
    h16 = h1.astype(jnp.bfloat16)
    q = (jnp.dot(h16, wq_ref[...], preferred_element_type=jnp.float32)
         + bq_ref[...]).astype(jnp.bfloat16)
    k = (jnp.dot(h16, wk_ref[...], preferred_element_type=jnp.float32)
         + bk_ref[...]).astype(jnp.bfloat16)
    v = (jnp.dot(h16, wv_ref[...], preferred_element_type=jnp.float32)
         + bv_ref[...]).astype(jnp.bfloat16)

    mhc = mhc_ref[...]     # (Hh*L, C) 0/1 head mask, bf16 (shared by k_rep/v_big)
    hsum = hsum_ref[...]   # (Hh*L, Hh) bf16 -- per-head softmax denominator
    hexp = hexp_ref[...]   # (Hh, C)   f32  -- expand per-head scalars to channels

    # Attention itself is per image (all heads at once, block-masked matmuls).
    outs = []
    for b in range(bt):
        qb = q[b * L:(b + 1) * L, :]
        kb = k[b * L:(b + 1) * L, :]
        vb = v[b * L:(b + 1) * L, :]
        # k_rep/v_big[h*L+m, c] = k/v[m, c] if channel c belongs to head h.
        k_rep = jnp.concatenate([kb] * num_heads, axis=0) * mhc         # (Hh*L, C)
        v_big = jnp.concatenate([vb] * num_heads, axis=0) * mhc         # (Hh*L, C)
        # q @ k_rep^T via trans-B dot_general (no in-kernel transpose).
        s = lax.dot_general(qb, k_rep, (((1,), (1,)), ((), ())),
                            preferred_element_type=jnp.float32) * scale  # (L, Hh*L)
        # Global (all-heads) max: mathematically exact; per-head max would be
        # more underflow-robust if head score scales ever diverge wildly.
        s = s - jnp.max(s, axis=-1, keepdims=True)
        p = jnp.exp(s).astype(jnp.bfloat16)
        denom = jnp.dot(p, hsum, preferred_element_type=jnp.float32)     # (L, Hh)
        inv = jnp.dot(1.0 / denom, hexp,
                      preferred_element_type=jnp.float32)                # (L, C)
        outs.append(jnp.dot(p, v_big,
                            preferred_element_type=jnp.float32) * inv)   # (L, C)
    attn = outs[0] if bt == 1 else jnp.concatenate(outs, axis=0)         # (Ls, C)
    # TODO(synk): attention dropout (p=0.1) and ResBlock dropout are train-time
    # only and intentionally skipped (inference path).
    y = jnp.dot(attn.astype(jnp.bfloat16), w2a_ref[...],
                preferred_element_type=jnp.float32) + b2a_ref[...]

    # ---------------- ResBlock 2 ----------------
    h2 = _resblock(y, g2_ref[...], be2_ref[...], gmat, bsum, cmask,
                   wc2_ref[...], bc2_ref[...], W=W)

    o_ref[...] = h2.reshape(bt, L, C).astype(o_ref.dtype)


# ----------------------------- pallas_call wrapper ---------------------------

def res_attention_pallas(x_nchw, kp, num_heads, batch_block=None):
    B, C, H, W = x_nchw.shape
    L = H * W
    # batch_block = images per grid step.  Default: stack the whole batch
    # (best on single-TC v5e/v6e).  On v7x pass batch_block=1 so the parallel
    # batch grid axis is sharded over both TensorCores.
    bt = B if batch_block is None else batch_block
    assert B % bt == 0
    Ls = bt * L

    xl = jnp.transpose(x_nchw, (0, 2, 3, 1)).reshape(B, L, C)

    # Shape-dependent constants (still built once per compiled shape under jit).
    cmask = jnp.tile(kp['cmask'], (bt, 1))                                # (Ls, 9) bf16
    rows = jnp.arange(Ls) // L
    bsum = (rows[:, None] == rows[None, :]).astype(jnp.float32)           # (Ls, Ls)

    const_args = [kp['gmat'], bsum, cmask,
                  kp['rb1_gamma'], kp['rb1_beta'], kp['rb1_w'], kp['rb1_b'],
                  kp['wq'], kp['wk'], kp['wv'], kp['bq'], kp['bk'], kp['bv'],
                  kp['maskHC'], kp['hsum'], kp['hexp'],
                  kp['w2a'], kp['b2a'],
                  kp['rb2_gamma'], kp['rb2_beta'], kp['rb2_w'], kp['rb2_b']]

    in_specs = [pl.BlockSpec((bt, L, C), lambda g: (g, 0, 0))]
    in_specs += [pl.BlockSpec(a.shape, (lambda g, _n=a.ndim: (0,) * _n))
                 for a in const_args]

    Hh = num_heads
    macs = B * (2 * L * 9 * C * C            # two conv im2col matmuls
                + 3 * L * C * C              # q / k / v projections
                + 2 * L * Hh * L * C         # scores + attn@V (block-dense)
                + L * Hh * L * Hh            # softmax denominators
                + L * Hh * C                 # denominator expansion
                + L * C * C                  # output projection
                + 2 * (L * L * C + L * C * C))   # groupnorm stat matmuls (per rb)
    cost = pl.CostEstimate(
        flops=2 * macs,
        transcendentals=B * (L * Hh * L + L * Hh + 4 * C),
        bytes_accessed=4 * 2 * B * L * C + sum(int(a.size) * a.dtype.itemsize
                                               for a in const_args),
    )

    out = pl.pallas_call(
        functools.partial(fused_res_attention_kernel, num_heads=num_heads,
                          H=H, W=W, batch_block=bt),
        out_shape=jax.ShapeDtypeStruct((B, L, C), x_nchw.dtype),
        grid=(B // bt,),
        in_specs=in_specs,
        out_specs=pl.BlockSpec((bt, L, C), lambda g: (g, 0, 0)),
        compiler_params=pltpu.CompilerParams(
            dimension_semantics=("parallel",)),
        cost_estimate=cost,
    )(xl, *const_args)

    return jnp.transpose(out.reshape(B, H, W, C), (0, 3, 1, 2))           # NCHW


# ----------------------------- parameter setup -------------------------------

def init_params(key, C, num_heads):
    """Deterministic synthetic params (PyTorch default-ish uniform init)."""
    ks = jax.random.split(key, 8)

    def u(k, shape, fan_in):
        bnd = 1.0 / math.sqrt(fan_in)
        return jax.random.uniform(k, shape, jnp.float32, -bnd, bnd)

    return dict(
        rb1_gamma=jnp.ones((C,), jnp.float32), rb1_beta=jnp.zeros((C,), jnp.float32),
        rb1_w=u(ks[0], (C, C, 3, 3), C * 9), rb1_b=u(ks[1], (C,), C * 9),
        rb2_gamma=jnp.ones((C,), jnp.float32), rb2_beta=jnp.zeros((C,), jnp.float32),
        rb2_w=u(ks[2], (C, C, 3, 3), C * 9), rb2_b=u(ks[3], (C,), C * 9),
        W1=u(ks[4], (3 * C, C), C), b1=u(ks[5], (3 * C,), C),
        W2=u(ks[6], (C, C), C), b2=u(ks[7], (C,), C),
    )


def prepare_kernel_params(p, C, num_heads, num_groups, H, W):
    """Pre-permute / pre-pack weights + masks once (hoisted out of forward)."""
    Hh, hd = num_heads, C // num_heads
    L = H * W
    bf16 = jnp.bfloat16

    # proj1 row order: torch feature index for (Ci, Hi, Ki) is Ci*Hh*3 + Hi*3 + Ki
    # (rearrange 'b L (C H K) -> K b H L C'); kernel column i = Hi*hd + Ci.
    base = jnp.asarray([Ci * Hh * 3 + Hi * 3
                        for Hi in range(Hh) for Ci in range(hd)])
    # proj2 input order: kernel col i = Hi*hd + Ci -> torch col Ci*Hh + Hi
    # (rearrange 'b H (h w) C -> b h w (C H)').
    jmap = jnp.asarray([Ci * Hh + Hi
                        for Hi in range(Hh) for Ci in range(hd)])

    def conv_w(w_oihw):
        # OIHW -> (kh, kw, Cin, Cout) -> (9*Cin, Cout); rows ordered (dy, dx, cin)
        # to match the shifted-copy column order built in the kernel.
        return jnp.transpose(w_oihw, (2, 3, 1, 0)).reshape(9 * C, C).astype(bf16)

    # GroupNorm group-averaging matrix.
    gs = C // num_groups
    gid = jnp.arange(C) // gs
    gmat = (gid[:, None] == gid[None, :]).astype(jnp.float32) / float(gs * H * W)

    # 3x3 conv boundary masks for the flat-shift im2col:
    # cmask[l, dy*3+dx] = 1 iff (y+dy-1, x+dx-1) is inside the image, l = y*W+x.
    yy = jnp.arange(L) // W
    xx = jnp.arange(L) % W
    cm = []
    for dy in range(3):
        for dx in range(3):
            cm.append((yy + dy - 1 >= 0) & (yy + dy - 1 < H) &
                      (xx + dx - 1 >= 0) & (xx + dx - 1 < W))
    cmask = jnp.stack(cm, axis=1).astype(bf16)                           # (L, 9)

    # Head masks for the all-heads-at-once block-dense attention matmuls
    # (bf16; the old maskK constant is gone -- scores use a trans-B dot).
    head_of_col = jnp.arange(C) // hd                                    # (C,)
    head_of_row = jnp.arange(Hh * L) // L                                # (Hh*L,)
    maskHC = (head_of_row[:, None] == head_of_col[None, :]).astype(bf16)
    hsum = (head_of_row[:, None] == jnp.arange(Hh)[None, :]).astype(bf16)
    hexp = (jnp.arange(Hh)[:, None] == head_of_col[None, :]).astype(jnp.float32)

    return dict(
        gmat=gmat, cmask=cmask,
        rb1_gamma=p['rb1_gamma'].reshape(1, C), rb1_beta=p['rb1_beta'].reshape(1, C),
        rb1_w=conv_w(p['rb1_w']), rb1_b=p['rb1_b'].reshape(1, C),
        rb2_gamma=p['rb2_gamma'].reshape(1, C), rb2_beta=p['rb2_beta'].reshape(1, C),
        rb2_w=conv_w(p['rb2_w']), rb2_b=p['rb2_b'].reshape(1, C),
        wq=p['W1'][base + 0, :].T.astype(bf16), bq=p['b1'][base + 0].reshape(1, C),
        wk=p['W1'][base + 1, :].T.astype(bf16), bk=p['b1'][base + 1].reshape(1, C),
        wv=p['W1'][base + 2, :].T.astype(bf16), bv=p['b1'][base + 2].reshape(1, C),
        w2a=p['W2'][:, jmap].T.astype(bf16), b2a=p['b2'].reshape(1, C),
        maskHC=maskHC, hsum=hsum, hexp=hexp,
    )


# ----------------------------- plain-JAX reference ---------------------------

def ref_groupnorm(x, gamma, beta, num_groups):
    B, C, H, W = x.shape
    gs = C // num_groups
    xg = x.reshape(B, num_groups, gs * H * W)
    mean = xg.mean(axis=-1, keepdims=True)
    var = ((xg - mean) ** 2).mean(axis=-1, keepdims=True)
    xn = ((xg - mean) / jnp.sqrt(var + EPS)).reshape(B, C, H, W)
    return xn * gamma.reshape(1, C, 1, 1) + beta.reshape(1, C, 1, 1)


def ref_resblock(x, gamma2, beta2, w2, b2, num_groups):
    a = jax.nn.relu(ref_groupnorm(x, gamma2, beta2, num_groups))
    y = lax.conv_general_dilated(a, w2, (1, 1), ((1, 1), (1, 1)),
                                 dimension_numbers=('NCHW', 'OIHW', 'NCHW'))
    return y + b2.reshape(1, -1, 1, 1) + x


def ref_attention(x, W1, b1, W2, b2, num_heads):
    B, C, H, W = x.shape
    L, hd = H * W, C // num_heads
    xl = x.transpose(0, 2, 3, 1).reshape(B, L, C)
    y = xl @ W1.T + b1                                   # (B, L, 3C)
    y = y.reshape(B, L, hd, num_heads, 3)                # (C, H, K)
    y = jnp.transpose(y, (4, 0, 3, 1, 2))                # K b H L C
    q, k, v = y[0], y[1], y[2]
    s = jnp.einsum('bhlc,bhmc->bhlm', q, k) / math.sqrt(hd)
    p = jax.nn.softmax(s, axis=-1)
    o = jnp.einsum('bhlm,bhmc->bhlc', p, v)              # b H L C
    o = jnp.transpose(o, (0, 2, 3, 1)).reshape(B, H, W, C)   # (C H), H fastest
    o = o @ W2.T + b2
    return jnp.transpose(o, (0, 3, 1, 2))


def ref_forward(x, p, num_groups, num_heads):
    x = ref_resblock(x, p['rb1_gamma'], p['rb1_beta'], p['rb1_w'], p['rb1_b'], num_groups)
    x = ref_attention(x, p['W1'], p['b1'], p['W2'], p['b2'], num_heads)
    x = ref_resblock(x, p['rb2_gamma'], p['rb2_beta'], p['rb2_w'], p['rb2_b'], num_groups)
    return x


# ----------------------------- main ------------------------------------------

if __name__ == "__main__":
    B, C, H, W = 2, 64, 8, 8
    num_groups, num_heads = 32, 8

    key = jax.random.PRNGKey(0)
    kx, kp_ = jax.random.split(key)
    x = jax.random.normal(kx, (B, C, H, W), jnp.float32)

    params = init_params(kp_, C, num_heads)
    kparams = prepare_kernel_params(params, C, num_heads, num_groups, H, W)

    fwd = jax.jit(functools.partial(res_attention_pallas, num_heads=num_heads))
    out = jax.block_until_ready(fwd(x, kparams))

    ref = jax.block_until_ready(ref_forward(x, params, num_groups, num_heads))
    assert out.shape == (B, C, H, W)
    err = float(jnp.max(jnp.abs(out - ref)))
    # bf16 matmul operands (f32 accumulation) => bf16-level end-to-end tolerance.
    assert jnp.allclose(out, ref, rtol=5e-2, atol=5e-2), f"max abs err {err}"

    print("KERNEL_OK")
</pallas_src>

<mosaic_0001>
module attributes {stable_mosaic.version = 11 : i64} {
  func.func @fused_res_attention_kernel(%arg0: i32, %arg1: memref<2x64x64xf32, #tpu.memory_space<vmem>>, %arg2: memref<64x64xf32, #tpu.memory_space<vmem>>, %arg3: memref<128x128xf32, #tpu.memory_space<vmem>>, %arg4: memref<128x9xbf16, #tpu.memory_space<vmem>>, %arg5: memref<1x64xf32, #tpu.memory_space<vmem>>, %arg6: memref<1x64xf32, #tpu.memory_space<vmem>>, %arg7: memref<576x64xbf16, #tpu.memory_space<vmem>>, %arg8: memref<1x64xf32, #tpu.memory_space<vmem>>, %arg9: memref<64x64xbf16, #tpu.memory_space<vmem>>, %arg10: memref<64x64xbf16, #tpu.memory_space<vmem>>, %arg11: memref<64x64xbf16, #tpu.memory_space<vmem>>, %arg12: memref<1x64xf32, #tpu.memory_space<vmem>>, %arg13: memref<1x64xf32, #tpu.memory_space<vmem>>, %arg14: memref<1x64xf32, #tpu.memory_space<vmem>>, %arg15: memref<512x64xbf16, #tpu.memory_space<vmem>>, %arg16: memref<512x8xbf16, #tpu.memory_space<vmem>>, %arg17: memref<8x64xf32, #tpu.memory_space<vmem>>, %arg18: memref<64x64xbf16, #tpu.memory_space<vmem>>, %arg19: memref<1x64xf32, #tpu.memory_space<vmem>>, %arg20: memref<1x64xf32, #tpu.memory_space<vmem>>, %arg21: memref<1x64xf32, #tpu.memory_space<vmem>>, %arg22: memref<576x64xbf16, #tpu.memory_space<vmem>>, %arg23: memref<1x64xf32, #tpu.memory_space<vmem>>, %arg24: memref<2x64x64xf32, #tpu.memory_space<vmem>>) attributes {dimension_semantics = [#tpu.dimension_semantics<parallel>], iteration_bounds = array<i64: 1>, scalar_prefetch = 0 : i64, scratch_operands = 0 : i64, tpu.core_type = #tpu.core_type<tc>, window_params = [{transform_indices = @transform_0, window_bounds = array<i64: 2, 64, 64>}, {pipeline_mode = #tpu.pipeline_mode<synchronous>, transform_indices = @transform_1, window_bounds = array<i64: 64, 64>}, {pipeline_mode = #tpu.pipeline_mode<synchronous>, transform_indices = @transform_2, window_bounds = array<i64: 128, 128>}, {pipeline_mode = #tpu.pipeline_mode<synchronous>, transform_indices = @transform_3, window_bounds = array<i64: 128, 9>}, {pipeline_mode = #tpu.pipeline_mode<synchronous>, transform_indices = @transform_4, window_bounds = array<i64: 1, 64>}, {pipeline_mode = #tpu.pipeline_mode<synchronous>, transform_indices = @transform_5, window_bounds = array<i64: 1, 64>}, {pipeline_mode = #tpu.pipeline_mode<synchronous>, transform_indices = @transform_6, window_bounds = array<i64: 576, 64>}, {pipeline_mode = #tpu.pipeline_mode<synchronous>, transform_indices = @transform_7, window_bounds = array<i64: 1, 64>}, {pipeline_mode = #tpu.pipeline_mode<synchronous>, transform_indices = @transform_8, window_bounds = array<i64: 64, 64>}, {pipeline_mode = #tpu.pipeline_mode<synchronous>, transform_indices = @transform_9, window_bounds = array<i64: 64, 64>}, {pipeline_mode = #tpu.pipeline_mode<synchronous>, transform_indices = @transform_10, window_bounds = array<i64: 64, 64>}, {pipeline_mode = #tpu.pipeline_mode<synchronous>, transform_indices = @transform_11, window_bounds = array<i64: 1, 64>}, {pipeline_mode = #tpu.pipeline_mode<synchronous>, transform_indices = @transform_12, window_bounds = array<i64: 1, 64>}, {pipeline_mode = #tpu.pipeline_mode<synchronous>, transform_indices = @transform_13, window_bounds = array<i64: 1, 64>}, {pipeline_mode = #tpu.pipeline_mode<synchronous>, transform_indices = @transform_14, window_bounds = array<i64: 512, 64>}, {pipeline_mode = #tpu.pipeline_mode<synchronous>, transform_indices = @transform_15, window_bounds = array<i64: 512, 8>}, {pipeline_mode = #tpu.pipeline_mode<synchronous>, transform_indices = @transform_16, window_bounds = array<i64: 8, 64>}, {pipeline_mode = #tpu.pipeline_mode<synchronous>, transform_indices = @transform_17, window_bounds = array<i64: 64, 64>}, {pipeline_mode = #tpu.pipeline_mode<synchronous>, transform_indices = @transform_18, window_bounds = array<i64: 1, 64>}, {pipeline_mode = #tpu.pipeline_mode<synchronous>, transform_indices = @transform_19, window_bounds = array<i64: 1, 64>}, {pipeline_mode = #tpu.pipeline_mode<synchronous>, transform_indices = @transform_20, window_bounds = array<i64: 1, 64>}, {pipeline_mode = #tpu.pipeline_mode<synchronous>, transform_indices = @transform_21, window_bounds = array<i64: 576, 64>}, {pipeline_mode = #tpu.pipeline_mode<synchronous>, transform_indices = @transform_22, window_bounds = array<i64: 1, 64>}, {transform_indices = @transform_23, window_bounds = array<i64: 2, 64, 64>}]} {
    %c0 = arith.constant 0 : index
    %c0_0 = arith.constant 0 : index
    %c0_1 = arith.constant 0 : index
    %0 = vector.load %arg1[%c0, %c0_0, %c0_1] : memref<2x64x64xf32, #tpu.memory_space<vmem>>, vector<2x64x64xf32>
    %1 = vector.shape_cast %0 : vector<2x64x64xf32> to vector<128x64xf32>
    %c0_2 = arith.constant 0 : index
    %c0_3 = arith.constant 0 : index
    %2 = vector.load %arg2[%c0_2, %c0_3] : memref<64x64xf32, #tpu.memory_space<vmem>>, vector<64x64xf32>
    %c0_4 = arith.constant 0 : index
    %c0_5 = arith.constant 0 : index
    %3 = vector.load %arg3[%c0_4, %c0_5] : memref<128x128xf32, #tpu.memory_space<vmem>>, vector<128x128xf32>
    %c0_6 = arith.constant 0 : index
    %c0_7 = arith.constant 0 : index
    %4 = vector.load %arg4[%c0_6, %c0_7] : memref<128x9xbf16, #tpu.memory_space<vmem>>, vector<128x9xbf16>
    %c0_8 = arith.constant 0 : index
    %c0_9 = arith.constant 0 : index
    %5 = vector.load %arg5[%c0_8, %c0_9] : memref<1x64xf32, #tpu.memory_space<vmem>>, vector<1x64xf32>
    %c0_10 = arith.constant 0 : index
    %c0_11 = arith.constant 0 : index
    %6 = vector.load %arg6[%c0_10, %c0_11] : memref<1x64xf32, #tpu.memory_space<vmem>>, vector<1x64xf32>
    %c0_12 = arith.constant 0 : index
    %c0_13 = arith.constant 0 : index
    %7 = vector.load %arg7[%c0_12, %c0_13] : memref<576x64xbf16, #tpu.memory_space<vmem>>, vector<576x64xbf16>
    %c0_14 = arith.constant 0 : index
    %c0_15 = arith.constant 0 : index
    %8 = vector.load %arg8[%c0_14, %c0_15] : memref<1x64xf32, #tpu.memory_space<vmem>>, vector<1x64xf32>
    %cst = arith.constant dense<0.000000e+00> : vector<128x64xf32>
    %9 = tpu.matmul %3, %1, %cst {dimension_numbers = #tpu.dot_dimension_numbers<[1], [0], [0], [1], [0, 0, 1, 1], [], []>} : vector<128x128xf32>, vector<128x64xf32>, vector<128x64xf32> -> vector<128x64xf32>
    %cst_16 = arith.constant dense<0.000000e+00> : vector<128x64xf32>
    %10 = tpu.matmul %9, %2, %cst_16 {dimension_numbers = #tpu.dot_dimension_numbers<[1], [0], [0], [1], [0, 0, 1, 1], [], []>} : vector<128x64xf32>, vector<64x64xf32>, vector<128x64xf32> -> vector<128x64xf32>
    %11 = arith.subf %1, %10 : vector<128x64xf32>
    %12 = arith.mulf %11, %11 : vector<128x64xf32>
    %cst_17 = arith.constant dense<0.000000e+00> : vector<128x64xf32>
    %13 = tpu.matmul %3, %12, %cst_17 {dimension_numbers = #tpu.dot_dimension_numbers<[1], [0], [0], [1], [0, 0, 1, 1], [], []>} : vector<128x128xf32>, vector<128x64xf32>, vector<128x64xf32> -> vector<128x64xf32>
    %cst_18 = arith.constant dense<0.000000e+00> : vector<128x64xf32>
    %14 = tpu.matmul %13, %2, %cst_18 {dimension_numbers = #tpu.dot_dimension_numbers<[1], [0], [0], [1], [0, 0, 1, 1], [], []>} : vector<128x64xf32>, vector<64x64xf32>, vector<128x64xf32> -> vector<128x64xf32>
    %cst_19 = arith.constant 9.99999974E-6 : f32
    %15 = vector.broadcast %cst_19 : f32 to vector<128x64xf32>
    %16 = arith.addf %14, %15 : vector<128x64xf32>
    %17 = math.rsqrt %16 : vector<128x64xf32>
    %18 = arith.mulf %11, %17 : vector<128x64xf32>
    %19 = vector.broadcast %5 : vector<1x64xf32> to vector<128x64xf32>
    %20 = arith.mulf %18, %19 : vector<128x64xf32>
    %21 = vector.broadcast %6 : vector<1x64xf32> to vector<128x64xf32>
    %22 = arith.addf %20, %21 : vector<128x64xf32>
    %cst_20 = arith.constant 0.000000e+00 : f32
    %23 = vector.broadcast %cst_20 : f32 to vector<128x64xf32>
    %24 = arith.maximumf %22, %23 : vector<128x64xf32>
    %25 = arith.truncf %24 : vector<128x64xf32> to vector<128x64xbf16>
    %cst_21 = arith.constant 0.000000e+00 : bf16
    %26 = vector.broadcast %cst_21 : bf16 to vector<9x64xbf16>
    %27 = tpu.concatenate %26, %25, %26 in 0 : vector<9x64xbf16>, vector<128x64xbf16>, vector<9x64xbf16> -> vector<146x64xbf16>
    %28 = vector.extract_strided_slice %27 {offsets = [0, 0], sizes = [128, 64], strides = [1, 1]} : vector<146x64xbf16> to vector<128x64xbf16>
    %29 = vector.extract_strided_slice %4 {offsets = [0, 0], sizes = [128, 1], strides = [1, 1]} : vector<128x9xbf16> to vector<128x1xbf16>
    %30 = vector.broadcast %29 : vector<128x1xbf16> to vector<128x64xbf16>
    %31 = arith.mulf %28, %30 : vector<128x64xbf16>
    %32 = vector.extract_strided_slice %27 {offsets = [1, 0], sizes = [128, 64], strides = [1, 1]} : vector<146x64xbf16> to vector<128x64xbf16>
    %33 = vector.extract_strided_slice %4 {offsets = [0, 1], sizes = [128, 1], strides = [1, 1]} : vector<128x9xbf16> to vector<128x1xbf16>
    %34 = vector.broadcast %33 : vector<128x1xbf16> to vector<128x64xbf16>
    %35 = arith.mulf %32, %34 : vector<128x64xbf16>
    %36 = vector.extract_strided_slice %27 {offsets = [2, 0], sizes = [128, 64], strides = [1, 1]} : vector<146x64xbf16> to vector<128x64xbf16>
    %37 = vector.extract_strided_slice %4 {offsets = [0, 2], sizes = [128, 1], strides = [1, 1]} : vector<128x9xbf16> to vector<128x1xbf16>
    %38 = vector.broadcast %37 : vector<128x1xbf16> to vector<128x64xbf16>
    %39 = arith.mulf %36, %38 : vector<128x64xbf16>
    %40 = vector.extract_strided_slice %27 {offsets = [8, 0], sizes = [128, 64], strides = [1, 1]} : vector<146x64xbf16> to vector<128x64xbf16>
    %41 = vector.extract_strided_slice %4 {offsets = [0, 3], sizes = [128, 1], strides = [1, 1]} : vector<128x9xbf16> to vector<128x1xbf16>
    %42 = vector.broadcast %41 : vector<128x1xbf16> to vector<128x64xbf16>
    %43 = arith.mulf %40, %42 : vector<128x64xbf16>
    %44 = vector.extract_strided_slice %27 {offsets = [9, 0], sizes = [128, 64], strides = [1, 1]} : vector<146x64xbf16> to vector<128x64xbf16>
    %45 = vector.extract_strided_slice %4 {offsets = [0, 4], sizes = [128, 1], strides = [1, 1]} : vector<128x9xbf16> to vector<128x1xbf16>
    %46 = vector.broadcast %45 : vector<128x1xbf16> to vector<128x64xbf16>
    %47 = arith.mulf %44, %46 : vector<128x64xbf16>
    %48 = vector.extract_strided_slice %27 {offsets = [10, 0], sizes = [128, 64], strides = [1, 1]} : vector<146x64xbf16> to vector<128x64xbf16>
    %49 = vector.extract_strided_slice %4 {offsets = [0, 5], sizes = [128, 1], strides = [1, 1]} : vector<128x9xbf16> to vector<128x1xbf16>
    %50 = vector.broadcast %49 : vector<128x1xbf16> to vector<128x64xbf16>
    %51 = arith.mulf %48, %50 : vector<128x64xbf16>
    %52 = vector.extract_strided_slice %27 {offsets = [16, 0], sizes = [128, 64], strides = [1, 1]} : vector<146x64xbf16> to vector<128x64xbf16>
    %53 = vector.extract_strided_slice %4 {offsets = [0, 6], sizes = [128, 1], strides = [1, 1]} : vector<128x9xbf16> to vector<128x1xbf16>
    %54 = vector.broadcast %53 : vector<128x1xbf16> to vector<128x64xbf16>
    %55 = arith.mulf %52, %54 : vector<128x64xbf16>
    %56 = vector.extract_strided_slice %27 {offsets = [17, 0], sizes = [128, 64], strides = [1, 1]} : vector<146x64xbf16> to vector<128x64xbf16>
    %57 = vector.extract_strided_slice %4 {offsets = [0, 7], sizes = [128, 1], strides = [1, 1]} : vector<128x9xbf16> to vector<128x1xbf16>
    %58 = vector.broadcast %57 : vector<128x1xbf16> to vector<128x64xbf16>
    %59 = arith.mulf %56, %58 : vector<128x64xbf16>
    %60 = vector.extract_strided_slice %27 {offsets = [18, 0], sizes = [128, 64], strides = [1, 1]} : vector<146x64xbf16> to vector<128x64xbf16>
    %61 = vector.extract_strided_slice %4 {offsets = [0, 8], sizes = [128, 1], strides = [1, 1]} : vector<128x9xbf16> to vector<128x1xbf16>
    %62 = vector.broadcast %61 : vector<128x1xbf16> to vector<128x64xbf16>
    %63 = arith.mulf %60, %62 : vector<128x64xbf16>
    %64 = tpu.concatenate %31, %35, %39, %43, %47, %51, %55, %59, %63 in 1 : vector<128x64xbf16>, vector<128x64xbf16>, vector<128x64xbf16>, vector<128x64xbf16>, vector<128x64xbf16>, vector<128x64xbf16>, vector<128x64xbf16>, vector<128x64xbf16>, vector<128x64xbf16> -> vector<128x576xbf16>
    %cst_22 = arith.constant dense<0.000000e+00> : vector<128x64xf32>
    %65 = tpu.matmul %64, %7, %cst_22 {dimension_numbers = #tpu.dot_dimension_numbers<[1], [0], [0], [1], [0, 0, 1, 1], [], []>} : vector<128x576xbf16>, vector<576x64xbf16>, vector<128x64xf32> -> vector<128x64xf32>
    %66 = vector.broadcast %8 : vector<1x64xf32> to vector<128x64xf32>
    %67 = arith.addf %65, %66 : vector<128x64xf32>
    %68 = arith.addf %67, %1 : vector<128x64xf32>
    %69 = arith.truncf %68 : vector<128x64xf32> to vector<128x64xbf16>
    %c0_23 = arith.constant 0 : index
    %c0_24 = arith.constant 0 : index
    %70 = vector.load %arg9[%c0_23, %c0_24] : memref<64x64xbf16, #tpu.memory_space<vmem>>, vector<64x64xbf16>
    %cst_25 = arith.constant dense<0.000000e+00> : vector<128x64xf32>
    %71 = tpu.matmul %69, %70, %cst_25 {dimension_numbers = #tpu.dot_dimension_numbers<[1], [0], [0], [1], [0, 0, 1, 1], [], []>} : vector<128x64xbf16>, vector<64x64xbf16>, vector<128x64xf32> -> vector<128x64xf32>
    %c0_26 = arith.constant 0 : index
    %c0_27 = arith.constant 0 : index
    %72 = vector.load %arg12[%c0_26, %c0_27] : memref<1x64xf32, #tpu.memory_space<vmem>>, vector<1x64xf32>
    %73 = vector.broadcast %72 : vector<1x64xf32> to vector<128x64xf32>
    %74 = arith.addf %71, %73 : vector<128x64xf32>
    %75 = arith.truncf %74 : vector<128x64xf32> to vector<128x64xbf16>
    %c0_28 = arith.constant 0 : index
    %c0_29 = arith.constant 0 : index
    %76 = vector.load %arg10[%c0_28, %c0_29] : memref<64x64xbf16, #tpu.memory_space<vmem>>, vector<64x64xbf16>
    %cst_30 = arith.constant dense<0.000000e+00> : vector<128x64xf32>
    %77 = tpu.matmul %69, %76, %cst_30 {dimension_numbers = #tpu.dot_dimension_numbers<[1], [0], [0], [1], [0, 0, 1, 1], [], []>} : vector<128x64xbf16>, vector<64x64xbf16>, vector<128x64xf32> -> vector<128x64xf32>
    %c0_31 = arith.constant 0 : index
    %c0_32 = arith.constant 0 : index
    %78 = vector.load %arg13[%c0_31, %c0_32] : memref<1x64xf32, #tpu.memory_space<vmem>>, vector<1x64xf32>
    %79 = vector.broadcast %78 : vector<1x64xf32> to vector<128x64xf32>
    %80 = arith.addf %77, %79 : vector<128x64xf32>
    %81 = arith.truncf %80 : vector<128x64xf32> to vector<128x64xbf16>
    %c0_33 = arith.constant 0 : index
    %c0_34 = arith.constant 0 : index
    %82 = vector.load %arg11[%c0_33, %c0_34] : memref<64x64xbf16, #tpu.memory_space<vmem>>, vector<64x64xbf16>
    %cst_35 = arith.constant dense<0.000000e+00> : vector<128x64xf32>
    %83 = tpu.matmul %69, %82, %cst_35 {dimension_numbers = #tpu.dot_dimension_numbers<[1], [0], [0], [1], [0, 0, 1, 1], [], []>} : vector<128x64xbf16>, vector<64x64xbf16>, vector<128x64xf32> -> vector<128x64xf32>
    %c0_36 = arith.constant 0 : index
    %c0_37 = arith.constant 0 : index
    %84 = vector.load %arg14[%c0_36, %c0_37] : memref<1x64xf32, #tpu.memory_space<vmem>>, vector<1x64xf32>
    %85 = vector.broadcast %84 : vector<1x64xf32> to vector<128x64xf32>
    %86 = arith.addf %83, %85 : vector<128x64xf32>
    %87 = arith.truncf %86 : vector<128x64xf32> to vector<128x64xbf16>
    %c0_38 = arith.constant 0 : index
    %c0_39 = arith.constant 0 : index
    %88 = vector.load %arg15[%c0_38, %c0_39] : memref<512x64xbf16, #tpu.memory_space<vmem>>, vector<512x64xbf16>
    %c0_40 = arith.constant 0 : index
    %c0_41 = arith.constant 0 : index
    %89 = vector.load %arg16[%c0_40, %c0_41] : memref<512x8xbf16, #tpu.memory_space<vmem>>, vector<512x8xbf16>
    %c0_42 = arith.constant 0 : index
    %c0_43 = arith.constant 0 : index
    %90 = vector.load %arg17[%c0_42, %c0_43] : memref<8x64xf32, #tpu.memory_space<vmem>>, vector<8x64xf32>
    %91 = vector.extract_strided_slice %75 {offsets = [0, 0], sizes = [64, 64], strides = [1, 1]} : vector<128x64xbf16> to vector<64x64xbf16>
    %92 = vector.extract_strided_slice %81 {offsets = [0, 0], sizes = [64, 64], strides = [1, 1]} : vector<128x64xbf16> to vector<64x64xbf16>
    %93 = vector.extract_strided_slice %87 {offsets = [0, 0], sizes = [64, 64], strides = [1, 1]} : vector<128x64xbf16> to vector<64x64xbf16>
    %94 = tpu.concatenate %92, %92, %92, %92, %92, %92, %92, %92 in 0 : vector<64x64xbf16>, vector<64x64xbf16>, vector<64x64xbf16>, vector<64x64xbf16>, vector<64x64xbf16>, vector<64x64xbf16>, vector<64x64xbf16>, vector<64x64xbf16> -> vector<512x64xbf16>
    %95 = arith.mulf %94, %88 : vector<512x64xbf16>
    %96 = tpu.concatenate %93, %93, %93, %93, %93, %93, %93, %93 in 0 : vector<64x64xbf16>, vector<64x64xbf16>, vector<64x64xbf16>, vector<64x64xbf16>, vector<64x64xbf16>, vector<64x64xbf16>, vector<64x64xbf16>, vector<64x64xbf16> -> vector<512x64xbf16>
    %97 = arith.mulf %96, %88 : vector<512x64xbf16>
    %cst_44 = arith.constant dense<0.000000e+00> : vector<64x512xf32>
    %98 = tpu.matmul %91, %95, %cst_44 {dimension_numbers = #tpu.dot_dimension_numbers<[1], [1], [0], [0], [0, 0, 1, 0], [], []>} : vector<64x64xbf16>, vector<512x64xbf16>, vector<64x512xf32> -> vector<64x512xf32>
    %cst_45 = arith.constant 0.353553385 : f32
    %99 = vector.broadcast %cst_45 : f32 to vector<64x512xf32>
    %100 = arith.mulf %98, %99 : vector<64x512xf32>
    %cst_46 = arith.constant dense<0xFF800000> : vector<64xf32>
    %101 = vector.multi_reduction <maximumf>, %100, %cst_46 [1] : vector<64x512xf32> to vector<64xf32>
    %102 = vector.shape_cast %101 : vector<64xf32> to vector<64x1xf32>
    %103 = vector.broadcast %102 : vector<64x1xf32> to vector<64x512xf32>
    %104 = arith.subf %100, %103 : vector<64x512xf32>
    %105 = math.exp %104 : vector<64x512xf32>
    %106 = arith.truncf %105 : vector<64x512xf32> to vector<64x512xbf16>
    %cst_47 = arith.constant dense<0.000000e+00> : vector<64x8xf32>
    %107 = tpu.matmul %106, %89, %cst_47 {dimension_numbers = #tpu.dot_dimension_numbers<[1], [0], [0], [1], [0, 0, 1, 1], [], []>} : vector<64x512xbf16>, vector<512x8xbf16>, vector<64x8xf32> -> vector<64x8xf32>
    %cst_48 = arith.constant 1.000000e+00 : f32
    %108 = vector.broadcast %cst_48 : f32 to vector<64x8xf32>
    %109 = arith.divf %108, %107 : vector<64x8xf32>
    %cst_49 = arith.constant dense<0.000000e+00> : vector<64x64xf32>
    %110 = tpu.matmul %109, %90, %cst_49 {dimension_numbers = #tpu.dot_dimension_numbers<[1], [0], [0], [1], [0, 0, 1, 1], [], []>} : vector<64x8xf32>, vector<8x64xf32>, vector<64x64xf32> -> vector<64x64xf32>
    %cst_50 = arith.constant dense<0.000000e+00> : vector<64x64xf32>
    %111 = tpu.matmul %106, %97, %cst_50 {dimension_numbers = #tpu.dot_dimension_numbers<[1], [0], [0], [1], [0, 0, 1, 1], [], []>} : vector<64x512xbf16>, vector<512x64xbf16>, vector<64x64xf32> -> vector<64x64xf32>
    %112 = arith.mulf %111, %110 : vector<64x64xf32>
    %113 = vector.extract_strided_slice %75 {offsets = [64, 0], sizes = [64, 64], strides = [1, 1]} : vector<128x64xbf16> to vector<64x64xbf16>
    %114 = vector.extract_strided_slice %81 {offsets = [64, 0], sizes = [64, 64], strides = [1, 1]} : vector<128x64xbf16> to vector<64x64xbf16>
    %115 = vector.extract_strided_slice %87 {offsets = [64, 0], sizes = [64, 64], strides = [1, 1]} : vector<128x64xbf16> to vector<64x64xbf16>
    %116 = tpu.concatenate %114, %114, %114, %114, %114, %114, %114, %114 in 0 : vector<64x64xbf16>, vector<64x64xbf16>, vector<64x64xbf16>, vector<64x64xbf16>, vector<64x64xbf16>, vector<64x64xbf16>, vector<64x64xbf16>, vector<64x64xbf16> -> vector<512x64xbf16>
    %117 = arith.mulf %116, %88 : vector<512x64xbf16>
    %118 = tpu.concatenate %115, %115, %115, %115, %115, %115, %115, %115 in 0 : vector<64x64xbf16>, vector<64x64xbf16>, vector<64x64xbf16>, vector<64x64xbf16>, vector<64x64xbf16>, vector<64x64xbf16>, vector<64x64xbf16>, vector<64x64xbf16> -> vector<512x64xbf16>
    %119 = arith.mulf %118, %88 : vector<512x64xbf16>
    %cst_51 = arith.constant dense<0.000000e+00> : vector<64x512xf32>
    %120 = tpu.matmul %113, %117, %cst_51 {dimension_numbers = #tpu.dot_dimension_numbers<[1], [1], [0], [0], [0, 0, 1, 0], [], []>} : vector<64x64xbf16>, vector<512x64xbf16>, vector<64x512xf32> -> vector<64x512xf32>
    %cst_52 = arith.constant 0.353553385 : f32
    %121 = vector.broadcast %cst_52 : f32 to vector<64x512xf32>
    %122 = arith.mulf %120, %121 : vector<64x512xf32>
    %cst_53 = arith.constant dense<0xFF800000> : vector<64xf32>
    %123 = vector.multi_reduction <maximumf>, %122, %cst_53 [1] : vector<64x512xf32> to vector<64xf32>
    %124 = vector.shape_cast %123 : vector<64xf32> to vector<64x1xf32>
    %125 = vector.broadcast %124 : vector<64x1xf32> to vector<64x512xf32>
    %126 = arith.subf %122, %125 : vector<64x512xf32>
    %127 = math.exp %126 : vector<64x512xf32>
    %128 = arith.truncf %127 : vector<64x512xf32> to vector<64x512xbf16>
    %cst_54 = arith.constant dense<0.000000e+00> : vector<64x8xf32>
    %129 = tpu.matmul %128, %89, %cst_54 {dimension_numbers = #tpu.dot_dimension_numbers<[1], [0], [0], [1], [0, 0, 1, 1], [], []>} : vector<64x512xbf16>, vector<512x8xbf16>, vector<64x8xf32> -> vector<64x8xf32>
    %cst_55 = arith.constant 1.000000e+00 : f32
    %130 = vector.broadcast %cst_55 : f32 to vector<64x8xf32>
    %131 = arith.divf %130, %129 : vector<64x8xf32>
    %cst_56 = arith.constant dense<0.000000e+00> : vector<64x64xf32>
    %132 = tpu.matmul %131, %90, %cst_56 {dimension_numbers = #tpu.dot_dimension_numbers<[1], [0], [0], [1], [0, 0, 1, 1], [], []>} : vector<64x8xf32>, vector<8x64xf32>, vector<64x64xf32> -> vector<64x64xf32>
    %cst_57 = arith.constant dense<0.000000e+00> : vector<64x64xf32>
    %133 = tpu.matmul %128, %119, %cst_57 {dimension_numbers = #tpu.dot_dimension_numbers<[1], [0], [0], [1], [0, 0, 1, 1], [], []>} : vector<64x512xbf16>, vector<512x64xbf16>, vector<64x64xf32> -> vector<64x64xf32>
    %134 = arith.mulf %133, %132 : vector<64x64xf32>
    %135 = tpu.concatenate %112, %134 in 0 : vector<64x64xf32>, vector<64x64xf32> -> vector<128x64xf32>
    %136 = arith.truncf %135 : vector<128x64xf32> to vector<128x64xbf16>
    %c0_58 = arith.constant 0 : index
    %c0_59 = arith.constant 0 : index
    %137 = vector.load %arg18[%c0_58, %c0_59] : memref<64x64xbf16, #tpu.memory_space<vmem>>, vector<64x64xbf16>
    %cst_60 = arith.constant dense<0.000000e+00> : vector<128x64xf32>
    %138 = tpu.matmul %136, %137, %cst_60 {dimension_numbers = #tpu.dot_dimension_numbers<[1], [0], [0], [1], [0, 0, 1, 1], [], []>} : vector<128x64xbf16>, vector<64x64xbf16>, vector<128x64xf32> -> vector<128x64xf32>
    %c0_61 = arith.constant 0 : index
    %c0_62 = arith.constant 0 : index
    %139 = vector.load %arg19[%c0_61, %c0_62] : memref<1x64xf32, #tpu.memory_space<vmem>>, vector<1x64xf32>
    %140 = vector.broadcast %139 : vector<1x64xf32> to vector<128x64xf32>
    %141 = arith.addf %138, %140 : vector<128x64xf32>
    %c0_63 = arith.constant 0 : index
    %c0_64 = arith.constant 0 : index
    %142 = vector.load %arg20[%c0_63, %c0_64] : memref<1x64xf32, #tpu.memory_space<vmem>>, vector<1x64xf32>
    %c0_65 = arith.constant 0 : index
    %c0_66 = arith.constant 0 : index
    %143 = vector.load %arg21[%c0_65, %c0_66] : memref<1x64xf32, #tpu.memory_space<vmem>>, vector<1x64xf32>
    %c0_67 = arith.constant 0 : index
    %c0_68 = arith.constant 0 : index
    %144 = vector.load %arg22[%c0_67, %c0_68] : memref<576x64xbf16, #tpu.memory_space<vmem>>, vector<576x64xbf16>
    %c0_69 = arith.constant 0 : index
    %c0_70 = arith.constant 0 : index
    %145 = vector.load %arg23[%c0_69, %c0_70] : memref<1x64xf32, #tpu.memory_space<vmem>>, vector<1x64xf32>
    %cst_71 = arith.constant dense<0.000000e+00> : vector<128x64xf32>
    %146 = tpu.matmul %3, %141, %cst_71 {dimension_numbers = #tpu.dot_dimension_numbers<[1], [0], [0], [1], [0, 0, 1, 1], [], []>} : vector<128x128xf32>, vector<128x64xf32>, vector<128x64xf32> -> vector<128x64xf32>
    %cst_72 = arith.constant dense<0.000000e+00> : vector<128x64xf32>
    %147 = tpu.matmul %146, %2, %cst_72 {dimension_numbers = #tpu.dot_dimension_numbers<[1], [0], [0], [1], [0, 0, 1, 1], [], []>} : vector<128x64xf32>, vector<64x64xf32>, vector<128x64xf32> -> vector<128x64xf32>
    %148 = arith.subf %141, %147 : vector<128x64xf32>
    %149 = arith.mulf %148, %148 : vector<128x64xf32>
    %cst_73 = arith.constant dense<0.000000e+00> : vector<128x64xf32>
    %150 = tpu.matmul %3, %149, %cst_73 {dimension_numbers = #tpu.dot_dimension_numbers<[1], [0], [0], [1], [0, 0, 1, 1], [], []>} : vector<128x128xf32>, vector<128x64xf32>, vector<128x64xf32> -> vector<128x64xf32>
    %cst_74 = arith.constant dense<0.000000e+00> : vector<128x64xf32>
    %151 = tpu.matmul %150, %2, %cst_74 {dimension_numbers = #tpu.dot_dimension_numbers<[1], [0], [0], [1], [0, 0, 1, 1], [], []>} : vector<128x64xf32>, vector<64x64xf32>, vector<128x64xf32> -> vector<128x64xf32>
    %cst_75 = arith.constant 9.99999974E-6 : f32
    %152 = vector.broadcast %cst_75 : f32 to vector<128x64xf32>
    %153 = arith.addf %151, %152 : vector<128x64xf32>
    %154 = math.rsqrt %153 : vector<128x64xf32>
    %155 = arith.mulf %148, %154 : vector<128x64xf32>
    %156 = vector.broadcast %142 : vector<1x64xf32> to vector<128x64xf32>
    %157 = arith.mulf %155, %156 : vector<128x64xf32>
    %158 = vector.broadcast %143 : vector<1x64xf32> to vector<128x64xf32>
    %159 = arith.addf %157, %158 : vector<128x64xf32>
    %cst_76 = arith.constant 0.000000e+00 : f32
    %160 = vector.broadcast %cst_76 : f32 to vector<128x64xf32>
    %161 = arith.maximumf %159, %160 : vector<128x64xf32>
    %162 = arith.truncf %161 : vector<128x64xf32> to vector<128x64xbf16>
    %cst_77 = arith.constant 0.000000e+00 : bf16
    %163 = vector.broadcast %cst_77 : bf16 to vector<9x64xbf16>
    %164 = tpu.concatenate %163, %162, %163 in 0 : vector<9x64xbf16>, vector<128x64xbf16>, vector<9x64xbf16> -> vector<146x64xbf16>
    %165 = vector.extract_strided_slice %164 {offsets = [0, 0], sizes = [128, 64], strides = [1, 1]} : vector<146x64xbf16> to vector<128x64xbf16>
    %166 = vector.extract_strided_slice %4 {offsets = [0, 0], sizes = [128, 1], strides = [1, 1]} : vector<128x9xbf16> to vector<128x1xbf16>
    %167 = vector.broadcast %166 : vector<128x1xbf16> to vector<128x64xbf16>
    %168 = arith.mulf %165, %167 : vector<128x64xbf16>
    %169 = vector.extract_strided_slice %164 {offsets = [1, 0], sizes = [128, 64], strides = [1, 1]} : vector<146x64xbf16> to vector<128x64xbf16>
    %170 = vector.extract_strided_slice %4 {offsets = [0, 1], sizes = [128, 1], strides = [1, 1]} : vector<128x9xbf16> to vector<128x1xbf16>
    %171 = vector.broadcast %170 : vector<128x1xbf16> to vector<128x64xbf16>
    %172 = arith.mulf %169, %171 : vector<128x64xbf16>
    %173 = vector.extract_strided_slice %164 {offsets = [2, 0], sizes = [128, 64], strides = [1, 1]} : vector<146x64xbf16> to vector<128x64xbf16>
    %174 = vector.extract_strided_slice %4 {offsets = [0, 2], sizes = [128, 1], strides = [1, 1]} : vector<128x9xbf16> to vector<128x1xbf16>
    %175 = vector.broadcast %174 : vector<128x1xbf16> to vector<128x64xbf16>
    %176 = arith.mulf %173, %175 : vector<128x64xbf16>
    %177 = vector.extract_strided_slice %164 {offsets = [8, 0], sizes = [128, 64], strides = [1, 1]} : vector<146x64xbf16> to vector<128x64xbf16>
    %178 = vector.extract_strided_slice %4 {offsets = [0, 3], sizes = [128, 1], strides = [1, 1]} : vector<128x9xbf16> to vector<128x1xbf16>
    %179 = vector.broadcast %178 : vector<128x1xbf16> to vector<128x64xbf16>
    %180 = arith.mulf %177, %179 : vector<128x64xbf16>
    %181 = vector.extract_strided_slice %164 {offsets = [9, 0], sizes = [128, 64], strides = [1, 1]} : vector<146x64xbf16> to vector<128x64xbf16>
    %182 = vector.extract_strided_slice %4 {offsets = [0, 4], sizes = [128, 1], strides = [1, 1]} : vector<128x9xbf16> to vector<128x1xbf16>
    %183 = vector.broadcast %182 : vector<128x1xbf16> to vector<128x64xbf16>
    %184 = arith.mulf %181, %183 : vector<128x64xbf16>
    %185 = vector.extract_strided_slice %164 {offsets = [10, 0], sizes = [128, 64], strides = [1, 1]} : vector<146x64xbf16> to vector<128x64xbf16>
    %186 = vector.extract_strided_slice %4 {offsets = [0, 5], sizes = [128, 1], strides = [1, 1]} : vector<128x9xbf16> to vector<128x1xbf16>
    %187 = vector.broadcast %186 : vector<128x1xbf16> to vector<128x64xbf16>
    %188 = arith.mulf %185, %187 : vector<128x64xbf16>
    %189 = vector.extract_strided_slice %164 {offsets = [16, 0], sizes = [128, 64], strides = [1, 1]} : vector<146x64xbf16> to vector<128x64xbf16>
    %190 = vector.extract_strided_slice %4 {offsets = [0, 6], sizes = [128, 1], strides = [1, 1]} : vector<128x9xbf16> to vector<128x1xbf16>
    %191 = vector.broadcast %190 : vector<128x1xbf16> to vector<128x64xbf16>
    %192 = arith.mulf %189, %191 : vector<128x64xbf16>
    %193 = vector.extract_strided_slice %164 {offsets = [17, 0], sizes = [128, 64], strides = [1, 1]} : vector<146x64xbf16> to vector<128x64xbf16>
    %194 = vector.extract_strided_slice %4 {offsets = [0, 7], sizes = [128, 1], strides = [1, 1]} : vector<128x9xbf16> to vector<128x1xbf16>
    %195 = vector.broadcast %194 : vector<128x1xbf16> to vector<128x64xbf16>
    %196 = arith.mulf %193, %195 : vector<128x64xbf16>
    %197 = vector.extract_strided_slice %164 {offsets = [18, 0], sizes = [128, 64], strides = [1, 1]} : vector<146x64xbf16> to vector<128x64xbf16>
    %198 = vector.extract_strided_slice %4 {offsets = [0, 8], sizes = [128, 1], strides = [1, 1]} : vector<128x9xbf16> to vector<128x1xbf16>
    %199 = vector.broadcast %198 : vector<128x1xbf16> to vector<128x64xbf16>
    %200 = arith.mulf %197, %199 : vector<128x64xbf16>
    %201 = tpu.concatenate %168, %172, %176, %180, %184, %188, %192, %196, %200 in 1 : vector<128x64xbf16>, vector<128x64xbf16>, vector<128x64xbf16>, vector<128x64xbf16>, vector<128x64xbf16>, vector<128x64xbf16>, vector<128x64xbf16>, vector<128x64xbf16>, vector<128x64xbf16> -> vector<128x576xbf16>
    %cst_78 = arith.constant dense<0.000000e+00> : vector<128x64xf32>
    %202 = tpu.matmul %201, %144, %cst_78 {dimension_numbers = #tpu.dot_dimension_numbers<[1], [0], [0], [1], [0, 0, 1, 1], [], []>} : vector<128x576xbf16>, vector<576x64xbf16>, vector<128x64xf32> -> vector<128x64xf32>
    %203 = vector.broadcast %145 : vector<1x64xf32> to vector<128x64xf32>
    %204 = arith.addf %202, %203 : vector<128x64xf32>
    %205 = arith.addf %204, %141 : vector<128x64xf32>
    %206 = vector.shape_cast %205 : vector<128x64xf32> to vector<2x64x64xf32>
    %c0_79 = arith.constant 0 : index
    %c0_80 = arith.constant 0 : index
    %c0_81 = arith.constant 0 : index
    %207 = vector.load %arg24[%c0_79, %c0_80, %c0_81] : memref<2x64x64xf32, #tpu.memory_space<vmem>>, vector<2x64x64xf32>
    tpu.vector_store %arg24[%c0_79, %c0_80, %c0_81], %206 {strides = array<i32>} : memref<2x64x64xf32, #tpu.memory_space<vmem>>, vector<2x64x64xf32>,
    return
  }
  func.func @transform_0(%arg0: i32) -> (i32, i32, i32) {
    %c0_i32 = arith.constant 0 : i32
    %c0_i32_0 = arith.constant 0 : i32
    %c0_i32_1 = arith.constant 0 : i32
    return %arg0, %c0_i32, %c0_i32_0 : i32, i32, i32
  }
  func.func @transform_1(%arg0: i32) -> (i32, i32) {
    %c0_i32 = arith.constant 0 : i32
    %c0_i32_0 = arith.constant 0 : i32
    %c0_i32_1 = arith.constant 0 : i32
    return %c0_i32, %c0_i32_0 : i32, i32
  }
  func.func @transform_2(%arg0: i32) -> (i32, i32) {
    %c0_i32 = arith.constant 0 : i32
    %c0_i32_0 = arith.constant 0 : i32
    %c0_i32_1 = arith.constant 0 : i32
    return %c0_i32, %c0_i32_0 : i32, i32
  }
  func.func @transform_3(%arg0: i32) -> (i32, i32) {
    %c0_i32 = arith.constant 0 : i32
    %c0_i32_0 = arith.constant 0 : i32
    %c0_i32_1 = arith.constant 0 : i32
    return %c0_i32, %c0_i32_0 : i32, i32
  }
  func.func @transform_4(%arg0: i32) -> (i32, i32) {
    %c0_i32 = arith.constant 0 : i32
    %c0_i32_0 = arith.constant 0 : i32
    %c0_i32_1 = arith.constant 0 : i32
    return %c0_i32, %c0_i32_0 : i32, i32
  }
  func.func @transform_5(%arg0: i32) -> (i32, i32) {
    %c0_i32 = arith.constant 0 : i32
    %c0_i32_0 = arith.constant 0 : i32
    %c0_i32_1 = arith.constant 0 : i32
    return %c0_i32, %c0_i32_0 : i32, i32
  }
  func.func @transform_6(%arg0: i32) -> (i32, i32) {
    %c0_i32 = arith.constant 0 : i32
    %c0_i32_0 = arith.constant 0 : i32
    %c0_i32_1 = arith.constant 0 : i32
    return %c0_i32, %c0_i32_0 : i32, i32
  }
  func.func @transform_7(%arg0: i32) -> (i32, i32) {
    %c0_i32 = arith.constant 0 : i32
    %c0_i32_0 = arith.constant 0 : i32
    %c0_i32_1 = arith.constant 0 : i32
    return %c0_i32, %c0_i32_0 : i32, i32
  }
  func.func @transform_8(%arg0: i32) -> (i32, i32) {
    %c0_i32 = arith.constant 0 : i32
    %c0_i32_0 = arith.constant 0 : i32
    %c0_i32_1 = arith.constant 0 : i32
    return %c0_i32, %c0_i32_0 : i32, i32
  }
  func.func @transform_9(%arg0: i32) -> (i32, i32) {
    %c0_i32 = arith.constant 0 : i32
    %c0_i32_0 = arith.constant 0 : i32
    %c0_i32_1 = arith.constant 0 : i32
    return %c0_i32, %c0_i32_0 : i32, i32
  }
  func.func @transform_10(%arg0: i32) -> (i32, i32) {
    %c0_i32 = arith.constant 0 : i32
    %c0_i32_0 = arith.constant 0 : i32
    %c0_i32_1 = arith.constant 0 : i32
    return %c0_i32, %c0_i32_0 : i32, i32
  }
  func.func @transform_11(%arg0: i32) -> (i32, i32) {
    %c0_i32 = arith.constant 0 : i32
    %c0_i32_0 = arith.constant 0 : i32
    %c0_i32_1 = arith.constant 0 : i32
    return %c0_i32, %c0_i32_0 : i32, i32
  }
  func.func @transform_12(%arg0: i32) -> (i32, i32) {
    %c0_i32 = arith.constant 0 : i32
    %c0_i32_0 = arith.constant 0 : i32
    %c0_i32_1 = arith.constant 0 : i32
    return %c0_i32, %c0_i32_0 : i32, i32
  }
  func.func @transform_13(%arg0: i32) -> (i32, i32) {
    %c0_i32 = arith.constant 0 : i32
    %c0_i32_0 = arith.constant 0 : i32
    %c0_i32_1 = arith.constant 0 : i32
    return %c0_i32, %c0_i32_0 : i32, i32
  }
  func.func @transform_14(%arg0: i32) -> (i32, i32) {
    %c0_i32 = arith.constant 0 : i32
    %c0_i32_0 = arith.constant 0 : i32
    %c0_i32_1 = arith.constant 0 : i32
    return %c0_i32, %c0_i32_0 : i32, i32
  }
  func.func @transform_15(%arg0: i32) -> (i32, i32) {
    %c0_i32 = arith.constant 0 : i32
    %c0_i32_0 = arith.constant 0 : i32
    %c0_i32_1 = arith.constant 0 : i32
    return %c0_i32, %c0_i32_0 : i32, i32
  }
  func.func @transform_16(%arg0: i32) -> (i32, i32) {
    %c0_i32 = arith.constant 0 : i32
    %c0_i32_0 = arith.constant 0 : i32
    %c0_i32_1 = arith.constant 0 : i32
    return %c0_i32, %c0_i32_0 : i32, i32
  }
  func.func @transform_17(%arg0: i32) -> (i32, i32) {
    %c0_i32 = arith.constant 0 : i32
    %c0_i32_0 = arith.constant 0 : i32
    %c0_i32_1 = arith.constant 0 : i32
    return %c0_i32, %c0_i32_0 : i32, i32
  }
  func.func @transform_18(%arg0: i32) -> (i32, i32) {
    %c0_i32 = arith.constant 0 : i32
    %c0_i32_0 = arith.constant 0 : i32
    %c0_i32_1 = arith.constant 0 : i32
    return %c0_i32, %c0_i32_0 : i32, i32
  }
  func.func @transform_19(%arg0: i32) -> (i32, i32) {
    %c0_i32 = arith.constant 0 : i32
    %c0_i32_0 = arith.constant 0 : i32
    %c0_i32_1 = arith.constant 0 : i32
    return %c0_i32, %c0_i32_0 : i32, i32
  }
  func.func @transform_20(%arg0: i32) -> (i32, i32) {
    %c0_i32 = arith.constant 0 : i32
    %c0_i32_0 = arith.constant 0 : i32
    %c0_i32_1 = arith.constant 0 : i32
    return %c0_i32, %c0_i32_0 : i32, i32
  }
  func.func @transform_21(%arg0: i32) -> (i32, i32) {
    %c0_i32 = arith.constant 0 : i32
    %c0_i32_0 = arith.constant 0 : i32
    %c0_i32_1 = arith.constant 0 : i32
    return %c0_i32, %c0_i32_0 : i32, i32
  }
  func.func @transform_22(%arg0: i32) -> (i32, i32) {
    %c0_i32 = arith.constant 0 : i32
    %c0_i32_0 = arith.constant 0 : i32
    %c0_i32_1 = arith.constant 0 : i32
    return %c0_i32, %c0_i32_0 : i32, i32
  }
  func.func @transform_23(%arg0: i32) -> (i32, i32, i32) {
    %c0_i32 = arith.constant 0 : i32
    %c0_i32_0 = arith.constant 0 : i32
    %c0_i32_1 = arith.constant 0 : i32
    return %arg0, %c0_i32, %c0_i32_0 : i32, i32, i32
  }
}

</mosaic_0001>

<llo_original>
// kernel: res_attention_pallas.1
$region0: #{res_attention_pallas.1}
  #allocation0 [shape = 'u32[]', space=smem, size = 0x4, offset = 0x4, fixed_abs, tag = 'smem constant byte address 0x4 - core index']
  #allocation1 [shape = 'u32[144,128]{1,0:T(1,128)}', space=vmem, size = 0x12000, scoped, tag = 'internal scratch']
  %s0 = inlined_call_operand.vmem [shape: f32[2,64,64], index: 0, kind: input, shape index: {}]
  %s1 = inlined_call_operand.vmem [shape: f32[64,64], index: 1, kind: input, shape index: {}]
  %s2 = inlined_call_operand.vmem [shape: f32[128,128], index: 2, kind: input, shape index: {}]
  %s3 = inlined_call_operand.vmem [shape: bf16[128,9], index: 3, kind: input, shape index: {}]
  %s4 = inlined_call_operand.vmem [shape: f32[1,64], index: 4, kind: input, shape index: {}]
  %s5 = inlined_call_operand.vmem [shape: f32[1,64], index: 5, kind: input, shape index: {}]
  %s6 = inlined_call_operand.vmem [shape: bf16[576,64], index: 6, kind: input, shape index: {}]
  %s7 = inlined_call_operand.vmem [shape: f32[1,64], index: 7, kind: input, shape index: {}]
  %s8 = inlined_call_operand.vmem [shape: bf16[64,64], index: 8, kind: input, shape index: {}]
  %s9 = inlined_call_operand.vmem [shape: bf16[64,64], index: 9, kind: input, shape index: {}]
  %s10 = inlined_call_operand.vmem [shape: bf16[64,64], index: 10, kind: input, shape index: {}]
  %s11 = inlined_call_operand.vmem [shape: f32[1,64], index: 11, kind: input, shape index: {}]
  %s12 = inlined_call_operand.vmem [shape: f32[1,64], index: 12, kind: input, shape index: {}]
  %s13 = inlined_call_operand.vmem [shape: f32[1,64], index: 13, kind: input, shape index: {}]
  %s14 = inlined_call_operand.vmem [shape: bf16[512,64], index: 14, kind: input, shape index: {}]
  %s15 = inlined_call_operand.vmem [shape: bf16[512,8], index: 15, kind: input, shape index: {}]
  %s16 = inlined_call_operand.vmem [shape: f32[8,64], index: 16, kind: input, shape index: {}]
  %s17 = inlined_call_operand.vmem [shape: bf16[64,64], index: 17, kind: input, shape index: {}]
  %s18 = inlined_call_operand.vmem [shape: f32[1,64], index: 18, kind: input, shape index: {}]
  %s19 = inlined_call_operand.vmem [shape: f32[1,64], index: 19, kind: input, shape index: {}]
  %s20 = inlined_call_operand.vmem [shape: f32[1,64], index: 20, kind: input, shape index: {}]
  %s21 = inlined_call_operand.vmem [shape: bf16[576,64], index: 21, kind: input, shape index: {}]
  %s22 = inlined_call_operand.vmem [shape: f32[1,64], index: 22, kind: input, shape index: {}]
  %s23 = inlined_call_operand.hbm [shape: f32[2,64,64], index: 23, kind: output, shape index: {}]
  %s24 = sld [smem:[#allocation0]]
  $region102: #{res_attention_pallas.1} parent=0
    _
  %s26 = ssub.s32 1, %s24
  %s27 = scalar_select 0, %s26, %s24
  $region1: #{res_attention_pallas.1} parent=0
    #allocation2 [shape = 'u8[65536]{0}', space=vmem, size = 0x10000, scoped, tag = 'output window, operand 0, single buffered']
    #allocation3 [shape = 's32[1]{0}', space=sflag, size = 0x4, scoped, tag = 'scoped memory for res_attention_pallas.1']
    %28 = vsyncpa [#allocation3], 0
    // Predicated region
    $region2: #{res_attention_pallas.1} parent=1 // pred_check
      _
    $region3: #{res_attention_pallas.1} parent=1 // pred_check_branch
      %30 = sbr.rel (0) target = $region5
    $region4: #{res_attention_pallas.1} parent=1 // pred_region
      _
    $region5: #{res_attention_pallas.1} parent=1 // pred_fallthru
      _
    // Predicated region
    $region6: #{res_attention_pallas.1} parent=1 // pred_check
      _
    $region7: #{res_attention_pallas.1} parent=1 // pred_check_branch
      %32 = sbr.rel (0) target = $region9
    $region8: #{res_attention_pallas.1} parent=1 // pred_region
      _
    $region9: #{res_attention_pallas.1} parent=1 // pred_fallthru
      _
    // Predicated region
    $region10: #{res_attention_pallas.1} parent=1 // pred_check
      _
    $region11: #{res_attention_pallas.1} parent=1 // pred_check_branch
      %34 = sbr.rel (0) target = $region13
    $region12: #{res_attention_pallas.1} parent=1 // pred_region
      _
    $region13: #{res_attention_pallas.1} parent=1 // pred_fallthru
      _
    // Predicated region
    $region14: #{res_attention_pallas.1} parent=1 // pred_check
      _
    $region15: #{res_attention_pallas.1} parent=1 // pred_check_branch
      %36 = sbr.rel (0) target = $region17
    $region16: #{res_attention_pallas.1} parent=1 // pred_region
      _
    $region17: #{res_attention_pallas.1} parent=1 // pred_fallthru
      _
    // Predicated region
    $region18: #{res_attention_pallas.1} parent=1 // pred_check
      _
    $region19: #{res_attention_pallas.1} parent=1 // pred_check_branch
      %38 = sbr.rel (0) target = $region21
    $region20: #{res_attention_pallas.1} parent=1 // pred_region
      _
    $region21: #{res_attention_pallas.1} parent=1 // pred_fallthru
      _
    // Predicated region
    $region22: #{res_attention_pallas.1} parent=1 // pred_check
      _
    $region23: #{res_attention_pallas.1} parent=1 // pred_check_branch
      %40 = sbr.rel (0) target = $region25
    $region24: #{res_attention_pallas.1} parent=1 // pred_region
      _
    $region25: #{res_attention_pallas.1} parent=1 // pred_fallthru
      _
    // Predicated region
    $region26: #{res_attention_pallas.1} parent=1 // pred_check
      _
    $region27: #{res_attention_pallas.1} parent=1 // pred_check_branch
      %42 = sbr.rel (0) target = $region29
    $region28: #{res_attention_pallas.1} parent=1 // pred_region
      _
    $region29: #{res_attention_pallas.1} parent=1 // pred_fallthru
      _
    // Predicated region
    $region30: #{res_attention_pallas.1} parent=1 // pred_check
      _
    $region31: #{res_attention_pallas.1} parent=1 // pred_check_branch
      %44 = sbr.rel (0) target = $region33
    $region32: #{res_attention_pallas.1} parent=1 // pred_region
      _
    $region33: #{res_attention_pallas.1} parent=1 // pred_fallthru
      _
    // Predicated region
    $region34: #{res_attention_pallas.1} parent=1 // pred_check
      _
    $region35: #{res_attention_pallas.1} parent=1 // pred_check_branch
      %46 = sbr.rel (0) target = $region37
    $region36: #{res_attention_pallas.1} parent=1 // pred_region
      _
    $region37: #{res_attention_pallas.1} parent=1 // pred_fallthru
      _
    // Predicated region
    $region38: #{res_attention_pallas.1} parent=1 // pred_check
      _
    $region39: #{res_attention_pallas.1} parent=1 // pred_check_branch
      %48 = sbr.rel (0) target = $region41
    $region40: #{res_attention_pallas.1} parent=1 // pred_region
      _
    $region41: #{res_attention_pallas.1} parent=1 // pred_fallthru
      _
    // Predicated region
    $region42: #{res_attention_pallas.1} parent=1 // pred_check
      _
    $region43: #{res_attention_pallas.1} parent=1 // pred_check_branch
      %50 = sbr.rel (0) target = $region45
    $region44: #{res_attention_pallas.1} parent=1 // pred_region
      _
    $region45: #{res_attention_pallas.1} parent=1 // pred_fallthru
      _
    // Predicated region
    $region46: #{res_attention_pallas.1} parent=1 // pred_check
      _
    $region47: #{res_attention_pallas.1} parent=1 // pred_check_branch
      %52 = sbr.rel (0) target = $region49
    $region48: #{res_attention_pallas.1} parent=1 // pred_region
      _
    $region49: #{res_attention_pallas.1} parent=1 // pred_fallthru
      _
    // Predicated region
    $region50: #{res_attention_pallas.1} parent=1 // pred_check
      _
    $region51: #{res_attention_pallas.1} parent=1 // pred_check_branch
      %54 = sbr.rel (0) target = $region53
    $region52: #{res_attention_pallas.1} parent=1 // pred_region
      _
    $region53: #{res_attention_pallas.1} parent=1 // pred_fallthru
      _
    // Predicated region
    $region54: #{res_attention_pallas.1} parent=1 // pred_check
      _
    $region55: #{res_attention_pallas.1} parent=1 // pred_check_branch
      %56 = sbr.rel (0) target = $region57
    $region56: #{res_attention_pallas.1} parent=1 // pred_region
      _
    $region57: #{res_attention_pallas.1} parent=1 // pred_fallthru
      _
    // Predicated region
    $region58: #{res_attention_pallas.1} parent=1 // pred_check
      _
    $region59: #{res_attention_pallas.1} parent=1 // pred_check_branch
      %58 = sbr.rel (0) target = $region61
    $region60: #{res_attention_pallas.1} parent=1 // pred_region
      _
    $region61: #{res_attention_pallas.1} parent=1 // pred_fallthru
      _
    // Predicated region
    $region62: #{res_attention_pallas.1} parent=1 // pred_check
      _
    $region63: #{res_attention_pallas.1} parent=1 // pred_check_branch
      %60 = sbr.rel (0) target = $region65
    $region64: #{res_attention_pallas.1} parent=1 // pred_region
      _
    $region65: #{res_attention_pallas.1} parent=1 // pred_fallthru
      _
    // Predicated region
    $region66: #{res_attention_pallas.1} parent=1 // pred_check
      _
    $region67: #{res_attention_pallas.1} parent=1 // pred_check_branch
      %62 = sbr.rel (0) target = $region69
    $region68: #{res_attention_pallas.1} parent=1 // pred_region
      _
    $region69: #{res_attention_pallas.1} parent=1 // pred_fallthru
      _
    // Predicated region
    $region70: #{res_attention_pallas.1} parent=1 // pred_check
      _
    $region71: #{res_attention_pallas.1} parent=1 // pred_check_branch
      %64 = sbr.rel (0) target = $region73
    $region72: #{res_attention_pallas.1} parent=1 // pred_region
      _
    $region73: #{res_attention_pallas.1} parent=1 // pred_fallthru
      _
    // Predicated region
    $region74: #{res_attention_pallas.1} parent=1 // pred_check
      _
    $region75: #{res_attention_pallas.1} parent=1 // pred_check_branch
      %66 = sbr.rel (0) target = $region77
    $region76: #{res_attention_pallas.1} parent=1 // pred_region
      _
    $region77: #{res_attention_pallas.1} parent=1 // pred_fallthru
      _
    // Predicated region
    $region78: #{res_attention_pallas.1} parent=1 // pred_check
      _
    $region79: #{res_attention_pallas.1} parent=1 // pred_check_branch
      %68 = sbr.rel (0) target = $region81
    $region80: #{res_attention_pallas.1} parent=1 // pred_region
      _
    $region81: #{res_attention_pallas.1} parent=1 // pred_fallthru
      _
    // Predicated region
    $region82: #{res_attention_pallas.1} parent=1 // pred_check
      _
    $region83: #{res_attention_pallas.1} parent=1 // pred_check_branch
      %70 = sbr.rel (0) target = $region85
    $region84: #{res_attention_pallas.1} parent=1 // pred_region
      _
    $region85: #{res_attention_pallas.1} parent=1 // pred_fallthru
      _
    // Predicated region
    $region86: #{res_attention_pallas.1} parent=1 // pred_check
      _
    $region87: #{res_attention_pallas.1} parent=1 // pred_check_branch
      %72 = sbr.rel (0) target = $region89
    $region88: #{res_attention_pallas.1} parent=1 // pred_region
      _
    $region89: #{res_attention_pallas.1} parent=1 // pred_fallthru
      _
    // Predicated region
    $region90: #{res_attention_pallas.1} parent=1 // pred_check
      _
    $region91: #{res_attention_pallas.1} parent=1 // pred_check_branch
      %74 = sbr.rel (0) target = $region93
    $region92: #{res_attention_pallas.1} parent=1 // pred_region
      _
    $region93: #{res_attention_pallas.1} parent=1 // pred_fallthru
      _
    %v76 = vld [vmem:[%s0] sm:$0xff]
    %v77 = vld [vmem:[%s0 + $0x8] sm:$0xff]
    %v78 = vld [vmem:[%s0 + $0x10] sm:$0xff]
    %v79 = vld [vmem:[%s0 + $0x18] sm:$0xff]
    %v80 = vld [vmem:[%s0 + $0x20] sm:$0xff]
    %v81 = vld [vmem:[%s0 + $0x28] sm:$0xff]
    %v82 = vld [vmem:[%s0 + $0x30] sm:$0xff]
    %v83 = vld [vmem:[%s0 + $0x38] sm:$0xff]
    %v84 = vld [vmem:[%s0 + $0x40] sm:$0xff]
    %v85 = vld [vmem:[%s0 + $0x48] sm:$0xff]
    %v86 = vld [vmem:[%s0 + $0x50] sm:$0xff]
    %v87 = vld [vmem:[%s0 + $0x58] sm:$0xff]
    %v88 = vld [vmem:[%s0 + $0x60] sm:$0xff]
    %v89 = vld [vmem:[%s0 + $0x68] sm:$0xff]
    %v90 = vld [vmem:[%s0 + $0x70] sm:$0xff]
    %v91 = vld [vmem:[%s0 + $0x78] sm:$0xff]
    %v92 = vld [vmem:[%s1] sm:$0xff]
    %v93 = vld [vmem:[%s1 + $0x8] sm:$0xff]
    %v94 = vld [vmem:[%s1 + $0x10] sm:$0xff]
    %v95 = vld [vmem:[%s1 + $0x18] sm:$0xff]
    %v96 = vld [vmem:[%s1 + $0x20] sm:$0xff]
    %v97 = vld [vmem:[%s1 + $0x28] sm:$0xff]
    %v98 = vld [vmem:[%s1 + $0x30] sm:$0xff]
    %v99 = vld [vmem:[%s1 + $0x38] sm:$0xff]
    %v100 = vld [vmem:[%s2] sm:$0xff]
    %v101 = vld [vmem:[%s2 + $0x8] sm:$0xff]
    %v102 = vld [vmem:[%s2 + $0x10] sm:$0xff]
    %v103 = vld [vmem:[%s2 + $0x18] sm:$0xff]
    %v104 = vld [vmem:[%s2 + $0x20] sm:$0xff]
    %v105 = vld [vmem:[%s2 + $0x28] sm:$0xff]
    %v106 = vld [vmem:[%s2 + $0x30] sm:$0xff]
    %v107 = vld [vmem:[%s2 + $0x38] sm:$0xff]
    %v108 = vld [vmem:[%s2 + $0x40] sm:$0xff]
    %v109 = vld [vmem:[%s2 + $0x48] sm:$0xff]
    %v110 = vld [vmem:[%s2 + $0x50] sm:$0xff]
    %v111 = vld [vmem:[%s2 + $0x58] sm:$0xff]
    %v112 = vld [vmem:[%s2 + $0x60] sm:$0xff]
    %v113 = vld [vmem:[%s2 + $0x68] sm:$0xff]
    %v114 = vld [vmem:[%s2 + $0x70] sm:$0xff]
    %v115 = vld [vmem:[%s2 + $0x78] sm:$0xff]
    %v116 = vld [vmem:[%s3] sm:$0xf]
    %v117 = vld [vmem:[%s3 + $0x4] sm:$0xf]
    %v118 = vld [vmem:[%s3 + $0x8] sm:$0xf]
    %v119 = vld [vmem:[%s3 + $0xc] sm:$0xf]
    %v120 = vld [vmem:[%s3 + $0x10] sm:$0xf]
    %v121 = vld [vmem:[%s3 + $0x14] sm:$0xf]
    %v122 = vld [vmem:[%s3 + $0x18] sm:$0xf]
    %v123 = vld [vmem:[%s3 + $0x1c] sm:$0xf]
    %v124 = vld [vmem:[%s3 + $0x20] sm:$0xf]
    %v125 = vld [vmem:[%s3 + $0x24] sm:$0xf]
    %v126 = vld [vmem:[%s3 + $0x28] sm:$0xf]
    %v127 = vld [vmem:[%s3 + $0x2c] sm:$0xf]
    %v128 = vld [vmem:[%s3 + $0x30] sm:$0xf]
    %v129 = vld [vmem:[%s3 + $0x34] sm:$0xf]
    %v130 = vld [vmem:[%s3 + $0x38] sm:$0xf]
    %v131 = vld [vmem:[%s3 + $0x3c] sm:$0xf]
    %v132 = vld [vmem:[%s4] sm:$0x1]
    %v133 = vld [vmem:[%s5] sm:$0x1]
    %v134 = vld [vmem:[%s6] sm:$0xf]
    %v135 = vld [vmem:[%s6 + $0x4] sm:$0xf]
    %v136 = vld [vmem:[%s6 + $0x8] sm:$0xf]
    %v137 = vld [vmem:[%s6 + $0xc] sm:$0xf]
    %v138 = vld [vmem:[%s6 + $0x10] sm:$0xf]
    %v139 = vld [vmem:[%s6 + $0x14] sm:$0xf]
    %v140 = vld [vmem:[%s6 + $0x18] sm:$0xf]
    %v141 = vld [vmem:[%s6 + $0x1c] sm:$0xf]
    %v142 = vld [vmem:[%s6 + $0x20] sm:$0xf]
    %v143 = vld [vmem:[%s6 + $0x24] sm:$0xf]
    %v144 = vld [vmem:[%s6 + $0x28] sm:$0xf]
    %v145 = vld [vmem:[%s6 + $0x2c] sm:$0xf]
    %v146 = vld [vmem:[%s6 + $0x30] sm:$0xf]
    %v147 = vld [vmem:[%s6 + $0x34] sm:$0xf]
    %v148 = vld [vmem:[%s6 + $0x38] sm:$0xf]
    %v149 = vld [vmem:[%s6 + $0x3c] sm:$0xf]
    %v150 = vld [vmem:[%s6 + $0x40] sm:$0xf]
    %v151 = vld [vmem:[%s6 + $0x44] sm:$0xf]
    %v152 = vld [vmem:[%s6 + $0x48] sm:$0xf]
    %v153 = vld [vmem:[%s6 + $0x4c] sm:$0xf]
    %v154 = vld [vmem:[%s6 + $0x50] sm:$0xf]
    %v155 = vld [vmem:[%s6 + $0x54] sm:$0xf]
    %v156 = vld [vmem:[%s6 + $0x58] sm:$0xf]
    %v157 = vld [vmem:[%s6 + $0x5c] sm:$0xf]
    %v158 = vld [vmem:[%s6 + $0x60] sm:$0xf]
    %v159 = vld [vmem:[%s6 + $0x64] sm:$0xf]
    %v160 = vld [vmem:[%s6 + $0x68] sm:$0xf]
    %v161 = vld [vmem:[%s6 + $0x6c] sm:$0xf]
    %v162 = vld [vmem:[%s6 + $0x70] sm:$0xf]
    %v163 = vld [vmem:[%s6 + $0x74] sm:$0xf]
    %v164 = vld [vmem:[%s6 + $0x78] sm:$0xf]
    %v165 = vld [vmem:[%s6 + $0x7c] sm:$0xf]
    %v166 = vld [vmem:[%s6 + $0x80] sm:$0xf]
    %v167 = vld [vmem:[%s6 + $0x84] sm:$0xf]
    %v168 = vld [vmem:[%s6 + $0x88] sm:$0xf]
    %v169 = vld [vmem:[%s6 + $0x8c] sm:$0xf]
    %v170 = vld [vmem:[%s6 + $0x90] sm:$0xf]
    %v171 = vld [vmem:[%s6 + $0x94] sm:$0xf]
    %v172 = vld [vmem:[%s6 + $0x98] sm:$0xf]
    %v173 = vld [vmem:[%s6 + $0x9c] sm:$0xf]
    %v174 = vld [vmem:[%s6 + $0xa0] sm:$0xf]
    %v175 = vld [vmem:[%s6 + $0xa4] sm:$0xf]
    %v176 = vld [vmem:[%s6 + $0xa8] sm:$0xf]
    %v177 = vld [vmem:[%s6 + $0xac] sm:$0xf]
    %v178 = vld [vmem:[%s6 + $0xb0] sm:$0xf]
    %v179 = vld [vmem:[%s6 + $0xb4] sm:$0xf]
    %v180 = vld [vmem:[%s6 + $0xb8] sm:$0xf]
    %v181 = vld [vmem:[%s6 + $0xbc] sm:$0xf]
    %v182 = vld [vmem:[%s6 + $0xc0] sm:$0xf]
    %v183 = vld [vmem:[%s6 + $0xc4] sm:$0xf]
    %v184 = vld [vmem:[%s6 + $0xc8] sm:$0xf]
    %v185 = vld [vmem:[%s6 + $0xcc] sm:$0xf]
    %v186 = vld [vmem:[%s6 + $0xd0] sm:$0xf]
    %v187 = vld [vmem:[%s6 + $0xd4] sm:$0xf]
    %v188 = vld [vmem:[%s6 + $0xd8] sm:$0xf]
    %v189 = vld [vmem:[%s6 + $0xdc] sm:$0xf]
    %v190 = vld [vmem:[%s6 + $0xe0] sm:$0xf]
    %v191 = vld [vmem:[%s6 + $0xe4] sm:$0xf]
    %v192 = vld [vmem:[%s6 + $0xe8] sm:$0xf]
    %v193 = vld [vmem:[%s6 + $0xec] sm:$0xf]
    %v194 = vld [vmem:[%s6 + $0xf0] sm:$0xf]
    %v195 = vld [vmem:[%s6 + $0xf4] sm:$0xf]
    %v196 = vld [vmem:[%s6 + $0xf8] sm:$0xf]
    %v197 = vld [vmem:[%s6 + $0xfc] sm:$0xf]
    %v198 = vld [vmem:[%s6 + $0x100] sm:$0xf]
    %v199 = vld [vmem:[%s6 + $0x104] sm:$0xf]
    %v200 = vld [vmem:[%s6 + $0x108] sm:$0xf]
    %v201 = vld [vmem:[%s6 + $0x10c] sm:$0xf]
    %v202 = vld [vmem:[%s6 + $0x110] sm:$0xf]
    %v203 = vld [vmem:[%s6 + $0x114] sm:$0xf]
    %v204 = vld [vmem:[%s6 + $0x118] sm:$0xf]
    %v205 = vld [vmem:[%s6 + $0x11c] sm:$0xf]
    %v206 = vld [vmem:[%s7] sm:$0x1]
    %207 = vmatprep.subr.mxu0 0.0
    %208 = vmatpush1.msra.mxu0 %v91
    %209 = vmatprep.subr.mxu0 0.0
    %210 = vmatpush1.msra.mxu0 %v90
    %211 = vmatprep.subr.mxu0 0.0
    %212 = vmatpush1.msra.mxu0 %v89
    %213 = vmatprep.subr.mxu0 0.0
    %214 = vmatpush1.msra.mxu0 %v88
    %215 = vmatprep.subr.mxu0 0.0
    %216 = vmatpush1.msra.mxu0 %v87
    %217 = vmatprep.subr.mxu0 0.0
    %218 = vmatpush1.msra.mxu0 %v86
    %219 = vmatprep.subr.mxu0 0.0
    %220 = vmatpush1.msra.mxu0 %v85
    %221 = vmatprep.subr.mxu0 0.0
    %222 = vmatpush1.msra.mxu0 %v84
    %223 = vmatprep.subr.mxu0 0.0
    %224 = vmatpush1.msra.mxu0 %v83
    %225 = vmatprep.subr.mxu0 0.0
    %226 = vmatpush1.msra.mxu0 %v82
    %227 = vmatprep.subr.mxu0 0.0
    %228 = vmatpush1.msra.mxu0 %v81
    %229 = vmatprep.subr.mxu0 0.0
    %230 = vmatpush1.msra.mxu0 %v80
    %231 = vmatprep.subr.mxu0 0.0
    %232 = vmatpush1.msra.mxu0 %v79
    %233 = vmatprep.subr.mxu0 0.0
    %234 = vmatpush1.msra.mxu0 %v78
    %235 = vmatprep.subr.mxu0 0.0
    %236 = vmatpush1.msra.mxu0 %v77
    %237 = vmatprep.subr.mxu0 0.0
    %238 = vmatpush1.msra.mxu0 %v76
    %239 = vmatprep.subr.mxu0 0.0
    %240 = vmatpush2.msra.mxu0 0.0
    %241 = vmatprep.subr.mxu0 0.0
    %242 = vmatpush2.msra.mxu0 0.0
    %243 = vmatprep.subr.mxu0 0.0
    %244 = vmatpush2.msra.mxu0 0.0
    %245 = vmatprep.subr.mxu0 0.0
    %246 = vmatpush2.msra.mxu0 0.0
    %247 = vmatprep.subr.mxu0 0.0
    %248 = vmatpush2.msra.mxu0 0.0
    %249 = vmatprep.subr.mxu0 0.0
    %250 = vmatpush2.msra.mxu0 0.0
    %251 = vmatprep.subr.mxu0 0.0
    %252 = vmatpush2.msra.mxu0 0.0
    %253 = vmatprep.subr.mxu0 0.0
    %254 = vmatpush2.msra.mxu0 0.0
    %255 = vmatprep.subr.mxu0 0.0
    %256 = vmatpush2.msra.mxu0 0.0
    %257 = vmatprep.subr.mxu0 0.0
    %258 = vmatpush2.msra.mxu0 0.0
    %259 = vmatprep.subr.mxu0 0.0
    %260 = vmatpush2.msra.mxu0 0.0
    %261 = vmatprep.subr.mxu0 0.0
    %262 = vmatpush2.msra.mxu0 0.0
    %263 = vmatprep.subr.mxu0 0.0
    %264 = vmatpush2.msra.mxu0 0.0
    %265 = vmatprep.subr.mxu0 0.0
    %266 = vmatpush2.msra.mxu0 0.0
    %267 = vmatprep.subr.mxu0 0.0
    %268 = vmatpush2.msra.mxu0 0.0
    %269 = vmatprep.subr.mxu0 0.0
    %270 = vmatpush2.msra.mxu0 0.0
    %271 = vmatprep.mubr.f32.mxu0 0.0
    %272 = vmatmul.mubr.f32.gmra.mxu0 %v100
    %v273 = vpop.f32.mrf.mxu0
    %v274 = vadd.f32 0.0, %v273
    %v275 = vpop.f32.mrf.mxu0
    %276 = vmatprep.mubr.f32.mxu0 0.0
    %277 = vmatmul.mubr.f32.gmra.mxu0 %v101
    %v278 = vpop.f32.mrf.mxu0
    %v279 = vadd.f32 0.0, %v278
    %v280 = vpop.f32.mrf.mxu0
    %281 = vmatprep.mubr.f32.mxu0 0.0
    %282 = vmatmul.mubr.f32.gmra.mxu0 %v102
    %v283 = vpop.f32.mrf.mxu0
    %v284 = vadd.f32 0.0, %v283
    %v285 = vpop.f32.mrf.mxu0
    %286 = vmatprep.mubr.f32.mxu0 0.0
    %287 = vmatmul.mubr.f32.gmra.mxu0 %v103
    %v288 = vpop.f32.mrf.mxu0
    %v289 = vadd.f32 0.0, %v288
    %v290 = vpop.f32.mrf.mxu0
    %291 = vmatprep.mubr.f32.mxu0 0.0
    %292 = vmatmul.mubr.f32.gmra.mxu0 %v104
    %v293 = vpop.f32.mrf.mxu0
    %v294 = vadd.f32 0.0, %v293
    %v295 = vpop.f32.mrf.mxu0
    %296 = vmatprep.mubr.f32.mxu0 0.0
    %297 = vmatmul.mubr.f32.gmra.mxu0 %v105
    %v298 = vpop.f32.mrf.mxu0
    %v299 = vadd.f32 0.0, %v298
    %v300 = vpop.f32.mrf.mxu0
    %301 = vmatprep.mubr.f32.mxu0 0.0
    %302 = vmatmul.mubr.f32.gmra.mxu0 %v106
    %v303 = vpop.f32.mrf.mxu0
    %v304 = vadd.f32 0.0, %v303
    %v305 = vpop.f32.mrf.mxu0
    %306 = vmatprep.mubr.f32.mxu0 0.0
    %307 = vmatmul.mubr.f32.gmra.mxu0 %v107
    %v308 = vpop.f32.mrf.mxu0
    %v309 = vadd.f32 0.0, %v308
    %v310 = vpop.f32.mrf.mxu0
    %311 = vmatprep.mubr.f32.mxu0 0.0
    %312 = vmatmul.mubr.f32.gmra.mxu0 %v108
    %v313 = vpop.f32.mrf.mxu0
    %v314 = vadd.f32 0.0, %v313
    %v315 = vpop.f32.mrf.mxu0
    %316 = vmatprep.mubr.f32.mxu0 0.0
    %317 = vmatmul.mubr.f32.gmra.mxu0 %v109
    %v318 = vpop.f32.mrf.mxu0
    %v319 = vadd.f32 0.0, %v318
    %v320 = vpop.f32.mrf.mxu0
    %321 = vmatprep.mubr.f32.mxu0 0.0
    %322 = vmatmul.mubr.f32.gmra.mxu0 %v110
    %v323 = vpop.f32.mrf.mxu0
    %v324 = vadd.f32 0.0, %v323
    %v325 = vpop.f32.mrf.mxu0
    %326 = vmatprep.mubr.f32.mxu0 0.0
    %327 = vmatmul.mubr.f32.gmra.mxu0 %v111
    %v328 = vpop.f32.mrf.mxu0
    %v329 = vadd.f32 0.0, %v328
    %v330 = vpop.f32.mrf.mxu0
    %331 = vmatprep.mubr.f32.mxu0 0.0
    %332 = vmatmul.mubr.f32.gmra.mxu0 %v112
    %v333 = vpop.f32.mrf.mxu0
    %v334 = vadd.f32 0.0, %v333
    %v335 = vpop.f32.mrf.mxu0
    %336 = vmatprep.mubr.f32.mxu0 0.0
    %337 = vmatmul.mubr.f32.gmra.mxu0 %v113
    %v338 = vpop.f32.mrf.mxu0
    %v339 = vadd.f32 0.0, %v338
    %v340 = vpop.f32.mrf.mxu0
    %341 = vmatprep.mubr.f32.mxu0 0.0
    %342 = vmatmul.mubr.f32.gmra.mxu0 %v114
    %v343 = vpop.f32.mrf.mxu0
    %v344 = vadd.f32 0.0, %v343
    %v345 = vpop.f32.mrf.mxu0
    %346 = vmatprep.mubr.f32.mxu0 0.0
    %347 = vmatmul.mubr.f32.gmra.mxu0 %v115
    %v348 = vpop.f32.mrf.mxu0
    %v349 = vadd.f32 0.0, %v348
    %v350 = vpop.f32.mrf.mxu0
    %351 = vdwg.mxu0
    %vm352 = vcmask 523264
    %v354 = vsel %vm352, %v274, 0
    %v357 = vsel %vm352, %v279, 0
    %v360 = vsel %vm352, %v284, 0
    %v363 = vsel %vm352, %v289, 0
    %v366 = vsel %vm352, %v294, 0
    %v369 = vsel %vm352, %v299, 0
    %v372 = vsel %vm352, %v304, 0
    %v375 = vsel %vm352, %v309, 0
    %v378 = vsel %vm352, %v314, 0
    %v381 = vsel %vm352, %v319, 0
    %v384 = vsel %vm352, %v324, 0
    %v387 = vsel %vm352, %v329, 0
    %v390 = vsel %vm352, %v334, 0
    %v393 = vsel %vm352, %v339, 0
    %v396 = vsel %vm352, %v344, 0
    %v399 = vsel %vm352, %v349, 0
    %401 = vmatprep.subr.mxu0 0.0
    %402 = vmatpush1.msra.mxu0 0.0
    %403 = vmatprep.subr.mxu0 0.0
    %404 = vmatpush1.msra.mxu0 0.0
    %405 = vmatprep.subr.mxu0 0.0
    %406 = vmatpush1.msra.mxu0 0.0
    %407 = vmatprep.subr.mxu0 0.0
    %408 = vmatpush1.msra.mxu0 0.0
    %409 = vmatprep.subr.mxu0 0.0
    %410 = vmatpush1.msra.mxu0 0.0
    %411 = vmatprep.subr.mxu0 0.0
    %412 = vmatpush1.msra.mxu0 0.0
    %413 = vmatprep.subr.mxu0 0.0
    %414 = vmatpush1.msra.mxu0 0.0
    %415 = vmatprep.subr.mxu0 0.0
    %416 = vmatpush1.msra.mxu0 0.0
    %417 = vmatprep.subr.mxu0 0.0
    %418 = vmatpush1.msra.mxu0 %v99
    %419 = vmatprep.subr.mxu0 0.0
    %420 = vmatpush1.msra.mxu0 %v98
    %421 = vmatprep.subr.mxu0 0.0
    %422 = vmatpush1.msra.mxu0 %v97
    %423 = vmatprep.subr.mxu0 0.0
    %424 = vmatpush1.msra.mxu0 %v96
    %425 = vmatprep.subr.mxu0 0.0
    %426 = vmatpush1.msra.mxu0 %v95
    %427 = vmatprep.subr.mxu0 0.0
    %428 = vmatpush1.msra.mxu0 %v94
    %429 = vmatprep.subr.mxu0 0.0
    %430 = vmatpush1.msra.mxu0 %v93
    %431 = vmatprep.subr.mxu0 0.0
    %432 = vmatpush1.msra.mxu0 %v92
    %433 = vmatprep.subr.mxu0 0.0
    %434 = vmatpush2.msra.mxu0 0.0
    %435 = vmatprep.subr.mxu0 0.0
    %436 = vmatpush2.msra.mxu0 0.0
    %437 = vmatprep.subr.mxu0 0.0
    %438 = vmatpush2.msra.mxu0 0.0
    %439 = vmatprep.subr.mxu0 0.0
    %440 = vmatpush2.msra.mxu0 0.0
    %441 = vmatprep.subr.mxu0 0.0
    %442 = vmatpush2.msra.mxu0 0.0
    %443 = vmatprep.subr.mxu0 0.0
    %444 = vmatpush2.msra.mxu0 0.0
    %445 = vmatprep.subr.mxu0 0.0
    %446 = vmatpush2.msra.mxu0 0.0
    %447 = vmatprep.subr.mxu0 0.0
    %448 = vmatpush2.msra.mxu0 0.0
    %449 = vmatprep.subr.mxu0 0.0
    %450 = vmatpush2.msra.mxu0 0.0
    %451 = vmatprep.subr.mxu0 0.0
    %452 = vmatpush2.msra.mxu0 0.0
    %453 = vmatprep.subr.mxu0 0.0
    %454 = vmatpush2.msra.mxu0 0.0
    %455 = vmatprep.subr.mxu0 0.0
    %456 = vmatpush2.msra.mxu0 0.0
    %457 = vmatprep.subr.mxu0 0.0
    %458 = vmatpush2.msra.mxu0 0.0
    %459 = vmatprep.subr.mxu0 0.0
    %460 = vmatpush2.msra.mxu0 0.0
    %461 = vmatprep.subr.mxu0 0.0
    %462 = vmatpush2.msra.mxu0 0.0
    %463 = vmatprep.subr.mxu0 0.0
    %464 = vmatpush2.msra.mxu0 0.0
    %465 = vmatprep.mubr.f32.mxu0 0.0
    %466 = vmatmul.mubr.f32.gmra.mxu0 %v354
    %v467 = vpop.f32.mrf.mxu0
    %v468 = vadd.f32 0.0, %v467
    %v469 = vpop.f32.mrf.mxu0
    %470 = vmatprep.mubr.f32.mxu0 0.0
    %471 = vmatmul.mubr.f32.gmra.mxu0 %v357
    %v472 = vpop.f32.mrf.mxu0
    %v473 = vadd.f32 0.0, %v472
    %v474 = vpop.f32.mrf.mxu0
    %475 = vmatprep.mubr.f32.mxu0 0.0
    %476 = vmatmul.mubr.f32.gmra.mxu0 %v360
    %v477 = vpop.f32.mrf.mxu0
    %v478 = vadd.f32 0.0, %v477
    %v479 = vpop.f32.mrf.mxu0
    %480 = vmatprep.mubr.f32.mxu0 0.0
    %481 = vmatmul.mubr.f32.gmra.mxu0 %v363
    %v482 = vpop.f32.mrf.mxu0
    %v483 = vadd.f32 0.0, %v482
    %v484 = vpop.f32.mrf.mxu0
    %485 = vmatprep.mubr.f32.mxu0 0.0
    %486 = vmatmul.mubr.f32.gmra.mxu0 %v366
    %v487 = vpop.f32.mrf.mxu0
    %v488 = vadd.f32 0.0, %v487
    %v489 = vpop.f32.mrf.mxu0
    %490 = vmatprep.mubr.f32.mxu0 0.0
    %491 = vmatmul.mubr.f32.gmra.mxu0 %v369
    %v492 = vpop.f32.mrf.mxu0
    %v493 = vadd.f32 0.0, %v492
    %v494 = vpop.f32.mrf.mxu0
    %495 = vmatprep.mubr.f32.mxu0 0.0
    %496 = vmatmul.mubr.f32.gmra.mxu0 %v372
    %v497 = vpop.f32.mrf.mxu0
    %v498 = vadd.f32 0.0, %v497
    %v499 = vpop.f32.mrf.mxu0
    %500 = vmatprep.mubr.f32.mxu0 0.0
    %501 = vmatmul.mubr.f32.gmra.mxu0 %v375
    %v502 = vpop.f32.mrf.mxu0
    %v503 = vadd.f32 0.0, %v502
    %v504 = vpop.f32.mrf.mxu0
    %505 = vmatprep.mubr.f32.mxu0 0.0
    %506 = vmatmul.mubr.f32.gmra.mxu0 %v378
    %v507 = vpop.f32.mrf.mxu0
    %v508 = vadd.f32 0.0, %v507
    %v509 = vpop.f32.mrf.mxu0
    %510 = vmatprep.mubr.f32.mxu0 0.0
    %511 = vmatmul.mubr.f32.gmra.mxu0 %v381
    %v512 = vpop.f32.mrf.mxu0
    %v513 = vadd.f32 0.0, %v512
    %v514 = vpop.f32.mrf.mxu0
    %515 = vmatprep.mubr.f32.mxu0 0.0
    %516 = vmatmul.mubr.f32.gmra.mxu0 %v384
    %v517 = vpop.f32.mrf.mxu0
    %v518 = vadd.f32 0.0, %v517
    %v519 = vpop.f32.mrf.mxu0
    %520 = vmatprep.mubr.f32.mxu0 0.0
    %521 = vmatmul.mubr.f32.gmra.mxu0 %v387
    %v522 = vpop.f32.mrf.mxu0
    %v523 = vadd.f32 0.0, %v522
    %v524 = vpop.f32.mrf.mxu0
    %525 = vmatprep.mubr.f32.mxu0 0.0
    %526 = vmatmul.mubr.f32.gmra.mxu0 %v390
    %v527 = vpop.f32.mrf.mxu0
    %v528 = vadd.f32 0.0, %v527
    %v529 = vpop.f32.mrf.mxu0
    %530 = vmatprep.mubr.f32.mxu0 0.0
    %531 = vmatmul.mubr.f32.gmra.mxu0 %v393
    %v532 = vpop.f32.mrf.mxu0
    %v533 = vadd.f32 0.0, %v532
    %v534 = vpop.f32.mrf.mxu0
    %535 = vmatprep.mubr.f32.mxu0 0.0
    %536 = vmatmul.mubr.f32.gmra.mxu0 %v396
    %v537 = vpop.f32.mrf.mxu0
    %v538 = vadd.f32 0.0, %v537
    %v539 = vpop.f32.mrf.mxu0
    %540 = vmatprep.mubr.f32.mxu0 0.0
    %541 = vmatmul.mubr.f32.gmra.mxu0 %v399
    %v542 = vpop.f32.mrf.mxu0
    %v543 = vadd.f32 0.0, %v542
    %v544 = vpop.f32.mrf.mxu0
    %545 = vdwg.mxu0
    %v546 = vsub.f32 %v76, %v468
    %v547 = vsub.f32 %v77, %v473
    %v548 = vsub.f32 %v78, %v478
    %v549 = vsub.f32 %v79, %v483
    %v550 = vsub.f32 %v80, %v488
    %v551 = vsub.f32 %v81, %v493
    %v552 = vsub.f32 %v82, %v498
    %v553 = vsub.f32 %v83, %v503
    %v554 = vsub.f32 %v84, %v508
    %v555 = vsub.f32 %v85, %v513
    %v556 = vsub.f32 %v86, %v518
    %v557 = vsub.f32 %v87, %v523
    %v558 = vsub.f32 %v88, %v528
    %v559 = vsub.f32 %v89, %v533
    %v560 = vsub.f32 %v90, %v538
    %v561 = vsub.f32 %v91, %v543
    %v562 = vmul.f32 %v546, %v546
    %v563 = vmul.f32 %v547, %v547
    %v564 = vmul.f32 %v548, %v548
    %v565 = vmul.f32 %v549, %v549
    %v566 = vmul.f32 %v550, %v550
    %v567 = vmul.f32 %v551, %v551
    %v568 = vmul.f32 %v552, %v552
    %v569 = vmul.f32 %v553, %v553
    %v570 = vmul.f32 %v554, %v554
    %v571 = vmul.f32 %v555, %v555
    %v572 = vmul.f32 %v556, %v556
    %v573 = vmul.f32 %v557, %v557
    %v574 = vmul.f32 %v558, %v558
    %v575 = vmul.f32 %v559, %v559
    %v576 = vmul.f32 %v560, %v560
    %v577 = vmul.f32 %v561, %v561
    %578 = vmatprep.subr.mxu0 0.0
    %579 = vmatpush1.msra.mxu0 %v577
    %580 = vmatprep.subr.mxu0 0.0
    %581 = vmatpush1.msra.mxu0 %v576
    %582 = vmatprep.subr.mxu0 0.0
    %583 = vmatpush1.msra.mxu0 %v575
    %584 = vmatprep.subr.mxu0 0.0
    %585 = vmatpush1.msra.mxu0 %v574
    %586 = vmatprep.subr.mxu0 0.0
    %587 = vmatpush1.msra.mxu0 %v573
    %588 = vmatprep.subr.mxu0 0.0
    %589 = vmatpush1.msra.mxu0 %v572
    %590 = vmatprep.subr.mxu0 0.0
    %591 = vmatpush1.msra.mxu0 %v571
    %592 = vmatprep.subr.mxu0 0.0
    %593 = vmatpush1.msra.mxu0 %v570
    %594 = vmatprep.subr.mxu0 0.0
    %595 = vmatpush1.msra.mxu0 %v569
    %596 = vmatprep.subr.mxu0 0.0
    %597 = vmatpush1.msra.mxu0 %v568
    %598 = vmatprep.subr.mxu0 0.0
    %599 = vmatpush1.msra.mxu0 %v567
    %600 = vmatprep.subr.mxu0 0.0
    %601 = vmatpush1.msra.mxu0 %v566
    %602 = vmatprep.subr.mxu0 0.0
    %603 = vmatpush1.msra.mxu0 %v565
    %604 = vmatprep.subr.mxu0 0.0
    %605 = vmatpush1.msra.mxu0 %v564
    %606 = vmatprep.subr.mxu0 0.0
    %607 = vmatpush1.msra.mxu0 %v563
    %608 = vmatprep.subr.mxu0 0.0
    %609 = vmatpush1.msra.mxu0 %v562
    %610 = vmatprep.subr.mxu0 0.0
    %611 = vmatpush2.msra.mxu0 0.0
    %612 = vmatprep.subr.mxu0 0.0
    %613 = vmatpush2.msra.mxu0 0.0
    %614 = vmatprep.subr.mxu0 0.0
    %615 = vmatpush2.msra.mxu0 0.0
    %616 = vmatprep.subr.mxu0 0.0
    %617 = vmatpush2.msra.mxu0 0.0
    %618 = vmatprep.subr.mxu0 0.0
    %619 = vmatpush2.msra.mxu0 0.0
    %620 = vmatprep.subr.mxu0 0.0
    %621 = vmatpush2.msra.mxu0 0.0
    %622 = vmatprep.subr.mxu0 0.0
    %623 = vmatpush2.msra.mxu0 0.0
    %624 = vmatprep.subr.mxu0 0.0
    %625 = vmatpush2.msra.mxu0 0.0
    %626 = vmatprep.subr.mxu0 0.0
    %627 = vmatpush2.msra.mxu0 0.0
    %628 = vmatprep.subr.mxu0 0.0
    %629 = vmatpush2.msra.mxu0 0.0
    %630 = vmatprep.subr.mxu0 0.0
    %631 = vmatpush2.msra.mxu0 0.0
    %632 = vmatprep.subr.mxu0 0.0
    %633 = vmatpush2.msra.mxu0 0.0
    %634 = vmatprep.subr.mxu0 0.0
    %635 = vmatpush2.msra.mxu0 0.0
    %636 = vmatprep.subr.mxu0 0.0
    %637 = vmatpush2.msra.mxu0 0.0
    %638 = vmatprep.subr.mxu0 0.0
    %639 = vmatpush2.msra.mxu0 0.0
    %640 = vmatprep.subr.mxu0 0.0
    %641 = vmatpush2.msra.mxu0 0.0
    %642 = vmatprep.mubr.f32.mxu0 0.0
    %643 = vmatmul.mubr.f32.gmra.mxu0 %v100
    %v644 = vpop.f32.mrf.mxu0
    %v645 = vadd.f32 0.0, %v644
    %v646 = vpop.f32.mrf.mxu0
    %647 = vmatprep.mubr.f32.mxu0 0.0
    %648 = vmatmul.mubr.f32.gmra.mxu0 %v101
    %v649 = vpop.f32.mrf.mxu0
    %v650 = vadd.f32 0.0, %v649
    %v651 = vpop.f32.mrf.mxu0
    %652 = vmatprep.mubr.f32.mxu0 0.0
    %653 = vmatmul.mubr.f32.gmra.mxu0 %v102
    %v654 = vpop.f32.mrf.mxu0
    %v655 = vadd.f32 0.0, %v654
    %v656 = vpop.f32.mrf.mxu0
    %657 = vmatprep.mubr.f32.mxu0 0.0
    %658 = vmatmul.mubr.f32.gmra.mxu0 %v103
    %v659 = vpop.f32.mrf.mxu0
    %v660 = vadd.f32 0.0, %v659
    %v661 = vpop.f32.mrf.mxu0
    %662 = vmatprep.mubr.f32.mxu0 0.0
    %663 = vmatmul.mubr.f32.gmra.mxu0 %v104
    %v664 = vpop.f32.mrf.mxu0
    %v665 = vadd.f32 0.0, %v664
    %v666 = vpop.f32.mrf.mxu0
    %667 = vmatprep.mubr.f32.mxu0 0.0
    %668 = vmatmul.mubr.f32.gmra.mxu0 %v105
    %v669 = vpop.f32.mrf.mxu0
    %v670 = vadd.f32 0.0, %v669
    %v671 = vpop.f32.mrf.mxu0
    %672 = vmatprep.mubr.f32.mxu0 0.0
    %673 = vmatmul.mubr.f32.gmra.mxu0 %v106
    %v674 = vpop.f32.mrf.mxu0
    %v675 = vadd.f32 0.0, %v674
    %v676 = vpop.f32.mrf.mxu0
    %677 = vmatprep.mubr.f32.mxu0 0.0
    %678 = vmatmul.mubr.f32.gmra.mxu0 %v107
    %v679 = vpop.f32.mrf.mxu0
    %v680 = vadd.f32 0.0, %v679
    %v681 = vpop.f32.mrf.mxu0
    %682 = vmatprep.mubr.f32.mxu0 0.0
    %683 = vmatmul.mubr.f32.gmra.mxu0 %v108
    %v684 = vpop.f32.mrf.mxu0
    %v685 = vadd.f32 0.0, %v684
    %v686 = vpop.f32.mrf.mxu0
    %687 = vmatprep.mubr.f32.mxu0 0.0
    %688 = vmatmul.mubr.f32.gmra.mxu0 %v109
    %v689 = vpop.f32.mrf.mxu0
    %v690 = vadd.f32 0.0, %v689
    %v691 = vpop.f32.mrf.mxu0
    %692 = vmatprep.mubr.f32.mxu0 0.0
    %693 = vmatmul.mubr.f32.gmra.mxu0 %v110
    %v694 = vpop.f32.mrf.mxu0
    %v695 = vadd.f32 0.0, %v694
    %v696 = vpop.f32.mrf.mxu0
    %697 = vmatprep.mubr.f32.mxu0 0.0
    %698 = vmatmul.mubr.f32.gmra.mxu0 %v111
    %v699 = vpop.f32.mrf.mxu0
    %v700 = vadd.f32 0.0, %v699
    %v701 = vpop.f32.mrf.mxu0
    %702 = vmatprep.mubr.f32.mxu0 0.0
    %703 = vmatmul.mubr.f32.gmra.mxu0 %v112
    %v704 = vpop.f32.mrf.mxu0
    %v705 = vadd.f32 0.0, %v704
    %v706 = vpop.f32.mrf.mxu0
    %707 = vmatprep.mubr.f32.mxu0 0.0
    %708 = vmatmul.mubr.f32.gmra.mxu0 %v113
    %v709 = vpop.f32.mrf.mxu0
    %v710 = vadd.f32 0.0, %v709
    %v711 = vpop.f32.mrf.mxu0
    %712 = vmatprep.mubr.f32.mxu0 0.0
    %713 = vmatmul.mubr.f32.gmra.mxu0 %v114
    %v714 = vpop.f32.mrf.mxu0
    %v715 = vadd.f32 0.0, %v714
    %v716 = vpop.f32.mrf.mxu0
    %717 = vmatprep.mubr.f32.mxu0 0.0
    %718 = vmatmul.mubr.f32.gmra.mxu0 %v115
    %v719 = vpop.f32.mrf.mxu0
    %v720 = vadd.f32 0.0, %v719
    %v721 = vpop.f32.mrf.mxu0
    %722 = vdwg.mxu0
    %v724 = vsel %vm352, %v645, 0
    %v727 = vsel %vm352, %v650, 0
    %v730 = vsel %vm352, %v655, 0
    %v733 = vsel %vm352, %v660, 0
    %v736 = vsel %vm352, %v665, 0
    %v739 = vsel %vm352, %v670, 0
    %v742 = vsel %vm352, %v675, 0
    %v745 = vsel %vm352, %v680, 0
    %v748 = vsel %vm352, %v685, 0
    %v751 = vsel %vm352, %v690, 0
    %v754 = vsel %vm352, %v695, 0
    %v757 = vsel %vm352, %v700, 0
    %v760 = vsel %vm352, %v705, 0
    %v763 = vsel %vm352, %v710, 0
    %v766 = vsel %vm352, %v715, 0
    %v769 = vsel %vm352, %v720, 0
    %771 = vmatprep.subr.mxu0 0.0
    %772 = vmatpush1.msra.mxu0 0.0
    %773 = vmatprep.subr.mxu0 0.0
    %774 = vmatpush1.msra.mxu0 0.0
    %775 = vmatprep.subr.mxu0 0.0
    %776 = vmatpush1.msra.mxu0 0.0
    %777 = vmatprep.subr.mxu0 0.0
    %778 = vmatpush1.msra.mxu0 0.0
    %779 = vmatprep.subr.mxu0 0.0
    %780 = vmatpush1.msra.mxu0 0.0
    %781 = vmatprep.subr.mxu0 0.0
    %782 = vmatpush1.msra.mxu0 0.0
    %783 = vmatprep.subr.mxu0 0.0
    %784 = vmatpush1.msra.mxu0 0.0
    %785 = vmatprep.subr.mxu0 0.0
    %786 = vmatpush1.msra.mxu0 0.0
    %787 = vmatprep.subr.mxu0 0.0
    %788 = vmatpush1.msra.mxu0 %v99
    %789 = vmatprep.subr.mxu0 0.0
    %790 = vmatpush1.msra.mxu0 %v98
    %791 = vmatprep.subr.mxu0 0.0
    %792 = vmatpush1.msra.mxu0 %v97
    %793 = vmatprep.subr.mxu0 0.0
    %794 = vmatpush1.msra.mxu0 %v96
    %795 = vmatprep.subr.mxu0 0.0
    %796 = vmatpush1.msra.mxu0 %v95
    %797 = vmatprep.subr.mxu0 0.0
    %798 = vmatpush1.msra.mxu0 %v94
    %799 = vmatprep.subr.mxu0 0.0
    %800 = vmatpush1.msra.mxu0 %v93
    %801 = vmatprep.subr.mxu0 0.0
    %802 = vmatpush1.msra.mxu0 %v92
    %803 = vmatprep.subr.mxu0 0.0
    %804 = vmatpush2.msra.mxu0 0.0
    %805 = vmatprep.subr.mxu0 0.0
    %806 = vmatpush2.msra.mxu0 0.0
    %807 = vmatprep.subr.mxu0 0.0
    %808 = vmatpush2.msra.mxu0 0.0
    %809 = vmatprep.subr.mxu0 0.0
    %810 = vmatpush2.msra.mxu0 0.0
    %811 = vmatprep.subr.mxu0 0.0
    %812 = vmatpush2.msra.mxu0 0.0
    %813 = vmatprep.subr.mxu0 0.0
    %814 = vmatpush2.msra.mxu0 0.0
    %815 = vmatprep.subr.mxu0 0.0
    %816 = vmatpush2.msra.mxu0 0.0
    %817 = vmatprep.subr.mxu0 0.0
    %818 = vmatpush2.msra.mxu0 0.0
    %819 = vmatprep.subr.mxu0 0.0
    %820 = vmatpush2.msra.mxu0 0.0
    %821 = vmatprep.subr.mxu0 0.0
    %822 = vmatpush2.msra.mxu0 0.0
    %823 = vmatprep.subr.mxu0 0.0
    %824 = vmatpush2.msra.mxu0 0.0
    %825 = vmatprep.subr.mxu0 0.0
    %826 = vmatpush2.msra.mxu0 0.0
    %827 = vmatprep.subr.mxu0 0.0
    %828 = vmatpush2.msra.mxu0 0.0
    %829 = vmatprep.subr.mxu0 0.0
    %830 = vmatpush2.msra.mxu0 0.0
    %831 = vmatprep.subr.mxu0 0.0
    %832 = vmatpush2.msra.mxu0 0.0
    %833 = vmatprep.subr.mxu0 0.0
    %834 = vmatpush2.msra.mxu0 0.0
    %835 = vmatprep.mubr.f32.mxu0 0.0
    %836 = vmatmul.mubr.f32.gmra.mxu0 %v724
    %v837 = vpop.f32.mrf.mxu0
    %v838 = vadd.f32 1e-05, %v837
    %v839 = vpop.f32.mrf.mxu0
    %840 = vmatprep.mubr.f32.mxu0 0.0
    %841 = vmatmul.mubr.f32.gmra.mxu0 %v727
    %v842 = vpop.f32.mrf.mxu0
    %v843 = vadd.f32 1e-05, %v842
    %v844 = vpop.f32.mrf.mxu0
    %845 = vmatprep.mubr.f32.mxu0 0.0
    %846 = vmatmul.mubr.f32.gmra.mxu0 %v730
    %v847 = vpop.f32.mrf.mxu0
    %v848 = vadd.f32 1e-05, %v847
    %v849 = vpop.f32.mrf.mxu0
    %850 = vmatprep.mubr.f32.mxu0 0.0
    %851 = vmatmul.mubr.f32.gmra.mxu0 %v733
    %v852 = vpop.f32.mrf.mxu0
    %v853 = vadd.f32 1e-05, %v852
    %v854 = vpop.f32.mrf.mxu0
    %855 = vmatprep.mubr.f32.mxu0 0.0
    %856 = vmatmul.mubr.f32.gmra.mxu0 %v736
    %v857 = vpop.f32.mrf.mxu0
    %v858 = vadd.f32 1e-05, %v857
    %v859 = vpop.f32.mrf.mxu0
    %860 = vmatprep.mubr.f32.mxu0 0.0
    %861 = vmatmul.mubr.f32.gmra.mxu0 %v739
    %v862 = vpop.f32.mrf.mxu0
    %v863 = vadd.f32 1e-05, %v862
    %v864 = vpop.f32.mrf.mxu0
    %865 = vmatprep.mubr.f32.mxu0 0.0
    %866 = vmatmul.mubr.f32.gmra.mxu0 %v742
    %v867 = vpop.f32.mrf.mxu0
    %v868 = vadd.f32 1e-05, %v867
    %v869 = vpop.f32.mrf.mxu0
    %870 = vmatprep.mubr.f32.mxu0 0.0
    %871 = vmatmul.mubr.f32.gmra.mxu0 %v745
    %v872 = vpop.f32.mrf.mxu0
    %v873 = vadd.f32 1e-05, %v872
    %v874 = vpop.f32.mrf.mxu0
    %875 = vmatprep.mubr.f32.mxu0 0.0
    %876 = vmatmul.mubr.f32.gmra.mxu0 %v748
    %v877 = vpop.f32.mrf.mxu0
    %v878 = vadd.f32 1e-05, %v877
    %v879 = vpop.f32.mrf.mxu0
    %880 = vmatprep.mubr.f32.mxu0 0.0
    %881 = vmatmul.mubr.f32.gmra.mxu0 %v751
    %v882 = vpop.f32.mrf.mxu0
    %v883 = vadd.f32 1e-05, %v882
    %v884 = vpop.f32.mrf.mxu0
    %885 = vmatprep.mubr.f32.mxu0 0.0
    %886 = vmatmul.mubr.f32.gmra.mxu0 %v754
    %v887 = vpop.f32.mrf.mxu0
    %v888 = vadd.f32 1e-05, %v887
    %v889 = vpop.f32.mrf.mxu0
    %890 = vmatprep.mubr.f32.mxu0 0.0
    %891 = vmatmul.mubr.f32.gmra.mxu0 %v757
    %v892 = vpop.f32.mrf.mxu0
    %v893 = vadd.f32 1e-05, %v892
    %v894 = vpop.f32.mrf.mxu0
    %895 = vmatprep.mubr.f32.mxu0 0.0
    %896 = vmatmul.mubr.f32.gmra.mxu0 %v760
    %v897 = vpop.f32.mrf.mxu0
    %v898 = vadd.f32 1e-05, %v897
    %v899 = vpop.f32.mrf.mxu0
    %900 = vmatprep.mubr.f32.mxu0 0.0
    %901 = vmatmul.mubr.f32.gmra.mxu0 %v763
    %v902 = vpop.f32.mrf.mxu0
    %v903 = vadd.f32 1e-05, %v902
    %v904 = vpop.f32.mrf.mxu0
    %905 = vmatprep.mubr.f32.mxu0 0.0
    %906 = vmatmul.mubr.f32.gmra.mxu0 %v766
    %v907 = vpop.f32.mrf.mxu0
    %v908 = vadd.f32 1e-05, %v907
    %v909 = vpop.f32.mrf.mxu0
    %910 = vmatprep.mubr.f32.mxu0 0.0
    %911 = vmatmul.mubr.f32.gmra.mxu0 %v769
    %v912 = vpop.f32.mrf.mxu0
    %v913 = vadd.f32 1e-05, %v912
    %v914 = vpop.f32.mrf.mxu0
    %915 = vdwg.mxu0
    %v916 = vrsqrt.pop %v838
    %v917 = vrsqrt.pop %v843
    %v918 = vrsqrt.pop %v848
    %v919 = vrsqrt.pop %v853
    %v920 = vrsqrt.pop %v858
    %v921 = vrsqrt.pop %v863
    %v922 = vrsqrt.pop %v868
    %v923 = vrsqrt.pop %v873
    %v924 = vrsqrt.pop %v878
    %v925 = vrsqrt.pop %v883
    %v926 = vrsqrt.pop %v888
    %v927 = vrsqrt.pop %v893
    %v928 = vrsqrt.pop %v898
    %v929 = vrsqrt.pop %v903
    %v930 = vrsqrt.pop %v908
    %v931 = vrsqrt.pop %v913
    %v932 = vmul.f32 %v546, %v916
    %v933 = vmul.f32 %v547, %v917
    %v934 = vmul.f32 %v548, %v918
    %v935 = vmul.f32 %v549, %v919
    %v936 = vmul.f32 %v550, %v920
    %v937 = vmul.f32 %v551, %v921
    %v938 = vmul.f32 %v552, %v922
    %v939 = vmul.f32 %v553, %v923
    %v940 = vmul.f32 %v554, %v924
    %v941 = vmul.f32 %v555, %v925
    %v942 = vmul.f32 %v556, %v926
    %v943 = vmul.f32 %v557, %v927
    %v944 = vmul.f32 %v558, %v928
    %v945 = vmul.f32 %v559, %v929
    %v946 = vmul.f32 %v560, %v930
    %v947 = vmul.f32 %v561, %v931
    %v949 = vlaneseq
    %v950 = vshrl.u32 %v949, 7
    %v951 = vsub.s32 0, %v950
    %v952 = vrot.slane %v132, %v951
    %v954 = vmul.f32 %v932, %v952
    %v955 = vmul.f32 %v933, %v952
    %v956 = vmul.f32 %v934, %v952
    %v957 = vmul.f32 %v935, %v952
    %v958 = vmul.f32 %v936, %v952
    %v959 = vmul.f32 %v937, %v952
    %v960 = vmul.f32 %v938, %v952
    %v961 = vmul.f32 %v939, %v952
    %v962 = vmul.f32 %v940, %v952
    %v963 = vmul.f32 %v941, %v952
    %v964 = vmul.f32 %v942, %v952
    %v965 = vmul.f32 %v943, %v952
    %v966 = vmul.f32 %v944, %v952
    %v967 = vmul.f32 %v945, %v952
    %v968 = vmul.f32 %v946, %v952
    %v969 = vmul.f32 %v947, %v952
    %v971 = vlaneseq
    %v972 = vshrl.u32 %v971, 7
    %v973 = vsub.s32 0, %v972
    %v974 = vrot.slane %v133, %v973
    %v976 = vadd.f32 %v954, %v974
    %v977 = vadd.f32 %v955, %v974
    %v978 = vadd.f32 %v956, %v974
    %v979 = vadd.f32 %v957, %v974
    %v980 = vadd.f32 %v958, %v974
    %v981 = vadd.f32 %v959, %v974
    %v982 = vadd.f32 %v960, %v974
    %v983 = vadd.f32 %v961, %v974
    %v984 = vadd.f32 %v962, %v974
    %v985 = vadd.f32 %v963, %v974
    %v986 = vadd.f32 %v964, %v974
    %v987 = vadd.f32 %v965, %v974
    %v988 = vadd.f32 %v966, %v974
    %v989 = vadd.f32 %v967, %v974
    %v990 = vadd.f32 %v968, %v974
    %v991 = vadd.f32 %v969, %v974
    %v992 = vmax.f32 %v976, 0.0
    %v993 = vmax.f32 %v977, 0.0
    %v994 = vmax.f32 %v978, 0.0
    %v995 = vmax.f32 %v979, 0.0
    %v996 = vmax.f32 %v980, 0.0
    %v997 = vmax.f32 %v981, 0.0
    %v998 = vmax.f32 %v982, 0.0
    %v999 = vmax.f32 %v983, 0.0
    %v1000 = vmax.f32 %v984, 0.0
    %v1001 = vmax.f32 %v985, 0.0
    %v1002 = vmax.f32 %v986, 0.0
    %v1003 = vmax.f32 %v987, 0.0
    %v1004 = vmax.f32 %v988, 0.0
    %v1005 = vmax.f32 %v989, 0.0
    %v1006 = vmax.f32 %v990, 0.0
    %v1007 = vmax.f32 %v991, 0.0
    %v1008 = vpack.c.bf16 %v993, %v992
    %v1009 = vpack.c.bf16 %v995, %v994
    %v1010 = vpack.c.bf16 %v997, %v996
    %v1011 = vpack.c.bf16 %v999, %v998
    %v1012 = vpack.c.bf16 %v1001, %v1000
    %v1013 = vpack.c.bf16 %v1003, %v1002
    %v1014 = vpack.c.bf16 %v1005, %v1004
    %v1015 = vpack.c.bf16 %v1007, %v1006
    %vm1016 = vsmask.f32 4352
    %v1018 = vshrl.u32 %v1008, 16
    %v1020 = vrot.slane %v1018, 3
    %v1021 = vshll.u32 %v1008, 16
    %v1023 = vrot.slane %v1021, 4
    %v1024 = vor.u32 %v1020, %v1023
    %v1026 = vshrl.u32 %v1009, 16
    %v1028 = vrot.slane %v1026, 3
    %v1029 = vshll.u32 %v1009, 16
    %v1031 = vrot.slane %v1029, 4
    %v1032 = vor.u32 %v1028, %v1031
    %v1033 = vsel %vm1016, %v1024, %v1032
    %v1035 = vshrl.u32 %v1010, 16
    %v1037 = vrot.slane %v1035, 3
    %v1038 = vshll.u32 %v1010, 16
    %v1040 = vrot.slane %v1038, 4
    %v1041 = vor.u32 %v1037, %v1040
    %v1042 = vsel %vm1016, %v1032, %v1041
    %v1044 = vshrl.u32 %v1011, 16
    %v1046 = vrot.slane %v1044, 3
    %v1047 = vshll.u32 %v1011, 16
    %v1049 = vrot.slane %v1047, 4
    %v1050 = vor.u32 %v1046, %v1049
    %v1051 = vsel %vm1016, %v1041, %v1050
    %v1053 = vshrl.u32 %v1012, 16
    %v1055 = vrot.slane %v1053, 3
    %v1056 = vshll.u32 %v1012, 16
    %v1058 = vrot.slane %v1056, 4
    %v1059 = vor.u32 %v1055, %v1058
    %v1060 = vsel %vm1016, %v1050, %v1059
    %v1062 = vshrl.u32 %v1013, 16
    %v1064 = vrot.slane %v1062, 3
    %v1065 = vshll.u32 %v1013, 16
    %v1067 = vrot.slane %v1065, 4
    %v1068 = vor.u32 %v1064, %v1067
    %v1069 = vsel %vm1016, %v1059, %v1068
    %v1071 = vshrl.u32 %v1014, 16
    %v1073 = vrot.slane %v1071, 3
    %v1074 = vshll.u32 %v1014, 16
    %v1076 = vrot.slane %v1074, 4
    %v1077 = vor.u32 %v1073, %v1076
    %v1078 = vsel %vm1016, %v1068, %v1077
    %v1080 = vshrl.u32 %v1015, 16
    %v1082 = vrot.slane %v1080, 3
    %v1083 = vshll.u32 %v1015, 16
    %v1085 = vrot.slane %v1083, 4
    %v1086 = vor.u32 %v1082, %v1085
    %v1087 = vsel %vm1016, %v1077, %v1086
    %vm1097 = vcmask 1044480
    %vm1098 = vmand %vm1097, %vm1016
    %v1099 = vsel %vm1098, 0, %v1024
    %v1100 = vsel %vm1098, %v1086, 0
    %1102 = vset.pattern.permute.xlu0 0
    %1103 = vperm.xlu0 %1102, %v116
    %v1104 = vpop.permute.xlu0 %1103
    %v1107 = vunpack.c.l.s4 839922192
    %v1108 = vunpack.c.0.s8 %v1107
    %v1109 = vlaneseq
    %v1110 = vshrl.u32 %v1109, 7
    %v1111 = vsub.s32 %v1108, %v1110
    %v1112 = vrot.slane %v1104, %v1111
    %1114 = vset.pattern.permute.xlu0 0
    %1115 = vperm.xlu0 %1114, %v117
    %v1116 = vpop.permute.xlu0 %1115
    %v1119 = vunpack.c.l.s4 839922192
    %v1120 = vunpack.c.0.s8 %v1119
    %v1121 = vlaneseq
    %v1122 = vshrl.u32 %v1121, 7
    %v1123 = vsub.s32 %v1120, %v1122
    %v1124 = vrot.slane %v1116, %v1123
    %1126 = vset.pattern.permute.xlu0 0
    %1127 = vperm.xlu0 %1126, %v118
    %v1128 = vpop.permute.xlu0 %1127
    %v1131 = vunpack.c.l.s4 839922192
    %v1132 = vunpack.c.0.s8 %v1131
    %v1133 = vlaneseq
    %v1134 = vshrl.u32 %v1133, 7
    %v1135 = vsub.s32 %v1132, %v1134
    %v1136 = vrot.slane %v1128, %v1135
    %1138 = vset.pattern.permute.xlu0 0
    %1139 = vperm.xlu0 %1138, %v119
    %v1140 = vpop.permute.xlu0 %1139
    %v1143 = vunpack.c.l.s4 839922192
    %v1144 = vunpack.c.0.s8 %v1143
    %v1145 = vlaneseq
    %v1146 = vshrl.u32 %v1145, 7
    %v1147 = vsub.s32 %v1144, %v1146
    %v1148 = vrot.slane %v1140, %v1147
    %1150 = vset.pattern.permute.xlu0 0
    %1151 = vperm.xlu0 %1150, %v120
    %v1152 = vpop.permute.xlu0 %1151
    %v1155 = vunpack.c.l.s4 839922192
    %v1156 = vunpack.c.0.s8 %v1155
    %v1157 = vlaneseq
    %v1158 = vshrl.u32 %v1157, 7
    %v1159 = vsub.s32 %v1156, %v1158
    %v1160 = vrot.slane %v1152, %v1159
    %1162 = vset.pattern.permute.xlu0 0
    %1163 = vperm.xlu0 %1162, %v121
    %v1164 = vpop.permute.xlu0 %1163
    %v1167 = vunpack.c.l.s4 839922192
    %v1168 = vunpack.c.0.s8 %v1167
    %v1169 = vlaneseq
    %v1170 = vshrl.u32 %v1169, 7
    %v1171 = vsub.s32 %v1168, %v1170
    %v1172 = vrot.slane %v1164, %v1171
    %1174 = vset.pattern.permute.xlu0 0
    %1175 = vperm.xlu0 %1174, %v122
    %v1176 = vpop.permute.xlu0 %1175
    %v1179 = vunpack.c.l.s4 839922192
    %v1180 = vunpack.c.0.s8 %v1179
    %v1181 = vlaneseq
    %v1182 = vshrl.u32 %v1181, 7
    %v1183 = vsub.s32 %v1180, %v1182
    %v1184 = vrot.slane %v1176, %v1183
    %1186 = vset.pattern.permute.xlu0 0
    %1187 = vperm.xlu0 %1186, %v123
    %v1188 = vpop.permute.xlu0 %1187
    %v1191 = vunpack.c.l.s4 839922192
    %v1192 = vunpack.c.0.s8 %v1191
    %v1193 = vlaneseq
    %v1194 = vshrl.u32 %v1193, 7
    %v1195 = vsub.s32 %v1192, %v1194
    %v1196 = vrot.slane %v1188, %v1195
    %1198 = vset.pattern.permute.xlu0 0
    %1199 = vperm.xlu0 %1198, %v124
    %v1200 = vpop.permute.xlu0 %1199
    %v1203 = vunpack.c.l.s4 839922192
    %v1204 = vunpack.c.0.s8 %v1203
    %v1205 = vlaneseq
    %v1206 = vshrl.u32 %v1205, 7
    %v1207 = vsub.s32 %v1204, %v1206
    %v1208 = vrot.slane %v1200, %v1207
    %1210 = vset.pattern.permute.xlu0 0
    %1211 = vperm.xlu0 %1210, %v125
    %v1212 = vpop.permute.xlu0 %1211
    %v1215 = vunpack.c.l.s4 839922192
    %v1216 = vunpack.c.0.s8 %v1215
    %v1217 = vlaneseq
    %v1218 = vshrl.u32 %v1217, 7
    %v1219 = vsub.s32 %v1216, %v1218
    %v1220 = vrot.slane %v1212, %v1219
    %1222 = vset.pattern.permute.xlu0 0
    %1223 = vperm.xlu0 %1222, %v126
    %v1224 = vpop.permute.xlu0 %1223
    %v1227 = vunpack.c.l.s4 839922192
    %v1228 = vunpack.c.0.s8 %v1227
    %v1229 = vlaneseq
    %v1230 = vshrl.u32 %v1229, 7
    %v1231 = vsub.s32 %v1228, %v1230
    %v1232 = vrot.slane %v1224, %v1231
    %1234 = vset.pattern.permute.xlu0 0
    %1235 = vperm.xlu0 %1234, %v127
    %v1236 = vpop.permute.xlu0 %1235
    %v1239 = vunpack.c.l.s4 839922192
    %v1240 = vunpack.c.0.s8 %v1239
    %v1241 = vlaneseq
    %v1242 = vshrl.u32 %v1241, 7
    %v1243 = vsub.s32 %v1240, %v1242
    %v1244 = vrot.slane %v1236, %v1243
    %1246 = vset.pattern.permute.xlu0 0
    %1247 = vperm.xlu0 %1246, %v128
    %v1248 = vpop.permute.xlu0 %1247
    %v1251 = vunpack.c.l.s4 839922192
    %v1252 = vunpack.c.0.s8 %v1251
    %v1253 = vlaneseq
    %v1254 = vshrl.u32 %v1253, 7
    %v1255 = vsub.s32 %v1252, %v1254
    %v1256 = vrot.slane %v1248, %v1255
    %1258 = vset.pattern.permute.xlu0 0
    %1259 = vperm.xlu0 %1258, %v129
    %v1260 = vpop.permute.xlu0 %1259
    %v1263 = vunpack.c.l.s4 839922192
    %v1264 = vunpack.c.0.s8 %v1263
    %v1265 = vlaneseq
    %v1266 = vshrl.u32 %v1265, 7
    %v1267 = vsub.s32 %v1264, %v1266
    %v1268 = vrot.slane %v1260, %v1267
    %1270 = vset.pattern.permute.xlu0 0
    %1271 = vperm.xlu0 %1270, %v130
    %v1272 = vpop.permute.xlu0 %1271
    %v1275 = vunpack.c.l.s4 839922192
    %v1276 = vunpack.c.0.s8 %v1275
    %v1277 = vlaneseq
    %v1278 = vshrl.u32 %v1277, 7
    %v1279 = vsub.s32 %v1276, %v1278
    %v1280 = vrot.slane %v1272, %v1279
    %1282 = vset.pattern.permute.xlu0 0
    %1283 = vperm.xlu0 %1282, %v131
    %v1284 = vpop.permute.xlu0 %1283
    %v1287 = vunpack.c.l.s4 839922192
    %v1288 = vunpack.c.0.s8 %v1287
    %v1289 = vlaneseq
    %v1290 = vshrl.u32 %v1289, 7
    %v1291 = vsub.s32 %v1288, %v1290
    %v1292 = vrot.slane %v1284, %v1291
    %v1309 = vunpack.c.l.b16 %v1112
    %v1310 = vunpack.c.l.b16 %v1124
    %v1311 = vunpack.c.l.b16 %v1136
    %v1312 = vunpack.c.l.b16 %v1148
    %v1313 = vunpack.c.l.b16 %v1160
    %v1314 = vunpack.c.l.b16 %v1172
    %v1315 = vunpack.c.l.b16 %v1184
    %v1316 = vunpack.c.l.b16 %v1196
    %v1317 = vunpack.c.l.b16 %v1208
    %v1318 = vunpack.c.l.b16 %v1220
    %v1319 = vunpack.c.l.b16 %v1232
    %v1320 = vunpack.c.l.b16 %v1244
    %v1321 = vunpack.c.l.b16 %v1256
    %v1322 = vunpack.c.l.b16 %v1268
    %v1323 = vunpack.c.l.b16 %v1280
    %v1324 = vunpack.c.l.b16 %v1292
    %v1325 = vpack.c.b16 %v1310, %v1309
    %v1326 = vpack.c.b16 %v1312, %v1311
    %v1327 = vpack.c.b16 %v1314, %v1313
    %v1328 = vpack.c.b16 %v1316, %v1315
    %v1329 = vpack.c.b16 %v1318, %v1317
    %v1330 = vpack.c.b16 %v1320, %v1319
    %v1331 = vpack.c.b16 %v1322, %v1321
    %v1332 = vpack.c.b16 %v1324, %v1323
    %v1341 = vmul.bf16 %v1099, %v1325
    %v1342 = vmul.bf16 %v1033, %v1326
    %v1343 = vmul.bf16 %v1042, %v1327
    %v1344 = vmul.bf16 %v1051, %v1328
    %v1345 = vmul.bf16 %v1060, %v1329
    %v1346 = vmul.bf16 %v1069, %v1330
    %v1347 = vmul.bf16 %v1078, %v1331
    %v1348 = vmul.bf16 %v1087, %v1332
    %1349 = vset.pattern.permute.xlu0 1
    %1350 = vperm.xlu0 %1349, %v116
    %v1351 = vpop.permute.xlu0 %1350
    %v1354 = vunpack.c.l.s4 839922192
    %v1355 = vunpack.c.0.s8 %v1354
    %v1356 = vlaneseq
    %v1357 = vshrl.u32 %v1356, 7
    %v1358 = vsub.s32 %v1355, %v1357
    %v1359 = vrot.slane %v1351, %v1358
    %1360 = vset.pattern.permute.xlu0 1
    %1361 = vperm.xlu0 %1360, %v117
    %v1362 = vpop.permute.xlu0 %1361
    %v1365 = vunpack.c.l.s4 839922192
    %v1366 = vunpack.c.0.s8 %v1365
    %v1367 = vlaneseq
    %v1368 = vshrl.u32 %v1367, 7
    %v1369 = vsub.s32 %v1366, %v1368
    %v1370 = vrot.slane %v1362, %v1369
    %1371 = vset.pattern.permute.xlu0 1
    %1372 = vperm.xlu0 %1371, %v118
    %v1373 = vpop.permute.xlu0 %1372
    %v1376 = vunpack.c.l.s4 839922192
    %v1377 = vunpack.c.0.s8 %v1376
    %v1378 = vlaneseq
    %v1379 = vshrl.u32 %v1378, 7
    %v1380 = vsub.s32 %v1377, %v1379
    %v1381 = vrot.slane %v1373, %v1380
    %1382 = vset.pattern.permute.xlu0 1
    %1383 = vperm.xlu0 %1382, %v119
    %v1384 = vpop.permute.xlu0 %1383
    %v1387 = vunpack.c.l.s4 839922192
    %v1388 = vunpack.c.0.s8 %v1387
    %v1389 = vlaneseq
    %v1390 = vshrl.u32 %v1389, 7
    %v1391 = vsub.s32 %v1388, %v1390
    %v1392 = vrot.slane %v1384, %v1391
    %1393 = vset.pattern.permute.xlu0 1
    %1394 = vperm.xlu0 %1393, %v120
    %v1395 = vpop.permute.xlu0 %1394
    %v1398 = vunpack.c.l.s4 839922192
    %v1399 = vunpack.c.0.s8 %v1398
    %v1400 = vlaneseq
    %v1401 = vshrl.u32 %v1400, 7
    %v1402 = vsub.s32 %v1399, %v1401
    %v1403 = vrot.slane %v1395, %v1402
    %1404 = vset.pattern.permute.xlu0 1
    %1405 = vperm.xlu0 %1404, %v121
    %v1406 = vpop.permute.xlu0 %1405
    %v1409 = vunpack.c.l.s4 839922192
    %v1410 = vunpack.c.0.s8 %v1409
    %v1411 = vlaneseq
    %v1412 = vshrl.u32 %v1411, 7
    %v1413 = vsub.s32 %v1410, %v1412
    %v1414 = vrot.slane %v1406, %v1413
    %1415 = vset.pattern.permute.xlu0 1
    %1416 = vperm.xlu0 %1415, %v122
    %v1417 = vpop.permute.xlu0 %1416
    %v1420 = vunpack.c.l.s4 839922192
    %v1421 = vunpack.c.0.s8 %v1420
    %v1422 = vlaneseq
    %v1423 = vshrl.u32 %v1422, 7
    %v1424 = vsub.s32 %v1421, %v1423
    %v1425 = vrot.slane %v1417, %v1424
    %1426 = vset.pattern.permute.xlu0 1
    %1427 = vperm.xlu0 %1426, %v123
    %v1428 = vpop.permute.xlu0 %1427
    %v1431 = vunpack.c.l.s4 839922192
    %v1432 = vunpack.c.0.s8 %v1431
    %v1433 = vlaneseq
    %v1434 = vshrl.u32 %v1433, 7
    %v1435 = vsub.s32 %v1432, %v1434
    %v1436 = vrot.slane %v1428, %v1435
    %1437 = vset.pattern.permute.xlu0 1
    %1438 = vperm.xlu0 %1437, %v124
    %v1439 = vpop.permute.xlu0 %1438
    %v1442 = vunpack.c.l.s4 839922192
    %v1443 = vunpack.c.0.s8 %v1442
    %v1444 = vlaneseq
    %v1445 = vshrl.u32 %v1444, 7
    %v1446 = vsub.s32 %v1443, %v1445
    %v1447 = vrot.slane %v1439, %v1446
    %1448 = vset.pattern.permute.xlu0 1
    %1449 = vperm.xlu0 %1448, %v125
    %v1450 = vpop.permute.xlu0 %1449
    %v1453 = vunpack.c.l.s4 839922192
    %v1454 = vunpack.c.0.s8 %v1453
    %v1455 = vlaneseq
    %v1456 = vshrl.u32 %v1455, 7
    %v1457 = vsub.s32 %v1454, %v1456
    %v1458 = vrot.slane %v1450, %v1457
    %1459 = vset.pattern.permute.xlu0 1
    %1460 = vperm.xlu0 %1459, %v126
    %v1461 = vpop.permute.xlu0 %1460
    %v1464 = vunpack.c.l.s4 839922192
    %v1465 = vunpack.c.0.s8 %v1464
    %v1466 = vlaneseq
    %v1467 = vshrl.u32 %v1466, 7
    %v1468 = vsub.s32 %v1465, %v1467
    %v1469 = vrot.slane %v1461, %v1468
    %1470 = vset.pattern.permute.xlu0 1
    %1471 = vperm.xlu0 %1470, %v127
    %v1472 = vpop.permute.xlu0 %1471
    %v1475 = vunpack.c.l.s4 839922192
    %v1476 = vunpack.c.0.s8 %v1475
    %v1477 = vlaneseq
    %v1478 = vshrl.u32 %v1477, 7
    %v1479 = vsub.s32 %v1476, %v1478
    %v1480 = vrot.slane %v1472, %v1479
    %1481 = vset.pattern.permute.xlu0 1
    %1482 = vperm.xlu0 %1481, %v128
    %v1483 = vpop.permute.xlu0 %1482
    %v1486 = vunpack.c.l.s4 839922192
    %v1487 = vunpack.c.0.s8 %v1486
    %v1488 = vlaneseq
    %v1489 = vshrl.u32 %v1488, 7
    %v1490 = vsub.s32 %v1487, %v1489
    %v1491 = vrot.slane %v1483, %v1490
    %1492 = vset.pattern.permute.xlu0 1
    %1493 = vperm.xlu0 %1492, %v129
    %v1494 = vpop.permute.xlu0 %1493
    %v1497 = vunpack.c.l.s4 839922192
    %v1498 = vunpack.c.0.s8 %v1497
    %v1499 = vlaneseq
    %v1500 = vshrl.u32 %v1499, 7
    %v1501 = vsub.s32 %v1498, %v1500
    %v1502 = vrot.slane %v1494, %v1501
    %1503 = vset.pattern.permute.xlu0 1
    %1504 = vperm.xlu0 %1503, %v130
    %v1505 = vpop.permute.xlu0 %1504
    %v1508 = vunpack.c.l.s4 839922192
    %v1509 = vunpack.c.0.s8 %v1508
    %v1510 = vlaneseq
    %v1511 = vshrl.u32 %v1510, 7
    %v1512 = vsub.s32 %v1509, %v1511
    %v1513 = vrot.slane %v1505, %v1512
    %1514 = vset.pattern.permute.xlu0 1
    %1515 = vperm.xlu0 %1514, %v131
    %v1516 = vpop.permute.xlu0 %1515
    %v1519 = vunpack.c.l.s4 839922192
    %v1520 = vunpack.c.0.s8 %v1519
    %v1521 = vlaneseq
    %v1522 = vshrl.u32 %v1521, 7
    %v1523 = vsub.s32 %v1520, %v1522
    %v1524 = vrot.slane %v1516, %v1523
    %v1541 = vunpack.c.l.b16 %v1359
    %v1542 = vunpack.c.l.b16 %v1370
    %v1543 = vunpack.c.l.b16 %v1381
    %v1544 = vunpack.c.l.b16 %v1392
    %v1545 = vunpack.c.l.b16 %v1403
    %v1546 = vunpack.c.l.b16 %v1414
    %v1547 = vunpack.c.l.b16 %v1425
    %v1548 = vunpack.c.l.b16 %v1436
    %v1549 = vunpack.c.l.b16 %v1447
    %v1550 = vunpack.c.l.b16 %v1458
    %v1551 = vunpack.c.l.b16 %v1469
    %v1552 = vunpack.c.l.b16 %v1480
    %v1553 = vunpack.c.l.b16 %v1491
    %v1554 = vunpack.c.l.b16 %v1502
    %v1555 = vunpack.c.l.b16 %v1513
    %v1556 = vunpack.c.l.b16 %v1524
    %v1557 = vpack.c.b16 %v1542, %v1541
    %v1558 = vpack.c.b16 %v1544, %v1543
    %v1559 = vpack.c.b16 %v1546, %v1545
    %v1560 = vpack.c.b16 %v1548, %v1547
    %v1561 = vpack.c.b16 %v1550, %v1549
    %v1562 = vpack.c.b16 %v1552, %v1551
    %v1563 = vpack.c.b16 %v1554, %v1553
    %v1564 = vpack.c.b16 %v1556, %v1555
    %vm1565 = vsmask.f32 256
    %v1567 = vshrl.u32 %v1557, 16
    %v1569 = vrot.slane %v1567, 7
    %v1570 = vshll.u32 %v1557, 16
    %v1572 = vor.u32 %v1569, %v1570
    %v1574 = vshrl.u32 %v1558, 16
    %v1576 = vrot.slane %v1574, 7
    %v1577 = vshll.u32 %v1558, 16
    %v1579 = vor.u32 %v1576, %v1577
    %v1580 = vsel %vm1565, %v1569, %v1579
    %v1582 = vshrl.u32 %v1559, 16
    %v1584 = vrot.slane %v1582, 7
    %v1585 = vshll.u32 %v1559, 16
    %v1587 = vor.u32 %v1584, %v1585
    %v1588 = vsel %vm1565, %v1576, %v1587
    %v1590 = vshrl.u32 %v1560, 16
    %v1592 = vrot.slane %v1590, 7
    %v1593 = vshll.u32 %v1560, 16
    %v1595 = vor.u32 %v1592, %v1593
    %v1596 = vsel %vm1565, %v1584, %v1595
    %v1598 = vshrl.u32 %v1561, 16
    %v1600 = vrot.slane %v1598, 7
    %v1601 = vshll.u32 %v1561, 16
    %v1603 = vor.u32 %v1600, %v1601
    %v1604 = vsel %vm1565, %v1592, %v1603
    %v1606 = vshrl.u32 %v1562, 16
    %v1608 = vrot.slane %v1606, 7
    %v1609 = vshll.u32 %v1562, 16
    %v1611 = vor.u32 %v1608, %v1609
    %v1612 = vsel %vm1565, %v1600, %v1611
    %v1614 = vshrl.u32 %v1563, 16
    %v1616 = vrot.slane %v1614, 7
    %v1617 = vshll.u32 %v1563, 16
    %v1619 = vor.u32 %v1616, %v1617
    %v1620 = vsel %vm1565, %v1608, %v1619
    %v1622 = vshrl.u32 %v1564, 16
    %v1624 = vrot.slane %v1622, 7
    %v1625 = vshll.u32 %v1564, 16
    %v1627 = vor.u32 %v1624, %v1625
    %v1628 = vsel %vm1565, %v1616, %v1627
    %v1638 = vmul.bf16 %v1099, %v1572
    %v1639 = vmul.bf16 %v1033, %v1580
    %v1640 = vmul.bf16 %v1042, %v1588
    %v1641 = vmul.bf16 %v1051, %v1596
    %v1642 = vmul.bf16 %v1060, %v1604
    %v1643 = vmul.bf16 %v1069, %v1612
    %v1644 = vmul.bf16 %v1078, %v1620
    %v1645 = vmul.bf16 %v1087, %v1628
    %v1646 = vmul.bf16 %v1100, %v1624
    %1647 = vset.pattern.permute.xlu0 2
    %1648 = vperm.xlu0 %1647, %v116
    %v1649 = vpop.permute.xlu0 %1648
    %v1652 = vunpack.c.l.s4 839922192
    %v1653 = vunpack.c.0.s8 %v1652
    %v1654 = vlaneseq
    %v1655 = vshrl.u32 %v1654, 7
    %v1656 = vsub.s32 %v1653, %v1655
    %v1657 = vrot.slane %v1649, %v1656
    %1658 = vset.pattern.permute.xlu0 2
    %1659 = vperm.xlu0 %1658, %v117
    %v1660 = vpop.permute.xlu0 %1659
    %v1663 = vunpack.c.l.s4 839922192
    %v1664 = vunpack.c.0.s8 %v1663
    %v1665 = vlaneseq
    %v1666 = vshrl.u32 %v1665, 7
    %v1667 = vsub.s32 %v1664, %v1666
    %v1668 = vrot.slane %v1660, %v1667
    %1669 = vset.pattern.permute.xlu0 2
    %1670 = vperm.xlu0 %1669, %v118
    %v1671 = vpop.permute.xlu0 %1670
    %v1674 = vunpack.c.l.s4 839922192
    %v1675 = vunpack.c.0.s8 %v1674
    %v1676 = vlaneseq
    %v1677 = vshrl.u32 %v1676, 7
    %v1678 = vsub.s32 %v1675, %v1677
    %v1679 = vrot.slane %v1671, %v1678
    %1680 = vset.pattern.permute.xlu0 2
    %1681 = vperm.xlu0 %1680, %v119
    %v1682 = vpop.permute.xlu0 %1681
    %v1685 = vunpack.c.l.s4 839922192
    %v1686 = vunpack.c.0.s8 %v1685
    %v1687 = vlaneseq
    %v1688 = vshrl.u32 %v1687, 7
    %v1689 = vsub.s32 %v1686, %v1688
    %v1690 = vrot.slane %v1682, %v1689
    %1691 = vset.pattern.permute.xlu0 2
    %1692 = vperm.xlu0 %1691, %v120
    %v1693 = vpop.permute.xlu0 %1692
    %v1696 = vunpack.c.l.s4 839922192
    %v1697 = vunpack.c.0.s8 %v1696
    %v1698 = vlaneseq
    %v1699 = vshrl.u32 %v1698, 7
    %v1700 = vsub.s32 %v1697, %v1699
    %v1701 = vrot.slane %v1693, %v1700
    %1702 = vset.pattern.permute.xlu0 2
    %1703 = vperm.xlu0 %1702, %v121
    %v1704 = vpop.permute.xlu0 %1703
    %v1707 = vunpack.c.l.s4 839922192
    %v1708 = vunpack.c.0.s8 %v1707
    %v1709 = vlaneseq
    %v1710 = vshrl.u32 %v1709, 7
    %v1711 = vsub.s32 %v1708, %v1710
    %v1712 = vrot.slane %v1704, %v1711
    %1713 = vset.pattern.permute.xlu0 2
    %1714 = vperm.xlu0 %1713, %v122
    %v1715 = vpop.permute.xlu0 %1714
    %v1718 = vunpack.c.l.s4 839922192
    %v1719 = vunpack.c.0.s8 %v1718
    %v1720 = vlaneseq
    %v1721 = vshrl.u32 %v1720, 7
    %v1722 = vsub.s32 %v1719, %v1721
    %v1723 = vrot.slane %v1715, %v1722
    %1724 = vset.pattern.permute.xlu0 2
    %1725 = vperm.xlu0 %1724, %v123
    %v1726 = vpop.permute.xlu0 %1725
    %v1729 = vunpack.c.l.s4 839922192
    %v1730 = vunpack.c.0.s8 %v1729
    %v1731 = vlaneseq
    %v1732 = vshrl.u32 %v1731, 7
    %v1733 = vsub.s32 %v1730, %v1732
    %v1734 = vrot.slane %v1726, %v1733
    %1735 = vset.pattern.permute.xlu0 2
    %1736 = vperm.xlu0 %1735, %v124
    %v1737 = vpop.permute.xlu0 %1736
    %v1740 = vunpack.c.l.s4 839922192
    %v1741 = vunpack.c.0.s8 %v1740
    %v1742 = vlaneseq
    %v1743 = vshrl.u32 %v1742, 7
    %v1744 = vsub.s32 %v1741, %v1743
    %v1745 = vrot.slane %v1737, %v1744
    %1746 = vset.pattern.permute.xlu0 2
    %1747 = vperm.xlu0 %1746, %v125
    %v1748 = vpop.permute.xlu0 %1747
    %v1751 = vunpack.c.l.s4 839922192
    %v1752 = vunpack.c.0.s8 %v1751
    %v1753 = vlaneseq
    %v1754 = vshrl.u32 %v1753, 7
    %v1755 = vsub.s32 %v1752, %v1754
    %v1756 = vrot.slane %v1748, %v1755
    %1757 = vset.pattern.permute.xlu0 2
    %1758 = vperm.xlu0 %1757, %v126
    %v1759 = vpop.permute.xlu0 %1758
    %v1762 = vunpack.c.l.s4 839922192
    %v1763 = vunpack.c.0.s8 %v1762
    %v1764 = vlaneseq
    %v1765 = vshrl.u32 %v1764, 7
    %v1766 = vsub.s32 %v1763, %v1765
    %v1767 = vrot.slane %v1759, %v1766
    %1768 = vset.pattern.permute.xlu0 2
    %1769 = vperm.xlu0 %1768, %v127
    %v1770 = vpop.permute.xlu0 %1769
    %v1773 = vunpack.c.l.s4 839922192
    %v1774 = vunpack.c.0.s8 %v1773
    %v1775 = vlaneseq
    %v1776 = vshrl.u32 %v1775, 7
    %v1777 = vsub.s32 %v1774, %v1776
    %v1778 = vrot.slane %v1770, %v1777
    %1779 = vset.pattern.permute.xlu0 2
    %1780 = vperm.xlu0 %1779, %v128
    %v1781 = vpop.permute.xlu0 %1780
    %v1784 = vunpack.c.l.s4 839922192
    %v1785 = vunpack.c.0.s8 %v1784
    %v1786 = vlaneseq
    %v1787 = vshrl.u32 %v1786, 7
    %v1788 = vsub.s32 %v1785, %v1787
    %v1789 = vrot.slane %v1781, %v1788
    %1790 = vset.pattern.permute.xlu0 2
    %1791 = vperm.xlu0 %1790, %v129
    %v1792 = vpop.permute.xlu0 %1791
    %v1795 = vunpack.c.l.s4 839922192
    %v1796 = vunpack.c.0.s8 %v1795
    %v1797 = vlaneseq
    %v1798 = vshrl.u32 %v1797, 7
    %v1799 = vsub.s32 %v1796, %v1798
    %v1800 = vrot.slane %v1792, %v1799
    %1801 = vset.pattern.permute.xlu0 2
    %1802 = vperm.xlu0 %1801, %v130
    %v1803 = vpop.permute.xlu0 %1802
    %v1806 = vunpack.c.l.s4 839922192
    %v1807 = vunpack.c.0.s8 %v1806
    %v1808 = vlaneseq
    %v1809 = vshrl.u32 %v1808, 7
    %v1810 = vsub.s32 %v1807, %v1809
    %v1811 = vrot.slane %v1803, %v1810
    %1812 = vset.pattern.permute.xlu0 2
    %1813 = vperm.xlu0 %1812, %v131
    %v1814 = vpop.permute.xlu0 %1813
    %v1817 = vunpack.c.l.s4 839922192
    %v1818 = vunpack.c.0.s8 %v1817
    %v1819 = vlaneseq
    %v1820 = vshrl.u32 %v1819, 7
    %v1821 = vsub.s32 %v1818, %v1820
    %v1822 = vrot.slane %v1814, %v1821
    %v1839 = vunpack.c.l.b16 %v1657
    %v1840 = vunpack.c.l.b16 %v1668
    %v1841 = vunpack.c.l.b16 %v1679
    %v1842 = vunpack.c.l.b16 %v1690
    %v1843 = vunpack.c.l.b16 %v1701
    %v1844 = vunpack.c.l.b16 %v1712
    %v1845 = vunpack.c.l.b16 %v1723
    %v1846 = vunpack.c.l.b16 %v1734
    %v1847 = vunpack.c.l.b16 %v1745
    %v1848 = vunpack.c.l.b16 %v1756
    %v1849 = vunpack.c.l.b16 %v1767
    %v1850 = vunpack.c.l.b16 %v1778
    %v1851 = vunpack.c.l.b16 %v1789
    %v1852 = vunpack.c.l.b16 %v1800
    %v1853 = vunpack.c.l.b16 %v1811
    %v1854 = vunpack.c.l.b16 %v1822
    %v1855 = vpack.c.b16 %v1840, %v1839
    %v1856 = vpack.c.b16 %v1842, %v1841
    %v1857 = vpack.c.b16 %v1844, %v1843
    %v1858 = vpack.c.b16 %v1846, %v1845
    %v1859 = vpack.c.b16 %v1848, %v1847
    %v1860 = vpack.c.b16 %v1850, %v1849
    %v1861 = vpack.c.b16 %v1852, %v1851
    %v1862 = vpack.c.b16 %v1854, %v1853
    %vm1863 = vcmask 1040384
    %v1864 = vrot.slane %v1855, 7
    %v1865 = vrot.slane %v1856, 7
    %v1866 = vsel %vm1863, %v1864, %v1865
    %v1867 = vrot.slane %v1857, 7
    %v1868 = vsel %vm1863, %v1865, %v1867
    %v1869 = vrot.slane %v1858, 7
    %v1870 = vsel %vm1863, %v1867, %v1869
    %v1871 = vrot.slane %v1859, 7
    %v1872 = vsel %vm1863, %v1869, %v1871
    %v1873 = vrot.slane %v1860, 7
    %v1874 = vsel %vm1863, %v1871, %v1873
    %v1875 = vrot.slane %v1861, 7
    %v1876 = vsel %vm1863, %v1873, %v1875
    %v1877 = vrot.slane %v1862, 7
    %v1878 = vsel %vm1863, %v1875, %v1877
    %v1888 = vmul.bf16 %v1099, %v1864
    %v1889 = vmul.bf16 %v1033, %v1866
    %v1890 = vmul.bf16 %v1042, %v1868
    %v1891 = vmul.bf16 %v1051, %v1870
    %v1892 = vmul.bf16 %v1060, %v1872
    %v1893 = vmul.bf16 %v1069, %v1874
    %v1894 = vmul.bf16 %v1078, %v1876
    %v1895 = vmul.bf16 %v1087, %v1878
    %v1896 = vmul.bf16 %v1100, %v1877
    %1897 = vset.pattern.permute.xlu0 3
    %1898 = vperm.xlu0 %1897, %v116
    %v1899 = vpop.permute.xlu0 %1898
    %v1902 = vunpack.c.l.s4 839922192
    %v1903 = vunpack.c.0.s8 %v1902
    %v1904 = vlaneseq
    %v1905 = vshrl.u32 %v1904, 7
    %v1906 = vsub.s32 %v1903, %v1905
    %v1907 = vrot.slane %v1899, %v1906
    %1908 = vset.pattern.permute.xlu0 3
    %1909 = vperm.xlu0 %1908, %v117
    %v1910 = vpop.permute.xlu0 %1909
    %v1913 = vunpack.c.l.s4 839922192
    %v1914 = vunpack.c.0.s8 %v1913
    %v1915 = vlaneseq
    %v1916 = vshrl.u32 %v1915, 7
    %v1917 = vsub.s32 %v1914, %v1916
    %v1918 = vrot.slane %v1910, %v1917
    %1919 = vset.pattern.permute.xlu0 3
    %1920 = vperm.xlu0 %1919, %v118
    %v1921 = vpop.permute.xlu0 %1920
    %v1924 = vunpack.c.l.s4 839922192
    %v1925 = vunpack.c.0.s8 %v1924
    %v1926 = vlaneseq
    %v1927 = vshrl.u32 %v1926, 7
    %v1928 = vsub.s32 %v1925, %v1927
    %v1929 = vrot.slane %v1921, %v1928
    %1930 = vset.pattern.permute.xlu0 3
    %1931 = vperm.xlu0 %1930, %v119
    %v1932 = vpop.permute.xlu0 %1931
    %v1935 = vunpack.c.l.s4 839922192
    %v1936 = vunpack.c.0.s8 %v1935
    %v1937 = vlaneseq
    %v1938 = vshrl.u32 %v1937, 7
    %v1939 = vsub.s32 %v1936, %v1938
    %v1940 = vrot.slane %v1932, %v1939
    %1941 = vset.pattern.permute.xlu0 3
    %1942 = vperm.xlu0 %1941, %v120
    %v1943 = vpop.permute.xlu0 %1942
    %v1946 = vunpack.c.l.s4 839922192
    %v1947 = vunpack.c.0.s8 %v1946
    %v1948 = vlaneseq
    %v1949 = vshrl.u32 %v1948, 7
    %v1950 = vsub.s32 %v1947, %v1949
    %v1951 = vrot.slane %v1943, %v1950
    %1952 = vset.pattern.permute.xlu0 3
    %1953 = vperm.xlu0 %1952, %v121
    %v1954 = vpop.permute.xlu0 %1953
    %v1957 = vunpack.c.l.s4 839922192
    %v1958 = vunpack.c.0.s8 %v1957
    %v1959 = vlaneseq
    %v1960 = vshrl.u32 %v1959, 7
    %v1961 = vsub.s32 %v1958, %v1960
    %v1962 = vrot.slane %v1954, %v1961
    %1963 = vset.pattern.permute.xlu0 3
    %1964 = vperm.xlu0 %1963, %v122
    %v1965 = vpop.permute.xlu0 %1964
    %v1968 = vunpack.c.l.s4 839922192
    %v1969 = vunpack.c.0.s8 %v1968
    %v1970 = vlaneseq
    %v1971 = vshrl.u32 %v1970, 7
    %v1972 = vsub.s32 %v1969, %v1971
    %v1973 = vrot.slane %v1965, %v1972
    %1974 = vset.pattern.permute.xlu0 3
    %1975 = vperm.xlu0 %1974, %v123
    %v1976 = vpop.permute.xlu0 %1975
    %v1979 = vunpack.c.l.s4 839922192
    %v1980 = vunpack.c.0.s8 %v1979
    %v1981 = vlaneseq
    %v1982 = vshrl.u32 %v1981, 7
    %v1983 = vsub.s32 %v1980, %v1982
    %v1984 = vrot.slane %v1976, %v1983
    %1985 = vset.pattern.permute.xlu0 3
    %1986 = vperm.xlu0 %1985, %v124
    %v1987 = vpop.permute.xlu0 %1986
    %v1990 = vunpack.c.l.s4 839922192
    %v1991 = vunpack.c.0.s8 %v1990
    %v1992 = vlaneseq
    %v1993 = vshrl.u32 %v1992, 7
    %v1994 = vsub.s32 %v1991, %v1993
    %v1995 = vrot.slane %v1987, %v1994
    %1996 = vset.pattern.permute.xlu0 3
    %1997 = vperm.xlu0 %1996, %v125
    %v1998 = vpop.permute.xlu0 %1997
    %v2001 = vunpack.c.l.s4 839922192
    %v2002 = vunpack.c.0.s8 %v2001
    %v2003 = vlaneseq
    %v2004 = vshrl.u32 %v2003, 7
    %v2005 = vsub.s32 %v2002, %v2004
    %v2006 = vrot.slane %v1998, %v2005
    %2007 = vset.pattern.permute.xlu0 3
    %2008 = vperm.xlu0 %2007, %v126
    %v2009 = vpop.permute.xlu0 %2008
    %v2012 = vunpack.c.l.s4 839922192
    %v2013 = vunpack.c.0.s8 %v2012
    %v2014 = vlaneseq
    %v2015 = vshrl.u32 %v2014, 7
    %v2016 = vsub.s32 %v2013, %v2015
    %v2017 = vrot.slane %v2009, %v2016
    %2018 = vset.pattern.permute.xlu0 3
    %2019 = vperm.xlu0 %2018, %v127
    %v2020 = vpop.permute.xlu0 %2019
    %v2023 = vunpack.c.l.s4 839922192
    %v2024 = vunpack.c.0.s8 %v2023
    %v2025 = vlaneseq
    %v2026 = vshrl.u32 %v2025, 7
    %v2027 = vsub.s32 %v2024, %v2026
    %v2028 = vrot.slane %v2020, %v2027
    %2029 = vset.pattern.permute.xlu0 3
    %2030 = vperm.xlu0 %2029, %v128
    %v2031 = vpop.permute.xlu0 %2030
    %v2034 = vunpack.c.l.s4 839922192
    %v2035 = vunpack.c.0.s8 %v2034
    %v2036 = vlaneseq
    %v2037 = vshrl.u32 %v2036, 7
    %v2038 = vsub.s32 %v2035, %v2037
    %v2039 = vrot.slane %v2031, %v2038
    %2040 = vset.pattern.permute.xlu0 3
    %2041 = vperm.xlu0 %2040, %v129
    %v2042 = vpop.permute.xlu0 %2041
    %v2045 = vunpack.c.l.s4 839922192
    %v2046 = vunpack.c.0.s8 %v2045
    %v2047 = vlaneseq
    %v2048 = vshrl.u32 %v2047, 7
    %v2049 = vsub.s32 %v2046, %v2048
    %v2050 = vrot.slane %v2042, %v2049
    %2051 = vset.pattern.permute.xlu0 3
    %2052 = vperm.xlu0 %2051, %v130
    %v2053 = vpop.permute.xlu0 %2052
    %v2056 = vunpack.c.l.s4 839922192
    %v2057 = vunpack.c.0.s8 %v2056
    %v2058 = vlaneseq
    %v2059 = vshrl.u32 %v2058, 7
    %v2060 = vsub.s32 %v2057, %v2059
    %v2061 = vrot.slane %v2053, %v2060
    %2062 = vset.pattern.permute.xlu0 3
    %2063 = vperm.xlu0 %2062, %v131
    %v2064 = vpop.permute.xlu0 %2063
    %v2067 = vunpack.c.l.s4 839922192
    %v2068 = vunpack.c.0.s8 %v2067
    %v2069 = vlaneseq
    %v2070 = vshrl.u32 %v2069, 7
    %v2071 = vsub.s32 %v2068, %v2070
    %v2072 = vrot.slane %v2064, %v2071
    %v2089 = vunpack.c.l.b16 %v1907
    %v2090 = vunpack.c.l.b16 %v1918
    %v2091 = vunpack.c.l.b16 %v1929
    %v2092 = vunpack.c.l.b16 %v1940
    %v2093 = vunpack.c.l.b16 %v1951
    %v2094 = vunpack.c.l.b16 %v1962
    %v2095 = vunpack.c.l.b16 %v1973
    %v2096 = vunpack.c.l.b16 %v1984
    %v2097 = vunpack.c.l.b16 %v1995
    %v2098 = vunpack.c.l.b16 %v2006
    %v2099 = vunpack.c.l.b16 %v2017
    %v2100 = vunpack.c.l.b16 %v2028
    %v2101 = vunpack.c.l.b16 %v2039
    %v2102 = vunpack.c.l.b16 %v2050
    %v2103 = vunpack.c.l.b16 %v2061
    %v2104 = vunpack.c.l.b16 %v2072
    %v2105 = vpack.c.b16 %v2089, %v2089
    %v2106 = vpack.c.b16 %v2091, %v2090
    %v2107 = vpack.c.b16 %v2093, %v2092
    %v2108 = vpack.c.b16 %v2095, %v2094
    %v2109 = vpack.c.b16 %v2097, %v2096
    %v2110 = vpack.c.b16 %v2099, %v2098
    %v2111 = vpack.c.b16 %v2101, %v2100
    %v2112 = vpack.c.b16 %v2103, %v2102
    %v2113 = vpack.c.b16 %v2104, %v2104
    %v2123 = vmul.bf16 %v1099, %v2105
    %v2124 = vmul.bf16 %v1033, %v2106
    %v2125 = vmul.bf16 %v1042, %v2107
    %v2126 = vmul.bf16 %v1051, %v2108
    %v2127 = vmul.bf16 %v1060, %v2109
    %v2128 = vmul.bf16 %v1069, %v2110
    %v2129 = vmul.bf16 %v1078, %v2111
    %v2130 = vmul.bf16 %v1087, %v2112
    %v2131 = vmul.bf16 %v1100, %v2113
    %2132 = vset.pattern.permute.xlu0 4
    %2133 = vperm.xlu0 %2132, %v116
    %v2134 = vpop.permute.xlu0 %2133
    %v2137 = vunpack.c.l.s4 839922192
    %v2138 = vunpack.c.0.s8 %v2137
    %v2139 = vlaneseq
    %v2140 = vshrl.u32 %v2139, 7
    %v2141 = vsub.s32 %v2138, %v2140
    %v2142 = vrot.slane %v2134, %v2141
    %2143 = vset.pattern.permute.xlu0 4
    %2144 = vperm.xlu0 %2143, %v117
    %v2145 = vpop.permute.xlu0 %2144
    %v2148 = vunpack.c.l.s4 839922192
    %v2149 = vunpack.c.0.s8 %v2148
    %v2150 = vlaneseq
    %v2151 = vshrl.u32 %v2150, 7
    %v2152 = vsub.s32 %v2149, %v2151
    %v2153 = vrot.slane %v2145, %v2152
    %2154 = vset.pattern.permute.xlu0 4
    %2155 = vperm.xlu0 %2154, %v118
    %v2156 = vpop.permute.xlu0 %2155
    %v2159 = vunpack.c.l.s4 839922192
    %v2160 = vunpack.c.0.s8 %v2159
    %v2161 = vlaneseq
    %v2162 = vshrl.u32 %v2161, 7
    %v2163 = vsub.s32 %v2160, %v2162
    %v2164 = vrot.slane %v2156, %v2163
    %2165 = vset.pattern.permute.xlu0 4
    %2166 = vperm.xlu0 %2165, %v119
    %v2167 = vpop.permute.xlu0 %2166
    %v2170 = vunpack.c.l.s4 839922192
    %v2171 = vunpack.c.0.s8 %v2170
    %v2172 = vlaneseq
    %v2173 = vshrl.u32 %v2172, 7
    %v2174 = vsub.s32 %v2171, %v2173
    %v2175 = vrot.slane %v2167, %v2174
    %2176 = vset.pattern.permute.xlu0 4
    %2177 = vperm.xlu0 %2176, %v120
    %v2178 = vpop.permute.xlu0 %2177
    %v2181 = vunpack.c.l.s4 839922192
    %v2182 = vunpack.c.0.s8 %v2181
    %v2183 = vlaneseq
    %v2184 = vshrl.u32 %v2183, 7
    %v2185 = vsub.s32 %v2182, %v2184
    %v2186 = vrot.slane %v2178, %v2185
    %2187 = vset.pattern.permute.xlu0 4
    %2188 = vperm.xlu0 %2187, %v121
    %v2189 = vpop.permute.xlu0 %2188
    %v2192 = vunpack.c.l.s4 839922192
    %v2193 = vunpack.c.0.s8 %v2192
    %v2194 = vlaneseq
    %v2195 = vshrl.u32 %v2194, 7
    %v2196 = vsub.s32 %v2193, %v2195
    %v2197 = vrot.slane %v2189, %v2196
    %2198 = vset.pattern.permute.xlu0 4
    %2199 = vperm.xlu0 %2198, %v122
    %v2200 = vpop.permute.xlu0 %2199
    %v2203 = vunpack.c.l.s4 839922192
    %v2204 = vunpack.c.0.s8 %v2203
    %v2205 = vlaneseq
    %v2206 = vshrl.u32 %v2205, 7
    %v2207 = vsub.s32 %v2204, %v2206
    %v2208 = vrot.slane %v2200, %v2207
    %2209 = vset.pattern.permute.xlu0 4
    %2210 = vperm.xlu0 %2209, %v123
    %v2211 = vpop.permute.xlu0 %2210
    %v2214 = vunpack.c.l.s4 839922192
    %v2215 = vunpack.c.0.s8 %v2214
    %v2216 = vlaneseq
    %v2217 = vshrl.u32 %v2216, 7
    %v2218 = vsub.s32 %v2215, %v2217
    %v2219 = vrot.slane %v2211, %v2218
    %2220 = vset.pattern.permute.xlu0 4
    %2221 = vperm.xlu0 %2220, %v124
    %v2222 = vpop.permute.xlu0 %2221
    %v2225 = vunpack.c.l.s4 839922192
    %v2226 = vunpack.c.0.s8 %v2225
    %v2227 = vlaneseq
    %v2228 = vshrl.u32 %v2227, 7
    %v2229 = vsub.s32 %v2226, %v2228
    %v2230 = vrot.slane %v2222, %v2229
    %2231 = vset.pattern.permute.xlu0 4
    %2232 = vperm.xlu0 %2231, %v125
    %v2233 = vpop.permute.xlu0 %2232
    %v2236 = vunpack.c.l.s4 839922192
    %v2237 = vunpack.c.0.s8 %v2236
    %v2238 = vlaneseq
    %v2239 = vshrl.u32 %v2238, 7
    %v2240 = vsub.s32 %v2237, %v2239
    %v2241 = vrot.slane %v2233, %v2240
    %2242 = vset.pattern.permute.xlu0 4
    %2243 = vperm.xlu0 %2242, %v126
    %v2244 = vpop.permute.xlu0 %2243
    %v2247 = vunpack.c.l.s4 839922192
    %v2248 = vunpack.c.0.s8 %v2247
    %v2249 = vlaneseq
    %v2250 = vshrl.u32 %v2249, 7
    %v2251 = vsub.s32 %v2248, %v2250
    %v2252 = vrot.slane %v2244, %v2251
    %2253 = vset.pattern.permute.xlu0 4
    %2254 = vperm.xlu0 %2253, %v127
    %v2255 = vpop.permute.xlu0 %2254
    %v2258 = vunpack.c.l.s4 839922192
    %v2259 = vunpack.c.0.s8 %v2258
    %v2260 = vlaneseq
    %v2261 = vshrl.u32 %v2260, 7
    %v2262 = vsub.s32 %v2259, %v2261
    %v2263 = vrot.slane %v2255, %v2262
    %2264 = vset.pattern.permute.xlu0 4
    %2265 = vperm.xlu0 %2264, %v128
    %v2266 = vpop.permute.xlu0 %2265
    %v2269 = vunpack.c.l.s4 839922192
    %v2270 = vunpack.c.0.s8 %v2269
    %v2271 = vlaneseq
    %v2272 = vshrl.u32 %v2271, 7
    %v2273 = vsub.s32 %v2270, %v2272
    %v2274 = vrot.slane %v2266, %v2273
    %2275 = vset.pattern.permute.xlu0 4
    %2276 = vperm.xlu0 %2275, %v129
    %v2277 = vpop.permute.xlu0 %2276
    %v2280 = vunpack.c.l.s4 839922192
    %v2281 = vunpack.c.0.s8 %v2280
    %v2282 = vlaneseq
    %v2283 = vshrl.u32 %v2282, 7
    %v2284 = vsub.s32 %v2281, %v2283
    %v2285 = vrot.slane %v2277, %v2284
    %2286 = vset.pattern.permute.xlu0 4
    %2287 = vperm.xlu0 %2286, %v130
    %v2288 = vpop.permute.xlu0 %2287
    %v2291 = vunpack.c.l.s4 839922192
    %v2292 = vunpack.c.0.s8 %v2291
    %v2293 = vlaneseq
    %v2294 = vshrl.u32 %v2293, 7
    %v2295 = vsub.s32 %v2292, %v2294
    %v2296 = vrot.slane %v2288, %v2295
    %2297 = vset.pattern.permute.xlu0 4
    %2298 = vperm.xlu0 %2297, %v131
    %v2299 = vpop.permute.xlu0 %2298
    %v2302 = vunpack.c.l.s4 839922192
    %v2303 = vunpack.c.0.s8 %v2302
    %v2304 = vlaneseq
    %v2305 = vshrl.u32 %v2304, 7
    %v2306 = vsub.s32 %v2303, %v2305
    %v2307 = vrot.slane %v2299, %v2306
    %v2324 = vunpack.c.l.b16 %v2142
    %v2325 = vunpack.c.l.b16 %v2153
    %v2326 = vunpack.c.l.b16 %v2164
    %v2327 = vunpack.c.l.b16 %v2175
    %v2328 = vunpack.c.l.b16 %v2186
    %v2329 = vunpack.c.l.b16 %v2197
    %v2330 = vunpack.c.l.b16 %v2208
    %v2331 = vunpack.c.l.b16 %v2219
    %v2332 = vunpack.c.l.b16 %v2230
    %v2333 = vunpack.c.l.b16 %v2241
    %v2334 = vunpack.c.l.b16 %v2252
    %v2335 = vunpack.c.l.b16 %v2263
    %v2336 = vunpack.c.l.b16 %v2274
    %v2337 = vunpack.c.l.b16 %v2285
    %v2338 = vunpack.c.l.b16 %v2296
    %v2339 = vunpack.c.l.b16 %v2307
    %v2340 = vpack.c.b16 %v2325, %v2324
    %v2341 = vpack.c.b16 %v2327, %v2326
    %v2342 = vpack.c.b16 %v2329, %v2328
    %v2343 = vpack.c.b16 %v2331, %v2330
    %v2344 = vpack.c.b16 %v2333, %v2332
    %v2345 = vpack.c.b16 %v2335, %v2334
    %v2346 = vpack.c.b16 %v2337, %v2336
    %v2347 = vpack.c.b16 %v2339, %v2338
    %v2349 = vshrl.u32 %v2340, 16
    %v2351 = vrot.slane %v2349, 3
    %v2352 = vshll.u32 %v2340, 16
    %v2354 = vrot.slane %v2352, 4
    %v2355 = vor.u32 %v2351, %v2354
    %v2357 = vshrl.u32 %v2341, 16
    %v2359 = vrot.slane %v2357, 3
    %v2360 = vshll.u32 %v2341, 16
    %v2362 = vrot.slane %v2360, 4
    %v2363 = vor.u32 %v2359, %v2362
    %v2364 = vsel %vm1016, %v2355, %v2363
    %v2366 = vshrl.u32 %v2342, 16
    %v2368 = vrot.slane %v2366, 3
    %v2369 = vshll.u32 %v2342, 16
    %v2371 = vrot.slane %v2369, 4
    %v2372 = vor.u32 %v2368, %v2371
    %v2373 = vsel %vm1016, %v2363, %v2372
    %v2375 = vshrl.u32 %v2343, 16
    %v2377 = vrot.slane %v2375, 3
    %v2378 = vshll.u32 %v2343, 16
    %v2380 = vrot.slane %v2378, 4
    %v2381 = vor.u32 %v2377, %v2380
    %v2382 = vsel %vm1016, %v2372, %v2381
    %v2384 = vshrl.u32 %v2344, 16
    %v2386 = vrot.slane %v2384, 3
    %v2387 = vshll.u32 %v2344, 16
    %v2389 = vrot.slane %v2387, 4
    %v2390 = vor.u32 %v2386, %v2389
    %v2391 = vsel %vm1016, %v2381, %v2390
    %v2393 = vshrl.u32 %v2345, 16
    %v2395 = vrot.slane %v2393, 3
    %v2396 = vshll.u32 %v2345, 16
    %v2398 = vrot.slane %v2396, 4
    %v2399 = vor.u32 %v2395, %v2398
    %v2400 = vsel %vm1016, %v2390, %v2399
    %v2402 = vshrl.u32 %v2346, 16
    %v2404 = vrot.slane %v2402, 3
    %v2405 = vshll.u32 %v2346, 16
    %v2407 = vrot.slane %v2405, 4
    %v2408 = vor.u32 %v2404, %v2407
    %v2409 = vsel %vm1016, %v2399, %v2408
    %v2411 = vshrl.u32 %v2347, 16
    %v2413 = vrot.slane %v2411, 3
    %v2414 = vshll.u32 %v2347, 16
    %v2416 = vrot.slane %v2414, 4
    %v2417 = vor.u32 %v2413, %v2416
    %v2418 = vsel %vm1016, %v2408, %v2417
    %v2428 = vmul.bf16 %v1099, %v2355
    %v2429 = vmul.bf16 %v1033, %v2364
    %v2430 = vmul.bf16 %v1042, %v2373
    %v2431 = vmul.bf16 %v1051, %v2382
    %v2432 = vmul.bf16 %v1060, %v2391
    %v2433 = vmul.bf16 %v1069, %v2400
    %v2434 = vmul.bf16 %v1078, %v2409
    %v2435 = vmul.bf16 %v1087, %v2418
    %v2436 = vmul.bf16 %v1100, %v2417
    %2437 = vset.pattern.permute.xlu0 5
    %2438 = vperm.xlu0 %2437, %v116
    %v2439 = vpop.permute.xlu0 %2438
    %v2442 = vunpack.c.l.s4 839922192
    %v2443 = vunpack.c.0.s8 %v2442
    %v2444 = vlaneseq
    %v2445 = vshrl.u32 %v2444, 7
    %v2446 = vsub.s32 %v2443, %v2445
    %v2447 = vrot.slane %v2439, %v2446
    %2448 = vset.pattern.permute.xlu0 5
    %2449 = vperm.xlu0 %2448, %v117
    %v2450 = vpop.permute.xlu0 %2449
    %v2453 = vunpack.c.l.s4 839922192
    %v2454 = vunpack.c.0.s8 %v2453
    %v2455 = vlaneseq
    %v2456 = vshrl.u32 %v2455, 7
    %v2457 = vsub.s32 %v2454, %v2456
    %v2458 = vrot.slane %v2450, %v2457
    %2459 = vset.pattern.permute.xlu0 5
    %2460 = vperm.xlu0 %2459, %v118
    %v2461 = vpop.permute.xlu0 %2460
    %v2464 = vunpack.c.l.s4 839922192
    %v2465 = vunpack.c.0.s8 %v2464
    %v2466 = vlaneseq
    %v2467 = vshrl.u32 %v2466, 7
    %v2468 = vsub.s32 %v2465, %v2467
    %v2469 = vrot.slane %v2461, %v2468
    %2470 = vset.pattern.permute.xlu0 5
    %2471 = vperm.xlu0 %2470, %v119
    %v2472 = vpop.permute.xlu0 %2471
    %v2475 = vunpack.c.l.s4 839922192
    %v2476 = vunpack.c.0.s8 %v2475
    %v2477 = vlaneseq
    %v2478 = vshrl.u32 %v2477, 7
    %v2479 = vsub.s32 %v2476, %v2478
    %v2480 = vrot.slane %v2472, %v2479
    %2481 = vset.pattern.permute.xlu0 5
    %2482 = vperm.xlu0 %2481, %v120
    %v2483 = vpop.permute.xlu0 %2482
    %v2486 = vunpack.c.l.s4 839922192
    %v2487 = vunpack.c.0.s8 %v2486
    %v2488 = vlaneseq
    %v2489 = vshrl.u32 %v2488, 7
    %v2490 = vsub.s32 %v2487, %v2489
    %v2491 = vrot.slane %v2483, %v2490
    %2492 = vset.pattern.permute.xlu0 5
    %2493 = vperm.xlu0 %2492, %v121
    %v2494 = vpop.permute.xlu0 %2493
    %v2497 = vunpack.c.l.s4 839922192
    %v2498 = vunpack.c.0.s8 %v2497
    %v2499 = vlaneseq
    %v2500 = vshrl.u32 %v2499, 7
    %v2501 = vsub.s32 %v2498, %v2500
    %v2502 = vrot.slane %v2494, %v2501
    %2503 = vset.pattern.permute.xlu0 5
    %2504 = vperm.xlu0 %2503, %v122
    %v2505 = vpop.permute.xlu0 %2504
    %v2508 = vunpack.c.l.s4 839922192
    %v2509 = vunpack.c.0.s8 %v2508
    %v2510 = vlaneseq
    %v2511 = vshrl.u32 %v2510, 7
    %v2512 = vsub.s32 %v2509, %v2511
    %v2513 = vrot.slane %v2505, %v2512
    %2514 = vset.pattern.permute.xlu0 5
    %2515 = vperm.xlu0 %2514, %v123
    %v2516 = vpop.permute.xlu0 %2515
    %v2519 = vunpack.c.l.s4 839922192
    %v2520 = vunpack.c.0.s8 %v2519
    %v2521 = vlaneseq
    %v2522 = vshrl.u32 %v2521, 7
    %v2523 = vsub.s32 %v2520, %v2522
    %v2524 = vrot.slane %v2516, %v2523
    %2525 = vset.pattern.permute.xlu0 5
    %2526 = vperm.xlu0 %2525, %v124
    %v2527 = vpop.permute.xlu0 %2526
    %v2530 = vunpack.c.l.s4 839922192
    %v2531 = vunpack.c.0.s8 %v2530
    %v2532 = vlaneseq
    %v2533 = vshrl.u32 %v2532, 7
    %v2534 = vsub.s32 %v2531, %v2533
    %v2535 = vrot.slane %v2527, %v2534
    %2536 = vset.pattern.permute.xlu0 5
    %2537 = vperm.xlu0 %2536, %v125
    %v2538 = vpop.permute.xlu0 %2537
    %v2541 = vunpack.c.l.s4 839922192
    %v2542 = vunpack.c.0.s8 %v2541
    %v2543 = vlaneseq
    %v2544 = vshrl.u32 %v2543, 7
    %v2545 = vsub.s32 %v2542, %v2544
    %v2546 = vrot.slane %v2538, %v2545
    %2547 = vset.pattern.permute.xlu0 5
    %2548 = vperm.xlu0 %2547, %v126
    %v2549 = vpop.permute.xlu0 %2548
    %v2552 = vunpack.c.l.s4 839922192
    %v2553 = vunpack.c.0.s8 %v2552
    %v2554 = vlaneseq
    %v2555 = vshrl.u32 %v2554, 7
    %v2556 = vsub.s32 %v2553, %v2555
    %v2557 = vrot.slane %v2549, %v2556
    %2558 = vset.pattern.permute.xlu0 5
    %2559 = vperm.xlu0 %2558, %v127
    %v2560 = vpop.permute.xlu0 %2559
    %v2563 = vunpack.c.l.s4 839922192
    %v2564 = vunpack.c.0.s8 %v2563
    %v2565 = vlaneseq
    %v2566 = vshrl.u32 %v2565, 7
    %v2567 = vsub.s32 %v2564, %v2566
    %v2568 = vrot.slane %v2560, %v2567
    %2569 = vset.pattern.permute.xlu0 5
    %2570 = vperm.xlu0 %2569, %v128
    %v2571 = vpop.permute.xlu0 %2570
    %v2574 = vunpack.c.l.s4 839922192
    %v2575 = vunpack.c.0.s8 %v2574
    %v2576 = vlaneseq
    %v2577 = vshrl.u32 %v2576, 7
    %v2578 = vsub.s32 %v2575, %v2577
    %v2579 = vrot.slane %v2571, %v2578
    %2580 = vset.pattern.permute.xlu0 5
    %2581 = vperm.xlu0 %2580, %v129
    %v2582 = vpop.permute.xlu0 %2581
    %v2585 = vunpack.c.l.s4 839922192
    %v2586 = vunpack.c.0.s8 %v2585
    %v2587 = vlaneseq
    %v2588 = vshrl.u32 %v2587, 7
    %v2589 = vsub.s32 %v2586, %v2588
    %v2590 = vrot.slane %v2582, %v2589
    %2591 = vset.pattern.permute.xlu0 5
    %2592 = vperm.xlu0 %2591, %v130
    %v2593 = vpop.permute.xlu0 %2592
    %v2596 = vunpack.c.l.s4 839922192
    %v2597 = vunpack.c.0.s8 %v2596
    %v2598 = vlaneseq
    %v2599 = vshrl.u32 %v2598, 7
    %v2600 = vsub.s32 %v2597, %v2599
    %v2601 = vrot.slane %v2593, %v2600
    %2602 = vset.pattern.permute.xlu0 5
    %2603 = vperm.xlu0 %2602, %v131
    %v2604 = vpop.permute.xlu0 %2603
    %v2607 = vunpack.c.l.s4 839922192
    %v2608 = vunpack.c.0.s8 %v2607
    %v2609 = vlaneseq
    %v2610 = vshrl.u32 %v2609, 7
    %v2611 = vsub.s32 %v2608, %v2610
    %v2612 = vrot.slane %v2604, %v2611
    %v2629 = vunpack.c.l.b16 %v2447
    %v2630 = vunpack.c.l.b16 %v2458
    %v2631 = vunpack.c.l.b16 %v2469
    %v2632 = vunpack.c.l.b16 %v2480
    %v2633 = vunpack.c.l.b16 %v2491
    %v2634 = vunpack.c.l.b16 %v2502
    %v2635 = vunpack.c.l.b16 %v2513
    %v2636 = vunpack.c.l.b16 %v2524
    %v2637 = vunpack.c.l.b16 %v2535
    %v2638 = vunpack.c.l.b16 %v2546
    %v2639 = vunpack.c.l.b16 %v2557
    %v2640 = vunpack.c.l.b16 %v2568
    %v2641 = vunpack.c.l.b16 %v2579
    %v2642 = vunpack.c.l.b16 %v2590
    %v2643 = vunpack.c.l.b16 %v2601
    %v2644 = vunpack.c.l.b16 %v2612
    %v2645 = vpack.c.b16 %v2630, %v2629
    %v2646 = vpack.c.b16 %v2632, %v2631
    %v2647 = vpack.c.b16 %v2634, %v2633
    %v2648 = vpack.c.b16 %v2636, %v2635
    %v2649 = vpack.c.b16 %v2638, %v2637
    %v2650 = vpack.c.b16 %v2640, %v2639
    %v2651 = vpack.c.b16 %v2642, %v2641
    %v2652 = vpack.c.b16 %v2644, %v2643
    %v2653 = vrot.slane %v2645, 3
    %v2654 = vrot.slane %v2646, 3
    %v2655 = vsel %vm1097, %v2653, %v2654
    %v2656 = vrot.slane %v2647, 3
    %v2657 = vsel %vm1097, %v2654, %v2656
    %v2658 = vrot.slane %v2648, 3
    %v2659 = vsel %vm1097, %v2656, %v2658
    %v2660 = vrot.slane %v2649, 3
    %v2661 = vsel %vm1097, %v2658, %v2660
    %v2662 = vrot.slane %v2650, 3
    %v2663 = vsel %vm1097, %v2660, %v2662
    %v2664 = vrot.slane %v2651, 3
    %v2665 = vsel %vm1097, %v2662, %v2664
    %v2666 = vrot.slane %v2652, 3
    %v2667 = vsel %vm1097, %v2664, %v2666
    %v2677 = vmul.bf16 %v1099, %v2653
    %v2678 = vmul.bf16 %v1033, %v2655
    %v2679 = vmul.bf16 %v1042, %v2657
    %v2680 = vmul.bf16 %v1051, %v2659
    %v2681 = vmul.bf16 %v1060, %v2661
    %v2682 = vmul.bf16 %v1069, %v2663
    %v2683 = vmul.bf16 %v1078, %v2665
    %v2684 = vmul.bf16 %v1087, %v2667
    %v2685 = vmul.bf16 %v1100, %v2666
    %2686 = vset.pattern.permute.xlu0 6
    %2687 = vperm.xlu0 %2686, %v116
    %v2688 = vpop.permute.xlu0 %2687
    %v2691 = vunpack.c.l.s4 839922192
    %v2692 = vunpack.c.0.s8 %v2691
    %v2693 = vlaneseq
    %v2694 = vshrl.u32 %v2693, 7
    %v2695 = vsub.s32 %v2692, %v2694
    %v2696 = vrot.slane %v2688, %v2695
    %2697 = vset.pattern.permute.xlu0 6
    %2698 = vperm.xlu0 %2697, %v117
    %v2699 = vpop.permute.xlu0 %2698
    %v2702 = vunpack.c.l.s4 839922192
    %v2703 = vunpack.c.0.s8 %v2702
    %v2704 = vlaneseq
    %v2705 = vshrl.u32 %v2704, 7
    %v2706 = vsub.s32 %v2703, %v2705
    %v2707 = vrot.slane %v2699, %v2706
    %2708 = vset.pattern.permute.xlu0 6
    %2709 = vperm.xlu0 %2708, %v118
    %v2710 = vpop.permute.xlu0 %2709
    %v2713 = vunpack.c.l.s4 839922192
    %v2714 = vunpack.c.0.s8 %v2713
    %v2715 = vlaneseq
    %v2716 = vshrl.u32 %v2715, 7
    %v2717 = vsub.s32 %v2714, %v2716
    %v2718 = vrot.slane %v2710, %v2717
    %2719 = vset.pattern.permute.xlu0 6
    %2720 = vperm.xlu0 %2719, %v119
    %v2721 = vpop.permute.xlu0 %2720
    %v2724 = vunpack.c.l.s4 839922192
    %v2725 = vunpack.c.0.s8 %v2724
    %v2726 = vlaneseq
    %v2727 = vshrl.u32 %v2726, 7
    %v2728 = vsub.s32 %v2725, %v2727
    %v2729 = vrot.slane %v2721, %v2728
    %2730 = vset.pattern.permute.xlu0 6
    %2731 = vperm.xlu0 %2730, %v120
    %v2732 = vpop.permute.xlu0 %2731
    %v2735 = vunpack.c.l.s4 839922192
    %v2736 = vunpack.c.0.s8 %v2735
    %v2737 = vlaneseq
    %v2738 = vshrl.u32 %v2737, 7
    %v2739 = vsub.s32 %v2736, %v2738
    %v2740 = vrot.slane %v2732, %v2739
    %2741 = vset.pattern.permute.xlu0 6
    %2742 = vperm.xlu0 %2741, %v121
    %v2743 = vpop.permute.xlu0 %2742
    %v2746 = vunpack.c.l.s4 839922192
    %v2747 = vunpack.c.0.s8 %v2746
    %v2748 = vlaneseq
    %v2749 = vshrl.u32 %v2748, 7
    %v2750 = vsub.s32 %v2747, %v2749
    %v2751 = vrot.slane %v2743, %v2750
    %2752 = vset.pattern.permute.xlu0 6
    %2753 = vperm.xlu0 %2752, %v122
    %v2754 = vpop.permute.xlu0 %2753
    %v2757 = vunpack.c.l.s4 839922192
    %v2758 = vunpack.c.0.s8 %v2757
    %v2759 = vlaneseq
    %v2760 = vshrl.u32 %v2759, 7
    %v2761 = vsub.s32 %v2758, %v2760
    %v2762 = vrot.slane %v2754, %v2761
    %2763 = vset.pattern.permute.xlu0 6
    %2764 = vperm.xlu0 %2763, %v123
    %v2765 = vpop.permute.xlu0 %2764
    %v2768 = vunpack.c.l.s4 839922192
    %v2769 = vunpack.c.0.s8 %v2768
    %v2770 = vlaneseq
    %v2771 = vshrl.u32 %v2770, 7
    %v2772 = vsub.s32 %v2769, %v2771
    %v2773 = vrot.slane %v2765, %v2772
    %2774 = vset.pattern.permute.xlu0 6
    %2775 = vperm.xlu0 %2774, %v124
    %v2776 = vpop.permute.xlu0 %2775
    %v2779 = vunpack.c.l.s4 839922192
    %v2780 = vunpack.c.0.s8 %v2779
    %v2781 = vlaneseq
    %v2782 = vshrl.u32 %v2781, 7
    %v2783 = vsub.s32 %v2780, %v2782
    %v2784 = vrot.slane %v2776, %v2783
    %2785 = vset.pattern.permute.xlu0 6
    %2786 = vperm.xlu0 %2785, %v125
    %v2787 = vpop.permute.xlu0 %2786
    %v2790 = vunpack.c.l.s4 839922192
    %v2791 = vunpack.c.0.s8 %v2790
    %v2792 = vlaneseq
    %v2793 = vshrl.u32 %v2792, 7
    %v2794 = vsub.s32 %v2791, %v2793
    %v2795 = vrot.slane %v2787, %v2794
    %2796 = vset.pattern.permute.xlu0 6
    %2797 = vperm.xlu0 %2796, %v126
    %v2798 = vpop.permute.xlu0 %2797
    %v2801 = vunpack.c.l.s4 839922192
    %v2802 = vunpack.c.0.s8 %v2801
    %v2803 = vlaneseq
    %v2804 = vshrl.u32 %v2803, 7
    %v2805 = vsub.s32 %v2802, %v2804
    %v2806 = vrot.slane %v2798, %v2805
    %2807 = vset.pattern.permute.xlu0 6
    %2808 = vperm.xlu0 %2807, %v127
    %v2809 = vpop.permute.xlu0 %2808
    %v2812 = vunpack.c.l.s4 839922192
    %v2813 = vunpack.c.0.s8 %v2812
    %v2814 = vlaneseq
    %v2815 = vshrl.u32 %v2814, 7
    %v2816 = vsub.s32 %v2813, %v2815
    %v2817 = vrot.slane %v2809, %v2816
    %2818 = vset.pattern.permute.xlu0 6
    %2819 = vperm.xlu0 %2818, %v128
    %v2820 = vpop.permute.xlu0 %2819
    %v2823 = vunpack.c.l.s4 839922192
    %v2824 = vunpack.c.0.s8 %v2823
    %v2825 = vlaneseq
    %v2826 = vshrl.u32 %v2825, 7
    %v2827 = vsub.s32 %v2824, %v2826
    %v2828 = vrot.slane %v2820, %v2827
    %2829 = vset.pattern.permute.xlu0 6
    %2830 = vperm.xlu0 %2829, %v129
    %v2831 = vpop.permute.xlu0 %2830
    %v2834 = vunpack.c.l.s4 839922192
    %v2835 = vunpack.c.0.s8 %v2834
    %v2836 = vlaneseq
    %v2837 = vshrl.u32 %v2836, 7
    %v2838 = vsub.s32 %v2835, %v2837
    %v2839 = vrot.slane %v2831, %v2838
    %2840 = vset.pattern.permute.xlu0 6
    %2841 = vperm.xlu0 %2840, %v130
    %v2842 = vpop.permute.xlu0 %2841
    %v2845 = vunpack.c.l.s4 839922192
    %v2846 = vunpack.c.0.s8 %v2845
    %v2847 = vlaneseq
    %v2848 = vshrl.u32 %v2847, 7
    %v2849 = vsub.s32 %v2846, %v2848
    %v2850 = vrot.slane %v2842, %v2849
    %2851 = vset.pattern.permute.xlu0 6
    %2852 = vperm.xlu0 %2851, %v131
    %v2853 = vpop.permute.xlu0 %2852
    %v2856 = vunpack.c.l.s4 839922192
    %v2857 = vunpack.c.0.s8 %v2856
    %v2858 = vlaneseq
    %v2859 = vshrl.u32 %v2858, 7
    %v2860 = vsub.s32 %v2857, %v2859
    %v2861 = vrot.slane %v2853, %v2860
    %v2878 = vunpack.c.l.b16 %v2696
    %v2879 = vunpack.c.l.b16 %v2707
    %v2880 = vunpack.c.l.b16 %v2718
    %v2881 = vunpack.c.l.b16 %v2729
    %v2882 = vunpack.c.l.b16 %v2740
    %v2883 = vunpack.c.l.b16 %v2751
    %v2884 = vunpack.c.l.b16 %v2762
    %v2885 = vunpack.c.l.b16 %v2773
    %v2886 = vunpack.c.l.b16 %v2784
    %v2887 = vunpack.c.l.b16 %v2795
    %v2888 = vunpack.c.l.b16 %v2806
    %v2889 = vunpack.c.l.b16 %v2817
    %v2890 = vunpack.c.l.b16 %v2828
    %v2891 = vunpack.c.l.b16 %v2839
    %v2892 = vunpack.c.l.b16 %v2850
    %v2893 = vunpack.c.l.b16 %v2861
    %v2894 = vpack.c.b16 %v2879, %v2878
    %v2895 = vpack.c.b16 %v2881, %v2880
    %v2896 = vpack.c.b16 %v2883, %v2882
    %v2897 = vpack.c.b16 %v2885, %v2884
    %v2898 = vpack.c.b16 %v2887, %v2886
    %v2899 = vpack.c.b16 %v2889, %v2888
    %v2900 = vpack.c.b16 %v2891, %v2890
    %v2901 = vpack.c.b16 %v2893, %v2892
    %v2910 = vmul.bf16 %v1033, %v2894
    %v2911 = vmul.bf16 %v1042, %v2895
    %v2912 = vmul.bf16 %v1051, %v2896
    %v2913 = vmul.bf16 %v1060, %v2897
    %v2914 = vmul.bf16 %v1069, %v2898
    %v2915 = vmul.bf16 %v1078, %v2899
    %v2916 = vmul.bf16 %v1087, %v2900
    %v2917 = vmul.bf16 %v1100, %v2901
    %2918 = vset.pattern.permute.xlu0 7
    %2919 = vperm.xlu0 %2918, %v116
    %v2920 = vpop.permute.xlu0 %2919
    %v2923 = vunpack.c.l.s4 839922192
    %v2924 = vunpack.c.0.s8 %v2923
    %v2925 = vlaneseq
    %v2926 = vshrl.u32 %v2925, 7
    %v2927 = vsub.s32 %v2924, %v2926
    %v2928 = vrot.slane %v2920, %v2927
    %2929 = vset.pattern.permute.xlu0 7
    %2930 = vperm.xlu0 %2929, %v117
    %v2931 = vpop.permute.xlu0 %2930
    %v2934 = vunpack.c.l.s4 839922192
    %v2935 = vunpack.c.0.s8 %v2934
    %v2936 = vlaneseq
    %v2937 = vshrl.u32 %v2936, 7
    %v2938 = vsub.s32 %v2935, %v2937
    %v2939 = vrot.slane %v2931, %v2938
    %2940 = vset.pattern.permute.xlu0 7
    %2941 = vperm.xlu0 %2940, %v118
    %v2942 = vpop.permute.xlu0 %2941
    %v2945 = vunpack.c.l.s4 839922192
    %v2946 = vunpack.c.0.s8 %v2945
    %v2947 = vlaneseq
    %v2948 = vshrl.u32 %v2947, 7
    %v2949 = vsub.s32 %v2946, %v2948
    %v2950 = vrot.slane %v2942, %v2949
    %2951 = vset.pattern.permute.xlu0 7
    %2952 = vperm.xlu0 %2951, %v119
    %v2953 = vpop.permute.xlu0 %2952
    %v2956 = vunpack.c.l.s4 839922192
    %v2957 = vunpack.c.0.s8 %v2956
    %v2958 = vlaneseq
    %v2959 = vshrl.u32 %v2958, 7
    %v2960 = vsub.s32 %v2957, %v2959
    %v2961 = vrot.slane %v2953, %v2960
    %2962 = vset.pattern.permute.xlu0 7
    %2963 = vperm.xlu0 %2962, %v120
    %v2964 = vpop.permute.xlu0 %2963
    %v2967 = vunpack.c.l.s4 839922192
    %v2968 = vunpack.c.0.s8 %v2967
    %v2969 = vlaneseq
    %v2970 = vshrl.u32 %v2969, 7
    %v2971 = vsub.s32 %v2968, %v2970
    %v2972 = vrot.slane %v2964, %v2971
    %2973 = vset.pattern.permute.xlu0 7
    %2974 = vperm.xlu0 %2973, %v121
    %v2975 = vpop.permute.xlu0 %2974
    %v2978 = vunpack.c.l.s4 839922192
    %v2979 = vunpack.c.0.s8 %v2978
    %v2980 = vlaneseq
    %v2981 = vshrl.u32 %v2980, 7
    %v2982 = vsub.s32 %v2979, %v2981
    %v2983 = vrot.slane %v2975, %v2982
    %2984 = vset.pattern.permute.xlu0 7
    %2985 = vperm.xlu0 %2984, %v122
    %v2986 = vpop.permute.xlu0 %2985
    %v2989 = vunpack.c.l.s4 839922192
    %v2990 = vunpack.c.0.s8 %v2989
    %v2991 = vlaneseq
    %v2992 = vshrl.u32 %v2991, 7
    %v2993 = vsub.s32 %v2990, %v2992
    %v2994 = vrot.slane %v2986, %v2993
    %2995 = vset.pattern.permute.xlu0 7
    %2996 = vperm.xlu0 %2995, %v123
    %v2997 = vpop.permute.xlu0 %2996
    %v3000 = vunpack.c.l.s4 839922192
    %v3001 = vunpack.c.0.s8 %v3000
    %v3002 = vlaneseq
    %v3003 = vshrl.u32 %v3002, 7
    %v3004 = vsub.s32 %v3001, %v3003
    %v3005 = vrot.slane %v2997, %v3004
    %3006 = vset.pattern.permute.xlu0 7
    %3007 = vperm.xlu0 %3006, %v124
    %v3008 = vpop.permute.xlu0 %3007
    %v3011 = vunpack.c.l.s4 839922192
    %v3012 = vunpack.c.0.s8 %v3011
    %v3013 = vlaneseq
    %v3014 = vshrl.u32 %v3013, 7
    %v3015 = vsub.s32 %v3012, %v3014
    %v3016 = vrot.slane %v3008, %v3015
    %3017 = vset.pattern.permute.xlu0 7
    %3018 = vperm.xlu0 %3017, %v125
    %v3019 = vpop.permute.xlu0 %3018
    %v3022 = vunpack.c.l.s4 839922192
    %v3023 = vunpack.c.0.s8 %v3022
    %v3024 = vlaneseq
    %v3025 = vshrl.u32 %v3024, 7
    %v3026 = vsub.s32 %v3023, %v3025
    %v3027 = vrot.slane %v3019, %v3026
    %3028 = vset.pattern.permute.xlu0 7
    %3029 = vperm.xlu0 %3028, %v126
    %v3030 = vpop.permute.xlu0 %3029
    %v3033 = vunpack.c.l.s4 839922192
    %v3034 = vunpack.c.0.s8 %v3033
    %v3035 = vlaneseq
    %v3036 = vshrl.u32 %v3035, 7
    %v3037 = vsub.s32 %v3034, %v3036
    %v3038 = vrot.slane %v3030, %v3037
    %3039 = vset.pattern.permute.xlu0 7
    %3040 = vperm.xlu0 %3039, %v127
    %v3041 = vpop.permute.xlu0 %3040
    %v3044 = vunpack.c.l.s4 839922192
    %v3045 = vunpack.c.0.s8 %v3044
    %v3046 = vlaneseq
    %v3047 = vshrl.u32 %v3046, 7
    %v3048 = vsub.s32 %v3045, %v3047
    %v3049 = vrot.slane %v3041, %v3048
    %3050 = vset.pattern.permute.xlu0 7
    %3051 = vperm.xlu0 %3050, %v128
    %v3052 = vpop.permute.xlu0 %3051
    %v3055 = vunpack.c.l.s4 839922192
    %v3056 = vunpack.c.0.s8 %v3055
    %v3057 = vlaneseq
    %v3058 = vshrl.u32 %v3057, 7
    %v3059 = vsub.s32 %v3056, %v3058
    %v3060 = vrot.slane %v3052, %v3059
    %3061 = vset.pattern.permute.xlu0 7
    %3062 = vperm.xlu0 %3061, %v129
    %v3063 = vpop.permute.xlu0 %3062
    %v3066 = vunpack.c.l.s4 839922192
    %v3067 = vunpack.c.0.s8 %v3066
    %v3068 = vlaneseq
    %v3069 = vshrl.u32 %v3068, 7
    %v3070 = vsub.s32 %v3067, %v3069
    %v3071 = vrot.slane %v3063, %v3070
    %3072 = vset.pattern.permute.xlu0 7
    %3073 = vperm.xlu0 %3072, %v130
    %v3074 = vpop.permute.xlu0 %3073
    %v3077 = vunpack.c.l.s4 839922192
    %v3078 = vunpack.c.0.s8 %v3077
    %v3079 = vlaneseq
    %v3080 = vshrl.u32 %v3079, 7
    %v3081 = vsub.s32 %v3078, %v3080
    %v3082 = vrot.slane %v3074, %v3081
    %3083 = vset.pattern.permute.xlu0 7
    %3084 = vperm.xlu0 %3083, %v131
    %v3085 = vpop.permute.xlu0 %3084
    %v3088 = vunpack.c.l.s4 839922192
    %v3089 = vunpack.c.0.s8 %v3088
    %v3090 = vlaneseq
    %v3091 = vshrl.u32 %v3090, 7
    %v3092 = vsub.s32 %v3089, %v3091
    %v3093 = vrot.slane %v3085, %v3092
    %v3110 = vunpack.c.l.b16 %v2928
    %v3111 = vunpack.c.l.b16 %v2939
    %v3112 = vunpack.c.l.b16 %v2950
    %v3113 = vunpack.c.l.b16 %v2961
    %v3114 = vunpack.c.l.b16 %v2972
    %v3115 = vunpack.c.l.b16 %v2983
    %v3116 = vunpack.c.l.b16 %v2994
    %v3117 = vunpack.c.l.b16 %v3005
    %v3118 = vunpack.c.l.b16 %v3016
    %v3119 = vunpack.c.l.b16 %v3027
    %v3120 = vunpack.c.l.b16 %v3038
    %v3121 = vunpack.c.l.b16 %v3049
    %v3122 = vunpack.c.l.b16 %v3060
    %v3123 = vunpack.c.l.b16 %v3071
    %v3124 = vunpack.c.l.b16 %v3082
    %v3125 = vunpack.c.l.b16 %v3093
    %v3126 = vpack.c.b16 %v3111, %v3110
    %v3127 = vpack.c.b16 %v3113, %v3112
    %v3128 = vpack.c.b16 %v3115, %v3114
    %v3129 = vpack.c.b16 %v3117, %v3116
    %v3130 = vpack.c.b16 %v3119, %v3118
    %v3131 = vpack.c.b16 %v3121, %v3120
    %v3132 = vpack.c.b16 %v3123, %v3122
    %v3133 = vpack.c.b16 %v3125, %v3124
    %v3135 = vshrl.u32 %v3126, 16
    %v3137 = vrot.slane %v3135, 7
    %v3138 = vshll.u32 %v3126, 16
    %v3140 = vor.u32 %v3137, %v3138
    %v3142 = vshrl.u32 %v3127, 16
    %v3144 = vrot.slane %v3142, 7
    %v3145 = vshll.u32 %v3127, 16
    %v3147 = vor.u32 %v3144, %v3145
    %v3148 = vsel %vm1565, %v3137, %v3147
    %v3150 = vshrl.u32 %v3128, 16
    %v3152 = vrot.slane %v3150, 7
    %v3153 = vshll.u32 %v3128, 16
    %v3155 = vor.u32 %v3152, %v3153
    %v3156 = vsel %vm1565, %v3144, %v3155
    %v3158 = vshrl.u32 %v3129, 16
    %v3160 = vrot.slane %v3158, 7
    %v3161 = vshll.u32 %v3129, 16
    %v3163 = vor.u32 %v3160, %v3161
    %v3164 = vsel %vm1565, %v3152, %v3163
    %v3166 = vshrl.u32 %v3130, 16
    %v3168 = vrot.slane %v3166, 7
    %v3169 = vshll.u32 %v3130, 16
    %v3171 = vor.u32 %v3168, %v3169
    %v3172 = vsel %vm1565, %v3160, %v3171
    %v3174 = vshrl.u32 %v3131, 16
    %v3176 = vrot.slane %v3174, 7
    %v3177 = vshll.u32 %v3131, 16
    %v3179 = vor.u32 %v3176, %v3177
    %v3180 = vsel %vm1565, %v3168, %v3179
    %v3182 = vshrl.u32 %v3132, 16
    %v3184 = vrot.slane %v3182, 7
    %v3185 = vshll.u32 %v3132, 16
    %v3187 = vor.u32 %v3184, %v3185
    %v3188 = vsel %vm1565, %v3176, %v3187
    %v3190 = vshrl.u32 %v3133, 16
    %v3192 = vrot.slane %v3190, 7
    %v3193 = vshll.u32 %v3133, 16
    %v3195 = vor.u32 %v3192, %v3193
    %v3196 = vsel %vm1565, %v3184, %v3195
    %v3206 = vmul.bf16 %v1033, %v3140
    %v3207 = vmul.bf16 %v1042, %v3148
    %v3208 = vmul.bf16 %v1051, %v3156
    %v3209 = vmul.bf16 %v1060, %v3164
    %v3210 = vmul.bf16 %v1069, %v3172
    %v3211 = vmul.bf16 %v1078, %v3180
    %v3212 = vmul.bf16 %v1087, %v3188
    %v3213 = vmul.bf16 %v1100, %v3196
    %v3214 = vmul.bf16 %v3192, 0
    %3215 = vset.pattern.permute.xlu0 8
    %3216 = vperm.xlu0 %3215, %v116
    %v3217 = vpop.permute.xlu0 %3216
    %v3220 = vunpack.c.l.s4 839922192
    %v3221 = vunpack.c.0.s8 %v3220
    %v3222 = vlaneseq
    %v3223 = vshrl.u32 %v3222, 7
    %v3224 = vsub.s32 %v3221, %v3223
    %v3225 = vrot.slane %v3217, %v3224
    %3226 = vset.pattern.permute.xlu0 8
    %3227 = vperm.xlu0 %3226, %v117
    %v3228 = vpop.permute.xlu0 %3227
    %v3231 = vunpack.c.l.s4 839922192
    %v3232 = vunpack.c.0.s8 %v3231
    %v3233 = vlaneseq
    %v3234 = vshrl.u32 %v3233, 7
    %v3235 = vsub.s32 %v3232, %v3234
    %v3236 = vrot.slane %v3228, %v3235
    %3237 = vset.pattern.permute.xlu0 8
    %3238 = vperm.xlu0 %3237, %v118
    %v3239 = vpop.permute.xlu0 %3238
    %v3242 = vunpack.c.l.s4 839922192
    %v3243 = vunpack.c.0.s8 %v3242
    %v3244 = vlaneseq
    %v3245 = vshrl.u32 %v3244, 7
    %v3246 = vsub.s32 %v3243, %v3245
    %v3247 = vrot.slane %v3239, %v3246
    %3248 = vset.pattern.permute.xlu0 8
    %3249 = vperm.xlu0 %3248, %v119
    %v3250 = vpop.permute.xlu0 %3249
    %v3253 = vunpack.c.l.s4 839922192
    %v3254 = vunpack.c.0.s8 %v3253
    %v3255 = vlaneseq
    %v3256 = vshrl.u32 %v3255, 7
    %v3257 = vsub.s32 %v3254, %v3256
    %v3258 = vrot.slane %v3250, %v3257
    %3259 = vset.pattern.permute.xlu0 8
    %3260 = vperm.xlu0 %3259, %v120
    %v3261 = vpop.permute.xlu0 %3260
    %v3264 = vunpack.c.l.s4 839922192
    %v3265 = vunpack.c.0.s8 %v3264
    %v3266 = vlaneseq
    %v3267 = vshrl.u32 %v3266, 7
    %v3268 = vsub.s32 %v3265, %v3267
    %v3269 = vrot.slane %v3261, %v3268
    %3270 = vset.pattern.permute.xlu0 8
    %3271 = vperm.xlu0 %3270, %v121
    %v3272 = vpop.permute.xlu0 %3271
    %v3275 = vunpack.c.l.s4 839922192
    %v3276 = vunpack.c.0.s8 %v3275
    %v3277 = vlaneseq
    %v3278 = vshrl.u32 %v3277, 7
    %v3279 = vsub.s32 %v3276, %v3278
    %v3280 = vrot.slane %v3272, %v3279
    %3281 = vset.pattern.permute.xlu0 8
    %3282 = vperm.xlu0 %3281, %v122
    %v3283 = vpop.permute.xlu0 %3282
    %v3286 = vunpack.c.l.s4 839922192
    %v3287 = vunpack.c.0.s8 %v3286
    %v3288 = vlaneseq
    %v3289 = vshrl.u32 %v3288, 7
    %v3290 = vsub.s32 %v3287, %v3289
    %v3291 = vrot.slane %v3283, %v3290
    %3292 = vset.pattern.permute.xlu0 8
    %3293 = vperm.xlu0 %3292, %v123
    %v3294 = vpop.permute.xlu0 %3293
    %v3297 = vunpack.c.l.s4 839922192
    %v3298 = vunpack.c.0.s8 %v3297
    %v3299 = vlaneseq
    %v3300 = vshrl.u32 %v3299, 7
    %v3301 = vsub.s32 %v3298, %v3300
    %v3302 = vrot.slane %v3294, %v3301
    %3303 = vset.pattern.permute.xlu0 8
    %3304 = vperm.xlu0 %3303, %v124
    %v3305 = vpop.permute.xlu0 %3304
    %v3308 = vunpack.c.l.s4 839922192
    %v3309 = vunpack.c.0.s8 %v3308
    %v3310 = vlaneseq
    %v3311 = vshrl.u32 %v3310, 7
    %v3312 = vsub.s32 %v3309, %v3311
    %v3313 = vrot.slane %v3305, %v3312
    %3314 = vset.pattern.permute.xlu0 8
    %3315 = vperm.xlu0 %3314, %v125
    %v3316 = vpop.permute.xlu0 %3315
    %v3319 = vunpack.c.l.s4 839922192
    %v3320 = vunpack.c.0.s8 %v3319
    %v3321 = vlaneseq
    %v3322 = vshrl.u32 %v3321, 7
    %v3323 = vsub.s32 %v3320, %v3322
    %v3324 = vrot.slane %v3316, %v3323
    %3325 = vset.pattern.permute.xlu0 8
    %3326 = vperm.xlu0 %3325, %v126
    %v3327 = vpop.permute.xlu0 %3326
    %v3330 = vunpack.c.l.s4 839922192
    %v3331 = vunpack.c.0.s8 %v3330
    %v3332 = vlaneseq
    %v3333 = vshrl.u32 %v3332, 7
    %v3334 = vsub.s32 %v3331, %v3333
    %v3335 = vrot.slane %v3327, %v3334
    %3336 = vset.pattern.permute.xlu0 8
    %3337 = vperm.xlu0 %3336, %v127
    %v3338 = vpop.permute.xlu0 %3337
    %v3341 = vunpack.c.l.s4 839922192
    %v3342 = vunpack.c.0.s8 %v3341
    %v3343 = vlaneseq
    %v3344 = vshrl.u32 %v3343, 7
    %v3345 = vsub.s32 %v3342, %v3344
    %v3346 = vrot.slane %v3338, %v3345
    %3347 = vset.pattern.permute.xlu0 8
    %3348 = vperm.xlu0 %3347, %v128
    %v3349 = vpop.permute.xlu0 %3348
    %v3352 = vunpack.c.l.s4 839922192
    %v3353 = vunpack.c.0.s8 %v3352
    %v3354 = vlaneseq
    %v3355 = vshrl.u32 %v3354, 7
    %v3356 = vsub.s32 %v3353, %v3355
    %v3357 = vrot.slane %v3349, %v3356
    %3358 = vset.pattern.permute.xlu0 8
    %3359 = vperm.xlu0 %3358, %v129
    %v3360 = vpop.permute.xlu0 %3359
    %v3363 = vunpack.c.l.s4 839922192
    %v3364 = vunpack.c.0.s8 %v3363
    %v3365 = vlaneseq
    %v3366 = vshrl.u32 %v3365, 7
    %v3367 = vsub.s32 %v3364, %v3366
    %v3368 = vrot.slane %v3360, %v3367
    %3369 = vset.pattern.permute.xlu0 8
    %3370 = vperm.xlu0 %3369, %v130
    %v3371 = vpop.permute.xlu0 %3370
    %v3374 = vunpack.c.l.s4 839922192
    %v3375 = vunpack.c.0.s8 %v3374
    %v3376 = vlaneseq
    %v3377 = vshrl.u32 %v3376, 7
    %v3378 = vsub.s32 %v3375, %v3377
    %v3379 = vrot.slane %v3371, %v3378
    %3380 = vset.pattern.permute.xlu0 8
    %3381 = vperm.xlu0 %3380, %v131
    %v3382 = vpop.permute.xlu0 %3381
    %v3385 = vunpack.c.l.s4 839922192
    %v3386 = vunpack.c.0.s8 %v3385
    %v3387 = vlaneseq
    %v3388 = vshrl.u32 %v3387, 7
    %v3389 = vsub.s32 %v3386, %v3388
    %v3390 = vrot.slane %v3382, %v3389
    %v3407 = vunpack.c.l.b16 %v3225
    %v3408 = vunpack.c.l.b16 %v3236
    %v3409 = vunpack.c.l.b16 %v3247
    %v3410 = vunpack.c.l.b16 %v3258
    %v3411 = vunpack.c.l.b16 %v3269
    %v3412 = vunpack.c.l.b16 %v3280
    %v3413 = vunpack.c.l.b16 %v3291
    %v3414 = vunpack.c.l.b16 %v3302
    %v3415 = vunpack.c.l.b16 %v3313
    %v3416 = vunpack.c.l.b16 %v3324
    %v3417 = vunpack.c.l.b16 %v3335
    %v3418 = vunpack.c.l.b16 %v3346
    %v3419 = vunpack.c.l.b16 %v3357
    %v3420 = vunpack.c.l.b16 %v3368
    %v3421 = vunpack.c.l.b16 %v3379
    %v3422 = vunpack.c.l.b16 %v3390
    %v3423 = vpack.c.b16 %v3408, %v3407
    %v3424 = vpack.c.b16 %v3410, %v3409
    %v3425 = vpack.c.b16 %v3412, %v3411
    %v3426 = vpack.c.b16 %v3414, %v3413
    %v3427 = vpack.c.b16 %v3416, %v3415
    %v3428 = vpack.c.b16 %v3418, %v3417
    %v3429 = vpack.c.b16 %v3420, %v3419
    %v3430 = vpack.c.b16 %v3422, %v3421
    %v3431 = vrot.slane %v3423, 7
    %v3432 = vrot.slane %v3424, 7
    %v3433 = vsel %vm1863, %v3431, %v3432
    %v3434 = vrot.slane %v3425, 7
    %v3435 = vsel %vm1863, %v3432, %v3434
    %v3436 = vrot.slane %v3426, 7
    %v3437 = vsel %vm1863, %v3434, %v3436
    %v3438 = vrot.slane %v3427, 7
    %v3439 = vsel %vm1863, %v3436, %v3438
    %v3440 = vrot.slane %v3428, 7
    %v3441 = vsel %vm1863, %v3438, %v3440
    %v3442 = vrot.slane %v3429, 7
    %v3443 = vsel %vm1863, %v3440, %v3442
    %v3444 = vrot.slane %v3430, 7
    %v3445 = vsel %vm1863, %v3442, %v3444
    %v3455 = vmul.bf16 %v1033, %v3431
    %v3456 = vmul.bf16 %v1042, %v3433
    %v3457 = vmul.bf16 %v1051, %v3435
    %v3458 = vmul.bf16 %v1060, %v3437
    %v3459 = vmul.bf16 %v1069, %v3439
    %v3460 = vmul.bf16 %v1078, %v3441
    %v3461 = vmul.bf16 %v1087, %v3443
    %v3462 = vmul.bf16 %v1100, %v3445
    %v3463 = vmul.bf16 %v3444, 0
    %vm3464 = vsmask.f32 7424
    %v3466 = vshrl.u32 %v1638, 16
    %v3468 = vshll.u32 %v1638, 16
    %v3470 = vrot.slane %v3468, 1
    %v3471 = vor.u32 %v3466, %v3470
    %v3473 = vshll.u32 %v1639, 16
    %v3475 = vrot.slane %v3473, 1
    %v3476 = vsel %vm3464, %v3471, %v3475
    %v3477 = vshrl.u32 %v1639, 16
    %v3479 = vor.u32 %v3477, %v3475
    %v3481 = vshll.u32 %v1640, 16
    %v3483 = vrot.slane %v3481, 1
    %v3484 = vsel %vm3464, %v3479, %v3483
    %v3485 = vshrl.u32 %v1640, 16
    %v3487 = vor.u32 %v3485, %v3483
    %v3489 = vshll.u32 %v1641, 16
    %v3491 = vrot.slane %v3489, 1
    %v3492 = vsel %vm3464, %v3487, %v3491
    %v3493 = vshrl.u32 %v1641, 16
    %v3495 = vor.u32 %v3493, %v3491
    %v3497 = vshll.u32 %v1642, 16
    %v3499 = vrot.slane %v3497, 1
    %v3500 = vsel %vm3464, %v3495, %v3499
    %v3501 = vshrl.u32 %v1642, 16
    %v3503 = vor.u32 %v3501, %v3499
    %v3505 = vshll.u32 %v1643, 16
    %v3507 = vrot.slane %v3505, 1
    %v3508 = vsel %vm3464, %v3503, %v3507
    %v3509 = vshrl.u32 %v1643, 16
    %v3511 = vor.u32 %v3509, %v3507
    %v3513 = vshll.u32 %v1644, 16
    %v3515 = vrot.slane %v3513, 1
    %v3516 = vsel %vm3464, %v3511, %v3515
    %v3517 = vshrl.u32 %v1644, 16
    %v3519 = vor.u32 %v3517, %v3515
    %v3521 = vshll.u32 %v1645, 16
    %v3523 = vrot.slane %v3521, 1
    %v3524 = vsel %vm3464, %v3519, %v3523
    %v3525 = vshrl.u32 %v1645, 16
    %v3527 = vor.u32 %v3525, %v3523
    %v3529 = vshll.u32 %v1646, 16
    %v3531 = vrot.slane %v3529, 1
    %v3532 = vsel %vm3464, %v3527, %v3531
    %3533 = vrot.lane.b32.xlu0 %v3476, 64
    %v3534 = vpop.permute.xlu0 %3533
    %3535 = vrot.lane.b32.xlu0 %v3484, 64
    %v3536 = vpop.permute.xlu0 %3535
    %3537 = vrot.lane.b32.xlu0 %v3492, 64
    %v3538 = vpop.permute.xlu0 %3537
    %3539 = vrot.lane.b32.xlu0 %v3500, 64
    %v3540 = vpop.permute.xlu0 %3539
    %3541 = vrot.lane.b32.xlu0 %v3508, 64
    %v3542 = vpop.permute.xlu0 %3541
    %3543 = vrot.lane.b32.xlu0 %v3516, 64
    %v3544 = vpop.permute.xlu0 %3543
    %3545 = vrot.lane.b32.xlu0 %v3524, 64
    %v3546 = vpop.permute.xlu0 %3545
    %3547 = vrot.lane.b32.xlu0 %v3532, 64
    %v3548 = vpop.permute.xlu0 %3547
    %vm3558 = vcmask 1046528
    %v3559 = vrot.slane %v1888, 1
    %v3560 = vrot.slane %v1889, 1
    %v3561 = vsel %vm3558, %v3559, %v3560
    %v3562 = vrot.slane %v1890, 1
    %v3563 = vsel %vm3558, %v3560, %v3562
    %v3564 = vrot.slane %v1891, 1
    %v3565 = vsel %vm3558, %v3562, %v3564
    %v3566 = vrot.slane %v1892, 1
    %v3567 = vsel %vm3558, %v3564, %v3566
    %v3568 = vrot.slane %v1893, 1
    %v3569 = vsel %vm3558, %v3566, %v3568
    %v3570 = vrot.slane %v1894, 1
    %v3571 = vsel %vm3558, %v3568, %v3570
    %v3572 = vrot.slane %v1895, 1
    %v3573 = vsel %vm3558, %v3570, %v3572
    %v3574 = vrot.slane %v1896, 1
    %v3575 = vsel %vm3558, %v3572, %v3574
    %vm3585 = vcmask 1043456
    %v3586 = vrot.slane %v2123, 4
    %v3587 = vrot.slane %v2124, 4
    %v3588 = vsel %vm3585, %v3586, %v3587
    %v3589 = vrot.slane %v2125, 4
    %v3590 = vsel %vm3585, %v3587, %v3589
    %v3591 = vrot.slane %v2126, 4
    %v3592 = vsel %vm3585, %v3589, %v3591
    %v3593 = vrot.slane %v2127, 4
    %v3594 = vsel %vm3585, %v3591, %v3593
    %v3595 = vrot.slane %v2128, 4
    %v3596 = vsel %vm3585, %v3593, %v3595
    %v3597 = vrot.slane %v2129, 4
    %v3598 = vsel %vm3585, %v3595, %v3597
    %v3599 = vrot.slane %v2130, 4
    %v3600 = vsel %vm3585, %v3597, %v3599
    %v3601 = vrot.slane %v2131, 4
    %v3602 = vsel %vm3585, %v3599, %v3601
    %3603 = vrot.lane.b32.xlu0 %v3588, 64
    %v3604 = vpop.permute.xlu0 %3603
    %3605 = vrot.lane.b32.xlu0 %v3590, 64
    %v3606 = vpop.permute.xlu0 %3605
    %3607 = vrot.lane.b32.xlu0 %v3592, 64
    %v3608 = vpop.permute.xlu0 %3607
    %3609 = vrot.lane.b32.xlu0 %v3594, 64
    %v3610 = vpop.permute.xlu0 %3609
    %3611 = vrot.lane.b32.xlu0 %v3596, 64
    %v3612 = vpop.permute.xlu0 %3611
    %3613 = vrot.lane.b32.xlu0 %v3598, 64
    %v3614 = vpop.permute.xlu0 %3613
    %3615 = vrot.lane.b32.xlu0 %v3600, 64
    %v3616 = vpop.permute.xlu0 %3615
    %3617 = vrot.lane.b32.xlu0 %v3602, 64
    %v3618 = vpop.permute.xlu0 %3617
    %vm3619 = vsmask.f32 3328
    %v3621 = vshrl.u32 %v2428, 16
    %v3623 = vrot.slane %v3621, 4
    %v3624 = vshll.u32 %v2428, 16
    %v3626 = vrot.slane %v3624, 5
    %v3627 = vor.u32 %v3623, %v3626
    %v3629 = vshrl.u32 %v2429, 16
    %v3631 = vrot.slane %v3629, 4
    %v3632 = vshll.u32 %v2429, 16
    %v3634 = vrot.slane %v3632, 5
    %v3635 = vor.u32 %v3631, %v3634
    %v3636 = vsel %vm3619, %v3627, %v3635
    %v3638 = vshrl.u32 %v2430, 16
    %v3640 = vrot.slane %v3638, 4
    %v3641 = vshll.u32 %v2430, 16
    %v3643 = vrot.slane %v3641, 5
    %v3644 = vor.u32 %v3640, %v3643
    %v3645 = vsel %vm3619, %v3635, %v3644
    %v3647 = vshrl.u32 %v2431, 16
    %v3649 = vrot.slane %v3647, 4
    %v3650 = vshll.u32 %v2431, 16
    %v3652 = vrot.slane %v3650, 5
    %v3653 = vor.u32 %v3649, %v3652
    %v3654 = vsel %vm3619, %v3644, %v3653
    %v3656 = vshrl.u32 %v2432, 16
    %v3658 = vrot.slane %v3656, 4
    %v3659 = vshll.u32 %v2432, 16
    %v3661 = vrot.slane %v3659, 5
    %v3662 = vor.u32 %v3658, %v3661
    %v3663 = vsel %vm3619, %v3653, %v3662
    %v3665 = vshrl.u32 %v2433, 16
    %v3667 = vrot.slane %v3665, 4
    %v3668 = vshll.u32 %v2433, 16
    %v3670 = vrot.slane %v3668, 5
    %v3671 = vor.u32 %v3667, %v3670
    %v3672 = vsel %vm3619, %v3662, %v3671
    %v3674 = vshrl.u32 %v2434, 16
    %v3676 = vrot.slane %v3674, 4
    %v3677 = vshll.u32 %v2434, 16
    %v3679 = vrot.slane %v3677, 5
    %v3680 = vor.u32 %v3676, %v3679
    %v3681 = vsel %vm3619, %v3671, %v3680
    %v3683 = vshrl.u32 %v2435, 16
    %v3685 = vrot.slane %v3683, 4
    %v3686 = vshll.u32 %v2435, 16
    %v3688 = vrot.slane %v3686, 5
    %v3689 = vor.u32 %v3685, %v3688
    %v3690 = vsel %vm3619, %v3680, %v3689
    %v3692 = vshrl.u32 %v2436, 16
    %v3694 = vrot.slane %v3692, 4
    %v3695 = vshll.u32 %v2436, 16
    %v3697 = vrot.slane %v3695, 5
    %v3698 = vor.u32 %v3694, %v3697
    %v3699 = vsel %vm3619, %v3689, %v3698
    %vm3709 = vcmask 1042432
    %v3710 = vrot.slane %v2677, 5
    %v3711 = vrot.slane %v2678, 5
    %v3712 = vsel %vm3709, %v3710, %v3711
    %v3713 = vrot.slane %v2679, 5
    %v3714 = vsel %vm3709, %v3711, %v3713
    %v3715 = vrot.slane %v2680, 5
    %v3716 = vsel %vm3709, %v3713, %v3715
    %v3717 = vrot.slane %v2681, 5
    %v3718 = vsel %vm3709, %v3715, %v3717
    %v3719 = vrot.slane %v2682, 5
    %v3720 = vsel %vm3709, %v3717, %v3719
    %v3721 = vrot.slane %v2683, 5
    %v3722 = vsel %vm3709, %v3719, %v3721
    %v3723 = vrot.slane %v2684, 5
    %v3724 = vsel %vm3709, %v3721, %v3723
    %v3725 = vrot.slane %v2685, 5
    %v3726 = vsel %vm3709, %v3723, %v3725
    %3727 = vrot.lane.b32.xlu0 %v3712, 64
    %v3728 = vpop.permute.xlu0 %3727
    %3729 = vrot.lane.b32.xlu0 %v3714, 64
    %v3730 = vpop.permute.xlu0 %3729
    %3731 = vrot.lane.b32.xlu0 %v3716, 64
    %v3732 = vpop.permute.xlu0 %3731
    %3733 = vrot.lane.b32.xlu0 %v3718, 64
    %v3734 = vpop.permute.xlu0 %3733
    %3735 = vrot.lane.b32.xlu0 %v3720, 64
    %v3736 = vpop.permute.xlu0 %3735
    %3737 = vrot.lane.b32.xlu0 %v3722, 64
    %v3738 = vpop.permute.xlu0 %3737
    %3739 = vrot.lane.b32.xlu0 %v3724, 64
    %v3740 = vpop.permute.xlu0 %3739
    %3741 = vrot.lane.b32.xlu0 %v3726, 64
    %v3742 = vpop.permute.xlu0 %3741
    %v3744 = vshrl.u32 %v3206, 16
    %v3746 = vshll.u32 %v3206, 16
    %v3748 = vrot.slane %v3746, 1
    %v3749 = vor.u32 %v3744, %v3748
    %v3751 = vshll.u32 %v3207, 16
    %v3753 = vrot.slane %v3751, 1
    %v3754 = vsel %vm3464, %v3749, %v3753
    %v3755 = vshrl.u32 %v3207, 16
    %v3757 = vor.u32 %v3755, %v3753
    %v3759 = vshll.u32 %v3208, 16
    %v3761 = vrot.slane %v3759, 1
    %v3762 = vsel %vm3464, %v3757, %v3761
    %v3763 = vshrl.u32 %v3208, 16
    %v3765 = vor.u32 %v3763, %v3761
    %v3767 = vshll.u32 %v3209, 16
    %v3769 = vrot.slane %v3767, 1
    %v3770 = vsel %vm3464, %v3765, %v3769
    %v3771 = vshrl.u32 %v3209, 16
    %v3773 = vor.u32 %v3771, %v3769
    %v3775 = vshll.u32 %v3210, 16
    %v3777 = vrot.slane %v3775, 1
    %v3778 = vsel %vm3464, %v3773, %v3777
    %v3779 = vshrl.u32 %v3210, 16
    %v3781 = vor.u32 %v3779, %v3777
    %v3783 = vshll.u32 %v3211, 16
    %v3785 = vrot.slane %v3783, 1
    %v3786 = vsel %vm3464, %v3781, %v3785
    %v3787 = vshrl.u32 %v3211, 16
    %v3789 = vor.u32 %v3787, %v3785
    %v3791 = vshll.u32 %v3212, 16
    %v3793 = vrot.slane %v3791, 1
    %v3794 = vsel %vm3464, %v3789, %v3793
    %v3795 = vshrl.u32 %v3212, 16
    %v3797 = vor.u32 %v3795, %v3793
    %v3799 = vshll.u32 %v3213, 16
    %v3801 = vrot.slane %v3799, 1
    %v3802 = vsel %vm3464, %v3797, %v3801
    %v3803 = vshrl.u32 %v3213, 16
    %v3805 = vor.u32 %v3803, %v3801
    %v3807 = vshll.u32 %v3214, 16
    %v3809 = vrot.slane %v3807, 1
    %v3810 = vsel %vm3464, %v3805, %v3809
    %3811 = vrot.lane.b32.xlu0 %v3754, 64
    %v3812 = vpop.permute.xlu0 %3811
    %3813 = vrot.lane.b32.xlu0 %v3762, 64
    %v3814 = vpop.permute.xlu0 %3813
    %3815 = vrot.lane.b32.xlu0 %v3770, 64
    %v3816 = vpop.permute.xlu0 %3815
    %3817 = vrot.lane.b32.xlu0 %v3778, 64
    %v3818 = vpop.permute.xlu0 %3817
    %3819 = vrot.lane.b32.xlu0 %v3786, 64
    %v3820 = vpop.permute.xlu0 %3819
    %3821 = vrot.lane.b32.xlu0 %v3794, 64
    %v3822 = vpop.permute.xlu0 %3821
    %3823 = vrot.lane.b32.xlu0 %v3802, 64
    %v3824 = vpop.permute.xlu0 %3823
    %3825 = vrot.lane.b32.xlu0 %v3810, 64
    %v3826 = vpop.permute.xlu0 %3825
    %v3836 = vrot.slane %v3455, 1
    %v3837 = vrot.slane %v3456, 1
    %v3838 = vsel %vm3558, %v3836, %v3837
    %v3839 = vrot.slane %v3457, 1
    %v3840 = vsel %vm3558, %v3837, %v3839
    %v3841 = vrot.slane %v3458, 1
    %v3842 = vsel %vm3558, %v3839, %v3841
    %v3843 = vrot.slane %v3459, 1
    %v3844 = vsel %vm3558, %v3841, %v3843
    %v3845 = vrot.slane %v3460, 1
    %v3846 = vsel %vm3558, %v3843, %v3845
    %v3847 = vrot.slane %v3461, 1
    %v3848 = vsel %vm3558, %v3845, %v3847
    %v3849 = vrot.slane %v3462, 1
    %v3850 = vsel %vm3558, %v3847, %v3849
    %v3851 = vrot.slane %v3463, 1
    %v3852 = vsel %vm3558, %v3849, %v3851
    %v3855 = vsel %vm352, %v1341, %v3534
    %v3859 = vsel %vm352, %v1342, %v3536
    %v3863 = vsel %vm352, %v1343, %v3538
    %v3867 = vsel %vm352, %v1344, %v3540
    %v3871 = vsel %vm352, %v1345, %v3542
    %v3875 = vsel %vm352, %v1346, %v3544
    %v3879 = vsel %vm352, %v1347, %v3546
    %v3883 = vsel %vm352, %v1348, %v3548
    %v3887 = vsel %vm352, %v3561, %v3604
    %v3891 = vsel %vm352, %v3563, %v3606
    %v3895 = vsel %vm352, %v3565, %v3608
    %v3899 = vsel %vm352, %v3567, %v3610
    %v3903 = vsel %vm352, %v3569, %v3612
    %v3907 = vsel %vm352, %v3571, %v3614
    %v3911 = vsel %vm352, %v3573, %v3616
    %v3915 = vsel %vm352, %v3575, %v3618
    %v3919 = vsel %vm352, %v3636, %v3728
    %v3923 = vsel %vm352, %v3645, %v3730
    %v3927 = vsel %vm352, %v3654, %v3732
    %v3931 = vsel %vm352, %v3663, %v3734
    %v3935 = vsel %vm352, %v3672, %v3736
    %v3939 = vsel %vm352, %v3681, %v3738
    %v3943 = vsel %vm352, %v3690, %v3740
    %v3947 = vsel %vm352, %v3699, %v3742
    %v3951 = vsel %vm352, %v2910, %v3812
    %v3955 = vsel %vm352, %v2911, %v3814
    %v3959 = vsel %vm352, %v2912, %v3816
    %v3963 = vsel %vm352, %v2913, %v3818
    %v3967 = vsel %vm352, %v2914, %v3820
    %v3971 = vsel %vm352, %v2915, %v3822
    %v3975 = vsel %vm352, %v2916, %v3824
    %v3979 = vsel %vm352, %v2917, %v3826
    %v3982 = vlaneseq
    %v3983 = vshrl.u32 %v3982, 7
    %v3984 = vsub.s32 0, %v3983
    %v3985 = vrot.slane %v206, %v3984
    %v4059 = vunpack.c.l.b16 %v134
    %v4060 = vunpack.c.l.b16 %v135
    %v4061 = vunpack.c.l.b16 %v136
    %v4062 = vunpack.c.l.b16 %v137
    %v4063 = vunpack.c.l.b16 %v138
    %v4064 = vunpack.c.l.b16 %v139
    %v4065 = vunpack.c.l.b16 %v140
    %v4066 = vunpack.c.l.b16 %v141
    %v4067 = vunpack.c.l.b16 %v142
    %v4068 = vunpack.c.l.b16 %v143
    %v4069 = vunpack.c.l.b16 %v144
    %v4070 = vunpack.c.l.b16 %v145
    %v4071 = vunpack.c.l.b16 %v146
    %v4072 = vunpack.c.l.b16 %v147
    %v4073 = vunpack.c.l.b16 %v148
    %v4074 = vunpack.c.l.b16 %v149
    %v4075 = vunpack.c.l.b16 %v150
    %v4076 = vunpack.c.l.b16 %v151
    %v4077 = vunpack.c.l.b16 %v152
    %v4078 = vunpack.c.l.b16 %v153
    %v4079 = vunpack.c.l.b16 %v154
    %v4080 = vunpack.c.l.b16 %v155
    %v4081 = vunpack.c.l.b16 %v156
    %v4082 = vunpack.c.l.b16 %v157
    %v4083 = vunpack.c.l.b16 %v158
    %v4084 = vunpack.c.l.b16 %v159
    %v4085 = vunpack.c.l.b16 %v160
    %v4086 = vunpack.c.l.b16 %v161
    %v4087 = vunpack.c.l.b16 %v162
    %v4088 = vunpack.c.l.b16 %v163
    %v4089 = vunpack.c.l.b16 %v164
    %v4090 = vunpack.c.l.b16 %v165
    %v4091 = vunpack.c.l.b16 %v166
    %v4092 = vunpack.c.l.b16 %v167
    %v4093 = vunpack.c.l.b16 %v168
    %v4094 = vunpack.c.l.b16 %v169
    %v4095 = vunpack.c.l.b16 %v170
    %v4096 = vunpack.c.l.b16 %v171
    %v4097 = vunpack.c.l.b16 %v172
    %v4098 = vunpack.c.l.b16 %v173
    %v4099 = vunpack.c.l.b16 %v174
    %v4100 = vunpack.c.l.b16 %v175
    %v4101 = vunpack.c.l.b16 %v176
    %v4102 = vunpack.c.l.b16 %v177
    %v4103 = vunpack.c.l.b16 %v178
    %v4104 = vunpack.c.l.b16 %v179
    %v4105 = vunpack.c.l.b16 %v180
    %v4106 = vunpack.c.l.b16 %v181
    %v4107 = vunpack.c.l.b16 %v182
    %v4108 = vunpack.c.l.b16 %v183
    %v4109 = vunpack.c.l.b16 %v184
    %v4110 = vunpack.c.l.b16 %v185
    %v4111 = vunpack.c.l.b16 %v186
    %v4112 = vunpack.c.l.b16 %v187
    %v4113 = vunpack.c.l.b16 %v188
    %v4114 = vunpack.c.l.b16 %v189
    %v4115 = vunpack.c.l.b16 %v190
    %v4116 = vunpack.c.l.b16 %v191
    %v4117 = vunpack.c.l.b16 %v192
    %v4118 = vunpack.c.l.b16 %v193
    %v4119 = vunpack.c.l.b16 %v194
    %v4120 = vunpack.c.l.b16 %v195
    %v4121 = vunpack.c.l.b16 %v196
    %v4122 = vunpack.c.l.b16 %v197
    %v4123 = vunpack.c.l.b16 %v198
    %v4124 = vunpack.c.l.b16 %v199
    %v4125 = vunpack.c.l.b16 %v200
    %v4126 = vunpack.c.l.b16 %v201
    %v4127 = vunpack.c.l.b16 %v202
    %v4128 = vunpack.c.l.b16 %v203
    %v4129 = vunpack.c.l.b16 %v204
    %v4130 = vunpack.c.l.b16 %v205
    %v4131 = vpack.c.b16 %v4060, %v4059
    %v4132 = vpack.c.b16 %v4062, %v4061
    %v4133 = vpack.c.b16 %v4064, %v4063
    %v4134 = vpack.c.b16 %v4066, %v4065
    %v4135 = vpack.c.b16 %v4068, %v4067
    %v4136 = vpack.c.b16 %v4070, %v4069
    %v4137 = vpack.c.b16 %v4072, %v4071
    %v4138 = vpack.c.b16 %v4074, %v4073
    %v4139 = vpack.c.b16 %v4076, %v4075
    %v4140 = vpack.c.b16 %v4078, %v4077
    %v4141 = vpack.c.b16 %v4080, %v4079
    %v4142 = vpack.c.b16 %v4082, %v4081
    %v4143 = vpack.c.b16 %v4084, %v4083
    %v4144 = vpack.c.b16 %v4086, %v4085
    %v4145 = vpack.c.b16 %v4088, %v4087
    %v4146 = vpack.c.b16 %v4090, %v4089
    %v4147 = vpack.c.b16 %v4092, %v4091
    %v4148 = vpack.c.b16 %v4094, %v4093
    %v4149 = vpack.c.b16 %v4096, %v4095
    %v4150 = vpack.c.b16 %v4098, %v4097
    %v4151 = vpack.c.b16 %v4100, %v4099
    %v4152 = vpack.c.b16 %v4102, %v4101
    %v4153 = vpack.c.b16 %v4104, %v4103
    %v4154 = vpack.c.b16 %v4106, %v4105
    %v4155 = vpack.c.b16 %v4108, %v4107
    %v4156 = vpack.c.b16 %v4110, %v4109
    %v4157 = vpack.c.b16 %v4112, %v4111
    %v4158 = vpack.c.b16 %v4114, %v4113
    %v4159 = vpack.c.b16 %v4116, %v4115
    %v4160 = vpack.c.b16 %v4118, %v4117
    %v4161 = vpack.c.b16 %v4120, %v4119
    %v4162 = vpack.c.b16 %v4122, %v4121
    %v4163 = vpack.c.b16 %v4124, %v4123
    %v4164 = vpack.c.b16 %v4126, %v4125
    %v4165 = vpack.c.b16 %v4128, %v4127
    %v4166 = vpack.c.b16 %v4130, %v4129
    %v4204 = vsel %vm352, %v3838, 0
    %v4207 = vsel %vm352, %v3840, 0
    %v4210 = vsel %vm352, %v3842, 0
    %v4213 = vsel %vm352, %v3844, 0
    %v4216 = vsel %vm352, %v3846, 0
    %v4219 = vsel %vm352, %v3848, 0
    %v4222 = vsel %vm352, %v3850, 0
    %v4225 = vsel %vm352, %v3852, 0
    %4227 = vmatprep.subr.bf16.mxu0 0
    %4228 = vmatpush1.bf16.msra.mxu0 %v4138
    %4229 = vmatprep.subr.bf16.mxu0 0
    %4230 = vmatpush1.bf16.msra.mxu0 %v4137
    %4231 = vmatprep.subr.bf16.mxu0 0
    %4232 = vmatpush1.bf16.msra.mxu0 %v4136
    %4233 = vmatprep.subr.bf16.mxu0 0
    %4234 = vmatpush1.bf16.msra.mxu0 %v4135
    %4235 = vmatprep.subr.bf16.mxu0 0
    %4236 = vmatpush1.bf16.msra.mxu0 %v4134
    %4237 = vmatprep.subr.bf16.mxu0 0
    %4238 = vmatpush1.bf16.msra.mxu0 %v4133
    %4239 = vmatprep.subr.bf16.mxu0 0
    %4240 = vmatpush1.bf16.msra.mxu0 %v4132
    %4241 = vmatprep.subr.bf16.mxu0 0
    %4242 = vmatpush1.bf16.msra.mxu0 %v4131
    %4243 = vmatprep.subr.bf16.mxu0 0
    %4244 = vmatpush2.bf16.msra.mxu0 %v4146
    %4245 = vmatprep.subr.bf16.mxu0 0
    %4246 = vmatpush2.bf16.msra.mxu0 %v4145
    %4247 = vmatprep.subr.bf16.mxu0 0
    %4248 = vmatpush2.bf16.msra.mxu0 %v4144
    %4249 = vmatprep.subr.bf16.mxu0 0
    %4250 = vmatpush2.bf16.msra.mxu0 %v4143
    %4251 = vmatprep.subr.bf16.mxu0 0
    %4252 = vmatpush2.bf16.msra.mxu0 %v4142
    %4253 = vmatprep.subr.bf16.mxu0 0
    %4254 = vmatpush2.bf16.msra.mxu0 %v4141
    %4255 = vmatprep.subr.bf16.mxu0 0
    %4256 = vmatpush2.bf16.msra.mxu0 %v4140
    %4257 = vmatprep.subr.bf16.mxu0 0
    %4258 = vmatpush2.bf16.msra.mxu0 %v4139
    %4259 = vmatprep.mubr.bf16.mxu0 %v3887
    %4260 = vmatmul.mubr.bf16.gmra.mxu0 %v3855
    %v4261 = vpop.f32.mrf.mxu0
    %v4262 = vadd.f32 %v3985, %v4261
    %v4263 = vpop.f32.mrf.mxu0
    %v4264 = vpop.f32.mrf.mxu0
    %v4265 = vadd.f32 %v3985, %v4264
    %v4266 = vpop.f32.mrf.mxu0
    %4267 = vmatprep.mubr.bf16.mxu0 %v3891
    %4268 = vmatmul.mubr.bf16.gmra.mxu0 %v3859
    %v4269 = vpop.f32.mrf.mxu0
    %v4270 = vadd.f32 %v3985, %v4269
    %v4271 = vpop.f32.mrf.mxu0
    %v4272 = vpop.f32.mrf.mxu0
    %v4273 = vadd.f32 %v3985, %v4272
    %v4274 = vpop.f32.mrf.mxu0
    %4275 = vmatprep.mubr.bf16.mxu0 %v3895
    %4276 = vmatmul.mubr.bf16.gmra.mxu0 %v3863
    %v4277 = vpop.f32.mrf.mxu0
    %v4278 = vadd.f32 %v3985, %v4277
    %v4279 = vpop.f32.mrf.mxu0
    %v4280 = vpop.f32.mrf.mxu0
    %v4281 = vadd.f32 %v3985, %v4280
    %v4282 = vpop.f32.mrf.mxu0
    %4283 = vmatprep.mubr.bf16.mxu0 %v3899
    %4284 = vmatmul.mubr.bf16.gmra.mxu0 %v3867
    %v4285 = vpop.f32.mrf.mxu0
    %v4286 = vadd.f32 %v3985, %v4285
    %v4287 = vpop.f32.mrf.mxu0
    %v4288 = vpop.f32.mrf.mxu0
    %v4289 = vadd.f32 %v3985, %v4288
    %v4290 = vpop.f32.mrf.mxu0
    %4291 = vmatprep.mubr.bf16.mxu0 %v3903
    %4292 = vmatmul.mubr.bf16.gmra.mxu0 %v3871
    %v4293 = vpop.f32.mrf.mxu0
    %v4294 = vadd.f32 %v3985, %v4293
    %v4295 = vpop.f32.mrf.mxu0
    %v4296 = vpop.f32.mrf.mxu0
    %v4297 = vadd.f32 %v3985, %v4296
    %v4298 = vpop.f32.mrf.mxu0
    %4299 = vmatprep.mubr.bf16.mxu0 %v3907
    %4300 = vmatmul.mubr.bf16.gmra.mxu0 %v3875
    %v4301 = vpop.f32.mrf.mxu0
    %v4302 = vadd.f32 %v3985, %v4301
    %v4303 = vpop.f32.mrf.mxu0
    %v4304 = vpop.f32.mrf.mxu0
    %v4305 = vadd.f32 %v3985, %v4304
    %v4306 = vpop.f32.mrf.mxu0
    %4307 = vmatprep.mubr.bf16.mxu0 %v3911
    %4308 = vmatmul.mubr.bf16.gmra.mxu0 %v3879
    %v4309 = vpop.f32.mrf.mxu0
    %v4310 = vadd.f32 %v3985, %v4309
    %v4311 = vpop.f32.mrf.mxu0
    %v4312 = vpop.f32.mrf.mxu0
    %v4313 = vadd.f32 %v3985, %v4312
    %v4314 = vpop.f32.mrf.mxu0
    %4315 = vmatprep.mubr.bf16.mxu0 %v3915
    %4316 = vmatmul.mubr.bf16.gmra.mxu0 %v3883
    %v4317 = vpop.f32.mrf.mxu0
    %v4318 = vadd.f32 %v3985, %v4317
    %v4319 = vpop.f32.mrf.mxu0
    %v4320 = vpop.f32.mrf.mxu0
    %v4321 = vadd.f32 %v3985, %v4320
    %v4322 = vpop.f32.mrf.mxu0
    %4323 = vdwg.mxu0
    %4324 = vmatprep.subr.bf16.mxu0 0
    %4325 = vmatpush1.bf16.msra.mxu0 %v4154
    %4326 = vmatprep.subr.bf16.mxu0 0
    %4327 = vmatpush1.bf16.msra.mxu0 %v4153
    %4328 = vmatprep.subr.bf16.mxu0 0
    %4329 = vmatpush1.bf16.msra.mxu0 %v4152
    %4330 = vmatprep.subr.bf16.mxu0 0
    %4331 = vmatpush1.bf16.msra.mxu0 %v4151
    %4332 = vmatprep.subr.bf16.mxu0 0
    %4333 = vmatpush1.bf16.msra.mxu0 %v4150
    %4334 = vmatprep.subr.bf16.mxu0 0
    %4335 = vmatpush1.bf16.msra.mxu0 %v4149
    %4336 = vmatprep.subr.bf16.mxu0 0
    %4337 = vmatpush1.bf16.msra.mxu0 %v4148
    %4338 = vmatprep.subr.bf16.mxu0 0
    %4339 = vmatpush1.bf16.msra.mxu0 %v4147
    %4340 = vmatprep.subr.bf16.mxu0 0
    %4341 = vmatpush2.bf16.msra.mxu0 %v4162
    %4342 = vmatprep.subr.bf16.mxu0 0
    %4343 = vmatpush2.bf16.msra.mxu0 %v4161
    %4344 = vmatprep.subr.bf16.mxu0 0
    %4345 = vmatpush2.bf16.msra.mxu0 %v4160
    %4346 = vmatprep.subr.bf16.mxu0 0
    %4347 = vmatpush2.bf16.msra.mxu0 %v4159
    %4348 = vmatprep.subr.bf16.mxu0 0
    %4349 = vmatpush2.bf16.msra.mxu0 %v4158
    %4350 = vmatprep.subr.bf16.mxu0 0
    %4351 = vmatpush2.bf16.msra.mxu0 %v4157
    %4352 = vmatprep.subr.bf16.mxu0 0
    %4353 = vmatpush2.bf16.msra.mxu0 %v4156
    %4354 = vmatprep.subr.bf16.mxu0 0
    %4355 = vmatpush2.bf16.msra.mxu0 %v4155
    %4356 = vmatprep.mubr.bf16.mxu0 %v3951
    %4357 = vmatmul.mubr.bf16.gmra.mxu0 %v3919
    %v4358 = vpop.f32.mrf.mxu0
    %v4359 = vadd.f32 %v4262, %v4358
    %v4360 = vpop.f32.mrf.mxu0
    %v4361 = vpop.f32.mrf.mxu0
    %v4362 = vadd.f32 %v4265, %v4361
    %v4363 = vpop.f32.mrf.mxu0
    %4364 = vmatprep.mubr.bf16.mxu0 %v3955
    %4365 = vmatmul.mubr.bf16.gmra.mxu0 %v3923
    %v4366 = vpop.f32.mrf.mxu0
    %v4367 = vadd.f32 %v4270, %v4366
    %v4368 = vpop.f32.mrf.mxu0
    %v4369 = vpop.f32.mrf.mxu0
    %v4370 = vadd.f32 %v4273, %v4369
    %v4371 = vpop.f32.mrf.mxu0
    %4372 = vmatprep.mubr.bf16.mxu0 %v3959
    %4373 = vmatmul.mubr.bf16.gmra.mxu0 %v3927
    %v4374 = vpop.f32.mrf.mxu0
    %v4375 = vadd.f32 %v4278, %v4374
    %v4376 = vpop.f32.mrf.mxu0
    %v4377 = vpop.f32.mrf.mxu0
    %v4378 = vadd.f32 %v4281, %v4377
    %v4379 = vpop.f32.mrf.mxu0
    %4380 = vmatprep.mubr.bf16.mxu0 %v3963
    %4381 = vmatmul.mubr.bf16.gmra.mxu0 %v3931
    %v4382 = vpop.f32.mrf.mxu0
    %v4383 = vadd.f32 %v4286, %v4382
    %v4384 = vpop.f32.mrf.mxu0
    %v4385 = vpop.f32.mrf.mxu0
    %v4386 = vadd.f32 %v4289, %v4385
    %v4387 = vpop.f32.mrf.mxu0
    %4388 = vmatprep.mubr.bf16.mxu0 %v3967
    %4389 = vmatmul.mubr.bf16.gmra.mxu0 %v3935
    %v4390 = vpop.f32.mrf.mxu0
    %v4391 = vadd.f32 %v4294, %v4390
    %v4392 = vpop.f32.mrf.mxu0
    %v4393 = vpop.f32.mrf.mxu0
    %v4394 = vadd.f32 %v4297, %v4393
    %v4395 = vpop.f32.mrf.mxu0
    %4396 = vmatprep.mubr.bf16.mxu0 %v3971
    %4397 = vmatmul.mubr.bf16.gmra.mxu0 %v3939
    %v4398 = vpop.f32.mrf.mxu0
    %v4399 = vadd.f32 %v4302, %v4398
    %v4400 = vpop.f32.mrf.mxu0
    %v4401 = vpop.f32.mrf.mxu0
    %v4402 = vadd.f32 %v4305, %v4401
    %v4403 = vpop.f32.mrf.mxu0
    %4404 = vmatprep.mubr.bf16.mxu0 %v3975
    %4405 = vmatmul.mubr.bf16.gmra.mxu0 %v3943
    %v4406 = vpop.f32.mrf.mxu0
    %v4407 = vadd.f32 %v4310, %v4406
    %v4408 = vpop.f32.mrf.mxu0
    %v4409 = vpop.f32.mrf.mxu0
    %v4410 = vadd.f32 %v4313, %v4409
    %v4411 = vpop.f32.mrf.mxu0
    %4412 = vmatprep.mubr.bf16.mxu0 %v3979
    %4413 = vmatmul.mubr.bf16.gmra.mxu0 %v3947
    %v4414 = vpop.f32.mrf.mxu0
    %v4415 = vadd.f32 %v4318, %v4414
    %v4416 = vpop.f32.mrf.mxu0
    %v4417 = vpop.f32.mrf.mxu0
    %v4418 = vadd.f32 %v4321, %v4417
    %v4419 = vpop.f32.mrf.mxu0
    %4420 = vdwg.mxu0
    %4421 = vmatprep.subr.bf16.mxu0 0
    %4422 = vmatpush1.bf16.msra.mxu0 0
    %4423 = vmatprep.subr.bf16.mxu0 0
    %4424 = vmatpush1.bf16.msra.mxu0 0
    %4425 = vmatprep.subr.bf16.mxu0 0
    %4426 = vmatpush1.bf16.msra.mxu0 0
    %4427 = vmatprep.subr.bf16.mxu0 0
    %4428 = vmatpush1.bf16.msra.mxu0 0
    %4429 = vmatprep.subr.bf16.mxu0 0
    %4430 = vmatpush1.bf16.msra.mxu0 %v4166
    %4431 = vmatprep.subr.bf16.mxu0 0
    %4432 = vmatpush1.bf16.msra.mxu0 %v4165
    %4433 = vmatprep.subr.bf16.mxu0 0
    %4434 = vmatpush1.bf16.msra.mxu0 %v4164
    %4435 = vmatprep.subr.bf16.mxu0 0
    %4436 = vmatpush1.bf16.msra.mxu0 %v4163
    %4437 = vmatprep.subr.bf16.mxu0 0
    %4438 = vmatpush2.bf16.msra.mxu0 0
    %4439 = vmatprep.subr.bf16.mxu0 0
    %4440 = vmatpush2.bf16.msra.mxu0 0
    %4441 = vmatprep.subr.bf16.mxu0 0
    %4442 = vmatpush2.bf16.msra.mxu0 0
    %4443 = vmatprep.subr.bf16.mxu0 0
    %4444 = vmatpush2.bf16.msra.mxu0 0
    %4445 = vmatprep.subr.bf16.mxu0 0
    %4446 = vmatpush2.bf16.msra.mxu0 0
    %4447 = vmatprep.subr.bf16.mxu0 0
    %4448 = vmatpush2.bf16.msra.mxu0 0
    %4449 = vmatprep.subr.bf16.mxu0 0
    %4450 = vmatpush2.bf16.msra.mxu0 0
    %4451 = vmatprep.subr.bf16.mxu0 0
    %4452 = vmatpush2.bf16.msra.mxu0 0
    %4453 = vmatprep.mubr.bf16.mxu0 0
    %4454 = vmatmul.mubr.bf16.gmra.mxu0 %v4204
    %v4455 = vpop.f32.mrf.mxu0
    %v4456 = vadd.f32 %v4359, %v4455
    %v4457 = vpop.f32.mrf.mxu0
    %v4458 = vpop.f32.mrf.mxu0
    %v4459 = vadd.f32 %v4362, %v4458
    %v4460 = vpop.f32.mrf.mxu0
    %4461 = vmatprep.mubr.bf16.mxu0 0
    %4462 = vmatmul.mubr.bf16.gmra.mxu0 %v4207
    %v4463 = vpop.f32.mrf.mxu0
    %v4464 = vadd.f32 %v4367, %v4463
    %v4465 = vpop.f32.mrf.mxu0
    %v4466 = vpop.f32.mrf.mxu0
    %v4467 = vadd.f32 %v4370, %v4466
    %v4468 = vpop.f32.mrf.mxu0
    %4469 = vmatprep.mubr.bf16.mxu0 0
    %4470 = vmatmul.mubr.bf16.gmra.mxu0 %v4210
    %v4471 = vpop.f32.mrf.mxu0
    %v4472 = vadd.f32 %v4375, %v4471
    %v4473 = vpop.f32.mrf.mxu0
    %v4474 = vpop.f32.mrf.mxu0
    %v4475 = vadd.f32 %v4378, %v4474
    %v4476 = vpop.f32.mrf.mxu0
    %4477 = vmatprep.mubr.bf16.mxu0 0
    %4478 = vmatmul.mubr.bf16.gmra.mxu0 %v4213
    %v4479 = vpop.f32.mrf.mxu0
    %v4480 = vadd.f32 %v4383, %v4479
    %v4481 = vpop.f32.mrf.mxu0
    %v4482 = vpop.f32.mrf.mxu0
    %v4483 = vadd.f32 %v4386, %v4482
    %v4484 = vpop.f32.mrf.mxu0
    %4485 = vmatprep.mubr.bf16.mxu0 0
    %4486 = vmatmul.mubr.bf16.gmra.mxu0 %v4216
    %v4487 = vpop.f32.mrf.mxu0
    %v4488 = vadd.f32 %v4391, %v4487
    %v4489 = vpop.f32.mrf.mxu0
    %v4490 = vpop.f32.mrf.mxu0
    %v4491 = vadd.f32 %v4394, %v4490
    %v4492 = vpop.f32.mrf.mxu0
    %4493 = vmatprep.mubr.bf16.mxu0 0
    %4494 = vmatmul.mubr.bf16.gmra.mxu0 %v4219
    %v4495 = vpop.f32.mrf.mxu0
    %v4496 = vadd.f32 %v4399, %v4495
    %v4497 = vpop.f32.mrf.mxu0
    %v4498 = vpop.f32.mrf.mxu0
    %v4499 = vadd.f32 %v4402, %v4498
    %v4500 = vpop.f32.mrf.mxu0
    %4501 = vmatprep.mubr.bf16.mxu0 0
    %4502 = vmatmul.mubr.bf16.gmra.mxu0 %v4222
    %v4503 = vpop.f32.mrf.mxu0
    %v4504 = vadd.f32 %v4407, %v4503
    %v4505 = vpop.f32.mrf.mxu0
    %v4506 = vpop.f32.mrf.mxu0
    %v4507 = vadd.f32 %v4410, %v4506
    %v4508 = vpop.f32.mrf.mxu0
    %4509 = vmatprep.mubr.bf16.mxu0 0
    %4510 = vmatmul.mubr.bf16.gmra.mxu0 %v4225
    %v4511 = vpop.f32.mrf.mxu0
    %v4512 = vadd.f32 %v4415, %v4511
    %v4513 = vpop.f32.mrf.mxu0
    %v4514 = vpop.f32.mrf.mxu0
    %v4515 = vadd.f32 %v4418, %v4514
    %v4516 = vpop.f32.mrf.mxu0
    %4517 = vdwg.mxu0
    %v4518 = vadd.f32 %v4456, %v76
    %v4519 = vadd.f32 %v4459, %v77
    %v4520 = vadd.f32 %v4464, %v78
    %v4521 = vadd.f32 %v4467, %v79
    %v4522 = vadd.f32 %v4472, %v80
    %v4523 = vadd.f32 %v4475, %v81
    %v4524 = vadd.f32 %v4480, %v82
    %v4525 = vadd.f32 %v4483, %v83
    %v4526 = vadd.f32 %v4488, %v84
    %v4527 = vadd.f32 %v4491, %v85
    %v4528 = vadd.f32 %v4496, %v86
    %v4529 = vadd.f32 %v4499, %v87
    %v4530 = vadd.f32 %v4504, %v88
    %v4531 = vadd.f32 %v4507, %v89
    %v4532 = vadd.f32 %v4512, %v90
    %v4533 = vadd.f32 %v4515, %v91
    %v4534 = vpack.c.bf16 %v4519, %v4518
    %v4535 = vpack.c.bf16 %v4521, %v4520
    %v4536 = vpack.c.bf16 %v4523, %v4522
    %v4537 = vpack.c.bf16 %v4525, %v4524
    %v4538 = vpack.c.bf16 %v4527, %v4526
    %v4539 = vpack.c.bf16 %v4529, %v4528
    %v4540 = vpack.c.bf16 %v4531, %v4530
    %v4541 = vpack.c.bf16 %v4533, %v4532
    %v4542 = vld [vmem:[%s8] sm:$0xf]
    %v4543 = vld [vmem:[%s8 + $0x4] sm:$0xf]
    %v4544 = vld [vmem:[%s8 + $0x8] sm:$0xf]
    %v4545 = vld [vmem:[%s8 + $0xc] sm:$0xf]
    %v4546 = vld [vmem:[%s8 + $0x10] sm:$0xf]
    %v4547 = vld [vmem:[%s8 + $0x14] sm:$0xf]
    %v4548 = vld [vmem:[%s8 + $0x18] sm:$0xf]
    %v4549 = vld [vmem:[%s8 + $0x1c] sm:$0xf]
    %v4550 = vld [vmem:[%s11] sm:$0x1]
    %v4552 = vlaneseq
    %v4553 = vshrl.u32 %v4552, 7
    %v4554 = vsub.s32 0, %v4553
    %v4555 = vrot.slane %v4550, %v4554
    %v4565 = vunpack.c.l.b16 %v4542
    %v4566 = vunpack.c.l.b16 %v4543
    %v4567 = vunpack.c.l.b16 %v4544
    %v4568 = vunpack.c.l.b16 %v4545
    %v4569 = vunpack.c.l.b16 %v4546
    %v4570 = vunpack.c.l.b16 %v4547
    %v4571 = vunpack.c.l.b16 %v4548
    %v4572 = vunpack.c.l.b16 %v4549
    %v4573 = vpack.c.b16 %v4566, %v4565
    %v4574 = vpack.c.b16 %v4568, %v4567
    %v4575 = vpack.c.b16 %v4570, %v4569
    %v4576 = vpack.c.b16 %v4572, %v4571
    %v4582 = vsel %vm352, %v4534, 0
    %v4585 = vsel %vm352, %v4535, 0
    %v4588 = vsel %vm352, %v4536, 0
    %v4591 = vsel %vm352, %v4537, 0
    %v4594 = vsel %vm352, %v4538, 0
    %v4597 = vsel %vm352, %v4539, 0
    %v4600 = vsel %vm352, %v4540, 0
    %v4603 = vsel %vm352, %v4541, 0
    %4605 = vmatprep.subr.bf16.mxu0 0
    %4606 = vmatpush1.bf16.msra.mxu0 0
    %4607 = vmatprep.subr.bf16.mxu0 0
    %4608 = vmatpush1.bf16.msra.mxu0 0
    %4609 = vmatprep.subr.bf16.mxu0 0
    %4610 = vmatpush1.bf16.msra.mxu0 0
    %4611 = vmatprep.subr.bf16.mxu0 0
    %4612 = vmatpush1.bf16.msra.mxu0 0
    %4613 = vmatprep.subr.bf16.mxu0 0
    %4614 = vmatpush1.bf16.msra.mxu0 %v4576
    %4615 = vmatprep.subr.bf16.mxu0 0
    %4616 = vmatpush1.bf16.msra.mxu0 %v4575
    %4617 = vmatprep.subr.bf16.mxu0 0
    %4618 = vmatpush1.bf16.msra.mxu0 %v4574
    %4619 = vmatprep.subr.bf16.mxu0 0
    %4620 = vmatpush1.bf16.msra.mxu0 %v4573
    %4621 = vmatprep.subr.bf16.mxu0 0
    %4622 = vmatpush2.bf16.msra.mxu0 0
    %4623 = vmatprep.subr.bf16.mxu0 0
    %4624 = vmatpush2.bf16.msra.mxu0 0
    %4625 = vmatprep.subr.bf16.mxu0 0
    %4626 = vmatpush2.bf16.msra.mxu0 0
    %4627 = vmatprep.subr.bf16.mxu0 0
    %4628 = vmatpush2.bf16.msra.mxu0 0
    %4629 = vmatprep.subr.bf16.mxu0 0
    %4630 = vmatpush2.bf16.msra.mxu0 0
    %4631 = vmatprep.subr.bf16.mxu0 0
    %4632 = vmatpush2.bf16.msra.mxu0 0
    %4633 = vmatprep.subr.bf16.mxu0 0
    %4634 = vmatpush2.bf16.msra.mxu0 0
    %4635 = vmatprep.subr.bf16.mxu0 0
    %4636 = vmatpush2.bf16.msra.mxu0 0
    %4637 = vmatprep.mubr.bf16.mxu0 0
    %4638 = vmatmul.mubr.bf16.gmra.mxu0 %v4582
    %v4639 = vpop.f32.mrf.mxu0
    %v4640 = vadd.f32 %v4555, %v4639
    %v4641 = vpop.f32.mrf.mxu0
    %v4642 = vpop.f32.mrf.mxu0
    %v4643 = vadd.f32 %v4555, %v4642
    %v4644 = vpop.f32.mrf.mxu0
    %4645 = vmatprep.mubr.bf16.mxu0 0
    %4646 = vmatmul.mubr.bf16.gmra.mxu0 %v4585
    %v4647 = vpop.f32.mrf.mxu0
    %v4648 = vadd.f32 %v4555, %v4647
    %v4649 = vpop.f32.mrf.mxu0
    %v4650 = vpop.f32.mrf.mxu0
    %v4651 = vadd.f32 %v4555, %v4650
    %v4652 = vpop.f32.mrf.mxu0
    %4653 = vmatprep.mubr.bf16.mxu0 0
    %4654 = vmatmul.mubr.bf16.gmra.mxu0 %v4588
    %v4655 = vpop.f32.mrf.mxu0
    %v4656 = vadd.f32 %v4555, %v4655
    %v4657 = vpop.f32.mrf.mxu0
    %v4658 = vpop.f32.mrf.mxu0
    %v4659 = vadd.f32 %v4555, %v4658
    %v4660 = vpop.f32.mrf.mxu0
    %4661 = vmatprep.mubr.bf16.mxu0 0
    %4662 = vmatmul.mubr.bf16.gmra.mxu0 %v4591
    %v4663 = vpop.f32.mrf.mxu0
    %v4664 = vadd.f32 %v4555, %v4663
    %v4665 = vpop.f32.mrf.mxu0
    %v4666 = vpop.f32.mrf.mxu0
    %v4667 = vadd.f32 %v4555, %v4666
    %v4668 = vpop.f32.mrf.mxu0
    %4669 = vmatprep.mubr.bf16.mxu0 0
    %4670 = vmatmul.mubr.bf16.gmra.mxu0 %v4594
    %v4671 = vpop.f32.mrf.mxu0
    %v4672 = vadd.f32 %v4555, %v4671
    %v4673 = vpop.f32.mrf.mxu0
    %v4674 = vpop.f32.mrf.mxu0
    %v4675 = vadd.f32 %v4555, %v4674
    %v4676 = vpop.f32.mrf.mxu0
    %4677 = vmatprep.mubr.bf16.mxu0 0
    %4678 = vmatmul.mubr.bf16.gmra.mxu0 %v4597
    %v4679 = vpop.f32.mrf.mxu0
    %v4680 = vadd.f32 %v4555, %v4679
    %v4681 = vpop.f32.mrf.mxu0
    %v4682 = vpop.f32.mrf.mxu0
    %v4683 = vadd.f32 %v4555, %v4682
    %v4684 = vpop.f32.mrf.mxu0
    %4685 = vmatprep.mubr.bf16.mxu0 0
    %4686 = vmatmul.mubr.bf16.gmra.mxu0 %v4600
    %v4687 = vpop.f32.mrf.mxu0
    %v4688 = vadd.f32 %v4555, %v4687
    %v4689 = vpop.f32.mrf.mxu0
    %v4690 = vpop.f32.mrf.mxu0
    %v4691 = vadd.f32 %v4555, %v4690
    %v4692 = vpop.f32.mrf.mxu0
    %4693 = vmatprep.mubr.bf16.mxu0 0
    %4694 = vmatmul.mubr.bf16.gmra.mxu0 %v4603
    %v4695 = vpop.f32.mrf.mxu0
    %v4696 = vadd.f32 %v4555, %v4695
    %v4697 = vpop.f32.mrf.mxu0
    %v4698 = vpop.f32.mrf.mxu0
    %v4699 = vadd.f32 %v4555, %v4698
    %v4700 = vpop.f32.mrf.mxu0
    %4701 = vdwg.mxu0
    %v4702 = vpack.c.bf16 %v4643, %v4640
    %v4703 = vpack.c.bf16 %v4651, %v4648
    %v4704 = vpack.c.bf16 %v4659, %v4656
    %v4705 = vpack.c.bf16 %v4667, %v4664
    %v4706 = vpack.c.bf16 %v4675, %v4672
    %v4707 = vpack.c.bf16 %v4683, %v4680
    %v4708 = vpack.c.bf16 %v4691, %v4688
    %v4709 = vpack.c.bf16 %v4699, %v4696
    %v4710 = vld [vmem:[%s9] sm:$0xf]
    %v4711 = vld [vmem:[%s9 + $0x4] sm:$0xf]
    %v4712 = vld [vmem:[%s9 + $0x8] sm:$0xf]
    %v4713 = vld [vmem:[%s9 + $0xc] sm:$0xf]
    %v4714 = vld [vmem:[%s9 + $0x10] sm:$0xf]
    %v4715 = vld [vmem:[%s9 + $0x14] sm:$0xf]
    %v4716 = vld [vmem:[%s9 + $0x18] sm:$0xf]
    %v4717 = vld [vmem:[%s9 + $0x1c] sm:$0xf]
    %v4718 = vld [vmem:[%s12] sm:$0x1]
    %v4720 = vlaneseq
    %v4721 = vshrl.u32 %v4720, 7
    %v4722 = vsub.s32 0, %v4721
    %v4723 = vrot.slane %v4718, %v4722
    %v4733 = vunpack.c.l.b16 %v4710
    %v4734 = vunpack.c.l.b16 %v4711
    %v4735 = vunpack.c.l.b16 %v4712
    %v4736 = vunpack.c.l.b16 %v4713
    %v4737 = vunpack.c.l.b16 %v4714
    %v4738 = vunpack.c.l.b16 %v4715
    %v4739 = vunpack.c.l.b16 %v4716
    %v4740 = vunpack.c.l.b16 %v4717
    %v4741 = vpack.c.b16 %v4734, %v4733
    %v4742 = vpack.c.b16 %v4736, %v4735
    %v4743 = vpack.c.b16 %v4738, %v4737
    %v4744 = vpack.c.b16 %v4740, %v4739
    %4749 = vmatprep.subr.bf16.mxu0 0
    %4750 = vmatpush1.bf16.msra.mxu0 0
    %4751 = vmatprep.subr.bf16.mxu0 0
    %4752 = vmatpush1.bf16.msra.mxu0 0
    %4753 = vmatprep.subr.bf16.mxu0 0
    %4754 = vmatpush1.bf16.msra.mxu0 0
    %4755 = vmatprep.subr.bf16.mxu0 0
    %4756 = vmatpush1.bf16.msra.mxu0 0
    %4757 = vmatprep.subr.bf16.mxu0 0
    %4758 = vmatpush1.bf16.msra.mxu0 %v4744
    %4759 = vmatprep.subr.bf16.mxu0 0
    %4760 = vmatpush1.bf16.msra.mxu0 %v4743
    %4761 = vmatprep.subr.bf16.mxu0 0
    %4762 = vmatpush1.bf16.msra.mxu0 %v4742
    %4763 = vmatprep.subr.bf16.mxu0 0
    %4764 = vmatpush1.bf16.msra.mxu0 %v4741
    %4765 = vmatprep.subr.bf16.mxu0 0
    %4766 = vmatpush2.bf16.msra.mxu0 0
    %4767 = vmatprep.subr.bf16.mxu0 0
    %4768 = vmatpush2.bf16.msra.mxu0 0
    %4769 = vmatprep.subr.bf16.mxu0 0
    %4770 = vmatpush2.bf16.msra.mxu0 0
    %4771 = vmatprep.subr.bf16.mxu0 0
    %4772 = vmatpush2.bf16.msra.mxu0 0
    %4773 = vmatprep.subr.bf16.mxu0 0
    %4774 = vmatpush2.bf16.msra.mxu0 0
    %4775 = vmatprep.subr.bf16.mxu0 0
    %4776 = vmatpush2.bf16.msra.mxu0 0
    %4777 = vmatprep.subr.bf16.mxu0 0
    %4778 = vmatpush2.bf16.msra.mxu0 0
    %4779 = vmatprep.subr.bf16.mxu0 0
    %4780 = vmatpush2.bf16.msra.mxu0 0
    %4781 = vmatprep.mubr.bf16.mxu0 0
    %4782 = vmatmul.mubr.bf16.gmra.mxu0 %v4582
    %v4783 = vpop.f32.mrf.mxu0
    %v4784 = vadd.f32 %v4723, %v4783
    %v4785 = vpop.f32.mrf.mxu0
    %v4786 = vpop.f32.mrf.mxu0
    %v4787 = vadd.f32 %v4723, %v4786
    %v4788 = vpop.f32.mrf.mxu0
    %4789 = vmatprep.mubr.bf16.mxu0 0
    %4790 = vmatmul.mubr.bf16.gmra.mxu0 %v4585
    %v4791 = vpop.f32.mrf.mxu0
    %v4792 = vadd.f32 %v4723, %v4791
    %v4793 = vpop.f32.mrf.mxu0
    %v4794 = vpop.f32.mrf.mxu0
    %v4795 = vadd.f32 %v4723, %v4794
    %v4796 = vpop.f32.mrf.mxu0
    %4797 = vmatprep.mubr.bf16.mxu0 0
    %4798 = vmatmul.mubr.bf16.gmra.mxu0 %v4588
    %v4799 = vpop.f32.mrf.mxu0
    %v4800 = vadd.f32 %v4723, %v4799
    %v4801 = vpop.f32.mrf.mxu0
    %v4802 = vpop.f32.mrf.mxu0
    %v4803 = vadd.f32 %v4723, %v4802
    %v4804 = vpop.f32.mrf.mxu0
    %4805 = vmatprep.mubr.bf16.mxu0 0
    %4806 = vmatmul.mubr.bf16.gmra.mxu0 %v4591
    %v4807 = vpop.f32.mrf.mxu0
    %v4808 = vadd.f32 %v4723, %v4807
    %v4809 = vpop.f32.mrf.mxu0
    %v4810 = vpop.f32.mrf.mxu0
    %v4811 = vadd.f32 %v4723, %v4810
    %v4812 = vpop.f32.mrf.mxu0
    %4813 = vmatprep.mubr.bf16.mxu0 0
    %4814 = vmatmul.mubr.bf16.gmra.mxu0 %v4594
    %v4815 = vpop.f32.mrf.mxu0
    %v4816 = vadd.f32 %v4723, %v4815
    %v4817 = vpop.f32.mrf.mxu0
    %v4818 = vpop.f32.mrf.mxu0
    %v4819 = vadd.f32 %v4723, %v4818
    %v4820 = vpop.f32.mrf.mxu0
    %4821 = vmatprep.mubr.bf16.mxu0 0
    %4822 = vmatmul.mubr.bf16.gmra.mxu0 %v4597
    %v4823 = vpop.f32.mrf.mxu0
    %v4824 = vadd.f32 %v4723, %v4823
    %v4825 = vpop.f32.mrf.mxu0
    %v4826 = vpop.f32.mrf.mxu0
    %v4827 = vadd.f32 %v4723, %v4826
    %v4828 = vpop.f32.mrf.mxu0
    %4829 = vmatprep.mubr.bf16.mxu0 0
    %4830 = vmatmul.mubr.bf16.gmra.mxu0 %v4600
    %v4831 = vpop.f32.mrf.mxu0
    %v4832 = vadd.f32 %v4723, %v4831
    %v4833 = vpop.f32.mrf.mxu0
    %v4834 = vpop.f32.mrf.mxu0
    %v4835 = vadd.f32 %v4723, %v4834
    %v4836 = vpop.f32.mrf.mxu0
    %4837 = vmatprep.mubr.bf16.mxu0 0
    %4838 = vmatmul.mubr.bf16.gmra.mxu0 %v4603
    %v4839 = vpop.f32.mrf.mxu0
    %v4840 = vadd.f32 %v4723, %v4839
    %v4841 = vpop.f32.mrf.mxu0
    %v4842 = vpop.f32.mrf.mxu0
    %v4843 = vadd.f32 %v4723, %v4842
    %v4844 = vpop.f32.mrf.mxu0
    %4845 = vdwg.mxu0
    %v4846 = vpack.c.bf16 %v4787, %v4784
    %v4847 = vpack.c.bf16 %v4795, %v4792
    %v4848 = vpack.c.bf16 %v4803, %v4800
    %v4849 = vpack.c.bf16 %v4811, %v4808
    %v4850 = vpack.c.bf16 %v4819, %v4816
    %v4851 = vpack.c.bf16 %v4827, %v4824
    %v4852 = vpack.c.bf16 %v4835, %v4832
    %v4853 = vpack.c.bf16 %v4843, %v4840
    %v4854 = vld [vmem:[%s10] sm:$0xf]
    %v4855 = vld [vmem:[%s10 + $0x4] sm:$0xf]
    %v4856 = vld [vmem:[%s10 + $0x8] sm:$0xf]
    %v4857 = vld [vmem:[%s10 + $0xc] sm:$0xf]
    %v4858 = vld [vmem:[%s10 + $0x10] sm:$0xf]
    %v4859 = vld [vmem:[%s10 + $0x14] sm:$0xf]
    %v4860 = vld [vmem:[%s10 + $0x18] sm:$0xf]
    %v4861 = vld [vmem:[%s10 + $0x1c] sm:$0xf]
    %v4862 = vld [vmem:[%s13] sm:$0x1]
    %v4864 = vlaneseq
    %v4865 = vshrl.u32 %v4864, 7
    %v4866 = vsub.s32 0, %v4865
    %v4867 = vrot.slane %v4862, %v4866
    %v4877 = vunpack.c.l.b16 %v4854
    %v4878 = vunpack.c.l.b16 %v4855
    %v4879 = vunpack.c.l.b16 %v4856
    %v4880 = vunpack.c.l.b16 %v4857
    %v4881 = vunpack.c.l.b16 %v4858
    %v4882 = vunpack.c.l.b16 %v4859
    %v4883 = vunpack.c.l.b16 %v4860
    %v4884 = vunpack.c.l.b16 %v4861
    %v4885 = vpack.c.b16 %v4878, %v4877
    %v4886 = vpack.c.b16 %v4880, %v4879
    %v4887 = vpack.c.b16 %v4882, %v4881
    %v4888 = vpack.c.b16 %v4884, %v4883
    %4893 = vmatprep.subr.bf16.mxu0 0
    %4894 = vmatpush1.bf16.msra.mxu0 0
    %4895 = vmatprep.subr.bf16.mxu0 0
    %4896 = vmatpush1.bf16.msra.mxu0 0
    %4897 = vmatprep.subr.bf16.mxu0 0
    %4898 = vmatpush1.bf16.msra.mxu0 0
    %4899 = vmatprep.subr.bf16.mxu0 0
    %4900 = vmatpush1.bf16.msra.mxu0 0
    %4901 = vmatprep.subr.bf16.mxu0 0
    %4902 = vmatpush1.bf16.msra.mxu0 %v4888
    %4903 = vmatprep.subr.bf16.mxu0 0
    %4904 = vmatpush1.bf16.msra.mxu0 %v4887
    %4905 = vmatprep.subr.bf16.mxu0 0
    %4906 = vmatpush1.bf16.msra.mxu0 %v4886
    %4907 = vmatprep.subr.bf16.mxu0 0
    %4908 = vmatpush1.bf16.msra.mxu0 %v4885
    %4909 = vmatprep.subr.bf16.mxu0 0
    %4910 = vmatpush2.bf16.msra.mxu0 0
    %4911 = vmatprep.subr.bf16.mxu0 0
    %4912 = vmatpush2.bf16.msra.mxu0 0
    %4913 = vmatprep.subr.bf16.mxu0 0
    %4914 = vmatpush2.bf16.msra.mxu0 0
    %4915 = vmatprep.subr.bf16.mxu0 0
    %4916 = vmatpush2.bf16.msra.mxu0 0
    %4917 = vmatprep.subr.bf16.mxu0 0
    %4918 = vmatpush2.bf16.msra.mxu0 0
    %4919 = vmatprep.subr.bf16.mxu0 0
    %4920 = vmatpush2.bf16.msra.mxu0 0
    %4921 = vmatprep.subr.bf16.mxu0 0
    %4922 = vmatpush2.bf16.msra.mxu0 0
    %4923 = vmatprep.subr.bf16.mxu0 0
    %4924 = vmatpush2.bf16.msra.mxu0 0
    %4925 = vmatprep.mubr.bf16.mxu0 0
    %4926 = vmatmul.mubr.bf16.gmra.mxu0 %v4582
    %v4927 = vpop.f32.mrf.mxu0
    %v4928 = vadd.f32 %v4867, %v4927
    %v4929 = vpop.f32.mrf.mxu0
    %v4930 = vpop.f32.mrf.mxu0
    %v4931 = vadd.f32 %v4867, %v4930
    %v4932 = vpop.f32.mrf.mxu0
    %4933 = vmatprep.mubr.bf16.mxu0 0
    %4934 = vmatmul.mubr.bf16.gmra.mxu0 %v4585
    %v4935 = vpop.f32.mrf.mxu0
    %v4936 = vadd.f32 %v4867, %v4935
    %v4937 = vpop.f32.mrf.mxu0
    %v4938 = vpop.f32.mrf.mxu0
    %v4939 = vadd.f32 %v4867, %v4938
    %v4940 = vpop.f32.mrf.mxu0
    %4941 = vmatprep.mubr.bf16.mxu0 0
    %4942 = vmatmul.mubr.bf16.gmra.mxu0 %v4588
    %v4943 = vpop.f32.mrf.mxu0
    %v4944 = vadd.f32 %v4867, %v4943
    %v4945 = vpop.f32.mrf.mxu0
    %v4946 = vpop.f32.mrf.mxu0
    %v4947 = vadd.f32 %v4867, %v4946
    %v4948 = vpop.f32.mrf.mxu0
    %4949 = vmatprep.mubr.bf16.mxu0 0
    %4950 = vmatmul.mubr.bf16.gmra.mxu0 %v4591
    %v4951 = vpop.f32.mrf.mxu0
    %v4952 = vadd.f32 %v4867, %v4951
    %v4953 = vpop.f32.mrf.mxu0
    %v4954 = vpop.f32.mrf.mxu0
    %v4955 = vadd.f32 %v4867, %v4954
    %v4956 = vpop.f32.mrf.mxu0
    %4957 = vmatprep.mubr.bf16.mxu0 0
    %4958 = vmatmul.mubr.bf16.gmra.mxu0 %v4594
    %v4959 = vpop.f32.mrf.mxu0
    %v4960 = vadd.f32 %v4867, %v4959
    %v4961 = vpop.f32.mrf.mxu0
    %v4962 = vpop.f32.mrf.mxu0
    %v4963 = vadd.f32 %v4867, %v4962
    %v4964 = vpop.f32.mrf.mxu0
    %4965 = vmatprep.mubr.bf16.mxu0 0
    %4966 = vmatmul.mubr.bf16.gmra.mxu0 %v4597
    %v4967 = vpop.f32.mrf.mxu0
    %v4968 = vadd.f32 %v4867, %v4967
    %v4969 = vpop.f32.mrf.mxu0
    %v4970 = vpop.f32.mrf.mxu0
    %v4971 = vadd.f32 %v4867, %v4970
    %v4972 = vpop.f32.mrf.mxu0
    %4973 = vmatprep.mubr.bf16.mxu0 0
    %4974 = vmatmul.mubr.bf16.gmra.mxu0 %v4600
    %v4975 = vpop.f32.mrf.mxu0
    %v4976 = vadd.f32 %v4867, %v4975
    %v4977 = vpop.f32.mrf.mxu0
    %v4978 = vpop.f32.mrf.mxu0
    %v4979 = vadd.f32 %v4867, %v4978
    %v4980 = vpop.f32.mrf.mxu0
    %4981 = vmatprep.mubr.bf16.mxu0 0
    %4982 = vmatmul.mubr.bf16.gmra.mxu0 %v4603
    %v4983 = vpop.f32.mrf.mxu0
    %v4984 = vadd.f32 %v4867, %v4983
    %v4985 = vpop.f32.mrf.mxu0
    %v4986 = vpop.f32.mrf.mxu0
    %v4987 = vadd.f32 %v4867, %v4986
    %v4988 = vpop.f32.mrf.mxu0
    %4989 = vdwg.mxu0
    %v4990 = vpack.c.bf16 %v4931, %v4928
    %v4991 = vpack.c.bf16 %v4939, %v4936
    %v4992 = vpack.c.bf16 %v4947, %v4944
    %v4993 = vpack.c.bf16 %v4955, %v4952
    %v4994 = vpack.c.bf16 %v4963, %v4960
    %v4995 = vpack.c.bf16 %v4971, %v4968
    %v4996 = vpack.c.bf16 %v4979, %v4976
    %v4997 = vpack.c.bf16 %v4987, %v4984
    %v4998 = vld [vmem:[%s14] sm:$0xf]
    %v4999 = vld [vmem:[%s14 + $0x4] sm:$0xf]
    %v5000 = vld [vmem:[%s14 + $0x8] sm:$0xf]
    %v5001 = vld [vmem:[%s14 + $0xc] sm:$0xf]
    %v5002 = vld [vmem:[%s14 + $0x10] sm:$0xf]
    %v5003 = vld [vmem:[%s14 + $0x14] sm:$0xf]
    %v5004 = vld [vmem:[%s14 + $0x18] sm:$0xf]
    %v5005 = vld [vmem:[%s14 + $0x1c] sm:$0xf]
    %v5006 = vld [vmem:[%s14 + $0x20] sm:$0xf]
    %v5007 = vld [vmem:[%s14 + $0x24] sm:$0xf]
    %v5008 = vld [vmem:[%s14 + $0x28] sm:$0xf]
    %v5009 = vld [vmem:[%s14 + $0x2c] sm:$0xf]
    %v5010 = vld [vmem:[%s14 + $0x30] sm:$0xf]
    %v5011 = vld [vmem:[%s14 + $0x34] sm:$0xf]
    %v5012 = vld [vmem:[%s14 + $0x38] sm:$0xf]
    %v5013 = vld [vmem:[%s14 + $0x3c] sm:$0xf]
    %v5014 = vld [vmem:[%s14 + $0x40] sm:$0xf]
    %v5015 = vld [vmem:[%s14 + $0x44] sm:$0xf]
    %v5016 = vld [vmem:[%s14 + $0x48] sm:$0xf]
    %v5017 = vld [vmem:[%s14 + $0x4c] sm:$0xf]
    %v5018 = vld [vmem:[%s14 + $0x50] sm:$0xf]
    %v5019 = vld [vmem:[%s14 + $0x54] sm:$0xf]
    %v5020 = vld [vmem:[%s14 + $0x58] sm:$0xf]
    %v5021 = vld [vmem:[%s14 + $0x5c] sm:$0xf]
    %v5022 = vld [vmem:[%s14 + $0x60] sm:$0xf]
    %v5023 = vld [vmem:[%s14 + $0x64] sm:$0xf]
    %v5024 = vld [vmem:[%s14 + $0x68] sm:$0xf]
    %v5025 = vld [vmem:[%s14 + $0x6c] sm:$0xf]
    %v5026 = vld [vmem:[%s14 + $0x70] sm:$0xf]
    %v5027 = vld [vmem:[%s14 + $0x74] sm:$0xf]
    %v5028 = vld [vmem:[%s14 + $0x78] sm:$0xf]
    %v5029 = vld [vmem:[%s14 + $0x7c] sm:$0xf]
    %v5030 = vld [vmem:[%s14 + $0x80] sm:$0xf]
    %v5031 = vld [vmem:[%s14 + $0x84] sm:$0xf]
    %v5032 = vld [vmem:[%s14 + $0x88] sm:$0xf]
    %v5033 = vld [vmem:[%s14 + $0x8c] sm:$0xf]
    %v5034 = vld [vmem:[%s14 + $0x90] sm:$0xf]
    %v5035 = vld [vmem:[%s14 + $0x94] sm:$0xf]
    %v5036 = vld [vmem:[%s14 + $0x98] sm:$0xf]
    %v5037 = vld [vmem:[%s14 + $0x9c] sm:$0xf]
    %v5038 = vld [vmem:[%s14 + $0xa0] sm:$0xf]
    %v5039 = vld [vmem:[%s14 + $0xa4] sm:$0xf]
    %v5040 = vld [vmem:[%s14 + $0xa8] sm:$0xf]
    %v5041 = vld [vmem:[%s14 + $0xac] sm:$0xf]
    %v5042 = vld [vmem:[%s14 + $0xb0] sm:$0xf]
    %v5043 = vld [vmem:[%s14 + $0xb4] sm:$0xf]
    %v5044 = vld [vmem:[%s14 + $0xb8] sm:$0xf]
    %v5045 = vld [vmem:[%s14 + $0xbc] sm:$0xf]
    %v5046 = vld [vmem:[%s14 + $0xc0] sm:$0xf]
    %v5047 = vld [vmem:[%s14 + $0xc4] sm:$0xf]
    %v5048 = vld [vmem:[%s14 + $0xc8] sm:$0xf]
    %v5049 = vld [vmem:[%s14 + $0xcc] sm:$0xf]
    %v5050 = vld [vmem:[%s14 + $0xd0] sm:$0xf]
    %v5051 = vld [vmem:[%s14 + $0xd4] sm:$0xf]
    %v5052 = vld [vmem:[%s14 + $0xd8] sm:$0xf]
    %v5053 = vld [vmem:[%s14 + $0xdc] sm:$0xf]
    %v5054 = vld [vmem:[%s14 + $0xe0] sm:$0xf]
    %v5055 = vld [vmem:[%s14 + $0xe4] sm:$0xf]
    %v5056 = vld [vmem:[%s14 + $0xe8] sm:$0xf]
    %v5057 = vld [vmem:[%s14 + $0xec] sm:$0xf]
    %v5058 = vld [vmem:[%s14 + $0xf0] sm:$0xf]
    %v5059 = vld [vmem:[%s14 + $0xf4] sm:$0xf]
    %v5060 = vld [vmem:[%s14 + $0xf8] sm:$0xf]
    %v5061 = vld [vmem:[%s14 + $0xfc] sm:$0xf]
    %v5062 = vld [vmem:[%s15] sm:$0xf]
    %v5063 = vld [vmem:[%s15 + $0x4] sm:$0xf]
    %v5064 = vld [vmem:[%s15 + $0x8] sm:$0xf]
    %v5065 = vld [vmem:[%s15 + $0xc] sm:$0xf]
    %v5066 = vld [vmem:[%s15 + $0x10] sm:$0xf]
    %v5067 = vld [vmem:[%s15 + $0x14] sm:$0xf]
    %v5068 = vld [vmem:[%s15 + $0x18] sm:$0xf]
    %v5069 = vld [vmem:[%s15 + $0x1c] sm:$0xf]
    %v5070 = vld [vmem:[%s15 + $0x20] sm:$0xf]
    %v5071 = vld [vmem:[%s15 + $0x24] sm:$0xf]
    %v5072 = vld [vmem:[%s15 + $0x28] sm:$0xf]
    %v5073 = vld [vmem:[%s15 + $0x2c] sm:$0xf]
    %v5074 = vld [vmem:[%s15 + $0x30] sm:$0xf]
    %v5075 = vld [vmem:[%s15 + $0x34] sm:$0xf]
    %v5076 = vld [vmem:[%s15 + $0x38] sm:$0xf]
    %v5077 = vld [vmem:[%s15 + $0x3c] sm:$0xf]
    %v5078 = vld [vmem:[%s15 + $0x40] sm:$0xf]
    %v5079 = vld [vmem:[%s15 + $0x44] sm:$0xf]
    %v5080 = vld [vmem:[%s15 + $0x48] sm:$0xf]
    %v5081 = vld [vmem:[%s15 + $0x4c] sm:$0xf]
    %v5082 = vld [vmem:[%s15 + $0x50] sm:$0xf]
    %v5083 = vld [vmem:[%s15 + $0x54] sm:$0xf]
    %v5084 = vld [vmem:[%s15 + $0x58] sm:$0xf]
    %v5085 = vld [vmem:[%s15 + $0x5c] sm:$0xf]
    %v5086 = vld [vmem:[%s15 + $0x60] sm:$0xf]
    %v5087 = vld [vmem:[%s15 + $0x64] sm:$0xf]
    %v5088 = vld [vmem:[%s15 + $0x68] sm:$0xf]
    %v5089 = vld [vmem:[%s15 + $0x6c] sm:$0xf]
    %v5090 = vld [vmem:[%s15 + $0x70] sm:$0xf]
    %v5091 = vld [vmem:[%s15 + $0x74] sm:$0xf]
    %v5092 = vld [vmem:[%s15 + $0x78] sm:$0xf]
    %v5093 = vld [vmem:[%s15 + $0x7c] sm:$0xf]
    %v5094 = vld [vmem:[%s15 + $0x80] sm:$0xf]
    %v5095 = vld [vmem:[%s15 + $0x84] sm:$0xf]
    %v5096 = vld [vmem:[%s15 + $0x88] sm:$0xf]
    %v5097 = vld [vmem:[%s15 + $0x8c] sm:$0xf]
    %v5098 = vld [vmem:[%s15 + $0x90] sm:$0xf]
    %v5099 = vld [vmem:[%s15 + $0x94] sm:$0xf]
    %v5100 = vld [vmem:[%s15 + $0x98] sm:$0xf]
    %v5101 = vld [vmem:[%s15 + $0x9c] sm:$0xf]
    %v5102 = vld [vmem:[%s15 + $0xa0] sm:$0xf]
    %v5103 = vld [vmem:[%s15 + $0xa4] sm:$0xf]
    %v5104 = vld [vmem:[%s15 + $0xa8] sm:$0xf]
    %v5105 = vld [vmem:[%s15 + $0xac] sm:$0xf]
    %v5106 = vld [vmem:[%s15 + $0xb0] sm:$0xf]
    %v5107 = vld [vmem:[%s15 + $0xb4] sm:$0xf]
    %v5108 = vld [vmem:[%s15 + $0xb8] sm:$0xf]
    %v5109 = vld [vmem:[%s15 + $0xbc] sm:$0xf]
    %v5110 = vld [vmem:[%s15 + $0xc0] sm:$0xf]
    %v5111 = vld [vmem:[%s15 + $0xc4] sm:$0xf]
    %v5112 = vld [vmem:[%s15 + $0xc8] sm:$0xf]
    %v5113 = vld [vmem:[%s15 + $0xcc] sm:$0xf]
    %v5114 = vld [vmem:[%s15 + $0xd0] sm:$0xf]
    %v5115 = vld [vmem:[%s15 + $0xd4] sm:$0xf]
    %v5116 = vld [vmem:[%s15 + $0xd8] sm:$0xf]
    %v5117 = vld [vmem:[%s15 + $0xdc] sm:$0xf]
    %v5118 = vld [vmem:[%s15 + $0xe0] sm:$0xf]
    %v5119 = vld [vmem:[%s15 + $0xe4] sm:$0xf]
    %v5120 = vld [vmem:[%s15 + $0xe8] sm:$0xf]
    %v5121 = vld [vmem:[%s15 + $0xec] sm:$0xf]
    %v5122 = vld [vmem:[%s15 + $0xf0] sm:$0xf]
    %v5123 = vld [vmem:[%s15 + $0xf4] sm:$0xf]
    %v5124 = vld [vmem:[%s15 + $0xf8] sm:$0xf]
    %v5125 = vld [vmem:[%s15 + $0xfc] sm:$0xf]
    %v5126 = vld [vmem:[%s16] sm:$0xff]
    %v5191 = vunpack.c.l.b16 %v4998
    %v5192 = vunpack.c.l.b16 %v4999
    %v5193 = vunpack.c.l.b16 %v5000
    %v5194 = vunpack.c.l.b16 %v5001
    %v5195 = vunpack.c.l.b16 %v5002
    %v5196 = vunpack.c.l.b16 %v5003
    %v5197 = vunpack.c.l.b16 %v5004
    %v5198 = vunpack.c.l.b16 %v5005
    %v5199 = vunpack.c.l.b16 %v5006
    %v5200 = vunpack.c.l.b16 %v5007
    %v5201 = vunpack.c.l.b16 %v5008
    %v5202 = vunpack.c.l.b16 %v5009
    %v5203 = vunpack.c.l.b16 %v5010
    %v5204 = vunpack.c.l.b16 %v5011
    %v5205 = vunpack.c.l.b16 %v5012
    %v5206 = vunpack.c.l.b16 %v5013
    %v5207 = vunpack.c.l.b16 %v5014
    %v5208 = vunpack.c.l.b16 %v5015
    %v5209 = vunpack.c.l.b16 %v5016
    %v5210 = vunpack.c.l.b16 %v5017
    %v5211 = vunpack.c.l.b16 %v5018
    %v5212 = vunpack.c.l.b16 %v5019
    %v5213 = vunpack.c.l.b16 %v5020
    %v5214 = vunpack.c.l.b16 %v5021
    %v5215 = vunpack.c.l.b16 %v5022
    %v5216 = vunpack.c.l.b16 %v5023
    %v5217 = vunpack.c.l.b16 %v5024
    %v5218 = vunpack.c.l.b16 %v5025
    %v5219 = vunpack.c.l.b16 %v5026
    %v5220 = vunpack.c.l.b16 %v5027
    %v5221 = vunpack.c.l.b16 %v5028
    %v5222 = vunpack.c.l.b16 %v5029
    %v5223 = vunpack.c.l.b16 %v5030
    %v5224 = vunpack.c.l.b16 %v5031
    %v5225 = vunpack.c.l.b16 %v5032
    %v5226 = vunpack.c.l.b16 %v5033
    %v5227 = vunpack.c.l.b16 %v5034
    %v5228 = vunpack.c.l.b16 %v5035
    %v5229 = vunpack.c.l.b16 %v5036
    %v5230 = vunpack.c.l.b16 %v5037
    %v5231 = vunpack.c.l.b16 %v5038
    %v5232 = vunpack.c.l.b16 %v5039
    %v5233 = vunpack.c.l.b16 %v5040
    %v5234 = vunpack.c.l.b16 %v5041
    %v5235 = vunpack.c.l.b16 %v5042
    %v5236 = vunpack.c.l.b16 %v5043
    %v5237 = vunpack.c.l.b16 %v5044
    %v5238 = vunpack.c.l.b16 %v5045
    %v5239 = vunpack.c.l.b16 %v5046
    %v5240 = vunpack.c.l.b16 %v5047
    %v5241 = vunpack.c.l.b16 %v5048
    %v5242 = vunpack.c.l.b16 %v5049
    %v5243 = vunpack.c.l.b16 %v5050
    %v5244 = vunpack.c.l.b16 %v5051
    %v5245 = vunpack.c.l.b16 %v5052
    %v5246 = vunpack.c.l.b16 %v5053
    %v5247 = vunpack.c.l.b16 %v5054
    %v5248 = vunpack.c.l.b16 %v5055
    %v5249 = vunpack.c.l.b16 %v5056
    %v5250 = vunpack.c.l.b16 %v5057
    %v5251 = vunpack.c.l.b16 %v5058
    %v5252 = vunpack.c.l.b16 %v5059
    %v5253 = vunpack.c.l.b16 %v5060
    %v5254 = vunpack.c.l.b16 %v5061
    %v5255 = vpack.c.b16 %v5192, %v5191
    %v5256 = vpack.c.b16 %v5194, %v5193
    %v5257 = vpack.c.b16 %v5196, %v5195
    %v5258 = vpack.c.b16 %v5198, %v5197
    %v5259 = vpack.c.b16 %v5200, %v5199
    %v5260 = vpack.c.b16 %v5202, %v5201
    %v5261 = vpack.c.b16 %v5204, %v5203
    %v5262 = vpack.c.b16 %v5206, %v5205
    %v5263 = vpack.c.b16 %v5208, %v5207
    %v5264 = vpack.c.b16 %v5210, %v5209
    %v5265 = vpack.c.b16 %v5212, %v5211
    %v5266 = vpack.c.b16 %v5214, %v5213
    %v5267 = vpack.c.b16 %v5216, %v5215
    %v5268 = vpack.c.b16 %v5218, %v5217
    %v5269 = vpack.c.b16 %v5220, %v5219
    %v5270 = vpack.c.b16 %v5222, %v5221
    %v5271 = vpack.c.b16 %v5224, %v5223
    %v5272 = vpack.c.b16 %v5226, %v5225
    %v5273 = vpack.c.b16 %v5228, %v5227
    %v5274 = vpack.c.b16 %v5230, %v5229
    %v5275 = vpack.c.b16 %v5232, %v5231
    %v5276 = vpack.c.b16 %v5234, %v5233
    %v5277 = vpack.c.b16 %v5236, %v5235
    %v5278 = vpack.c.b16 %v5238, %v5237
    %v5279 = vpack.c.b16 %v5240, %v5239
    %v5280 = vpack.c.b16 %v5242, %v5241
    %v5281 = vpack.c.b16 %v5244, %v5243
    %v5282 = vpack.c.b16 %v5246, %v5245
    %v5283 = vpack.c.b16 %v5248, %v5247
    %v5284 = vpack.c.b16 %v5250, %v5249
    %v5285 = vpack.c.b16 %v5252, %v5251
    %v5286 = vpack.c.b16 %v5254, %v5253
    %v5319 = vmul.bf16 %v4846, %v5255
    %v5320 = vmul.bf16 %v4847, %v5256
    %v5321 = vmul.bf16 %v4848, %v5257
    %v5322 = vmul.bf16 %v4849, %v5258
    %v5323 = vmul.bf16 %v4846, %v5259
    %v5324 = vmul.bf16 %v4847, %v5260
    %v5325 = vmul.bf16 %v4848, %v5261
    %v5326 = vmul.bf16 %v4849, %v5262
    %v5327 = vmul.bf16 %v4846, %v5263
    %v5328 = vmul.bf16 %v4847, %v5264
    %v5329 = vmul.bf16 %v4848, %v5265
    %v5330 = vmul.bf16 %v4849, %v5266
    %v5331 = vmul.bf16 %v4846, %v5267
    %v5332 = vmul.bf16 %v4847, %v5268
    %v5333 = vmul.bf16 %v4848, %v5269
    %v5334 = vmul.bf16 %v4849, %v5270
    %v5335 = vmul.bf16 %v4846, %v5271
    %v5336 = vmul.bf16 %v4847, %v5272
    %v5337 = vmul.bf16 %v4848, %v5273
    %v5338 = vmul.bf16 %v4849, %v5274
    %v5339 = vmul.bf16 %v4846, %v5275
    %v5340 = vmul.bf16 %v4847, %v5276
    %v5341 = vmul.bf16 %v4848, %v5277
    %v5342 = vmul.bf16 %v4849, %v5278
    %v5343 = vmul.bf16 %v4846, %v5279
    %v5344 = vmul.bf16 %v4847, %v5280
    %v5345 = vmul.bf16 %v4848, %v5281
    %v5346 = vmul.bf16 %v4849, %v5282
    %v5347 = vmul.bf16 %v4846, %v5283
    %v5348 = vmul.bf16 %v4847, %v5284
    %v5349 = vmul.bf16 %v4848, %v5285
    %v5350 = vmul.bf16 %v4849, %v5286
    %v5351 = vmul.bf16 %v4990, %v5255
    %v5352 = vmul.bf16 %v4991, %v5256
    %v5353 = vmul.bf16 %v4992, %v5257
    %v5354 = vmul.bf16 %v4993, %v5258
    %v5355 = vmul.bf16 %v4990, %v5259
    %v5356 = vmul.bf16 %v4991, %v5260
    %v5357 = vmul.bf16 %v4992, %v5261
    %v5358 = vmul.bf16 %v4993, %v5262
    %v5359 = vmul.bf16 %v4990, %v5263
    %v5360 = vmul.bf16 %v4991, %v5264
    %v5361 = vmul.bf16 %v4992, %v5265
    %v5362 = vmul.bf16 %v4993, %v5266
    %v5363 = vmul.bf16 %v4990, %v5267
    %v5364 = vmul.bf16 %v4991, %v5268
    %v5365 = vmul.bf16 %v4992, %v5269
    %v5366 = vmul.bf16 %v4993, %v5270
    %v5367 = vmul.bf16 %v4990, %v5271
    %v5368 = vmul.bf16 %v4991, %v5272
    %v5369 = vmul.bf16 %v4992, %v5273
    %v5370 = vmul.bf16 %v4993, %v5274
    %v5371 = vmul.bf16 %v4990, %v5275
    %v5372 = vmul.bf16 %v4991, %v5276
    %v5373 = vmul.bf16 %v4992, %v5277
    %v5374 = vmul.bf16 %v4993, %v5278
    %v5375 = vmul.bf16 %v4990, %v5279
    %v5376 = vmul.bf16 %v4991, %v5280
    %v5377 = vmul.bf16 %v4992, %v5281
    %v5378 = vmul.bf16 %v4993, %v5282
    %v5379 = vmul.bf16 %v4990, %v5283
    %v5380 = vmul.bf16 %v4991, %v5284
    %v5381 = vmul.bf16 %v4992, %v5285
    %v5382 = vmul.bf16 %v4993, %v5286
    %v5384 = vsel %vm352, %v4702, 0
    %v5387 = vsel %vm352, %v4703, 0
    %v5390 = vsel %vm352, %v4704, 0
    %v5393 = vsel %vm352, %v4705, 0
    %v5396 = vsel %vm352, %v5319, 0
    %v5399 = vsel %vm352, %v5320, 0
    %v5402 = vsel %vm352, %v5321, 0
    %v5405 = vsel %vm352, %v5322, 0
    %v5408 = vsel %vm352, %v5323, 0
    %v5411 = vsel %vm352, %v5324, 0
    %v5414 = vsel %vm352, %v5325, 0
    %v5417 = vsel %vm352, %v5326, 0
    %v5420 = vsel %vm352, %v5327, 0
    %v5423 = vsel %vm352, %v5328, 0
    %v5426 = vsel %vm352, %v5329, 0
    %v5429 = vsel %vm352, %v5330, 0
    %v5432 = vsel %vm352, %v5331, 0
    %v5435 = vsel %vm352, %v5332, 0
    %v5438 = vsel %vm352, %v5333, 0
    %v5441 = vsel %vm352, %v5334, 0
    %v5444 = vsel %vm352, %v5335, 0
    %v5447 = vsel %vm352, %v5336, 0
    %v5450 = vsel %vm352, %v5337, 0
    %v5453 = vsel %vm352, %v5338, 0
    %v5456 = vsel %vm352, %v5339, 0
    %v5459 = vsel %vm352, %v5340, 0
    %v5462 = vsel %vm352, %v5341, 0
    %v5465 = vsel %vm352, %v5342, 0
    %v5468 = vsel %vm352, %v5343, 0
    %v5471 = vsel %vm352, %v5344, 0
    %v5474 = vsel %vm352, %v5345, 0
    %v5477 = vsel %vm352, %v5346, 0
    %v5480 = vsel %vm352, %v5347, 0
    %v5483 = vsel %vm352, %v5348, 0
    %v5486 = vsel %vm352, %v5349, 0
    %v5489 = vsel %vm352, %v5350, 0
    %5491 = vmatprep.subr.bf16.mxu0 0
    %5492 = vmatpush1.bf16.xpose.msra.mxu0 %v5417
    %5493 = vmatprep.subr.bf16.mxu0 0
    %5494 = vmatpush1.bf16.xpose.msra.mxu0 %v5414
    %5495 = vmatprep.subr.bf16.mxu0 0
    %5496 = vmatpush1.bf16.xpose.msra.mxu0 %v5411
    %5497 = vmatprep.subr.bf16.mxu0 0
    %5498 = vmatpush1.bf16.xpose.msra.mxu0 %v5408
    %5499 = vmatprep.subr.bf16.mxu0 0
    %5500 = vmatpush1.bf16.xpose.msra.mxu0 %v5405
    %5501 = vmatprep.subr.bf16.mxu0 0
    %5502 = vmatpush1.bf16.xpose.msra.mxu0 %v5402
    %5503 = vmatprep.subr.bf16.mxu0 0
    %5504 = vmatpush1.bf16.xpose.msra.mxu0 %v5399
    %5505 = vmatprep.subr.bf16.mxu0 0
    %5506 = vmatpush1.bf16.xpose.msra.mxu0 %v5396
    %5507 = vmatprep.subr.bf16.mxu0 0
    %5508 = vmatpush2.bf16.xpose.msra.mxu0 %v5441
    %5509 = vmatprep.subr.bf16.mxu0 0
    %5510 = vmatpush2.bf16.xpose.msra.mxu0 %v5438
    %5511 = vmatprep.subr.bf16.mxu0 0
    %5512 = vmatpush2.bf16.xpose.msra.mxu0 %v5435
    %5513 = vmatprep.subr.bf16.mxu0 0
    %5514 = vmatpush2.bf16.xpose.msra.mxu0 %v5432
    %5515 = vmatprep.subr.bf16.mxu0 0
    %5516 = vmatpush2.bf16.xpose.msra.mxu0 %v5429
    %5517 = vmatprep.subr.bf16.mxu0 0
    %5518 = vmatpush2.bf16.xpose.msra.mxu0 %v5426
    %5519 = vmatprep.subr.bf16.mxu0 0
    %5520 = vmatpush2.bf16.xpose.msra.mxu0 %v5423
    %5521 = vmatprep.subr.bf16.mxu0 0
    %5522 = vmatpush2.bf16.xpose.msra.mxu0 %v5420
    %5523 = vmatprep.mubr.bf16.mxu0 0
    %5524 = vmatmul.mubr.bf16.gmra.mxu0 %v5384
    %v5525 = vpop.f32.mrf.mxu0
    %v5526 = vadd.f32 0.0, %v5525
    %v5527 = vpop.f32.mrf.mxu0
    %v5528 = vadd.f32 0.0, %v5527
    %v5529 = vpop.f32.mrf.mxu0
    %v5530 = vadd.f32 0.0, %v5529
    %v5531 = vpop.f32.mrf.mxu0
    %v5532 = vadd.f32 0.0, %v5531
    %5533 = vmatprep.mubr.bf16.mxu0 0
    %5534 = vmatmul.mubr.bf16.gmra.mxu0 %v5387
    %v5535 = vpop.f32.mrf.mxu0
    %v5536 = vadd.f32 0.0, %v5535
    %v5537 = vpop.f32.mrf.mxu0
    %v5538 = vadd.f32 0.0, %v5537
    %v5539 = vpop.f32.mrf.mxu0
    %v5540 = vadd.f32 0.0, %v5539
    %v5541 = vpop.f32.mrf.mxu0
    %v5542 = vadd.f32 0.0, %v5541
    %5543 = vmatprep.mubr.bf16.mxu0 0
    %5544 = vmatmul.mubr.bf16.gmra.mxu0 %v5390
    %v5545 = vpop.f32.mrf.mxu0
    %v5546 = vadd.f32 0.0, %v5545
    %v5547 = vpop.f32.mrf.mxu0
    %v5548 = vadd.f32 0.0, %v5547
    %v5549 = vpop.f32.mrf.mxu0
    %v5550 = vadd.f32 0.0, %v5549
    %v5551 = vpop.f32.mrf.mxu0
    %v5552 = vadd.f32 0.0, %v5551
    %5553 = vmatprep.mubr.bf16.mxu0 0
    %5554 = vmatmul.mubr.bf16.gmra.mxu0 %v5393
    %v5555 = vpop.f32.mrf.mxu0
    %v5556 = vadd.f32 0.0, %v5555
    %v5557 = vpop.f32.mrf.mxu0
    %v5558 = vadd.f32 0.0, %v5557
    %v5559 = vpop.f32.mrf.mxu0
    %v5560 = vadd.f32 0.0, %v5559
    %v5561 = vpop.f32.mrf.mxu0
    %v5562 = vadd.f32 0.0, %v5561
    %5563 = vdwg.mxu0
    %5564 = vmatprep.subr.bf16.mxu0 0
    %5565 = vmatpush1.bf16.xpose.msra.mxu0 %v5465
    %5566 = vmatprep.subr.bf16.mxu0 0
    %5567 = vmatpush1.bf16.xpose.msra.mxu0 %v5462
    %5568 = vmatprep.subr.bf16.mxu0 0
    %5569 = vmatpush1.bf16.xpose.msra.mxu0 %v5459
    %5570 = vmatprep.subr.bf16.mxu0 0
    %5571 = vmatpush1.bf16.xpose.msra.mxu0 %v5456
    %5572 = vmatprep.subr.bf16.mxu0 0
    %5573 = vmatpush1.bf16.xpose.msra.mxu0 %v5453
    %5574 = vmatprep.subr.bf16.mxu0 0
    %5575 = vmatpush1.bf16.xpose.msra.mxu0 %v5450
    %5576 = vmatprep.subr.bf16.mxu0 0
    %5577 = vmatpush1.bf16.xpose.msra.mxu0 %v5447
    %5578 = vmatprep.subr.bf16.mxu0 0
    %5579 = vmatpush1.bf16.xpose.msra.mxu0 %v5444
    %5580 = vmatprep.subr.bf16.mxu0 0
    %5581 = vmatpush2.bf16.xpose.msra.mxu0 %v5489
    %5582 = vmatprep.subr.bf16.mxu0 0
    %5583 = vmatpush2.bf16.xpose.msra.mxu0 %v5486
    %5584 = vmatprep.subr.bf16.mxu0 0
    %5585 = vmatpush2.bf16.xpose.msra.mxu0 %v5483
    %5586 = vmatprep.subr.bf16.mxu0 0
    %5587 = vmatpush2.bf16.xpose.msra.mxu0 %v5480
    %5588 = vmatprep.subr.bf16.mxu0 0
    %5589 = vmatpush2.bf16.xpose.msra.mxu0 %v5477
    %5590 = vmatprep.subr.bf16.mxu0 0
    %5591 = vmatpush2.bf16.xpose.msra.mxu0 %v5474
    %5592 = vmatprep.subr.bf16.mxu0 0
    %5593 = vmatpush2.bf16.xpose.msra.mxu0 %v5471
    %5594 = vmatprep.subr.bf16.mxu0 0
    %5595 = vmatpush2.bf16.xpose.msra.mxu0 %v5468
    %5596 = vmatprep.mubr.bf16.mxu0 0
    %5597 = vmatmul.mubr.bf16.gmra.mxu0 %v5384
    %v5598 = vpop.f32.mrf.mxu0
    %v5599 = vadd.f32 0.0, %v5598
    %v5600 = vpop.f32.mrf.mxu0
    %v5601 = vadd.f32 0.0, %v5600
    %v5602 = vpop.f32.mrf.mxu0
    %v5603 = vadd.f32 0.0, %v5602
    %v5604 = vpop.f32.mrf.mxu0
    %v5605 = vadd.f32 0.0, %v5604
    %5606 = vmatprep.mubr.bf16.mxu0 0
    %5607 = vmatmul.mubr.bf16.gmra.mxu0 %v5387
    %v5608 = vpop.f32.mrf.mxu0
    %v5609 = vadd.f32 0.0, %v5608
    %v5610 = vpop.f32.mrf.mxu0
    %v5611 = vadd.f32 0.0, %v5610
    %v5612 = vpop.f32.mrf.mxu0
    %v5613 = vadd.f32 0.0, %v5612
    %v5614 = vpop.f32.mrf.mxu0
    %v5615 = vadd.f32 0.0, %v5614
    %5616 = vmatprep.mubr.bf16.mxu0 0
    %5617 = vmatmul.mubr.bf16.gmra.mxu0 %v5390
    %v5618 = vpop.f32.mrf.mxu0
    %v5619 = vadd.f32 0.0, %v5618
    %v5620 = vpop.f32.mrf.mxu0
    %v5621 = vadd.f32 0.0, %v5620
    %v5622 = vpop.f32.mrf.mxu0
    %v5623 = vadd.f32 0.0, %v5622
    %v5624 = vpop.f32.mrf.mxu0
    %v5625 = vadd.f32 0.0, %v5624
    %5626 = vmatprep.mubr.bf16.mxu0 0
    %5627 = vmatmul.mubr.bf16.gmra.mxu0 %v5393
    %v5628 = vpop.f32.mrf.mxu0
    %v5629 = vadd.f32 0.0, %v5628
    %v5630 = vpop.f32.mrf.mxu0
    %v5631 = vadd.f32 0.0, %v5630
    %v5632 = vpop.f32.mrf.mxu0
    %v5633 = vadd.f32 0.0, %v5632
    %v5634 = vpop.f32.mrf.mxu0
    %v5635 = vadd.f32 0.0, %v5634
    %5636 = vdwg.mxu0
    %v5637 = vmul.f32 %v5526, 0.35355338
    %v5638 = vmul.f32 %v5528, 0.35355338
    %v5639 = vmul.f32 %v5599, 0.35355338
    %v5640 = vmul.f32 %v5601, 0.35355338
    %v5641 = vmul.f32 %v5530, 0.35355338
    %v5642 = vmul.f32 %v5532, 0.35355338
    %v5643 = vmul.f32 %v5603, 0.35355338
    %v5644 = vmul.f32 %v5605, 0.35355338
    %v5645 = vmul.f32 %v5536, 0.35355338
    %v5646 = vmul.f32 %v5538, 0.35355338
    %v5647 = vmul.f32 %v5609, 0.35355338
    %v5648 = vmul.f32 %v5611, 0.35355338
    %v5649 = vmul.f32 %v5540, 0.35355338
    %v5650 = vmul.f32 %v5542, 0.35355338
    %v5651 = vmul.f32 %v5613, 0.35355338
    %v5652 = vmul.f32 %v5615, 0.35355338
    %v5653 = vmul.f32 %v5546, 0.35355338
    %v5654 = vmul.f32 %v5548, 0.35355338
    %v5655 = vmul.f32 %v5619, 0.35355338
    %v5656 = vmul.f32 %v5621, 0.35355338
    %v5657 = vmul.f32 %v5550, 0.35355338
    %v5658 = vmul.f32 %v5552, 0.35355338
    %v5659 = vmul.f32 %v5623, 0.35355338
    %v5660 = vmul.f32 %v5625, 0.35355338
    %v5661 = vmul.f32 %v5556, 0.35355338
    %v5662 = vmul.f32 %v5558, 0.35355338
    %v5663 = vmul.f32 %v5629, 0.35355338
    %v5664 = vmul.f32 %v5631, 0.35355338
    %v5665 = vmul.f32 %v5560, 0.35355338
    %v5666 = vmul.f32 %v5562, 0.35355338
    %v5667 = vmul.f32 %v5633, 0.35355338
    %v5668 = vmul.f32 %v5635, 0.35355338
    %v5669 = vmax.f32 %v5637, %v5638
    %v5670 = vmax.f32 %v5669, %v5639
    %v5671 = vmax.f32 %v5670, %v5640
    %5672 = vmax.xlane.f32.xlu0 %v5671
    %v5673 = vpop.xlane.xlu0 %5672
    %v5674 = vmax.f32 %v5641, %v5642
    %v5675 = vmax.f32 %v5674, %v5643
    %v5676 = vmax.f32 %v5675, %v5644
    %5677 = vmax.xlane.f32.xlu0 %v5676
    %v5678 = vpop.xlane.xlu0 %5677
    %v5679 = vmax.f32 %v5645, %v5646
    %v5680 = vmax.f32 %v5679, %v5647
    %v5681 = vmax.f32 %v5680, %v5648
    %5682 = vmax.xlane.f32.xlu0 %v5681
    %v5683 = vpop.xlane.xlu0 %5682
    %v5684 = vmax.f32 %v5649, %v5650
    %v5685 = vmax.f32 %v5684, %v5651
    %v5686 = vmax.f32 %v5685, %v5652
    %5687 = vmax.xlane.f32.xlu0 %v5686
    %v5688 = vpop.xlane.xlu0 %5687
    %v5689 = vmax.f32 %v5653, %v5654
    %v5690 = vmax.f32 %v5689, %v5655
    %v5691 = vmax.f32 %v5690, %v5656
    %5692 = vmax.xlane.f32.xlu0 %v5691
    %v5693 = vpop.xlane.xlu0 %5692
    %v5694 = vmax.f32 %v5657, %v5658
    %v5695 = vmax.f32 %v5694, %v5659
    %v5696 = vmax.f32 %v5695, %v5660
    %5697 = vmax.xlane.f32.xlu0 %v5696
    %v5698 = vpop.xlane.xlu0 %5697
    %v5699 = vmax.f32 %v5661, %v5662
    %v5700 = vmax.f32 %v5699, %v5663
    %v5701 = vmax.f32 %v5700, %v5664
    %5702 = vmax.xlane.f32.xlu0 %v5701
    %v5703 = vpop.xlane.xlu0 %5702
    %v5704 = vmax.f32 %v5665, %v5666
    %v5705 = vmax.f32 %v5704, %v5667
    %v5706 = vmax.f32 %v5705, %v5668
    %5707 = vmax.xlane.f32.xlu0 %v5706
    %v5708 = vpop.xlane.xlu0 %5707
    %v5709 = vsub.f32 %v5637, %v5673
    %v5710 = vsub.f32 %v5638, %v5673
    %v5711 = vsub.f32 %v5639, %v5673
    %v5712 = vsub.f32 %v5640, %v5673
    %v5713 = vsub.f32 %v5641, %v5678
    %v5714 = vsub.f32 %v5642, %v5678
    %v5715 = vsub.f32 %v5643, %v5678
    %v5716 = vsub.f32 %v5644, %v5678
    %v5717 = vsub.f32 %v5645, %v5683
    %v5718 = vsub.f32 %v5646, %v5683
    %v5719 = vsub.f32 %v5647, %v5683
    %v5720 = vsub.f32 %v5648, %v5683
    %v5721 = vsub.f32 %v5649, %v5688
    %v5722 = vsub.f32 %v5650, %v5688
    %v5723 = vsub.f32 %v5651, %v5688
    %v5724 = vsub.f32 %v5652, %v5688
    %v5725 = vsub.f32 %v5653, %v5693
    %v5726 = vsub.f32 %v5654, %v5693
    %v5727 = vsub.f32 %v5655, %v5693
    %v5728 = vsub.f32 %v5656, %v5693
    %v5729 = vsub.f32 %v5657, %v5698
    %v5730 = vsub.f32 %v5658, %v5698
    %v5731 = vsub.f32 %v5659, %v5698
    %v5732 = vsub.f32 %v5660, %v5698
    %v5733 = vsub.f32 %v5661, %v5703
    %v5734 = vsub.f32 %v5662, %v5703
    %v5735 = vsub.f32 %v5663, %v5703
    %v5736 = vsub.f32 %v5664, %v5703
    %v5737 = vsub.f32 %v5665, %v5708
    %v5738 = vsub.f32 %v5666, %v5708
    %v5739 = vsub.f32 %v5667, %v5708
    %v5740 = vsub.f32 %v5668, %v5708
    %v5741 = vmul.f32 %v5709, 1.442695
    %v5742 = vpow.pop %v5741
    %v5743 = vmul.f32 %v5710, 1.442695
    %v5744 = vpow.pop %v5743
    %v5745 = vmul.f32 %v5711, 1.442695
    %v5746 = vpow.pop %v5745
    %v5747 = vmul.f32 %v5712, 1.442695
    %v5748 = vpow.pop %v5747
    %v5749 = vmul.f32 %v5713, 1.442695
    %v5750 = vpow.pop %v5749
    %v5751 = vmul.f32 %v5714, 1.442695
    %v5752 = vpow.pop %v5751
    %v5753 = vmul.f32 %v5715, 1.442695
    %v5754 = vpow.pop %v5753
    %v5755 = vmul.f32 %v5716, 1.442695
    %v5756 = vpow.pop %v5755
    %v5757 = vmul.f32 %v5717, 1.442695
    %v5758 = vpow.pop %v5757
    %v5759 = vmul.f32 %v5718, 1.442695
    %v5760 = vpow.pop %v5759
    %v5761 = vmul.f32 %v5719, 1.442695
    %v5762 = vpow.pop %v5761
    %v5763 = vmul.f32 %v5720, 1.442695
    %v5764 = vpow.pop %v5763
    %v5765 = vmul.f32 %v5721, 1.442695
    %v5766 = vpow.pop %v5765
    %v5767 = vmul.f32 %v5722, 1.442695
    %v5768 = vpow.pop %v5767
    %v5769 = vmul.f32 %v5723, 1.442695
    %v5770 = vpow.pop %v5769
    %v5771 = vmul.f32 %v5724, 1.442695
    %v5772 = vpow.pop %v5771
    %v5773 = vmul.f32 %v5725, 1.442695
    %v5774 = vpow.pop %v5773
    %v5775 = vmul.f32 %v5726, 1.442695
    %v5776 = vpow.pop %v5775
    %v5777 = vmul.f32 %v5727, 1.442695
    %v5778 = vpow.pop %v5777
    %v5779 = vmul.f32 %v5728, 1.442695
    %v5780 = vpow.pop %v5779
    %v5781 = vmul.f32 %v5729, 1.442695
    %v5782 = vpow.pop %v5781
    %v5783 = vmul.f32 %v5730, 1.442695
    %v5784 = vpow.pop %v5783
    %v5785 = vmul.f32 %v5731, 1.442695
    %v5786 = vpow.pop %v5785
    %v5787 = vmul.f32 %v5732, 1.442695
    %v5788 = vpow.pop %v5787
    %v5789 = vmul.f32 %v5733, 1.442695
    %v5790 = vpow.pop %v5789
    %v5791 = vmul.f32 %v5734, 1.442695
    %v5792 = vpow.pop %v5791
    %v5793 = vmul.f32 %v5735, 1.442695
    %v5794 = vpow.pop %v5793
    %v5795 = vmul.f32 %v5736, 1.442695
    %v5796 = vpow.pop %v5795
    %v5797 = vmul.f32 %v5737, 1.442695
    %v5798 = vpow.pop %v5797
    %v5799 = vmul.f32 %v5738, 1.442695
    %v5800 = vpow.pop %v5799
    %v5801 = vmul.f32 %v5739, 1.442695
    %v5802 = vpow.pop %v5801
    %v5803 = vmul.f32 %v5740, 1.442695
    %v5804 = vpow.pop %v5803
    %v5805 = vpack.c.bf16 %v5750, %v5742
    %v5806 = vpack.c.bf16 %v5752, %v5744
    %v5807 = vpack.c.bf16 %v5754, %v5746
    %v5808 = vpack.c.bf16 %v5756, %v5748
    %v5809 = vpack.c.bf16 %v5766, %v5758
    %v5810 = vpack.c.bf16 %v5768, %v5760
    %v5811 = vpack.c.bf16 %v5770, %v5762
    %v5812 = vpack.c.bf16 %v5772, %v5764
    %v5813 = vpack.c.bf16 %v5782, %v5774
    %v5814 = vpack.c.bf16 %v5784, %v5776
    %v5815 = vpack.c.bf16 %v5786, %v5778
    %v5816 = vpack.c.bf16 %v5788, %v5780
    %v5817 = vpack.c.bf16 %v5798, %v5790
    %v5818 = vpack.c.bf16 %v5800, %v5792
    %v5819 = vpack.c.bf16 %v5802, %v5794
    %v5820 = vpack.c.bf16 %v5804, %v5796
    %v5885 = vunpack.c.l.b16 %v5062
    %v5886 = vunpack.c.l.b16 %v5063
    %v5887 = vunpack.c.l.b16 %v5064
    %v5888 = vunpack.c.l.b16 %v5065
    %v5889 = vunpack.c.l.b16 %v5066
    %v5890 = vunpack.c.l.b16 %v5067
    %v5891 = vunpack.c.l.b16 %v5068
    %v5892 = vunpack.c.l.b16 %v5069
    %v5893 = vunpack.c.l.b16 %v5070
    %v5894 = vunpack.c.l.b16 %v5071
    %v5895 = vunpack.c.l.b16 %v5072
    %v5896 = vunpack.c.l.b16 %v5073
    %v5897 = vunpack.c.l.b16 %v5074
    %v5898 = vunpack.c.l.b16 %v5075
    %v5899 = vunpack.c.l.b16 %v5076
    %v5900 = vunpack.c.l.b16 %v5077
    %v5901 = vunpack.c.l.b16 %v5078
    %v5902 = vunpack.c.l.b16 %v5079
    %v5903 = vunpack.c.l.b16 %v5080
    %v5904 = vunpack.c.l.b16 %v5081
    %v5905 = vunpack.c.l.b16 %v5082
    %v5906 = vunpack.c.l.b16 %v5083
    %v5907 = vunpack.c.l.b16 %v5084
    %v5908 = vunpack.c.l.b16 %v5085
    %v5909 = vunpack.c.l.b16 %v5086
    %v5910 = vunpack.c.l.b16 %v5087
    %v5911 = vunpack.c.l.b16 %v5088
    %v5912 = vunpack.c.l.b16 %v5089
    %v5913 = vunpack.c.l.b16 %v5090
    %v5914 = vunpack.c.l.b16 %v5091
    %v5915 = vunpack.c.l.b16 %v5092
    %v5916 = vunpack.c.l.b16 %v5093
    %v5917 = vunpack.c.l.b16 %v5094
    %v5918 = vunpack.c.l.b16 %v5095
    %v5919 = vunpack.c.l.b16 %v5096
    %v5920 = vunpack.c.l.b16 %v5097
    %v5921 = vunpack.c.l.b16 %v5098
    %v5922 = vunpack.c.l.b16 %v5099
    %v5923 = vunpack.c.l.b16 %v5100
    %v5924 = vunpack.c.l.b16 %v5101
    %v5925 = vunpack.c.l.b16 %v5102
    %v5926 = vunpack.c.l.b16 %v5103
    %v5927 = vunpack.c.l.b16 %v5104
    %v5928 = vunpack.c.l.b16 %v5105
    %v5929 = vunpack.c.l.b16 %v5106
    %v5930 = vunpack.c.l.b16 %v5107
    %v5931 = vunpack.c.l.b16 %v5108
    %v5932 = vunpack.c.l.b16 %v5109
    %v5933 = vunpack.c.l.b16 %v5110
    %v5934 = vunpack.c.l.b16 %v5111
    %v5935 = vunpack.c.l.b16 %v5112
    %v5936 = vunpack.c.l.b16 %v5113
    %v5937 = vunpack.c.l.b16 %v5114
    %v5938 = vunpack.c.l.b16 %v5115
    %v5939 = vunpack.c.l.b16 %v5116
    %v5940 = vunpack.c.l.b16 %v5117
    %v5941 = vunpack.c.l.b16 %v5118
    %v5942 = vunpack.c.l.b16 %v5119
    %v5943 = vunpack.c.l.b16 %v5120
    %v5944 = vunpack.c.l.b16 %v5121
    %v5945 = vunpack.c.l.b16 %v5122
    %v5946 = vunpack.c.l.b16 %v5123
    %v5947 = vunpack.c.l.b16 %v5124
    %v5948 = vunpack.c.l.b16 %v5125
    %v5949 = vpack.c.b16 %v5886, %v5885
    %v5950 = vpack.c.b16 %v5888, %v5887
    %v5951 = vpack.c.b16 %v5890, %v5889
    %v5952 = vpack.c.b16 %v5892, %v5891
    %v5953 = vpack.c.b16 %v5894, %v5893
    %v5954 = vpack.c.b16 %v5896, %v5895
    %v5955 = vpack.c.b16 %v5898, %v5897
    %v5956 = vpack.c.b16 %v5900, %v5899
    %v5957 = vpack.c.b16 %v5902, %v5901
    %v5958 = vpack.c.b16 %v5904, %v5903
    %v5959 = vpack.c.b16 %v5906, %v5905
    %v5960 = vpack.c.b16 %v5908, %v5907
    %v5961 = vpack.c.b16 %v5910, %v5909
    %v5962 = vpack.c.b16 %v5912, %v5911
    %v5963 = vpack.c.b16 %v5914, %v5913
    %v5964 = vpack.c.b16 %v5916, %v5915
    %v5965 = vpack.c.b16 %v5918, %v5917
    %v5966 = vpack.c.b16 %v5920, %v5919
    %v5967 = vpack.c.b16 %v5922, %v5921
    %v5968 = vpack.c.b16 %v5924, %v5923
    %v5969 = vpack.c.b16 %v5926, %v5925
    %v5970 = vpack.c.b16 %v5928, %v5927
    %v5971 = vpack.c.b16 %v5930, %v5929
    %v5972 = vpack.c.b16 %v5932, %v5931
    %v5973 = vpack.c.b16 %v5934, %v5933
    %v5974 = vpack.c.b16 %v5936, %v5935
    %v5975 = vpack.c.b16 %v5938, %v5937
    %v5976 = vpack.c.b16 %v5940, %v5939
    %v5977 = vpack.c.b16 %v5942, %v5941
    %v5978 = vpack.c.b16 %v5944, %v5943
    %v5979 = vpack.c.b16 %v5946, %v5945
    %v5980 = vpack.c.b16 %v5948, %v5947
    %6013 = vmatprep.subr.bf16.mxu0 0
    %6014 = vmatpush1.bf16.msra.mxu0 %v5956
    %6015 = vmatprep.subr.bf16.mxu0 0
    %6016 = vmatpush1.bf16.msra.mxu0 %v5955
    %6017 = vmatprep.subr.bf16.mxu0 0
    %6018 = vmatpush1.bf16.msra.mxu0 %v5954
    %6019 = vmatprep.subr.bf16.mxu0 0
    %6020 = vmatpush1.bf16.msra.mxu0 %v5953
    %6021 = vmatprep.subr.bf16.mxu0 0
    %6022 = vmatpush1.bf16.msra.mxu0 %v5952
    %6023 = vmatprep.subr.bf16.mxu0 0
    %6024 = vmatpush1.bf16.msra.mxu0 %v5951
    %6025 = vmatprep.subr.bf16.mxu0 0
    %6026 = vmatpush1.bf16.msra.mxu0 %v5950
    %6027 = vmatprep.subr.bf16.mxu0 0
    %6028 = vmatpush1.bf16.msra.mxu0 %v5949
    %6029 = vmatprep.subr.bf16.mxu0 0
    %6030 = vmatpush2.bf16.msra.mxu0 %v5964
    %6031 = vmatprep.subr.bf16.mxu0 0
    %6032 = vmatpush2.bf16.msra.mxu0 %v5963
    %6033 = vmatprep.subr.bf16.mxu0 0
    %6034 = vmatpush2.bf16.msra.mxu0 %v5962
    %6035 = vmatprep.subr.bf16.mxu0 0
    %6036 = vmatpush2.bf16.msra.mxu0 %v5961
    %6037 = vmatprep.subr.bf16.mxu0 0
    %6038 = vmatpush2.bf16.msra.mxu0 %v5960
    %6039 = vmatprep.subr.bf16.mxu0 0
    %6040 = vmatpush2.bf16.msra.mxu0 %v5959
    %6041 = vmatprep.subr.bf16.mxu0 0
    %6042 = vmatpush2.bf16.msra.mxu0 %v5958
    %6043 = vmatprep.subr.bf16.mxu0 0
    %6044 = vmatpush2.bf16.msra.mxu0 %v5957
    %6045 = vmatprep.mubr.bf16.mxu0 %v5806
    %6046 = vmatmul.mubr.bf16.gmra.mxu0 %v5805
    %v6047 = vpop.f32.mrf.mxu0
    %v6048 = vadd.f32 0.0, %v6047
    %v6049 = vpop.f32.mrf.mxu0
    %v6050 = vpop.f32.mrf.mxu0
    %v6051 = vadd.f32 0.0, %v6050
    %v6052 = vpop.f32.mrf.mxu0
    %6053 = vmatprep.mubr.bf16.mxu0 %v5810
    %6054 = vmatmul.mubr.bf16.gmra.mxu0 %v5809
    %v6055 = vpop.f32.mrf.mxu0
    %v6056 = vadd.f32 0.0, %v6055
    %v6057 = vpop.f32.mrf.mxu0
    %v6058 = vpop.f32.mrf.mxu0
    %v6059 = vadd.f32 0.0, %v6058
    %v6060 = vpop.f32.mrf.mxu0
    %6061 = vmatprep.mubr.bf16.mxu0 %v5814
    %6062 = vmatmul.mubr.bf16.gmra.mxu0 %v5813
    %v6063 = vpop.f32.mrf.mxu0
    %v6064 = vadd.f32 0.0, %v6063
    %v6065 = vpop.f32.mrf.mxu0
    %v6066 = vpop.f32.mrf.mxu0
    %v6067 = vadd.f32 0.0, %v6066
    %v6068 = vpop.f32.mrf.mxu0
    %6069 = vmatprep.mubr.bf16.mxu0 %v5818
    %6070 = vmatmul.mubr.bf16.gmra.mxu0 %v5817
    %v6071 = vpop.f32.mrf.mxu0
    %v6072 = vadd.f32 0.0, %v6071
    %v6073 = vpop.f32.mrf.mxu0
    %v6074 = vpop.f32.mrf.mxu0
    %v6075 = vadd.f32 0.0, %v6074
    %v6076 = vpop.f32.mrf.mxu0
    %6077 = vdwg.mxu0
    %6078 = vmatprep.subr.bf16.mxu0 0
    %6079 = vmatpush1.bf16.msra.mxu0 %v5972
    %6080 = vmatprep.subr.bf16.mxu0 0
    %6081 = vmatpush1.bf16.msra.mxu0 %v5971
    %6082 = vmatprep.subr.bf16.mxu0 0
    %6083 = vmatpush1.bf16.msra.mxu0 %v5970
    %6084 = vmatprep.subr.bf16.mxu0 0
    %6085 = vmatpush1.bf16.msra.mxu0 %v5969
    %6086 = vmatprep.subr.bf16.mxu0 0
    %6087 = vmatpush1.bf16.msra.mxu0 %v5968
    %6088 = vmatprep.subr.bf16.mxu0 0
    %6089 = vmatpush1.bf16.msra.mxu0 %v5967
    %6090 = vmatprep.subr.bf16.mxu0 0
    %6091 = vmatpush1.bf16.msra.mxu0 %v5966
    %6092 = vmatprep.subr.bf16.mxu0 0
    %6093 = vmatpush1.bf16.msra.mxu0 %v5965
    %6094 = vmatprep.subr.bf16.mxu0 0
    %6095 = vmatpush2.bf16.msra.mxu0 %v5980
    %6096 = vmatprep.subr.bf16.mxu0 0
    %6097 = vmatpush2.bf16.msra.mxu0 %v5979
    %6098 = vmatprep.subr.bf16.mxu0 0
    %6099 = vmatpush2.bf16.msra.mxu0 %v5978
    %6100 = vmatprep.subr.bf16.mxu0 0
    %6101 = vmatpush2.bf16.msra.mxu0 %v5977
    %6102 = vmatprep.subr.bf16.mxu0 0
    %6103 = vmatpush2.bf16.msra.mxu0 %v5976
    %6104 = vmatprep.subr.bf16.mxu0 0
    %6105 = vmatpush2.bf16.msra.mxu0 %v5975
    %6106 = vmatprep.subr.bf16.mxu0 0
    %6107 = vmatpush2.bf16.msra.mxu0 %v5974
    %6108 = vmatprep.subr.bf16.mxu0 0
    %6109 = vmatpush2.bf16.msra.mxu0 %v5973
    %6110 = vmatprep.mubr.bf16.mxu0 %v5808
    %6111 = vmatmul.mubr.bf16.gmra.mxu0 %v5807
    %v6112 = vpop.f32.mrf.mxu0
    %v6113 = vadd.f32 %v6048, %v6112
    %v6114 = vpop.f32.mrf.mxu0
    %v6115 = vpop.f32.mrf.mxu0
    %v6116 = vadd.f32 %v6051, %v6115
    %v6117 = vpop.f32.mrf.mxu0
    %6118 = vmatprep.mubr.bf16.mxu0 %v5812
    %6119 = vmatmul.mubr.bf16.gmra.mxu0 %v5811
    %v6120 = vpop.f32.mrf.mxu0
    %v6121 = vadd.f32 %v6056, %v6120
    %v6122 = vpop.f32.mrf.mxu0
    %v6123 = vpop.f32.mrf.mxu0
    %v6124 = vadd.f32 %v6059, %v6123
    %v6125 = vpop.f32.mrf.mxu0
    %6126 = vmatprep.mubr.bf16.mxu0 %v5816
    %6127 = vmatmul.mubr.bf16.gmra.mxu0 %v5815
    %v6128 = vpop.f32.mrf.mxu0
    %v6129 = vadd.f32 %v6064, %v6128
    %v6130 = vpop.f32.mrf.mxu0
    %v6131 = vpop.f32.mrf.mxu0
    %v6132 = vadd.f32 %v6067, %v6131
    %v6133 = vpop.f32.mrf.mxu0
    %6134 = vmatprep.mubr.bf16.mxu0 %v5820
    %6135 = vmatmul.mubr.bf16.gmra.mxu0 %v5819
    %v6136 = vpop.f32.mrf.mxu0
    %v6137 = vadd.f32 %v6072, %v6136
    %v6138 = vpop.f32.mrf.mxu0
    %v6139 = vpop.f32.mrf.mxu0
    %v6140 = vadd.f32 %v6075, %v6139
    %v6141 = vpop.f32.mrf.mxu0
    %6142 = vdwg.mxu0
    %v6143 = vrcp.pop %v6113
    %v6144 = vmul.f32 1.0, %v6143
    %v6145 = vrcp.pop %v6116
    %v6146 = vmul.f32 1.0, %v6145
    %v6147 = vrcp.pop %v6121
    %v6148 = vmul.f32 1.0, %v6147
    %v6149 = vrcp.pop %v6124
    %v6150 = vmul.f32 1.0, %v6149
    %v6151 = vrcp.pop %v6129
    %v6152 = vmul.f32 1.0, %v6151
    %v6153 = vrcp.pop %v6132
    %v6154 = vmul.f32 1.0, %v6153
    %v6155 = vrcp.pop %v6137
    %v6156 = vmul.f32 1.0, %v6155
    %v6157 = vrcp.pop %v6140
    %v6158 = vmul.f32 1.0, %v6157
    %vm6159 = vcmask 64512
    %v6161 = vsel %vm6159, %v6144, 0
    %v6164 = vsel %vm6159, %v6146, 0
    %v6167 = vsel %vm6159, %v6148, 0
    %v6170 = vsel %vm6159, %v6150, 0
    %v6173 = vsel %vm6159, %v6152, 0
    %v6176 = vsel %vm6159, %v6154, 0
    %v6179 = vsel %vm6159, %v6156, 0
    %v6182 = vsel %vm6159, %v6158, 0
    %6184 = vmatprep.subr.mxu0 0.0
    %6185 = vmatpush1.msra.mxu0 0.0
    %6186 = vmatprep.subr.mxu0 0.0
    %6187 = vmatpush1.msra.mxu0 0.0
    %6188 = vmatprep.subr.mxu0 0.0
    %6189 = vmatpush1.msra.mxu0 0.0
    %6190 = vmatprep.subr.mxu0 0.0
    %6191 = vmatpush1.msra.mxu0 0.0
    %6192 = vmatprep.subr.mxu0 0.0
    %6193 = vmatpush1.msra.mxu0 0.0
    %6194 = vmatprep.subr.mxu0 0.0
    %6195 = vmatpush1.msra.mxu0 0.0
    %6196 = vmatprep.subr.mxu0 0.0
    %6197 = vmatpush1.msra.mxu0 0.0
    %6198 = vmatprep.subr.mxu0 0.0
    %6199 = vmatpush1.msra.mxu0 0.0
    %6200 = vmatprep.subr.mxu0 0.0
    %6201 = vmatpush1.msra.mxu0 0.0
    %6202 = vmatprep.subr.mxu0 0.0
    %6203 = vmatpush1.msra.mxu0 0.0
    %6204 = vmatprep.subr.mxu0 0.0
    %6205 = vmatpush1.msra.mxu0 0.0
    %6206 = vmatprep.subr.mxu0 0.0
    %6207 = vmatpush1.msra.mxu0 0.0
    %6208 = vmatprep.subr.mxu0 0.0
    %6209 = vmatpush1.msra.mxu0 0.0
    %6210 = vmatprep.subr.mxu0 0.0
    %6211 = vmatpush1.msra.mxu0 0.0
    %6212 = vmatprep.subr.mxu0 0.0
    %6213 = vmatpush1.msra.mxu0 0.0
    %6214 = vmatprep.subr.mxu0 0.0
    %6215 = vmatpush1.msra.mxu0 %v5126
    %6216 = vmatprep.subr.mxu0 0.0
    %6217 = vmatpush2.msra.mxu0 0.0
    %6218 = vmatprep.subr.mxu0 0.0
    %6219 = vmatpush2.msra.mxu0 0.0
    %6220 = vmatprep.subr.mxu0 0.0
    %6221 = vmatpush2.msra.mxu0 0.0
    %6222 = vmatprep.subr.mxu0 0.0
    %6223 = vmatpush2.msra.mxu0 0.0
    %6224 = vmatprep.subr.mxu0 0.0
    %6225 = vmatpush2.msra.mxu0 0.0
    %6226 = vmatprep.subr.mxu0 0.0
    %6227 = vmatpush2.msra.mxu0 0.0
    %6228 = vmatprep.subr.mxu0 0.0
    %6229 = vmatpush2.msra.mxu0 0.0
    %6230 = vmatprep.subr.mxu0 0.0
    %6231 = vmatpush2.msra.mxu0 0.0
    %6232 = vmatprep.subr.mxu0 0.0
    %6233 = vmatpush2.msra.mxu0 0.0
    %6234 = vmatprep.subr.mxu0 0.0
    %6235 = vmatpush2.msra.mxu0 0.0
    %6236 = vmatprep.subr.mxu0 0.0
    %6237 = vmatpush2.msra.mxu0 0.0
    %6238 = vmatprep.subr.mxu0 0.0
    %6239 = vmatpush2.msra.mxu0 0.0
    %6240 = vmatprep.subr.mxu0 0.0
    %6241 = vmatpush2.msra.mxu0 0.0
    %6242 = vmatprep.subr.mxu0 0.0
    %6243 = vmatpush2.msra.mxu0 0.0
    %6244 = vmatprep.subr.mxu0 0.0
    %6245 = vmatpush2.msra.mxu0 0.0
    %6246 = vmatprep.subr.mxu0 0.0
    %6247 = vmatpush2.msra.mxu0 0.0
    %6248 = vmatprep.mubr.f32.mxu0 0.0
    %6249 = vmatmul.mubr.f32.gmra.mxu0 %v6161
    %v6250 = vpop.f32.mrf.mxu0
    %v6251 = vadd.f32 0.0, %v6250
    %v6252 = vpop.f32.mrf.mxu0
    %6253 = vmatprep.mubr.f32.mxu0 0.0
    %6254 = vmatmul.mubr.f32.gmra.mxu0 %v6164
    %v6255 = vpop.f32.mrf.mxu0
    %v6256 = vadd.f32 0.0, %v6255
    %v6257 = vpop.f32.mrf.mxu0
    %6258 = vmatprep.mubr.f32.mxu0 0.0
    %6259 = vmatmul.mubr.f32.gmra.mxu0 %v6167
    %v6260 = vpop.f32.mrf.mxu0
    %v6261 = vadd.f32 0.0, %v6260
    %v6262 = vpop.f32.mrf.mxu0
    %6263 = vmatprep.mubr.f32.mxu0 0.0
    %6264 = vmatmul.mubr.f32.gmra.mxu0 %v6170
    %v6265 = vpop.f32.mrf.mxu0
    %v6266 = vadd.f32 0.0, %v6265
    %v6267 = vpop.f32.mrf.mxu0
    %6268 = vmatprep.mubr.f32.mxu0 0.0
    %6269 = vmatmul.mubr.f32.gmra.mxu0 %v6173
    %v6270 = vpop.f32.mrf.mxu0
    %v6271 = vadd.f32 0.0, %v6270
    %v6272 = vpop.f32.mrf.mxu0
    %6273 = vmatprep.mubr.f32.mxu0 0.0
    %6274 = vmatmul.mubr.f32.gmra.mxu0 %v6176
    %v6275 = vpop.f32.mrf.mxu0
    %v6276 = vadd.f32 0.0, %v6275
    %v6277 = vpop.f32.mrf.mxu0
    %6278 = vmatprep.mubr.f32.mxu0 0.0
    %6279 = vmatmul.mubr.f32.gmra.mxu0 %v6179
    %v6280 = vpop.f32.mrf.mxu0
    %v6281 = vadd.f32 0.0, %v6280
    %v6282 = vpop.f32.mrf.mxu0
    %6283 = vmatprep.mubr.f32.mxu0 0.0
    %6284 = vmatmul.mubr.f32.gmra.mxu0 %v6182
    %v6285 = vpop.f32.mrf.mxu0
    %v6286 = vadd.f32 0.0, %v6285
    %v6287 = vpop.f32.mrf.mxu0
    %6288 = vdwg.mxu0
    %6289 = vmatprep.subr.bf16.mxu0 0
    %6290 = vmatpush1.bf16.msra.mxu0 %v5358
    %6291 = vmatprep.subr.bf16.mxu0 0
    %6292 = vmatpush1.bf16.msra.mxu0 %v5357
    %6293 = vmatprep.subr.bf16.mxu0 0
    %6294 = vmatpush1.bf16.msra.mxu0 %v5356
    %6295 = vmatprep.subr.bf16.mxu0 0
    %6296 = vmatpush1.bf16.msra.mxu0 %v5355
    %6297 = vmatprep.subr.bf16.mxu0 0
    %6298 = vmatpush1.bf16.msra.mxu0 %v5354
    %6299 = vmatprep.subr.bf16.mxu0 0
    %6300 = vmatpush1.bf16.msra.mxu0 %v5353
    %6301 = vmatprep.subr.bf16.mxu0 0
    %6302 = vmatpush1.bf16.msra.mxu0 %v5352
    %6303 = vmatprep.subr.bf16.mxu0 0
    %6304 = vmatpush1.bf16.msra.mxu0 %v5351
    %6305 = vmatprep.subr.bf16.mxu0 0
    %6306 = vmatpush2.bf16.msra.mxu0 %v5366
    %6307 = vmatprep.subr.bf16.mxu0 0
    %6308 = vmatpush2.bf16.msra.mxu0 %v5365
    %6309 = vmatprep.subr.bf16.mxu0 0
    %6310 = vmatpush2.bf16.msra.mxu0 %v5364
    %6311 = vmatprep.subr.bf16.mxu0 0
    %6312 = vmatpush2.bf16.msra.mxu0 %v5363
    %6313 = vmatprep.subr.bf16.mxu0 0
    %6314 = vmatpush2.bf16.msra.mxu0 %v5362
    %6315 = vmatprep.subr.bf16.mxu0 0
    %6316 = vmatpush2.bf16.msra.mxu0 %v5361
    %6317 = vmatprep.subr.bf16.mxu0 0
    %6318 = vmatpush2.bf16.msra.mxu0 %v5360
    %6319 = vmatprep.subr.bf16.mxu0 0
    %6320 = vmatpush2.bf16.msra.mxu0 %v5359
    %6321 = vmatprep.mubr.bf16.mxu0 %v5806
    %6322 = vmatmul.mubr.bf16.gmra.mxu0 %v5805
    %v6323 = vpop.f32.mrf.mxu0
    %v6324 = vadd.f32 0.0, %v6323
    %v6325 = vpop.f32.mrf.mxu0
    %v6326 = vpop.f32.mrf.mxu0
    %v6327 = vadd.f32 0.0, %v6326
    %v6328 = vpop.f32.mrf.mxu0
    %6329 = vmatprep.mubr.bf16.mxu0 %v5810
    %6330 = vmatmul.mubr.bf16.gmra.mxu0 %v5809
    %v6331 = vpop.f32.mrf.mxu0
    %v6332 = vadd.f32 0.0, %v6331
    %v6333 = vpop.f32.mrf.mxu0
    %v6334 = vpop.f32.mrf.mxu0
    %v6335 = vadd.f32 0.0, %v6334
    %v6336 = vpop.f32.mrf.mxu0
    %6337 = vmatprep.mubr.bf16.mxu0 %v5814
    %6338 = vmatmul.mubr.bf16.gmra.mxu0 %v5813
    %v6339 = vpop.f32.mrf.mxu0
    %v6340 = vadd.f32 0.0, %v6339
    %v6341 = vpop.f32.mrf.mxu0
    %v6342 = vpop.f32.mrf.mxu0
    %v6343 = vadd.f32 0.0, %v6342
    %v6344 = vpop.f32.mrf.mxu0
    %6345 = vmatprep.mubr.bf16.mxu0 %v5818
    %6346 = vmatmul.mubr.bf16.gmra.mxu0 %v5817
    %v6347 = vpop.f32.mrf.mxu0
    %v6348 = vadd.f32 0.0, %v6347
    %v6349 = vpop.f32.mrf.mxu0
    %v6350 = vpop.f32.mrf.mxu0
    %v6351 = vadd.f32 0.0, %v6350
    %v6352 = vpop.f32.mrf.mxu0
    %6353 = vdwg.mxu0
    %6354 = vmatprep.subr.bf16.mxu0 0
    %6355 = vmatpush1.bf16.msra.mxu0 %v5374
    %6356 = vmatprep.subr.bf16.mxu0 0
    %6357 = vmatpush1.bf16.msra.mxu0 %v5373
    %6358 = vmatprep.subr.bf16.mxu0 0
    %6359 = vmatpush1.bf16.msra.mxu0 %v5372
    %6360 = vmatprep.subr.bf16.mxu0 0
    %6361 = vmatpush1.bf16.msra.mxu0 %v5371
    %6362 = vmatprep.subr.bf16.mxu0 0
    %6363 = vmatpush1.bf16.msra.mxu0 %v5370
    %6364 = vmatprep.subr.bf16.mxu0 0
    %6365 = vmatpush1.bf16.msra.mxu0 %v5369
    %6366 = vmatprep.subr.bf16.mxu0 0
    %6367 = vmatpush1.bf16.msra.mxu0 %v5368
    %6368 = vmatprep.subr.bf16.mxu0 0
    %6369 = vmatpush1.bf16.msra.mxu0 %v5367
    %6370 = vmatprep.subr.bf16.mxu0 0
    %6371 = vmatpush2.bf16.msra.mxu0 %v5382
    %6372 = vmatprep.subr.bf16.mxu0 0
    %6373 = vmatpush2.bf16.msra.mxu0 %v5381
    %6374 = vmatprep.subr.bf16.mxu0 0
    %6375 = vmatpush2.bf16.msra.mxu0 %v5380
    %6376 = vmatprep.subr.bf16.mxu0 0
    %6377 = vmatpush2.bf16.msra.mxu0 %v5379
    %6378 = vmatprep.subr.bf16.mxu0 0
    %6379 = vmatpush2.bf16.msra.mxu0 %v5378
    %6380 = vmatprep.subr.bf16.mxu0 0
    %6381 = vmatpush2.bf16.msra.mxu0 %v5377
    %6382 = vmatprep.subr.bf16.mxu0 0
    %6383 = vmatpush2.bf16.msra.mxu0 %v5376
    %6384 = vmatprep.subr.bf16.mxu0 0
    %6385 = vmatpush2.bf16.msra.mxu0 %v5375
    %6386 = vmatprep.mubr.bf16.mxu0 %v5808
    %6387 = vmatmul.mubr.bf16.gmra.mxu0 %v5807
    %v6388 = vpop.f32.mrf.mxu0
    %v6389 = vadd.f32 %v6324, %v6388
    %v6390 = vpop.f32.mrf.mxu0
    %v6391 = vpop.f32.mrf.mxu0
    %v6392 = vadd.f32 %v6327, %v6391
    %v6393 = vpop.f32.mrf.mxu0
    %6394 = vmatprep.mubr.bf16.mxu0 %v5812
    %6395 = vmatmul.mubr.bf16.gmra.mxu0 %v5811
    %v6396 = vpop.f32.mrf.mxu0
    %v6397 = vadd.f32 %v6332, %v6396
    %v6398 = vpop.f32.mrf.mxu0
    %v6399 = vpop.f32.mrf.mxu0
    %v6400 = vadd.f32 %v6335, %v6399
    %v6401 = vpop.f32.mrf.mxu0
    %6402 = vmatprep.mubr.bf16.mxu0 %v5816
    %6403 = vmatmul.mubr.bf16.gmra.mxu0 %v5815
    %v6404 = vpop.f32.mrf.mxu0
    %v6405 = vadd.f32 %v6340, %v6404
    %v6406 = vpop.f32.mrf.mxu0
    %v6407 = vpop.f32.mrf.mxu0
    %v6408 = vadd.f32 %v6343, %v6407
    %v6409 = vpop.f32.mrf.mxu0
    %6410 = vmatprep.mubr.bf16.mxu0 %v5820
    %6411 = vmatmul.mubr.bf16.gmra.mxu0 %v5819
    %v6412 = vpop.f32.mrf.mxu0
    %v6413 = vadd.f32 %v6348, %v6412
    %v6414 = vpop.f32.mrf.mxu0
    %v6415 = vpop.f32.mrf.mxu0
    %v6416 = vadd.f32 %v6351, %v6415
    %v6417 = vpop.f32.mrf.mxu0
    %6418 = vdwg.mxu0
    %v6419 = vmul.f32 %v6389, %v6251
    %v6420 = vmul.f32 %v6392, %v6256
    %v6421 = vmul.f32 %v6397, %v6261
    %v6422 = vmul.f32 %v6400, %v6266
    %v6423 = vmul.f32 %v6405, %v6271
    %v6424 = vmul.f32 %v6408, %v6276
    %v6425 = vmul.f32 %v6413, %v6281
    %v6426 = vmul.f32 %v6416, %v6286
    %v6427 = vmul.bf16 %v4850, %v5255
    %v6428 = vmul.bf16 %v4851, %v5256
    %v6429 = vmul.bf16 %v4852, %v5257
    %v6430 = vmul.bf16 %v4853, %v5258
    %v6431 = vmul.bf16 %v4850, %v5259
    %v6432 = vmul.bf16 %v4851, %v5260
    %v6433 = vmul.bf16 %v4852, %v5261
    %v6434 = vmul.bf16 %v4853, %v5262
    %v6435 = vmul.bf16 %v4850, %v5263
    %v6436 = vmul.bf16 %v4851, %v5264
    %v6437 = vmul.bf16 %v4852, %v5265
    %v6438 = vmul.bf16 %v4853, %v5266
    %v6439 = vmul.bf16 %v4850, %v5267
    %v6440 = vmul.bf16 %v4851, %v5268
    %v6441 = vmul.bf16 %v4852, %v5269
    %v6442 = vmul.bf16 %v4853, %v5270
    %v6443 = vmul.bf16 %v4850, %v5271
    %v6444 = vmul.bf16 %v4851, %v5272
    %v6445 = vmul.bf16 %v4852, %v5273
    %v6446 = vmul.bf16 %v4853, %v5274
    %v6447 = vmul.bf16 %v4850, %v5275
    %v6448 = vmul.bf16 %v4851, %v5276
    %v6449 = vmul.bf16 %v4852, %v5277
    %v6450 = vmul.bf16 %v4853, %v5278
    %v6451 = vmul.bf16 %v4850, %v5279
    %v6452 = vmul.bf16 %v4851, %v5280
    %v6453 = vmul.bf16 %v4852, %v5281
    %v6454 = vmul.bf16 %v4853, %v5282
    %v6455 = vmul.bf16 %v4850, %v5283
    %v6456 = vmul.bf16 %v4851, %v5284
    %v6457 = vmul.bf16 %v4852, %v5285
    %v6458 = vmul.bf16 %v4853, %v5286
    %v6459 = vmul.bf16 %v4994, %v5255
    %v6460 = vmul.bf16 %v4995, %v5256
    %v6461 = vmul.bf16 %v4996, %v5257
    %v6462 = vmul.bf16 %v4997, %v5258
    %v6463 = vmul.bf16 %v4994, %v5259
    %v6464 = vmul.bf16 %v4995, %v5260
    %v6465 = vmul.bf16 %v4996, %v5261
    %v6466 = vmul.bf16 %v4997, %v5262
    %v6467 = vmul.bf16 %v4994, %v5263
    %v6468 = vmul.bf16 %v4995, %v5264
    %v6469 = vmul.bf16 %v4996, %v5265
    %v6470 = vmul.bf16 %v4997, %v5266
    %v6471 = vmul.bf16 %v4994, %v5267
    %v6472 = vmul.bf16 %v4995, %v5268
    %v6473 = vmul.bf16 %v4996, %v5269
    %v6474 = vmul.bf16 %v4997, %v5270
    %v6475 = vmul.bf16 %v4994, %v5271
    %v6476 = vmul.bf16 %v4995, %v5272
    %v6477 = vmul.bf16 %v4996, %v5273
    %v6478 = vmul.bf16 %v4997, %v5274
    %v6479 = vmul.bf16 %v4994, %v5275
    %v6480 = vmul.bf16 %v4995, %v5276
    %v6481 = vmul.bf16 %v4996, %v5277
    %v6482 = vmul.bf16 %v4997, %v5278
    %v6483 = vmul.bf16 %v4994, %v5279
    %v6484 = vmul.bf16 %v4995, %v5280
    %v6485 = vmul.bf16 %v4996, %v5281
    %v6486 = vmul.bf16 %v4997, %v5282
    %v6487 = vmul.bf16 %v4994, %v5283
    %v6488 = vmul.bf16 %v4995, %v5284
    %v6489 = vmul.bf16 %v4996, %v5285
    %v6490 = vmul.bf16 %v4997, %v5286
    %v6492 = vsel %vm352, %v4706, 0
    %v6495 = vsel %vm352, %v4707, 0
    %v6498 = vsel %vm352, %v4708, 0
    %v6501 = vsel %vm352, %v4709, 0
    %v6504 = vsel %vm352, %v6427, 0
    %v6507 = vsel %vm352, %v6428, 0
    %v6510 = vsel %vm352, %v6429, 0
    %v6513 = vsel %vm352, %v6430, 0
    %v6516 = vsel %vm352, %v6431, 0
    %v6519 = vsel %vm352, %v6432, 0
    %v6522 = vsel %vm352, %v6433, 0
    %v6525 = vsel %vm352, %v6434, 0
    %v6528 = vsel %vm352, %v6435, 0
    %v6531 = vsel %vm352, %v6436, 0
    %v6534 = vsel %vm352, %v6437, 0
    %v6537 = vsel %vm352, %v6438, 0
    %v6540 = vsel %vm352, %v6439, 0
    %v6543 = vsel %vm352, %v6440, 0
    %v6546 = vsel %vm352, %v6441, 0
    %v6549 = vsel %vm352, %v6442, 0
    %v6552 = vsel %vm352, %v6443, 0
    %v6555 = vsel %vm352, %v6444, 0
    %v6558 = vsel %vm352, %v6445, 0
    %v6561 = vsel %vm352, %v6446, 0
    %v6564 = vsel %vm352, %v6447, 0
    %v6567 = vsel %vm352, %v6448, 0
    %v6570 = vsel %vm352, %v6449, 0
    %v6573 = vsel %vm352, %v6450, 0
    %v6576 = vsel %vm352, %v6451, 0
    %v6579 = vsel %vm352, %v6452, 0
    %v6582 = vsel %vm352, %v6453, 0
    %v6585 = vsel %vm352, %v6454, 0
    %v6588 = vsel %vm352, %v6455, 0
    %v6591 = vsel %vm352, %v6456, 0
    %v6594 = vsel %vm352, %v6457, 0
    %v6597 = vsel %vm352, %v6458, 0
    %6599 = vmatprep.subr.bf16.mxu0 0
    %6600 = vmatpush1.bf16.xpose.msra.mxu0 %v6525
    %6601 = vmatprep.subr.bf16.mxu0 0
    %6602 = vmatpush1.bf16.xpose.msra.mxu0 %v6522
    %6603 = vmatprep.subr.bf16.mxu0 0
    %6604 = vmatpush1.bf16.xpose.msra.mxu0 %v6519
    %6605 = vmatprep.subr.bf16.mxu0 0
    %6606 = vmatpush1.bf16.xpose.msra.mxu0 %v6516
    %6607 = vmatprep.subr.bf16.mxu0 0
    %6608 = vmatpush1.bf16.xpose.msra.mxu0 %v6513
    %6609 = vmatprep.subr.bf16.mxu0 0
    %6610 = vmatpush1.bf16.xpose.msra.mxu0 %v6510
    %6611 = vmatprep.subr.bf16.mxu0 0
    %6612 = vmatpush1.bf16.xpose.msra.mxu0 %v6507
    %6613 = vmatprep.subr.bf16.mxu0 0
    %6614 = vmatpush1.bf16.xpose.msra.mxu0 %v6504
    %6615 = vmatprep.subr.bf16.mxu0 0
    %6616 = vmatpush2.bf16.xpose.msra.mxu0 %v6549
    %6617 = vmatprep.subr.bf16.mxu0 0
    %6618 = vmatpush2.bf16.xpose.msra.mxu0 %v6546
    %6619 = vmatprep.subr.bf16.mxu0 0
    %6620 = vmatpush2.bf16.xpose.msra.mxu0 %v6543
    %6621 = vmatprep.subr.bf16.mxu0 0
    %6622 = vmatpush2.bf16.xpose.msra.mxu0 %v6540
    %6623 = vmatprep.subr.bf16.mxu0 0
    %6624 = vmatpush2.bf16.xpose.msra.mxu0 %v6537
    %6625 = vmatprep.subr.bf16.mxu0 0
    %6626 = vmatpush2.bf16.xpose.msra.mxu0 %v6534
    %6627 = vmatprep.subr.bf16.mxu0 0
    %6628 = vmatpush2.bf16.xpose.msra.mxu0 %v6531
    %6629 = vmatprep.subr.bf16.mxu0 0
    %6630 = vmatpush2.bf16.xpose.msra.mxu0 %v6528
    %6631 = vmatprep.mubr.bf16.mxu0 0
    %6632 = vmatmul.mubr.bf16.gmra.mxu0 %v6492
    %v6633 = vpop.f32.mrf.mxu0
    %v6634 = vadd.f32 0.0, %v6633
    %v6635 = vpop.f32.mrf.mxu0
    %v6636 = vadd.f32 0.0, %v6635
    %v6637 = vpop.f32.mrf.mxu0
    %v6638 = vadd.f32 0.0, %v6637
    %v6639 = vpop.f32.mrf.mxu0
    %v6640 = vadd.f32 0.0, %v6639
    %6641 = vmatprep.mubr.bf16.mxu0 0
    %6642 = vmatmul.mubr.bf16.gmra.mxu0 %v6495
    %v6643 = vpop.f32.mrf.mxu0
    %v6644 = vadd.f32 0.0, %v6643
    %v6645 = vpop.f32.mrf.mxu0
    %v6646 = vadd.f32 0.0, %v6645
    %v6647 = vpop.f32.mrf.mxu0
    %v6648 = vadd.f32 0.0, %v6647
    %v6649 = vpop.f32.mrf.mxu0
    %v6650 = vadd.f32 0.0, %v6649
    %6651 = vmatprep.mubr.bf16.mxu0 0
    %6652 = vmatmul.mubr.bf16.gmra.mxu0 %v6498
    %v6653 = vpop.f32.mrf.mxu0
    %v6654 = vadd.f32 0.0, %v6653
    %v6655 = vpop.f32.mrf.mxu0
    %v6656 = vadd.f32 0.0, %v6655
    %v6657 = vpop.f32.mrf.mxu0
    %v6658 = vadd.f32 0.0, %v6657
    %v6659 = vpop.f32.mrf.mxu0
    %v6660 = vadd.f32 0.0, %v6659
    %6661 = vmatprep.mubr.bf16.mxu0 0
    %6662 = vmatmul.mubr.bf16.gmra.mxu0 %v6501
    %v6663 = vpop.f32.mrf.mxu0
    %v6664 = vadd.f32 0.0, %v6663
    %v6665 = vpop.f32.mrf.mxu0
    %v6666 = vadd.f32 0.0, %v6665
    %v6667 = vpop.f32.mrf.mxu0
    %v6668 = vadd.f32 0.0, %v6667
    %v6669 = vpop.f32.mrf.mxu0
    %v6670 = vadd.f32 0.0, %v6669
    %6671 = vdwg.mxu0
    %6672 = vmatprep.subr.bf16.mxu0 0
    %6673 = vmatpush1.bf16.xpose.msra.mxu0 %v6573
    %6674 = vmatprep.subr.bf16.mxu0 0
    %6675 = vmatpush1.bf16.xpose.msra.mxu0 %v6570
    %6676 = vmatprep.subr.bf16.mxu0 0
    %6677 = vmatpush1.bf16.xpose.msra.mxu0 %v6567
    %6678 = vmatprep.subr.bf16.mxu0 0
    %6679 = vmatpush1.bf16.xpose.msra.mxu0 %v6564
    %6680 = vmatprep.subr.bf16.mxu0 0
    %6681 = vmatpush1.bf16.xpose.msra.mxu0 %v6561
    %6682 = vmatprep.subr.bf16.mxu0 0
    %6683 = vmatpush1.bf16.xpose.msra.mxu0 %v6558
    %6684 = vmatprep.subr.bf16.mxu0 0
    %6685 = vmatpush1.bf16.xpose.msra.mxu0 %v6555
    %6686 = vmatprep.subr.bf16.mxu0 0
    %6687 = vmatpush1.bf16.xpose.msra.mxu0 %v6552
    %6688 = vmatprep.subr.bf16.mxu0 0
    %6689 = vmatpush2.bf16.xpose.msra.mxu0 %v6597
    %6690 = vmatprep.subr.bf16.mxu0 0
    %6691 = vmatpush2.bf16.xpose.msra.mxu0 %v6594
    %6692 = vmatprep.subr.bf16.mxu0 0
    %6693 = vmatpush2.bf16.xpose.msra.mxu0 %v6591
    %6694 = vmatprep.subr.bf16.mxu0 0
    %6695 = vmatpush2.bf16.xpose.msra.mxu0 %v6588
    %6696 = vmatprep.subr.bf16.mxu0 0
    %6697 = vmatpush2.bf16.xpose.msra.mxu0 %v6585
    %6698 = vmatprep.subr.bf16.mxu0 0
    %6699 = vmatpush2.bf16.xpose.msra.mxu0 %v6582
    %6700 = vmatprep.subr.bf16.mxu0 0
    %6701 = vmatpush2.bf16.xpose.msra.mxu0 %v6579
    %6702 = vmatprep.subr.bf16.mxu0 0
    %6703 = vmatpush2.bf16.xpose.msra.mxu0 %v6576
    %6704 = vmatprep.mubr.bf16.mxu0 0
    %6705 = vmatmul.mubr.bf16.gmra.mxu0 %v6492
    %v6706 = vpop.f32.mrf.mxu0
    %v6707 = vadd.f32 0.0, %v6706
    %v6708 = vpop.f32.mrf.mxu0
    %v6709 = vadd.f32 0.0, %v6708
    %v6710 = vpop.f32.mrf.mxu0
    %v6711 = vadd.f32 0.0, %v6710
    %v6712 = vpop.f32.mrf.mxu0
    %v6713 = vadd.f32 0.0, %v6712
    %6714 = vmatprep.mubr.bf16.mxu0 0
    %6715 = vmatmul.mubr.bf16.gmra.mxu0 %v6495
    %v6716 = vpop.f32.mrf.mxu0
    %v6717 = vadd.f32 0.0, %v6716
    %v6718 = vpop.f32.mrf.mxu0
    %v6719 = vadd.f32 0.0, %v6718
    %v6720 = vpop.f32.mrf.mxu0
    %v6721 = vadd.f32 0.0, %v6720
    %v6722 = vpop.f32.mrf.mxu0
    %v6723 = vadd.f32 0.0, %v6722
    %6724 = vmatprep.mubr.bf16.mxu0 0
    %6725 = vmatmul.mubr.bf16.gmra.mxu0 %v6498
    %v6726 = vpop.f32.mrf.mxu0
    %v6727 = vadd.f32 0.0, %v6726
    %v6728 = vpop.f32.mrf.mxu0
    %v6729 = vadd.f32 0.0, %v6728
    %v6730 = vpop.f32.mrf.mxu0
    %v6731 = vadd.f32 0.0, %v6730
    %v6732 = vpop.f32.mrf.mxu0
    %v6733 = vadd.f32 0.0, %v6732
    %6734 = vmatprep.mubr.bf16.mxu0 0
    %6735 = vmatmul.mubr.bf16.gmra.mxu0 %v6501
    %v6736 = vpop.f32.mrf.mxu0
    %v6737 = vadd.f32 0.0, %v6736
    %v6738 = vpop.f32.mrf.mxu0
    %v6739 = vadd.f32 0.0, %v6738
    %v6740 = vpop.f32.mrf.mxu0
    %v6741 = vadd.f32 0.0, %v6740
    %v6742 = vpop.f32.mrf.mxu0
    %v6743 = vadd.f32 0.0, %v6742
    %6744 = vdwg.mxu0
    %v6745 = vmul.f32 %v6634, 0.35355338
    %v6746 = vmul.f32 %v6636, 0.35355338
    %v6747 = vmul.f32 %v6707, 0.35355338
    %v6748 = vmul.f32 %v6709, 0.35355338
    %v6749 = vmul.f32 %v6638, 0.35355338
    %v6750 = vmul.f32 %v6640, 0.35355338
    %v6751 = vmul.f32 %v6711, 0.35355338
    %v6752 = vmul.f32 %v6713, 0.35355338
    %v6753 = vmul.f32 %v6644, 0.35355338
    %v6754 = vmul.f32 %v6646, 0.35355338
    %v6755 = vmul.f32 %v6717, 0.35355338
    %v6756 = vmul.f32 %v6719, 0.35355338
    %v6757 = vmul.f32 %v6648, 0.35355338
    %v6758 = vmul.f32 %v6650, 0.35355338
    %v6759 = vmul.f32 %v6721, 0.35355338
    %v6760 = vmul.f32 %v6723, 0.35355338
    %v6761 = vmul.f32 %v6654, 0.35355338
    %v6762 = vmul.f32 %v6656, 0.35355338
    %v6763 = vmul.f32 %v6727, 0.35355338
    %v6764 = vmul.f32 %v6729, 0.35355338
    %v6765 = vmul.f32 %v6658, 0.35355338
    %v6766 = vmul.f32 %v6660, 0.35355338
    %v6767 = vmul.f32 %v6731, 0.35355338
    %v6768 = vmul.f32 %v6733, 0.35355338
    %v6769 = vmul.f32 %v6664, 0.35355338
    %v6770 = vmul.f32 %v6666, 0.35355338
    %v6771 = vmul.f32 %v6737, 0.35355338
    %v6772 = vmul.f32 %v6739, 0.35355338
    %v6773 = vmul.f32 %v6668, 0.35355338
    %v6774 = vmul.f32 %v6670, 0.35355338
    %v6775 = vmul.f32 %v6741, 0.35355338
    %v6776 = vmul.f32 %v6743, 0.35355338
    %v6777 = vmax.f32 %v6745, %v6746
    %v6778 = vmax.f32 %v6777, %v6747
    %v6779 = vmax.f32 %v6778, %v6748
    %6780 = vmax.xlane.f32.xlu0 %v6779
    %v6781 = vpop.xlane.xlu0 %6780
    %v6782 = vmax.f32 %v6749, %v6750
    %v6783 = vmax.f32 %v6782, %v6751
    %v6784 = vmax.f32 %v6783, %v6752
    %6785 = vmax.xlane.f32.xlu0 %v6784
    %v6786 = vpop.xlane.xlu0 %6785
    %v6787 = vmax.f32 %v6753, %v6754
    %v6788 = vmax.f32 %v6787, %v6755
    %v6789 = vmax.f32 %v6788, %v6756
    %6790 = vmax.xlane.f32.xlu0 %v6789
    %v6791 = vpop.xlane.xlu0 %6790
    %v6792 = vmax.f32 %v6757, %v6758
    %v6793 = vmax.f32 %v6792, %v6759
    %v6794 = vmax.f32 %v6793, %v6760
    %6795 = vmax.xlane.f32.xlu0 %v6794
    %v6796 = vpop.xlane.xlu0 %6795
    %v6797 = vmax.f32 %v6761, %v6762
    %v6798 = vmax.f32 %v6797, %v6763
    %v6799 = vmax.f32 %v6798, %v6764
    %6800 = vmax.xlane.f32.xlu0 %v6799
    %v6801 = vpop.xlane.xlu0 %6800
    %v6802 = vmax.f32 %v6765, %v6766
    %v6803 = vmax.f32 %v6802, %v6767
    %v6804 = vmax.f32 %v6803, %v6768
    %6805 = vmax.xlane.f32.xlu0 %v6804
    %v6806 = vpop.xlane.xlu0 %6805
    %v6807 = vmax.f32 %v6769, %v6770
    %v6808 = vmax.f32 %v6807, %v6771
    %v6809 = vmax.f32 %v6808, %v6772
    %6810 = vmax.xlane.f32.xlu0 %v6809
    %v6811 = vpop.xlane.xlu0 %6810
    %v6812 = vmax.f32 %v6773, %v6774
    %v6813 = vmax.f32 %v6812, %v6775
    %v6814 = vmax.f32 %v6813, %v6776
    %6815 = vmax.xlane.f32.xlu0 %v6814
    %v6816 = vpop.xlane.xlu0 %6815
    %v6817 = vsub.f32 %v6745, %v6781
    %v6818 = vsub.f32 %v6746, %v6781
    %v6819 = vsub.f32 %v6747, %v6781
    %v6820 = vsub.f32 %v6748, %v6781
    %v6821 = vsub.f32 %v6749, %v6786
    %v6822 = vsub.f32 %v6750, %v6786
    %v6823 = vsub.f32 %v6751, %v6786
    %v6824 = vsub.f32 %v6752, %v6786
    %v6825 = vsub.f32 %v6753, %v6791
    %v6826 = vsub.f32 %v6754, %v6791
    %v6827 = vsub.f32 %v6755, %v6791
    %v6828 = vsub.f32 %v6756, %v6791
    %v6829 = vsub.f32 %v6757, %v6796
    %v6830 = vsub.f32 %v6758, %v6796
    %v6831 = vsub.f32 %v6759, %v6796
    %v6832 = vsub.f32 %v6760, %v6796
    %v6833 = vsub.f32 %v6761, %v6801
    %v6834 = vsub.f32 %v6762, %v6801
    %v6835 = vsub.f32 %v6763, %v6801
    %v6836 = vsub.f32 %v6764, %v6801
    %v6837 = vsub.f32 %v6765, %v6806
    %v6838 = vsub.f32 %v6766, %v6806
    %v6839 = vsub.f32 %v6767, %v6806
    %v6840 = vsub.f32 %v6768, %v6806
    %v6841 = vsub.f32 %v6769, %v6811
    %v6842 = vsub.f32 %v6770, %v6811
    %v6843 = vsub.f32 %v6771, %v6811
    %v6844 = vsub.f32 %v6772, %v6811
    %v6845 = vsub.f32 %v6773, %v6816
    %v6846 = vsub.f32 %v6774, %v6816
    %v6847 = vsub.f32 %v6775, %v6816
    %v6848 = vsub.f32 %v6776, %v6816
    %v6849 = vmul.f32 %v6817, 1.442695
    %v6850 = vpow.pop %v6849
    %v6851 = vmul.f32 %v6818, 1.442695
    %v6852 = vpow.pop %v6851
    %v6853 = vmul.f32 %v6819, 1.442695
    %v6854 = vpow.pop %v6853
    %v6855 = vmul.f32 %v6820, 1.442695
    %v6856 = vpow.pop %v6855
    %v6857 = vmul.f32 %v6821, 1.442695
    %v6858 = vpow.pop %v6857
    %v6859 = vmul.f32 %v6822, 1.442695
    %v6860 = vpow.pop %v6859
    %v6861 = vmul.f32 %v6823, 1.442695
    %v6862 = vpow.pop %v6861
    %v6863 = vmul.f32 %v6824, 1.442695
    %v6864 = vpow.pop %v6863
    %v6865 = vmul.f32 %v6825, 1.442695
    %v6866 = vpow.pop %v6865
    %v6867 = vmul.f32 %v6826, 1.442695
    %v6868 = vpow.pop %v6867
    %v6869 = vmul.f32 %v6827, 1.442695
    %v6870 = vpow.pop %v6869
    %v6871 = vmul.f32 %v6828, 1.442695
    %v6872 = vpow.pop %v6871
    %v6873 = vmul.f32 %v6829, 1.442695
    %v6874 = vpow.pop %v6873
    %v6875 = vmul.f32 %v6830, 1.442695
    %v6876 = vpow.pop %v6875
    %v6877 = vmul.f32 %v6831, 1.442695
    %v6878 = vpow.pop %v6877
    %v6879 = vmul.f32 %v6832, 1.442695
    %v6880 = vpow.pop %v6879
    %v6881 = vmul.f32 %v6833, 1.442695
    %v6882 = vpow.pop %v6881
    %v6883 = vmul.f32 %v6834, 1.442695
    %v6884 = vpow.pop %v6883
    %v6885 = vmul.f32 %v6835, 1.442695
    %v6886 = vpow.pop %v6885
    %v6887 = vmul.f32 %v6836, 1.442695
    %v6888 = vpow.pop %v6887
    %v6889 = vmul.f32 %v6837, 1.442695
    %v6890 = vpow.pop %v6889
    %v6891 = vmul.f32 %v6838, 1.442695
    %v6892 = vpow.pop %v6891
    %v6893 = vmul.f32 %v6839, 1.442695
    %v6894 = vpow.pop %v6893
    %v6895 = vmul.f32 %v6840, 1.442695
    %v6896 = vpow.pop %v6895
    %v6897 = vmul.f32 %v6841, 1.442695
    %v6898 = vpow.pop %v6897
    %v6899 = vmul.f32 %v6842, 1.442695
    %v6900 = vpow.pop %v6899
    %v6901 = vmul.f32 %v6843, 1.442695
    %v6902 = vpow.pop %v6901
    %v6903 = vmul.f32 %v6844, 1.442695
    %v6904 = vpow.pop %v6903
    %v6905 = vmul.f32 %v6845, 1.442695
    %v6906 = vpow.pop %v6905
    %v6907 = vmul.f32 %v6846, 1.442695
    %v6908 = vpow.pop %v6907
    %v6909 = vmul.f32 %v6847, 1.442695
    %v6910 = vpow.pop %v6909
    %v6911 = vmul.f32 %v6848, 1.442695
    %v6912 = vpow.pop %v6911
    %v6913 = vpack.c.bf16 %v6858, %v6850
    %v6914 = vpack.c.bf16 %v6860, %v6852
    %v6915 = vpack.c.bf16 %v6862, %v6854
    %v6916 = vpack.c.bf16 %v6864, %v6856
    %v6917 = vpack.c.bf16 %v6874, %v6866
    %v6918 = vpack.c.bf16 %v6876, %v6868
    %v6919 = vpack.c.bf16 %v6878, %v6870
    %v6920 = vpack.c.bf16 %v6880, %v6872
    %v6921 = vpack.c.bf16 %v6890, %v6882
    %v6922 = vpack.c.bf16 %v6892, %v6884
    %v6923 = vpack.c.bf16 %v6894, %v6886
    %v6924 = vpack.c.bf16 %v6896, %v6888
    %v6925 = vpack.c.bf16 %v6906, %v6898
    %v6926 = vpack.c.bf16 %v6908, %v6900
    %v6927 = vpack.c.bf16 %v6910, %v6902
    %v6928 = vpack.c.bf16 %v6912, %v6904
    %6929 = vmatprep.subr.bf16.mxu0 0
    %6930 = vmatpush1.bf16.msra.mxu0 %v5956
    %6931 = vmatprep.subr.bf16.mxu0 0
    %6932 = vmatpush1.bf16.msra.mxu0 %v5955
    %6933 = vmatprep.subr.bf16.mxu0 0
    %6934 = vmatpush1.bf16.msra.mxu0 %v5954
    %6935 = vmatprep.subr.bf16.mxu0 0
    %6936 = vmatpush1.bf16.msra.mxu0 %v5953
    %6937 = vmatprep.subr.bf16.mxu0 0
    %6938 = vmatpush1.bf16.msra.mxu0 %v5952
    %6939 = vmatprep.subr.bf16.mxu0 0
    %6940 = vmatpush1.bf16.msra.mxu0 %v5951
    %6941 = vmatprep.subr.bf16.mxu0 0
    %6942 = vmatpush1.bf16.msra.mxu0 %v5950
    %6943 = vmatprep.subr.bf16.mxu0 0
    %6944 = vmatpush1.bf16.msra.mxu0 %v5949
    %6945 = vmatprep.subr.bf16.mxu0 0
    %6946 = vmatpush2.bf16.msra.mxu0 %v5964
    %6947 = vmatprep.subr.bf16.mxu0 0
    %6948 = vmatpush2.bf16.msra.mxu0 %v5963
    %6949 = vmatprep.subr.bf16.mxu0 0
    %6950 = vmatpush2.bf16.msra.mxu0 %v5962
    %6951 = vmatprep.subr.bf16.mxu0 0
    %6952 = vmatpush2.bf16.msra.mxu0 %v5961
    %6953 = vmatprep.subr.bf16.mxu0 0
    %6954 = vmatpush2.bf16.msra.mxu0 %v5960
    %6955 = vmatprep.subr.bf16.mxu0 0
    %6956 = vmatpush2.bf16.msra.mxu0 %v5959
    %6957 = vmatprep.subr.bf16.mxu0 0
    %6958 = vmatpush2.bf16.msra.mxu0 %v5958
    %6959 = vmatprep.subr.bf16.mxu0 0
    %6960 = vmatpush2.bf16.msra.mxu0 %v5957
    %6961 = vmatprep.mubr.bf16.mxu0 %v6914
    %6962 = vmatmul.mubr.bf16.gmra.mxu0 %v6913
    %v6963 = vpop.f32.mrf.mxu0
    %v6964 = vadd.f32 0.0, %v6963
    %v6965 = vpop.f32.mrf.mxu0
    %v6966 = vpop.f32.mrf.mxu0
    %v6967 = vadd.f32 0.0, %v6966
    %v6968 = vpop.f32.mrf.mxu0
    %6969 = vmatprep.mubr.bf16.mxu0 %v6918
    %6970 = vmatmul.mubr.bf16.gmra.mxu0 %v6917
    %v6971 = vpop.f32.mrf.mxu0
    %v6972 = vadd.f32 0.0, %v6971
    %v6973 = vpop.f32.mrf.mxu0
    %v6974 = vpop.f32.mrf.mxu0
    %v6975 = vadd.f32 0.0, %v6974
    %v6976 = vpop.f32.mrf.mxu0
    %6977 = vmatprep.mubr.bf16.mxu0 %v6922
    %6978 = vmatmul.mubr.bf16.gmra.mxu0 %v6921
    %v6979 = vpop.f32.mrf.mxu0
    %v6980 = vadd.f32 0.0, %v6979
    %v6981 = vpop.f32.mrf.mxu0
    %v6982 = vpop.f32.mrf.mxu0
    %v6983 = vadd.f32 0.0, %v6982
    %v6984 = vpop.f32.mrf.mxu0
    %6985 = vmatprep.mubr.bf16.mxu0 %v6926
    %6986 = vmatmul.mubr.bf16.gmra.mxu0 %v6925
    %v6987 = vpop.f32.mrf.mxu0
    %v6988 = vadd.f32 0.0, %v6987
    %v6989 = vpop.f32.mrf.mxu0
    %v6990 = vpop.f32.mrf.mxu0
    %v6991 = vadd.f32 0.0, %v6990
    %v6992 = vpop.f32.mrf.mxu0
    %6993 = vdwg.mxu0
    %6994 = vmatprep.subr.bf16.mxu0 0
    %6995 = vmatpush1.bf16.msra.mxu0 %v5972
    %6996 = vmatprep.subr.bf16.mxu0 0
    %6997 = vmatpush1.bf16.msra.mxu0 %v5971
    %6998 = vmatprep.subr.bf16.mxu0 0
    %6999 = vmatpush1.bf16.msra.mxu0 %v5970
    %7000 = vmatprep.subr.bf16.mxu0 0
    %7001 = vmatpush1.bf16.msra.mxu0 %v5969
    %7002 = vmatprep.subr.bf16.mxu0 0
    %7003 = vmatpush1.bf16.msra.mxu0 %v5968
    %7004 = vmatprep.subr.bf16.mxu0 0
    %7005 = vmatpush1.bf16.msra.mxu0 %v5967
    %7006 = vmatprep.subr.bf16.mxu0 0
    %7007 = vmatpush1.bf16.msra.mxu0 %v5966
    %7008 = vmatprep.subr.bf16.mxu0 0
    %7009 = vmatpush1.bf16.msra.mxu0 %v5965
    %7010 = vmatprep.subr.bf16.mxu0 0
    %7011 = vmatpush2.bf16.msra.mxu0 %v5980
    %7012 = vmatprep.subr.bf16.mxu0 0
    %7013 = vmatpush2.bf16.msra.mxu0 %v5979
    %7014 = vmatprep.subr.bf16.mxu0 0
    %7015 = vmatpush2.bf16.msra.mxu0 %v5978
    %7016 = vmatprep.subr.bf16.mxu0 0
    %7017 = vmatpush2.bf16.msra.mxu0 %v5977
    %7018 = vmatprep.subr.bf16.mxu0 0
    %7019 = vmatpush2.bf16.msra.mxu0 %v5976
    %7020 = vmatprep.subr.bf16.mxu0 0
    %7021 = vmatpush2.bf16.msra.mxu0 %v5975
    %7022 = vmatprep.subr.bf16.mxu0 0
    %7023 = vmatpush2.bf16.msra.mxu0 %v5974
    %7024 = vmatprep.subr.bf16.mxu0 0
    %7025 = vmatpush2.bf16.msra.mxu0 %v5973
    %7026 = vmatprep.mubr.bf16.mxu0 %v6916
    %7027 = vmatmul.mubr.bf16.gmra.mxu0 %v6915
    %v7028 = vpop.f32.mrf.mxu0
    %v7029 = vadd.f32 %v6964, %v7028
    %v7030 = vpop.f32.mrf.mxu0
    %v7031 = vpop.f32.mrf.mxu0
    %v7032 = vadd.f32 %v6967, %v7031
    %v7033 = vpop.f32.mrf.mxu0
    %7034 = vmatprep.mubr.bf16.mxu0 %v6920
    %7035 = vmatmul.mubr.bf16.gmra.mxu0 %v6919
    %v7036 = vpop.f32.mrf.mxu0
    %v7037 = vadd.f32 %v6972, %v7036
    %v7038 = vpop.f32.mrf.mxu0
    %v7039 = vpop.f32.mrf.mxu0
    %v7040 = vadd.f32 %v6975, %v7039
    %v7041 = vpop.f32.mrf.mxu0
    %7042 = vmatprep.mubr.bf16.mxu0 %v6924
    %7043 = vmatmul.mubr.bf16.gmra.mxu0 %v6923
    %v7044 = vpop.f32.mrf.mxu0
    %v7045 = vadd.f32 %v6980, %v7044
    %v7046 = vpop.f32.mrf.mxu0
    %v7047 = vpop.f32.mrf.mxu0
    %v7048 = vadd.f32 %v6983, %v7047
    %v7049 = vpop.f32.mrf.mxu0
    %7050 = vmatprep.mubr.bf16.mxu0 %v6928
    %7051 = vmatmul.mubr.bf16.gmra.mxu0 %v6927
    %v7052 = vpop.f32.mrf.mxu0
    %v7053 = vadd.f32 %v6988, %v7052
    %v7054 = vpop.f32.mrf.mxu0
    %v7055 = vpop.f32.mrf.mxu0
    %v7056 = vadd.f32 %v6991, %v7055
    %v7057 = vpop.f32.mrf.mxu0
    %7058 = vdwg.mxu0
    %v7059 = vrcp.pop %v7029
    %v7060 = vmul.f32 1.0, %v7059
    %v7061 = vrcp.pop %v7032
    %v7062 = vmul.f32 1.0, %v7061
    %v7063 = vrcp.pop %v7037
    %v7064 = vmul.f32 1.0, %v7063
    %v7065 = vrcp.pop %v7040
    %v7066 = vmul.f32 1.0, %v7065
    %v7067 = vrcp.pop %v7045
    %v7068 = vmul.f32 1.0, %v7067
    %v7069 = vrcp.pop %v7048
    %v7070 = vmul.f32 1.0, %v7069
    %v7071 = vrcp.pop %v7053
    %v7072 = vmul.f32 1.0, %v7071
    %v7073 = vrcp.pop %v7056
    %v7074 = vmul.f32 1.0, %v7073
    %v7076 = vsel %vm6159, %v7060, 0
    %v7079 = vsel %vm6159, %v7062, 0
    %v7082 = vsel %vm6159, %v7064, 0
    %v7085 = vsel %vm6159, %v7066, 0
    %v7088 = vsel %vm6159, %v7068, 0
    %v7091 = vsel %vm6159, %v7070, 0
    %v7094 = vsel %vm6159, %v7072, 0
    %v7097 = vsel %vm6159, %v7074, 0
    %7099 = vmatprep.subr.mxu0 0.0
    %7100 = vmatpush1.msra.mxu0 0.0
    %7101 = vmatprep.subr.mxu0 0.0
    %7102 = vmatpush1.msra.mxu0 0.0
    %7103 = vmatprep.subr.mxu0 0.0
    %7104 = vmatpush1.msra.mxu0 0.0
    %7105 = vmatprep.subr.mxu0 0.0
    %7106 = vmatpush1.msra.mxu0 0.0
    %7107 = vmatprep.subr.mxu0 0.0
    %7108 = vmatpush1.msra.mxu0 0.0
    %7109 = vmatprep.subr.mxu0 0.0
    %7110 = vmatpush1.msra.mxu0 0.0
    %7111 = vmatprep.subr.mxu0 0.0
    %7112 = vmatpush1.msra.mxu0 0.0
    %7113 = vmatprep.subr.mxu0 0.0
    %7114 = vmatpush1.msra.mxu0 0.0
    %7115 = vmatprep.subr.mxu0 0.0
    %7116 = vmatpush1.msra.mxu0 0.0
    %7117 = vmatprep.subr.mxu0 0.0
    %7118 = vmatpush1.msra.mxu0 0.0
    %7119 = vmatprep.subr.mxu0 0.0
    %7120 = vmatpush1.msra.mxu0 0.0
    %7121 = vmatprep.subr.mxu0 0.0
    %7122 = vmatpush1.msra.mxu0 0.0
    %7123 = vmatprep.subr.mxu0 0.0
    %7124 = vmatpush1.msra.mxu0 0.0
    %7125 = vmatprep.subr.mxu0 0.0
    %7126 = vmatpush1.msra.mxu0 0.0
    %7127 = vmatprep.subr.mxu0 0.0
    %7128 = vmatpush1.msra.mxu0 0.0
    %7129 = vmatprep.subr.mxu0 0.0
    %7130 = vmatpush1.msra.mxu0 %v5126
    %7131 = vmatprep.subr.mxu0 0.0
    %7132 = vmatpush2.msra.mxu0 0.0
    %7133 = vmatprep.subr.mxu0 0.0
    %7134 = vmatpush2.msra.mxu0 0.0
    %7135 = vmatprep.subr.mxu0 0.0
    %7136 = vmatpush2.msra.mxu0 0.0
    %7137 = vmatprep.subr.mxu0 0.0
    %7138 = vmatpush2.msra.mxu0 0.0
    %7139 = vmatprep.subr.mxu0 0.0
    %7140 = vmatpush2.msra.mxu0 0.0
    %7141 = vmatprep.subr.mxu0 0.0
    %7142 = vmatpush2.msra.mxu0 0.0
    %7143 = vmatprep.subr.mxu0 0.0
    %7144 = vmatpush2.msra.mxu0 0.0
    %7145 = vmatprep.subr.mxu0 0.0
    %7146 = vmatpush2.msra.mxu0 0.0
    %7147 = vmatprep.subr.mxu0 0.0
    %7148 = vmatpush2.msra.mxu0 0.0
    %7149 = vmatprep.subr.mxu0 0.0
    %7150 = vmatpush2.msra.mxu0 0.0
    %7151 = vmatprep.subr.mxu0 0.0
    %7152 = vmatpush2.msra.mxu0 0.0
    %7153 = vmatprep.subr.mxu0 0.0
    %7154 = vmatpush2.msra.mxu0 0.0
    %7155 = vmatprep.subr.mxu0 0.0
    %7156 = vmatpush2.msra.mxu0 0.0
    %7157 = vmatprep.subr.mxu0 0.0
    %7158 = vmatpush2.msra.mxu0 0.0
    %7159 = vmatprep.subr.mxu0 0.0
    %7160 = vmatpush2.msra.mxu0 0.0
    %7161 = vmatprep.subr.mxu0 0.0
    %7162 = vmatpush2.msra.mxu0 0.0
    %7163 = vmatprep.mubr.f32.mxu0 0.0
    %7164 = vmatmul.mubr.f32.gmra.mxu0 %v7076
    %v7165 = vpop.f32.mrf.mxu0
    %v7166 = vadd.f32 0.0, %v7165
    %v7167 = vpop.f32.mrf.mxu0
    %7168 = vmatprep.mubr.f32.mxu0 0.0
    %7169 = vmatmul.mubr.f32.gmra.mxu0 %v7079
    %v7170 = vpop.f32.mrf.mxu0
    %v7171 = vadd.f32 0.0, %v7170
    %v7172 = vpop.f32.mrf.mxu0
    %7173 = vmatprep.mubr.f32.mxu0 0.0
    %7174 = vmatmul.mubr.f32.gmra.mxu0 %v7082
    %v7175 = vpop.f32.mrf.mxu0
    %v7176 = vadd.f32 0.0, %v7175
    %v7177 = vpop.f32.mrf.mxu0
    %7178 = vmatprep.mubr.f32.mxu0 0.0
    %7179 = vmatmul.mubr.f32.gmra.mxu0 %v7085
    %v7180 = vpop.f32.mrf.mxu0
    %v7181 = vadd.f32 0.0, %v7180
    %v7182 = vpop.f32.mrf.mxu0
    %7183 = vmatprep.mubr.f32.mxu0 0.0
    %7184 = vmatmul.mubr.f32.gmra.mxu0 %v7088
    %v7185 = vpop.f32.mrf.mxu0
    %v7186 = vadd.f32 0.0, %v7185
    %v7187 = vpop.f32.mrf.mxu0
    %7188 = vmatprep.mubr.f32.mxu0 0.0
    %7189 = vmatmul.mubr.f32.gmra.mxu0 %v7091
    %v7190 = vpop.f32.mrf.mxu0
    %v7191 = vadd.f32 0.0, %v7190
    %v7192 = vpop.f32.mrf.mxu0
    %7193 = vmatprep.mubr.f32.mxu0 0.0
    %7194 = vmatmul.mubr.f32.gmra.mxu0 %v7094
    %v7195 = vpop.f32.mrf.mxu0
    %v7196 = vadd.f32 0.0, %v7195
    %v7197 = vpop.f32.mrf.mxu0
    %7198 = vmatprep.mubr.f32.mxu0 0.0
    %7199 = vmatmul.mubr.f32.gmra.mxu0 %v7097
    %v7200 = vpop.f32.mrf.mxu0
    %v7201 = vadd.f32 0.0, %v7200
    %v7202 = vpop.f32.mrf.mxu0
    %7203 = vdwg.mxu0
    %7204 = vmatprep.subr.bf16.mxu0 0
    %7205 = vmatpush1.bf16.msra.mxu0 %v6466
    %7206 = vmatprep.subr.bf16.mxu0 0
    %7207 = vmatpush1.bf16.msra.mxu0 %v6465
    %7208 = vmatprep.subr.bf16.mxu0 0
    %7209 = vmatpush1.bf16.msra.mxu0 %v6464
    %7210 = vmatprep.subr.bf16.mxu0 0
    %7211 = vmatpush1.bf16.msra.mxu0 %v6463
    %7212 = vmatprep.subr.bf16.mxu0 0
    %7213 = vmatpush1.bf16.msra.mxu0 %v6462
    %7214 = vmatprep.subr.bf16.mxu0 0
    %7215 = vmatpush1.bf16.msra.mxu0 %v6461
    %7216 = vmatprep.subr.bf16.mxu0 0
    %7217 = vmatpush1.bf16.msra.mxu0 %v6460
    %7218 = vmatprep.subr.bf16.mxu0 0
    %7219 = vmatpush1.bf16.msra.mxu0 %v6459
    %7220 = vmatprep.subr.bf16.mxu0 0
    %7221 = vmatpush2.bf16.msra.mxu0 %v6474
    %7222 = vmatprep.subr.bf16.mxu0 0
    %7223 = vmatpush2.bf16.msra.mxu0 %v6473
    %7224 = vmatprep.subr.bf16.mxu0 0
    %7225 = vmatpush2.bf16.msra.mxu0 %v6472
    %7226 = vmatprep.subr.bf16.mxu0 0
    %7227 = vmatpush2.bf16.msra.mxu0 %v6471
    %7228 = vmatprep.subr.bf16.mxu0 0
    %7229 = vmatpush2.bf16.msra.mxu0 %v6470
    %7230 = vmatprep.subr.bf16.mxu0 0
    %7231 = vmatpush2.bf16.msra.mxu0 %v6469
    %7232 = vmatprep.subr.bf16.mxu0 0
    %7233 = vmatpush2.bf16.msra.mxu0 %v6468
    %7234 = vmatprep.subr.bf16.mxu0 0
    %7235 = vmatpush2.bf16.msra.mxu0 %v6467
    %7236 = vmatprep.mubr.bf16.mxu0 %v6914
    %7237 = vmatmul.mubr.bf16.gmra.mxu0 %v6913
    %v7238 = vpop.f32.mrf.mxu0
    %v7239 = vadd.f32 0.0, %v7238
    %v7240 = vpop.f32.mrf.mxu0
    %v7241 = vpop.f32.mrf.mxu0
    %v7242 = vadd.f32 0.0, %v7241
    %v7243 = vpop.f32.mrf.mxu0
    %7244 = vmatprep.mubr.bf16.mxu0 %v6918
    %7245 = vmatmul.mubr.bf16.gmra.mxu0 %v6917
    %v7246 = vpop.f32.mrf.mxu0
    %v7247 = vadd.f32 0.0, %v7246
    %v7248 = vpop.f32.mrf.mxu0
    %v7249 = vpop.f32.mrf.mxu0
    %v7250 = vadd.f32 0.0, %v7249
    %v7251 = vpop.f32.mrf.mxu0
    %7252 = vmatprep.mubr.bf16.mxu0 %v6922
    %7253 = vmatmul.mubr.bf16.gmra.mxu0 %v6921
    %v7254 = vpop.f32.mrf.mxu0
    %v7255 = vadd.f32 0.0, %v7254
    %v7256 = vpop.f32.mrf.mxu0
    %v7257 = vpop.f32.mrf.mxu0
    %v7258 = vadd.f32 0.0, %v7257
    %v7259 = vpop.f32.mrf.mxu0
    %7260 = vmatprep.mubr.bf16.mxu0 %v6926
    %7261 = vmatmul.mubr.bf16.gmra.mxu0 %v6925
    %v7262 = vpop.f32.mrf.mxu0
    %v7263 = vadd.f32 0.0, %v7262
    %v7264 = vpop.f32.mrf.mxu0
    %v7265 = vpop.f32.mrf.mxu0
    %v7266 = vadd.f32 0.0, %v7265
    %v7267 = vpop.f32.mrf.mxu0
    %7268 = vdwg.mxu0
    %7269 = vmatprep.subr.bf16.mxu0 0
    %7270 = vmatpush1.bf16.msra.mxu0 %v6482
    %7271 = vmatprep.subr.bf16.mxu0 0
    %7272 = vmatpush1.bf16.msra.mxu0 %v6481
    %7273 = vmatprep.subr.bf16.mxu0 0
    %7274 = vmatpush1.bf16.msra.mxu0 %v6480
    %7275 = vmatprep.subr.bf16.mxu0 0
    %7276 = vmatpush1.bf16.msra.mxu0 %v6479
    %7277 = vmatprep.subr.bf16.mxu0 0
    %7278 = vmatpush1.bf16.msra.mxu0 %v6478
    %7279 = vmatprep.subr.bf16.mxu0 0
    %7280 = vmatpush1.bf16.msra.mxu0 %v6477
    %7281 = vmatprep.subr.bf16.mxu0 0
    %7282 = vmatpush1.bf16.msra.mxu0 %v6476
    %7283 = vmatprep.subr.bf16.mxu0 0
    %7284 = vmatpush1.bf16.msra.mxu0 %v6475
    %7285 = vmatprep.subr.bf16.mxu0 0
    %7286 = vmatpush2.bf16.msra.mxu0 %v6490
    %7287 = vmatprep.subr.bf16.mxu0 0
    %7288 = vmatpush2.bf16.msra.mxu0 %v6489
    %7289 = vmatprep.subr.bf16.mxu0 0
    %7290 = vmatpush2.bf16.msra.mxu0 %v6488
    %7291 = vmatprep.subr.bf16.mxu0 0
    %7292 = vmatpush2.bf16.msra.mxu0 %v6487
    %7293 = vmatprep.subr.bf16.mxu0 0
    %7294 = vmatpush2.bf16.msra.mxu0 %v6486
    %7295 = vmatprep.subr.bf16.mxu0 0
    %7296 = vmatpush2.bf16.msra.mxu0 %v6485
    %7297 = vmatprep.subr.bf16.mxu0 0
    %7298 = vmatpush2.bf16.msra.mxu0 %v6484
    %7299 = vmatprep.subr.bf16.mxu0 0
    %7300 = vmatpush2.bf16.msra.mxu0 %v6483
    %7301 = vmatprep.mubr.bf16.mxu0 %v6916
    %7302 = vmatmul.mubr.bf16.gmra.mxu0 %v6915
    %v7303 = vpop.f32.mrf.mxu0
    %v7304 = vadd.f32 %v7239, %v7303
    %v7305 = vpop.f32.mrf.mxu0
    %v7306 = vpop.f32.mrf.mxu0
    %v7307 = vadd.f32 %v7242, %v7306
    %v7308 = vpop.f32.mrf.mxu0
    %7309 = vmatprep.mubr.bf16.mxu0 %v6920
    %7310 = vmatmul.mubr.bf16.gmra.mxu0 %v6919
    %v7311 = vpop.f32.mrf.mxu0
    %v7312 = vadd.f32 %v7247, %v7311
    %v7313 = vpop.f32.mrf.mxu0
    %v7314 = vpop.f32.mrf.mxu0
    %v7315 = vadd.f32 %v7250, %v7314
    %v7316 = vpop.f32.mrf.mxu0
    %7317 = vmatprep.mubr.bf16.mxu0 %v6924
    %7318 = vmatmul.mubr.bf16.gmra.mxu0 %v6923
    %v7319 = vpop.f32.mrf.mxu0
    %v7320 = vadd.f32 %v7255, %v7319
    %v7321 = vpop.f32.mrf.mxu0
    %v7322 = vpop.f32.mrf.mxu0
    %v7323 = vadd.f32 %v7258, %v7322
    %v7324 = vpop.f32.mrf.mxu0
    %7325 = vmatprep.mubr.bf16.mxu0 %v6928
    %7326 = vmatmul.mubr.bf16.gmra.mxu0 %v6927
    %v7327 = vpop.f32.mrf.mxu0
    %v7328 = vadd.f32 %v7263, %v7327
    %v7329 = vpop.f32.mrf.mxu0
    %v7330 = vpop.f32.mrf.mxu0
    %v7331 = vadd.f32 %v7266, %v7330
    %v7332 = vpop.f32.mrf.mxu0
    %7333 = vdwg.mxu0
    %v7334 = vmul.f32 %v7304, %v7166
    %v7335 = vmul.f32 %v7307, %v7171
    %v7336 = vmul.f32 %v7312, %v7176
    %v7337 = vmul.f32 %v7315, %v7181
    %v7338 = vmul.f32 %v7320, %v7186
    %v7339 = vmul.f32 %v7323, %v7191
    %v7340 = vmul.f32 %v7328, %v7196
    %v7341 = vmul.f32 %v7331, %v7201
    %v7342 = vpack.c.bf16 %v6420, %v6419
    %v7343 = vpack.c.bf16 %v6422, %v6421
    %v7344 = vpack.c.bf16 %v6424, %v6423
    %v7345 = vpack.c.bf16 %v6426, %v6425
    %v7346 = vpack.c.bf16 %v7335, %v7334
    %v7347 = vpack.c.bf16 %v7337, %v7336
    %v7348 = vpack.c.bf16 %v7339, %v7338
    %v7349 = vpack.c.bf16 %v7341, %v7340
    %v7350 = vld [vmem:[%s17] sm:$0xf]
    %v7351 = vld [vmem:[%s17 + $0x4] sm:$0xf]
    %v7352 = vld [vmem:[%s17 + $0x8] sm:$0xf]
    %v7353 = vld [vmem:[%s17 + $0xc] sm:$0xf]
    %v7354 = vld [vmem:[%s17 + $0x10] sm:$0xf]
    %v7355 = vld [vmem:[%s17 + $0x14] sm:$0xf]
    %v7356 = vld [vmem:[%s17 + $0x18] sm:$0xf]
    %v7357 = vld [vmem:[%s17 + $0x1c] sm:$0xf]
    %v7358 = vld [vmem:[%s18] sm:$0x1]
    %v7360 = vlaneseq
    %v7361 = vshrl.u32 %v7360, 7
    %v7362 = vsub.s32 0, %v7361
    %v7363 = vrot.slane %v7358, %v7362
    %v7373 = vunpack.c.l.b16 %v7350
    %v7374 = vunpack.c.l.b16 %v7351
    %v7375 = vunpack.c.l.b16 %v7352
    %v7376 = vunpack.c.l.b16 %v7353
    %v7377 = vunpack.c.l.b16 %v7354
    %v7378 = vunpack.c.l.b16 %v7355
    %v7379 = vunpack.c.l.b16 %v7356
    %v7380 = vunpack.c.l.b16 %v7357
    %v7381 = vpack.c.b16 %v7374, %v7373
    %v7382 = vpack.c.b16 %v7376, %v7375
    %v7383 = vpack.c.b16 %v7378, %v7377
    %v7384 = vpack.c.b16 %v7380, %v7379
    %v7390 = vsel %vm352, %v7342, 0
    %v7393 = vsel %vm352, %v7343, 0
    %v7396 = vsel %vm352, %v7344, 0
    %v7399 = vsel %vm352, %v7345, 0
    %v7402 = vsel %vm352, %v7346, 0
    %v7405 = vsel %vm352, %v7347, 0
    %v7408 = vsel %vm352, %v7348, 0
    %v7411 = vsel %vm352, %v7349, 0
    %7413 = vmatprep.subr.bf16.mxu0 0
    %7414 = vmatpush1.bf16.msra.mxu0 0
    %7415 = vmatprep.subr.bf16.mxu0 0
    %7416 = vmatpush1.bf16.msra.mxu0 0
    %7417 = vmatprep.subr.bf16.mxu0 0
    %7418 = vmatpush1.bf16.msra.mxu0 0
    %7419 = vmatprep.subr.bf16.mxu0 0
    %7420 = vmatpush1.bf16.msra.mxu0 0
    %7421 = vmatprep.subr.bf16.mxu0 0
    %7422 = vmatpush1.bf16.msra.mxu0 %v7384
    %7423 = vmatprep.subr.bf16.mxu0 0
    %7424 = vmatpush1.bf16.msra.mxu0 %v7383
    %7425 = vmatprep.subr.bf16.mxu0 0
    %7426 = vmatpush1.bf16.msra.mxu0 %v7382
    %7427 = vmatprep.subr.bf16.mxu0 0
    %7428 = vmatpush1.bf16.msra.mxu0 %v7381
    %7429 = vmatprep.subr.bf16.mxu0 0
    %7430 = vmatpush2.bf16.msra.mxu0 0
    %7431 = vmatprep.subr.bf16.mxu0 0
    %7432 = vmatpush2.bf16.msra.mxu0 0
    %7433 = vmatprep.subr.bf16.mxu0 0
    %7434 = vmatpush2.bf16.msra.mxu0 0
    %7435 = vmatprep.subr.bf16.mxu0 0
    %7436 = vmatpush2.bf16.msra.mxu0 0
    %7437 = vmatprep.subr.bf16.mxu0 0
    %7438 = vmatpush2.bf16.msra.mxu0 0
    %7439 = vmatprep.subr.bf16.mxu0 0
    %7440 = vmatpush2.bf16.msra.mxu0 0
    %7441 = vmatprep.subr.bf16.mxu0 0
    %7442 = vmatpush2.bf16.msra.mxu0 0
    %7443 = vmatprep.subr.bf16.mxu0 0
    %7444 = vmatpush2.bf16.msra.mxu0 0
    %7445 = vmatprep.mubr.bf16.mxu0 0
    %7446 = vmatmul.mubr.bf16.gmra.mxu0 %v7390
    %v7447 = vpop.f32.mrf.mxu0
    %v7448 = vadd.f32 %v7363, %v7447
    %v7449 = vpop.f32.mrf.mxu0
    %v7450 = vpop.f32.mrf.mxu0
    %v7451 = vadd.f32 %v7363, %v7450
    %v7452 = vpop.f32.mrf.mxu0
    %7453 = vmatprep.mubr.bf16.mxu0 0
    %7454 = vmatmul.mubr.bf16.gmra.mxu0 %v7393
    %v7455 = vpop.f32.mrf.mxu0
    %v7456 = vadd.f32 %v7363, %v7455
    %v7457 = vpop.f32.mrf.mxu0
    %v7458 = vpop.f32.mrf.mxu0
    %v7459 = vadd.f32 %v7363, %v7458
    %v7460 = vpop.f32.mrf.mxu0
    %7461 = vmatprep.mubr.bf16.mxu0 0
    %7462 = vmatmul.mubr.bf16.gmra.mxu0 %v7396
    %v7463 = vpop.f32.mrf.mxu0
    %v7464 = vadd.f32 %v7363, %v7463
    %v7465 = vpop.f32.mrf.mxu0
    %v7466 = vpop.f32.mrf.mxu0
    %v7467 = vadd.f32 %v7363, %v7466
    %v7468 = vpop.f32.mrf.mxu0
    %7469 = vmatprep.mubr.bf16.mxu0 0
    %7470 = vmatmul.mubr.bf16.gmra.mxu0 %v7399
    %v7471 = vpop.f32.mrf.mxu0
    %v7472 = vadd.f32 %v7363, %v7471
    %v7473 = vpop.f32.mrf.mxu0
    %v7474 = vpop.f32.mrf.mxu0
    %v7475 = vadd.f32 %v7363, %v7474
    %v7476 = vpop.f32.mrf.mxu0
    %7477 = vmatprep.mubr.bf16.mxu0 0
    %7478 = vmatmul.mubr.bf16.gmra.mxu0 %v7402
    %v7479 = vpop.f32.mrf.mxu0
    %v7480 = vadd.f32 %v7363, %v7479
    %v7481 = vpop.f32.mrf.mxu0
    %v7482 = vpop.f32.mrf.mxu0
    %v7483 = vadd.f32 %v7363, %v7482
    %v7484 = vpop.f32.mrf.mxu0
    %7485 = vmatprep.mubr.bf16.mxu0 0
    %7486 = vmatmul.mubr.bf16.gmra.mxu0 %v7405
    %v7487 = vpop.f32.mrf.mxu0
    %v7488 = vadd.f32 %v7363, %v7487
    %v7489 = vpop.f32.mrf.mxu0
    %v7490 = vpop.f32.mrf.mxu0
    %v7491 = vadd.f32 %v7363, %v7490
    %v7492 = vpop.f32.mrf.mxu0
    %7493 = vmatprep.mubr.bf16.mxu0 0
    %7494 = vmatmul.mubr.bf16.gmra.mxu0 %v7408
    %v7495 = vpop.f32.mrf.mxu0
    %v7496 = vadd.f32 %v7363, %v7495
    %v7497 = vpop.f32.mrf.mxu0
    %v7498 = vpop.f32.mrf.mxu0
    %v7499 = vadd.f32 %v7363, %v7498
    %v7500 = vpop.f32.mrf.mxu0
    %7501 = vmatprep.mubr.bf16.mxu0 0
    %7502 = vmatmul.mubr.bf16.gmra.mxu0 %v7411
    %v7503 = vpop.f32.mrf.mxu0
    %v7504 = vadd.f32 %v7363, %v7503
    %v7505 = vpop.f32.mrf.mxu0
    %v7506 = vpop.f32.mrf.mxu0
    %v7507 = vadd.f32 %v7363, %v7506
    %v7508 = vpop.f32.mrf.mxu0
    %7509 = vdwg.mxu0
    %v7510 = vld [vmem:[%s19] sm:$0x1]
    %v7511 = vld [vmem:[%s20] sm:$0x1]
    %v7512 = vld [vmem:[%s21] sm:$0xf]
    %v7513 = vld [vmem:[%s21 + $0x4] sm:$0xf]
    %v7514 = vld [vmem:[%s21 + $0x8] sm:$0xf]
    %v7515 = vld [vmem:[%s21 + $0xc] sm:$0xf]
    %v7516 = vld [vmem:[%s21 + $0x10] sm:$0xf]
    %v7517 = vld [vmem:[%s21 + $0x14] sm:$0xf]
    %v7518 = vld [vmem:[%s21 + $0x18] sm:$0xf]
    %v7519 = vld [vmem:[%s21 + $0x1c] sm:$0xf]
    %v7520 = vld [vmem:[%s21 + $0x20] sm:$0xf]
    %v7521 = vld [vmem:[%s21 + $0x24] sm:$0xf]
    %v7522 = vld [vmem:[%s21 + $0x28] sm:$0xf]
    %v7523 = vld [vmem:[%s21 + $0x2c] sm:$0xf]
    %v7524 = vld [vmem:[%s21 + $0x30] sm:$0xf]
    %v7525 = vld [vmem:[%s21 + $0x34] sm:$0xf]
    %v7526 = vld [vmem:[%s21 + $0x38] sm:$0xf]
    %v7527 = vld [vmem:[%s21 + $0x3c] sm:$0xf]
    %v7528 = vld [vmem:[%s21 + $0x40] sm:$0xf]
    %v7529 = vld [vmem:[%s21 + $0x44] sm:$0xf]
    %v7530 = vld [vmem:[%s21 + $0x48] sm:$0xf]
    %v7531 = vld [vmem:[%s21 + $0x4c] sm:$0xf]
    %v7532 = vld [vmem:[%s21 + $0x50] sm:$0xf]
    %v7533 = vld [vmem:[%s21 + $0x54] sm:$0xf]
    %v7534 = vld [vmem:[%s21 + $0x58] sm:$0xf]
    %v7535 = vld [vmem:[%s21 + $0x5c] sm:$0xf]
    %v7536 = vld [vmem:[%s21 + $0x60] sm:$0xf]
    %v7537 = vld [vmem:[%s21 + $0x64] sm:$0xf]
    %v7538 = vld [vmem:[%s21 + $0x68] sm:$0xf]
    %v7539 = vld [vmem:[%s21 + $0x6c] sm:$0xf]
    %v7540 = vld [vmem:[%s21 + $0x70] sm:$0xf]
    %v7541 = vld [vmem:[%s21 + $0x74] sm:$0xf]
    %v7542 = vld [vmem:[%s21 + $0x78] sm:$0xf]
    %v7543 = vld [vmem:[%s21 + $0x7c] sm:$0xf]
    %v7544 = vld [vmem:[%s21 + $0x80] sm:$0xf]
    %v7545 = vld [vmem:[%s21 + $0x84] sm:$0xf]
    %v7546 = vld [vmem:[%s21 + $0x88] sm:$0xf]
    %v7547 = vld [vmem:[%s21 + $0x8c] sm:$0xf]
    %v7548 = vld [vmem:[%s21 + $0x90] sm:$0xf]
    %v7549 = vld [vmem:[%s21 + $0x94] sm:$0xf]
    %v7550 = vld [vmem:[%s21 + $0x98] sm:$0xf]
    %v7551 = vld [vmem:[%s21 + $0x9c] sm:$0xf]
    %v7552 = vld [vmem:[%s21 + $0xa0] sm:$0xf]
    %v7553 = vld [vmem:[%s21 + $0xa4] sm:$0xf]
    %v7554 = vld [vmem:[%s21 + $0xa8] sm:$0xf]
    %v7555 = vld [vmem:[%s21 + $0xac] sm:$0xf]
    %v7556 = vld [vmem:[%s21 + $0xb0] sm:$0xf]
    %v7557 = vld [vmem:[%s21 + $0xb4] sm:$0xf]
    %v7558 = vld [vmem:[%s21 + $0xb8] sm:$0xf]
    %v7559 = vld [vmem:[%s21 + $0xbc] sm:$0xf]
    %v7560 = vld [vmem:[%s21 + $0xc0] sm:$0xf]
    %v7561 = vld [vmem:[%s21 + $0xc4] sm:$0xf]
    %v7562 = vld [vmem:[%s21 + $0xc8] sm:$0xf]
    %v7563 = vld [vmem:[%s21 + $0xcc] sm:$0xf]
    %v7564 = vld [vmem:[%s21 + $0xd0] sm:$0xf]
    %v7565 = vld [vmem:[%s21 + $0xd4] sm:$0xf]
    %v7566 = vld [vmem:[%s21 + $0xd8] sm:$0xf]
    %v7567 = vld [vmem:[%s21 + $0xdc] sm:$0xf]
    %v7568 = vld [vmem:[%s21 + $0xe0] sm:$0xf]
    %v7569 = vld [vmem:[%s21 + $0xe4] sm:$0xf]
    %v7570 = vld [vmem:[%s21 + $0xe8] sm:$0xf]
    %v7571 = vld [vmem:[%s21 + $0xec] sm:$0xf]
    %v7572 = vld [vmem:[%s21 + $0xf0] sm:$0xf]
    %v7573 = vld [vmem:[%s21 + $0xf4] sm:$0xf]
    %v7574 = vld [vmem:[%s21 + $0xf8] sm:$0xf]
    %v7575 = vld [vmem:[%s21 + $0xfc] sm:$0xf]
    %v7576 = vld [vmem:[%s21 + $0x100] sm:$0xf]
    %v7577 = vld [vmem:[%s21 + $0x104] sm:$0xf]
    %v7578 = vld [vmem:[%s21 + $0x108] sm:$0xf]
    %v7579 = vld [vmem:[%s21 + $0x10c] sm:$0xf]
    %v7580 = vld [vmem:[%s21 + $0x110] sm:$0xf]
    %v7581 = vld [vmem:[%s21 + $0x114] sm:$0xf]
    %v7582 = vld [vmem:[%s21 + $0x118] sm:$0xf]
    %v7583 = vld [vmem:[%s21 + $0x11c] sm:$0xf]
    %v7584 = vld [vmem:[%s22] sm:$0x1]
    %7585 = vmatprep.subr.mxu0 0.0
    %7586 = vmatpush1.msra.mxu0 %v7507
    %7587 = vmatprep.subr.mxu0 0.0
    %7588 = vmatpush1.msra.mxu0 %v7504
    %7589 = vmatprep.subr.mxu0 0.0
    %7590 = vmatpush1.msra.mxu0 %v7499
    %7591 = vmatprep.subr.mxu0 0.0
    %7592 = vmatpush1.msra.mxu0 %v7496
    %7593 = vmatprep.subr.mxu0 0.0
    %7594 = vmatpush1.msra.mxu0 %v7491
    %7595 = vmatprep.subr.mxu0 0.0
    %7596 = vmatpush1.msra.mxu0 %v7488
    %7597 = vmatprep.subr.mxu0 0.0
    %7598 = vmatpush1.msra.mxu0 %v7483
    %7599 = vmatprep.subr.mxu0 0.0
    %7600 = vmatpush1.msra.mxu0 %v7480
    %7601 = vmatprep.subr.mxu0 0.0
    %7602 = vmatpush1.msra.mxu0 %v7475
    %7603 = vmatprep.subr.mxu0 0.0
    %7604 = vmatpush1.msra.mxu0 %v7472
    %7605 = vmatprep.subr.mxu0 0.0
    %7606 = vmatpush1.msra.mxu0 %v7467
    %7607 = vmatprep.subr.mxu0 0.0
    %7608 = vmatpush1.msra.mxu0 %v7464
    %7609 = vmatprep.subr.mxu0 0.0
    %7610 = vmatpush1.msra.mxu0 %v7459
    %7611 = vmatprep.subr.mxu0 0.0
    %7612 = vmatpush1.msra.mxu0 %v7456
    %7613 = vmatprep.subr.mxu0 0.0
    %7614 = vmatpush1.msra.mxu0 %v7451
    %7615 = vmatprep.subr.mxu0 0.0
    %7616 = vmatpush1.msra.mxu0 %v7448
    %7617 = vmatprep.subr.mxu0 0.0
    %7618 = vmatpush2.msra.mxu0 0.0
    %7619 = vmatprep.subr.mxu0 0.0
    %7620 = vmatpush2.msra.mxu0 0.0
    %7621 = vmatprep.subr.mxu0 0.0
    %7622 = vmatpush2.msra.mxu0 0.0
    %7623 = vmatprep.subr.mxu0 0.0
    %7624 = vmatpush2.msra.mxu0 0.0
    %7625 = vmatprep.subr.mxu0 0.0
    %7626 = vmatpush2.msra.mxu0 0.0
    %7627 = vmatprep.subr.mxu0 0.0
    %7628 = vmatpush2.msra.mxu0 0.0
    %7629 = vmatprep.subr.mxu0 0.0
    %7630 = vmatpush2.msra.mxu0 0.0
    %7631 = vmatprep.subr.mxu0 0.0
    %7632 = vmatpush2.msra.mxu0 0.0
    %7633 = vmatprep.subr.mxu0 0.0
    %7634 = vmatpush2.msra.mxu0 0.0
    %7635 = vmatprep.subr.mxu0 0.0
    %7636 = vmatpush2.msra.mxu0 0.0
    %7637 = vmatprep.subr.mxu0 0.0
    %7638 = vmatpush2.msra.mxu0 0.0
    %7639 = vmatprep.subr.mxu0 0.0
    %7640 = vmatpush2.msra.mxu0 0.0
    %7641 = vmatprep.subr.mxu0 0.0
    %7642 = vmatpush2.msra.mxu0 0.0
    %7643 = vmatprep.subr.mxu0 0.0
    %7644 = vmatpush2.msra.mxu0 0.0
    %7645 = vmatprep.subr.mxu0 0.0
    %7646 = vmatpush2.msra.mxu0 0.0
    %7647 = vmatprep.subr.mxu0 0.0
    %7648 = vmatpush2.msra.mxu0 0.0
    %7649 = vmatprep.mubr.f32.mxu0 0.0
    %7650 = vmatmul.mubr.f32.gmra.mxu0 %v100
    %v7651 = vpop.f32.mrf.mxu0
    %v7652 = vadd.f32 0.0, %v7651
    %v7653 = vpop.f32.mrf.mxu0
    %7654 = vmatprep.mubr.f32.mxu0 0.0
    %7655 = vmatmul.mubr.f32.gmra.mxu0 %v101
    %v7656 = vpop.f32.mrf.mxu0
    %v7657 = vadd.f32 0.0, %v7656
    %v7658 = vpop.f32.mrf.mxu0
    %7659 = vmatprep.mubr.f32.mxu0 0.0
    %7660 = vmatmul.mubr.f32.gmra.mxu0 %v102
    %v7661 = vpop.f32.mrf.mxu0
    %v7662 = vadd.f32 0.0, %v7661
    %v7663 = vpop.f32.mrf.mxu0
    %7664 = vmatprep.mubr.f32.mxu0 0.0
    %7665 = vmatmul.mubr.f32.gmra.mxu0 %v103
    %v7666 = vpop.f32.mrf.mxu0
    %v7667 = vadd.f32 0.0, %v7666
    %v7668 = vpop.f32.mrf.mxu0
    %7669 = vmatprep.mubr.f32.mxu0 0.0
    %7670 = vmatmul.mubr.f32.gmra.mxu0 %v104
    %v7671 = vpop.f32.mrf.mxu0
    %v7672 = vadd.f32 0.0, %v7671
    %v7673 = vpop.f32.mrf.mxu0
    %7674 = vmatprep.mubr.f32.mxu0 0.0
    %7675 = vmatmul.mubr.f32.gmra.mxu0 %v105
    %v7676 = vpop.f32.mrf.mxu0
    %v7677 = vadd.f32 0.0, %v7676
    %v7678 = vpop.f32.mrf.mxu0
    %7679 = vmatprep.mubr.f32.mxu0 0.0
    %7680 = vmatmul.mubr.f32.gmra.mxu0 %v106
    %v7681 = vpop.f32.mrf.mxu0
    %v7682 = vadd.f32 0.0, %v7681
    %v7683 = vpop.f32.mrf.mxu0
    %7684 = vmatprep.mubr.f32.mxu0 0.0
    %7685 = vmatmul.mubr.f32.gmra.mxu0 %v107
    %v7686 = vpop.f32.mrf.mxu0
    %v7687 = vadd.f32 0.0, %v7686
    %v7688 = vpop.f32.mrf.mxu0
    %7689 = vmatprep.mubr.f32.mxu0 0.0
    %7690 = vmatmul.mubr.f32.gmra.mxu0 %v108
    %v7691 = vpop.f32.mrf.mxu0
    %v7692 = vadd.f32 0.0, %v7691
    %v7693 = vpop.f32.mrf.mxu0
    %7694 = vmatprep.mubr.f32.mxu0 0.0
    %7695 = vmatmul.mubr.f32.gmra.mxu0 %v109
    %v7696 = vpop.f32.mrf.mxu0
    %v7697 = vadd.f32 0.0, %v7696
    %v7698 = vpop.f32.mrf.mxu0
    %7699 = vmatprep.mubr.f32.mxu0 0.0
    %7700 = vmatmul.mubr.f32.gmra.mxu0 %v110
    %v7701 = vpop.f32.mrf.mxu0
    %v7702 = vadd.f32 0.0, %v7701
    %v7703 = vpop.f32.mrf.mxu0
    %7704 = vmatprep.mubr.f32.mxu0 0.0
    %7705 = vmatmul.mubr.f32.gmra.mxu0 %v111
    %v7706 = vpop.f32.mrf.mxu0
    %v7707 = vadd.f32 0.0, %v7706
    %v7708 = vpop.f32.mrf.mxu0
    %7709 = vmatprep.mubr.f32.mxu0 0.0
    %7710 = vmatmul.mubr.f32.gmra.mxu0 %v112
    %v7711 = vpop.f32.mrf.mxu0
    %v7712 = vadd.f32 0.0, %v7711
    %v7713 = vpop.f32.mrf.mxu0
    %7714 = vmatprep.mubr.f32.mxu0 0.0
    %7715 = vmatmul.mubr.f32.gmra.mxu0 %v113
    %v7716 = vpop.f32.mrf.mxu0
    %v7717 = vadd.f32 0.0, %v7716
    %v7718 = vpop.f32.mrf.mxu0
    %7719 = vmatprep.mubr.f32.mxu0 0.0
    %7720 = vmatmul.mubr.f32.gmra.mxu0 %v114
    %v7721 = vpop.f32.mrf.mxu0
    %v7722 = vadd.f32 0.0, %v7721
    %v7723 = vpop.f32.mrf.mxu0
    %7724 = vmatprep.mubr.f32.mxu0 0.0
    %7725 = vmatmul.mubr.f32.gmra.mxu0 %v115
    %v7726 = vpop.f32.mrf.mxu0
    %v7727 = vadd.f32 0.0, %v7726
    %v7728 = vpop.f32.mrf.mxu0
    %7729 = vdwg.mxu0
    %v7731 = vsel %vm352, %v7652, 0
    %v7734 = vsel %vm352, %v7657, 0
    %v7737 = vsel %vm352, %v7662, 0
    %v7740 = vsel %vm352, %v7667, 0
    %v7743 = vsel %vm352, %v7672, 0
    %v7746 = vsel %vm352, %v7677, 0
    %v7749 = vsel %vm352, %v7682, 0
    %v7752 = vsel %vm352, %v7687, 0
    %v7755 = vsel %vm352, %v7692, 0
    %v7758 = vsel %vm352, %v7697, 0
    %v7761 = vsel %vm352, %v7702, 0
    %v7764 = vsel %vm352, %v7707, 0
    %v7767 = vsel %vm352, %v7712, 0
    %v7770 = vsel %vm352, %v7717, 0
    %v7773 = vsel %vm352, %v7722, 0
    %v7776 = vsel %vm352, %v7727, 0
    %7778 = vmatprep.subr.mxu0 0.0
    %7779 = vmatpush1.msra.mxu0 0.0
    %7780 = vmatprep.subr.mxu0 0.0
    %7781 = vmatpush1.msra.mxu0 0.0
    %7782 = vmatprep.subr.mxu0 0.0
    %7783 = vmatpush1.msra.mxu0 0.0
    %7784 = vmatprep.subr.mxu0 0.0
    %7785 = vmatpush1.msra.mxu0 0.0
    %7786 = vmatprep.subr.mxu0 0.0
    %7787 = vmatpush1.msra.mxu0 0.0
    %7788 = vmatprep.subr.mxu0 0.0
    %7789 = vmatpush1.msra.mxu0 0.0
    %7790 = vmatprep.subr.mxu0 0.0
    %7791 = vmatpush1.msra.mxu0 0.0
    %7792 = vmatprep.subr.mxu0 0.0
    %7793 = vmatpush1.msra.mxu0 0.0
    %7794 = vmatprep.subr.mxu0 0.0
    %7795 = vmatpush1.msra.mxu0 %v99
    %7796 = vmatprep.subr.mxu0 0.0
    %7797 = vmatpush1.msra.mxu0 %v98
    %7798 = vmatprep.subr.mxu0 0.0
    %7799 = vmatpush1.msra.mxu0 %v97
    %7800 = vmatprep.subr.mxu0 0.0
    %7801 = vmatpush1.msra.mxu0 %v96
    %7802 = vmatprep.subr.mxu0 0.0
    %7803 = vmatpush1.msra.mxu0 %v95
    %7804 = vmatprep.subr.mxu0 0.0
    %7805 = vmatpush1.msra.mxu0 %v94
    %7806 = vmatprep.subr.mxu0 0.0
    %7807 = vmatpush1.msra.mxu0 %v93
    %7808 = vmatprep.subr.mxu0 0.0
    %7809 = vmatpush1.msra.mxu0 %v92
    %7810 = vmatprep.subr.mxu0 0.0
    %7811 = vmatpush2.msra.mxu0 0.0
    %7812 = vmatprep.subr.mxu0 0.0
    %7813 = vmatpush2.msra.mxu0 0.0
    %7814 = vmatprep.subr.mxu0 0.0
    %7815 = vmatpush2.msra.mxu0 0.0
    %7816 = vmatprep.subr.mxu0 0.0
    %7817 = vmatpush2.msra.mxu0 0.0
    %7818 = vmatprep.subr.mxu0 0.0
    %7819 = vmatpush2.msra.mxu0 0.0
    %7820 = vmatprep.subr.mxu0 0.0
    %7821 = vmatpush2.msra.mxu0 0.0
    %7822 = vmatprep.subr.mxu0 0.0
    %7823 = vmatpush2.msra.mxu0 0.0
    %7824 = vmatprep.subr.mxu0 0.0
    %7825 = vmatpush2.msra.mxu0 0.0
    %7826 = vmatprep.subr.mxu0 0.0
    %7827 = vmatpush2.msra.mxu0 0.0
    %7828 = vmatprep.subr.mxu0 0.0
    %7829 = vmatpush2.msra.mxu0 0.0
    %7830 = vmatprep.subr.mxu0 0.0
    %7831 = vmatpush2.msra.mxu0 0.0
    %7832 = vmatprep.subr.mxu0 0.0
    %7833 = vmatpush2.msra.mxu0 0.0
    %7834 = vmatprep.subr.mxu0 0.0
    %7835 = vmatpush2.msra.mxu0 0.0
    %7836 = vmatprep.subr.mxu0 0.0
    %7837 = vmatpush2.msra.mxu0 0.0
    %7838 = vmatprep.subr.mxu0 0.0
    %7839 = vmatpush2.msra.mxu0 0.0
    %7840 = vmatprep.subr.mxu0 0.0
    %7841 = vmatpush2.msra.mxu0 0.0
    %7842 = vmatprep.mubr.f32.mxu0 0.0
    %7843 = vmatmul.mubr.f32.gmra.mxu0 %v7731
    %v7844 = vpop.f32.mrf.mxu0
    %v7845 = vadd.f32 0.0, %v7844
    %v7846 = vpop.f32.mrf.mxu0
    %7847 = vmatprep.mubr.f32.mxu0 0.0
    %7848 = vmatmul.mubr.f32.gmra.mxu0 %v7734
    %v7849 = vpop.f32.mrf.mxu0
    %v7850 = vadd.f32 0.0, %v7849
    %v7851 = vpop.f32.mrf.mxu0
    %7852 = vmatprep.mubr.f32.mxu0 0.0
    %7853 = vmatmul.mubr.f32.gmra.mxu0 %v7737
    %v7854 = vpop.f32.mrf.mxu0
    %v7855 = vadd.f32 0.0, %v7854
    %v7856 = vpop.f32.mrf.mxu0
    %7857 = vmatprep.mubr.f32.mxu0 0.0
    %7858 = vmatmul.mubr.f32.gmra.mxu0 %v7740
    %v7859 = vpop.f32.mrf.mxu0
    %v7860 = vadd.f32 0.0, %v7859
    %v7861 = vpop.f32.mrf.mxu0
    %7862 = vmatprep.mubr.f32.mxu0 0.0
    %7863 = vmatmul.mubr.f32.gmra.mxu0 %v7743
    %v7864 = vpop.f32.mrf.mxu0
    %v7865 = vadd.f32 0.0, %v7864
    %v7866 = vpop.f32.mrf.mxu0
    %7867 = vmatprep.mubr.f32.mxu0 0.0
    %7868 = vmatmul.mubr.f32.gmra.mxu0 %v7746
    %v7869 = vpop.f32.mrf.mxu0
    %v7870 = vadd.f32 0.0, %v7869
    %v7871 = vpop.f32.mrf.mxu0
    %7872 = vmatprep.mubr.f32.mxu0 0.0
    %7873 = vmatmul.mubr.f32.gmra.mxu0 %v7749
    %v7874 = vpop.f32.mrf.mxu0
    %v7875 = vadd.f32 0.0, %v7874
    %v7876 = vpop.f32.mrf.mxu0
    %7877 = vmatprep.mubr.f32.mxu0 0.0
    %7878 = vmatmul.mubr.f32.gmra.mxu0 %v7752
    %v7879 = vpop.f32.mrf.mxu0
    %v7880 = vadd.f32 0.0, %v7879
    %v7881 = vpop.f32.mrf.mxu0
    %7882 = vmatprep.mubr.f32.mxu0 0.0
    %7883 = vmatmul.mubr.f32.gmra.mxu0 %v7755
    %v7884 = vpop.f32.mrf.mxu0
    %v7885 = vadd.f32 0.0, %v7884
    %v7886 = vpop.f32.mrf.mxu0
    %7887 = vmatprep.mubr.f32.mxu0 0.0
    %7888 = vmatmul.mubr.f32.gmra.mxu0 %v7758
    %v7889 = vpop.f32.mrf.mxu0
    %v7890 = vadd.f32 0.0, %v7889
    %v7891 = vpop.f32.mrf.mxu0
    %7892 = vmatprep.mubr.f32.mxu0 0.0
    %7893 = vmatmul.mubr.f32.gmra.mxu0 %v7761
    %v7894 = vpop.f32.mrf.mxu0
    %v7895 = vadd.f32 0.0, %v7894
    %v7896 = vpop.f32.mrf.mxu0
    %7897 = vmatprep.mubr.f32.mxu0 0.0
    %7898 = vmatmul.mubr.f32.gmra.mxu0 %v7764
    %v7899 = vpop.f32.mrf.mxu0
    %v7900 = vadd.f32 0.0, %v7899
    %v7901 = vpop.f32.mrf.mxu0
    %7902 = vmatprep.mubr.f32.mxu0 0.0
    %7903 = vmatmul.mubr.f32.gmra.mxu0 %v7767
    %v7904 = vpop.f32.mrf.mxu0
    %v7905 = vadd.f32 0.0, %v7904
    %v7906 = vpop.f32.mrf.mxu0
    %7907 = vmatprep.mubr.f32.mxu0 0.0
    %7908 = vmatmul.mubr.f32.gmra.mxu0 %v7770
    %v7909 = vpop.f32.mrf.mxu0
    %v7910 = vadd.f32 0.0, %v7909
    %v7911 = vpop.f32.mrf.mxu0
    %7912 = vmatprep.mubr.f32.mxu0 0.0
    %7913 = vmatmul.mubr.f32.gmra.mxu0 %v7773
    %v7914 = vpop.f32.mrf.mxu0
    %v7915 = vadd.f32 0.0, %v7914
    %v7916 = vpop.f32.mrf.mxu0
    %7917 = vmatprep.mubr.f32.mxu0 0.0
    %7918 = vmatmul.mubr.f32.gmra.mxu0 %v7776
    %v7919 = vpop.f32.mrf.mxu0
    %v7920 = vadd.f32 0.0, %v7919
    %v7921 = vpop.f32.mrf.mxu0
    %7922 = vdwg.mxu0
    %v7923 = vsub.f32 %v7448, %v7845
    %v7924 = vsub.f32 %v7451, %v7850
    %v7925 = vsub.f32 %v7456, %v7855
    %v7926 = vsub.f32 %v7459, %v7860
    %v7927 = vsub.f32 %v7464, %v7865
    %v7928 = vsub.f32 %v7467, %v7870
    %v7929 = vsub.f32 %v7472, %v7875
    %v7930 = vsub.f32 %v7475, %v7880
    %v7931 = vsub.f32 %v7480, %v7885
    %v7932 = vsub.f32 %v7483, %v7890
    %v7933 = vsub.f32 %v7488, %v7895
    %v7934 = vsub.f32 %v7491, %v7900
    %v7935 = vsub.f32 %v7496, %v7905
    %v7936 = vsub.f32 %v7499, %v7910
    %v7937 = vsub.f32 %v7504, %v7915
    %v7938 = vsub.f32 %v7507, %v7920
    %v7939 = vmul.f32 %v7923, %v7923
    %v7940 = vmul.f32 %v7924, %v7924
    %v7941 = vmul.f32 %v7925, %v7925
    %v7942 = vmul.f32 %v7926, %v7926
    %v7943 = vmul.f32 %v7927, %v7927
    %v7944 = vmul.f32 %v7928, %v7928
    %v7945 = vmul.f32 %v7929, %v7929
    %v7946 = vmul.f32 %v7930, %v7930
    %v7947 = vmul.f32 %v7931, %v7931
    %v7948 = vmul.f32 %v7932, %v7932
    %v7949 = vmul.f32 %v7933, %v7933
    %v7950 = vmul.f32 %v7934, %v7934
    %v7951 = vmul.f32 %v7935, %v7935
    %v7952 = vmul.f32 %v7936, %v7936
    %v7953 = vmul.f32 %v7937, %v7937
    %v7954 = vmul.f32 %v7938, %v7938
    %7955 = vmatprep.subr.mxu0 0.0
    %7956 = vmatpush1.msra.mxu0 %v7954
    %7957 = vmatprep.subr.mxu0 0.0
    %7958 = vmatpush1.msra.mxu0 %v7953
    %7959 = vmatprep.subr.mxu0 0.0
    %7960 = vmatpush1.msra.mxu0 %v7952
    %7961 = vmatprep.subr.mxu0 0.0
    %7962 = vmatpush1.msra.mxu0 %v7951
    %7963 = vmatprep.subr.mxu0 0.0
    %7964 = vmatpush1.msra.mxu0 %v7950
    %7965 = vmatprep.subr.mxu0 0.0
    %7966 = vmatpush1.msra.mxu0 %v7949
    %7967 = vmatprep.subr.mxu0 0.0
    %7968 = vmatpush1.msra.mxu0 %v7948
    %7969 = vmatprep.subr.mxu0 0.0
    %7970 = vmatpush1.msra.mxu0 %v7947
    %7971 = vmatprep.subr.mxu0 0.0
    %7972 = vmatpush1.msra.mxu0 %v7946
    %7973 = vmatprep.subr.mxu0 0.0
    %7974 = vmatpush1.msra.mxu0 %v7945
    %7975 = vmatprep.subr.mxu0 0.0
    %7976 = vmatpush1.msra.mxu0 %v7944
    %7977 = vmatprep.subr.mxu0 0.0
    %7978 = vmatpush1.msra.mxu0 %v7943
    %7979 = vmatprep.subr.mxu0 0.0
    %7980 = vmatpush1.msra.mxu0 %v7942
    %7981 = vmatprep.subr.mxu0 0.0
    %7982 = vmatpush1.msra.mxu0 %v7941
    %7983 = vmatprep.subr.mxu0 0.0
    %7984 = vmatpush1.msra.mxu0 %v7940
    %7985 = vmatprep.subr.mxu0 0.0
    %7986 = vmatpush1.msra.mxu0 %v7939
    %7987 = vmatprep.subr.mxu0 0.0
    %7988 = vmatpush2.msra.mxu0 0.0
    %7989 = vmatprep.subr.mxu0 0.0
    %7990 = vmatpush2.msra.mxu0 0.0
    %7991 = vmatprep.subr.mxu0 0.0
    %7992 = vmatpush2.msra.mxu0 0.0
    %7993 = vmatprep.subr.mxu0 0.0
    %7994 = vmatpush2.msra.mxu0 0.0
    %7995 = vmatprep.subr.mxu0 0.0
    %7996 = vmatpush2.msra.mxu0 0.0
    %7997 = vmatprep.subr.mxu0 0.0
    %7998 = vmatpush2.msra.mxu0 0.0
    %7999 = vmatprep.subr.mxu0 0.0
    %8000 = vmatpush2.msra.mxu0 0.0
    %8001 = vmatprep.subr.mxu0 0.0
    %8002 = vmatpush2.msra.mxu0 0.0
    %8003 = vmatprep.subr.mxu0 0.0
    %8004 = vmatpush2.msra.mxu0 0.0
    %8005 = vmatprep.subr.mxu0 0.0
    %8006 = vmatpush2.msra.mxu0 0.0
    %8007 = vmatprep.subr.mxu0 0.0
    %8008 = vmatpush2.msra.mxu0 0.0
    %8009 = vmatprep.subr.mxu0 0.0
    %8010 = vmatpush2.msra.mxu0 0.0
    %8011 = vmatprep.subr.mxu0 0.0
    %8012 = vmatpush2.msra.mxu0 0.0
    %8013 = vmatprep.subr.mxu0 0.0
    %8014 = vmatpush2.msra.mxu0 0.0
    %8015 = vmatprep.subr.mxu0 0.0
    %8016 = vmatpush2.msra.mxu0 0.0
    %8017 = vmatprep.subr.mxu0 0.0
    %8018 = vmatpush2.msra.mxu0 0.0
    %8019 = vmatprep.mubr.f32.mxu0 0.0
    %8020 = vmatmul.mubr.f32.gmra.mxu0 %v100
    %v8021 = vpop.f32.mrf.mxu0
    %v8022 = vadd.f32 0.0, %v8021
    %v8023 = vpop.f32.mrf.mxu0
    %8024 = vmatprep.mubr.f32.mxu0 0.0
    %8025 = vmatmul.mubr.f32.gmra.mxu0 %v101
    %v8026 = vpop.f32.mrf.mxu0
    %v8027 = vadd.f32 0.0, %v8026
    %v8028 = vpop.f32.mrf.mxu0
    %8029 = vmatprep.mubr.f32.mxu0 0.0
    %8030 = vmatmul.mubr.f32.gmra.mxu0 %v102
    %v8031 = vpop.f32.mrf.mxu0
    %v8032 = vadd.f32 0.0, %v8031
    %v8033 = vpop.f32.mrf.mxu0
    %8034 = vmatprep.mubr.f32.mxu0 0.0
    %8035 = vmatmul.mubr.f32.gmra.mxu0 %v103
    %v8036 = vpop.f32.mrf.mxu0
    %v8037 = vadd.f32 0.0, %v8036
    %v8038 = vpop.f32.mrf.mxu0
    %8039 = vmatprep.mubr.f32.mxu0 0.0
    %8040 = vmatmul.mubr.f32.gmra.mxu0 %v104
    %v8041 = vpop.f32.mrf.mxu0
    %v8042 = vadd.f32 0.0, %v8041
    %v8043 = vpop.f32.mrf.mxu0
    %8044 = vmatprep.mubr.f32.mxu0 0.0
    %8045 = vmatmul.mubr.f32.gmra.mxu0 %v105
    %v8046 = vpop.f32.mrf.mxu0
    %v8047 = vadd.f32 0.0, %v8046
    %v8048 = vpop.f32.mrf.mxu0
    %8049 = vmatprep.mubr.f32.mxu0 0.0
    %8050 = vmatmul.mubr.f32.gmra.mxu0 %v106
    %v8051 = vpop.f32.mrf.mxu0
    %v8052 = vadd.f32 0.0, %v8051
    %v8053 = vpop.f32.mrf.mxu0
    %8054 = vmatprep.mubr.f32.mxu0 0.0
    %8055 = vmatmul.mubr.f32.gmra.mxu0 %v107
    %v8056 = vpop.f32.mrf.mxu0
    %v8057 = vadd.f32 0.0, %v8056
    %v8058 = vpop.f32.mrf.mxu0
    %8059 = vmatprep.mubr.f32.mxu0 0.0
    %8060 = vmatmul.mubr.f32.gmra.mxu0 %v108
    %v8061 = vpop.f32.mrf.mxu0
    %v8062 = vadd.f32 0.0, %v8061
    %v8063 = vpop.f32.mrf.mxu0
    %8064 = vmatprep.mubr.f32.mxu0 0.0
    %8065 = vmatmul.mubr.f32.gmra.mxu0 %v109
    %v8066 = vpop.f32.mrf.mxu0
    %v8067 = vadd.f32 0.0, %v8066
    %v8068 = vpop.f32.mrf.mxu0
    %8069 = vmatprep.mubr.f32.mxu0 0.0
    %8070 = vmatmul.mubr.f32.gmra.mxu0 %v110
    %v8071 = vpop.f32.mrf.mxu0
    %v8072 = vadd.f32 0.0, %v8071
    %v8073 = vpop.f32.mrf.mxu0
    %8074 = vmatprep.mubr.f32.mxu0 0.0
    %8075 = vmatmul.mubr.f32.gmra.mxu0 %v111
    %v8076 = vpop.f32.mrf.mxu0
    %v8077 = vadd.f32 0.0, %v8076
    %v8078 = vpop.f32.mrf.mxu0
    %8079 = vmatprep.mubr.f32.mxu0 0.0
    %8080 = vmatmul.mubr.f32.gmra.mxu0 %v112
    %v8081 = vpop.f32.mrf.mxu0
    %v8082 = vadd.f32 0.0, %v8081
    %v8083 = vpop.f32.mrf.mxu0
    %8084 = vmatprep.mubr.f32.mxu0 0.0
    %8085 = vmatmul.mubr.f32.gmra.mxu0 %v113
    %v8086 = vpop.f32.mrf.mxu0
    %v8087 = vadd.f32 0.0, %v8086
    %v8088 = vpop.f32.mrf.mxu0
    %8089 = vmatprep.mubr.f32.mxu0 0.0
    %8090 = vmatmul.mubr.f32.gmra.mxu0 %v114
    %v8091 = vpop.f32.mrf.mxu0
    %v8092 = vadd.f32 0.0, %v8091
    %v8093 = vpop.f32.mrf.mxu0
    %8094 = vmatprep.mubr.f32.mxu0 0.0
    %8095 = vmatmul.mubr.f32.gmra.mxu0 %v115
    %v8096 = vpop.f32.mrf.mxu0
    %v8097 = vadd.f32 0.0, %v8096
    %v8098 = vpop.f32.mrf.mxu0
    %8099 = vdwg.mxu0
    %v8101 = vsel %vm352, %v8022, 0
    %v8104 = vsel %vm352, %v8027, 0
    %v8107 = vsel %vm352, %v8032, 0
    %v8110 = vsel %vm352, %v8037, 0
    %v8113 = vsel %vm352, %v8042, 0
    %v8116 = vsel %vm352, %v8047, 0
    %v8119 = vsel %vm352, %v8052, 0
    %v8122 = vsel %vm352, %v8057, 0
    %v8125 = vsel %vm352, %v8062, 0
    %v8128 = vsel %vm352, %v8067, 0
    %v8131 = vsel %vm352, %v8072, 0
    %v8134 = vsel %vm352, %v8077, 0
    %v8137 = vsel %vm352, %v8082, 0
    %v8140 = vsel %vm352, %v8087, 0
    %v8143 = vsel %vm352, %v8092, 0
    %v8146 = vsel %vm352, %v8097, 0
    %8148 = vmatprep.subr.mxu0 0.0
    %8149 = vmatpush1.msra.mxu0 0.0
    %8150 = vmatprep.subr.mxu0 0.0
    %8151 = vmatpush1.msra.mxu0 0.0
    %8152 = vmatprep.subr.mxu0 0.0
    %8153 = vmatpush1.msra.mxu0 0.0
    %8154 = vmatprep.subr.mxu0 0.0
    %8155 = vmatpush1.msra.mxu0 0.0
    %8156 = vmatprep.subr.mxu0 0.0
    %8157 = vmatpush1.msra.mxu0 0.0
    %8158 = vmatprep.subr.mxu0 0.0
    %8159 = vmatpush1.msra.mxu0 0.0
    %8160 = vmatprep.subr.mxu0 0.0
    %8161 = vmatpush1.msra.mxu0 0.0
    %8162 = vmatprep.subr.mxu0 0.0
    %8163 = vmatpush1.msra.mxu0 0.0
    %8164 = vmatprep.subr.mxu0 0.0
    %8165 = vmatpush1.msra.mxu0 %v99
    %8166 = vmatprep.subr.mxu0 0.0
    %8167 = vmatpush1.msra.mxu0 %v98
    %8168 = vmatprep.subr.mxu0 0.0
    %8169 = vmatpush1.msra.mxu0 %v97
    %8170 = vmatprep.subr.mxu0 0.0
    %8171 = vmatpush1.msra.mxu0 %v96
    %8172 = vmatprep.subr.mxu0 0.0
    %8173 = vmatpush1.msra.mxu0 %v95
    %8174 = vmatprep.subr.mxu0 0.0
    %8175 = vmatpush1.msra.mxu0 %v94
    %8176 = vmatprep.subr.mxu0 0.0
    %8177 = vmatpush1.msra.mxu0 %v93
    %8178 = vmatprep.subr.mxu0 0.0
    %8179 = vmatpush1.msra.mxu0 %v92
    %8180 = vmatprep.subr.mxu0 0.0
    %8181 = vmatpush2.msra.mxu0 0.0
    %8182 = vmatprep.subr.mxu0 0.0
    %8183 = vmatpush2.msra.mxu0 0.0
    %8184 = vmatprep.subr.mxu0 0.0
    %8185 = vmatpush2.msra.mxu0 0.0
    %8186 = vmatprep.subr.mxu0 0.0
    %8187 = vmatpush2.msra.mxu0 0.0
    %8188 = vmatprep.subr.mxu0 0.0
    %8189 = vmatpush2.msra.mxu0 0.0
    %8190 = vmatprep.subr.mxu0 0.0
    %8191 = vmatpush2.msra.mxu0 0.0
    %8192 = vmatprep.subr.mxu0 0.0
    %8193 = vmatpush2.msra.mxu0 0.0
    %8194 = vmatprep.subr.mxu0 0.0
    %8195 = vmatpush2.msra.mxu0 0.0
    %8196 = vmatprep.subr.mxu0 0.0
    %8197 = vmatpush2.msra.mxu0 0.0
    %8198 = vmatprep.subr.mxu0 0.0
    %8199 = vmatpush2.msra.mxu0 0.0
    %8200 = vmatprep.subr.mxu0 0.0
    %8201 = vmatpush2.msra.mxu0 0.0
    %8202 = vmatprep.subr.mxu0 0.0
    %8203 = vmatpush2.msra.mxu0 0.0
    %8204 = vmatprep.subr.mxu0 0.0
    %8205 = vmatpush2.msra.mxu0 0.0
    %8206 = vmatprep.subr.mxu0 0.0
    %8207 = vmatpush2.msra.mxu0 0.0
    %8208 = vmatprep.subr.mxu0 0.0
    %8209 = vmatpush2.msra.mxu0 0.0
    %8210 = vmatprep.subr.mxu0 0.0
    %8211 = vmatpush2.msra.mxu0 0.0
    %8212 = vmatprep.mubr.f32.mxu0 0.0
    %8213 = vmatmul.mubr.f32.gmra.mxu0 %v8101
    %v8214 = vpop.f32.mrf.mxu0
    %v8215 = vadd.f32 1e-05, %v8214
    %v8216 = vpop.f32.mrf.mxu0
    %8217 = vmatprep.mubr.f32.mxu0 0.0
    %8218 = vmatmul.mubr.f32.gmra.mxu0 %v8104
    %v8219 = vpop.f32.mrf.mxu0
    %v8220 = vadd.f32 1e-05, %v8219
    %v8221 = vpop.f32.mrf.mxu0
    %8222 = vmatprep.mubr.f32.mxu0 0.0
    %8223 = vmatmul.mubr.f32.gmra.mxu0 %v8107
    %v8224 = vpop.f32.mrf.mxu0
    %v8225 = vadd.f32 1e-05, %v8224
    %v8226 = vpop.f32.mrf.mxu0
    %8227 = vmatprep.mubr.f32.mxu0 0.0
    %8228 = vmatmul.mubr.f32.gmra.mxu0 %v8110
    %v8229 = vpop.f32.mrf.mxu0
    %v8230 = vadd.f32 1e-05, %v8229
    %v8231 = vpop.f32.mrf.mxu0
    %8232 = vmatprep.mubr.f32.mxu0 0.0
    %8233 = vmatmul.mubr.f32.gmra.mxu0 %v8113
    %v8234 = vpop.f32.mrf.mxu0
    %v8235 = vadd.f32 1e-05, %v8234
    %v8236 = vpop.f32.mrf.mxu0
    %8237 = vmatprep.mubr.f32.mxu0 0.0
    %8238 = vmatmul.mubr.f32.gmra.mxu0 %v8116
    %v8239 = vpop.f32.mrf.mxu0
    %v8240 = vadd.f32 1e-05, %v8239
    %v8241 = vpop.f32.mrf.mxu0
    %8242 = vmatprep.mubr.f32.mxu0 0.0
    %8243 = vmatmul.mubr.f32.gmra.mxu0 %v8119
    %v8244 = vpop.f32.mrf.mxu0
    %v8245 = vadd.f32 1e-05, %v8244
    %v8246 = vpop.f32.mrf.mxu0
    %8247 = vmatprep.mubr.f32.mxu0 0.0
    %8248 = vmatmul.mubr.f32.gmra.mxu0 %v8122
    %v8249 = vpop.f32.mrf.mxu0
    %v8250 = vadd.f32 1e-05, %v8249
    %v8251 = vpop.f32.mrf.mxu0
    %8252 = vmatprep.mubr.f32.mxu0 0.0
    %8253 = vmatmul.mubr.f32.gmra.mxu0 %v8125
    %v8254 = vpop.f32.mrf.mxu0
    %v8255 = vadd.f32 1e-05, %v8254
    %v8256 = vpop.f32.mrf.mxu0
    %8257 = vmatprep.mubr.f32.mxu0 0.0
    %8258 = vmatmul.mubr.f32.gmra.mxu0 %v8128
    %v8259 = vpop.f32.mrf.mxu0
    %v8260 = vadd.f32 1e-05, %v8259
    %v8261 = vpop.f32.mrf.mxu0
    %8262 = vmatprep.mubr.f32.mxu0 0.0
    %8263 = vmatmul.mubr.f32.gmra.mxu0 %v8131
    %v8264 = vpop.f32.mrf.mxu0
    %v8265 = vadd.f32 1e-05, %v8264
    %v8266 = vpop.f32.mrf.mxu0
    %8267 = vmatprep.mubr.f32.mxu0 0.0
    %8268 = vmatmul.mubr.f32.gmra.mxu0 %v8134
    %v8269 = vpop.f32.mrf.mxu0
    %v8270 = vadd.f32 1e-05, %v8269
    %v8271 = vpop.f32.mrf.mxu0
    %8272 = vmatprep.mubr.f32.mxu0 0.0
    %8273 = vmatmul.mubr.f32.gmra.mxu0 %v8137
    %v8274 = vpop.f32.mrf.mxu0
    %v8275 = vadd.f32 1e-05, %v8274
    %v8276 = vpop.f32.mrf.mxu0
    %8277 = vmatprep.mubr.f32.mxu0 0.0
    %8278 = vmatmul.mubr.f32.gmra.mxu0 %v8140
    %v8279 = vpop.f32.mrf.mxu0
    %v8280 = vadd.f32 1e-05, %v8279
    %v8281 = vpop.f32.mrf.mxu0
    %8282 = vmatprep.mubr.f32.mxu0 0.0
    %8283 = vmatmul.mubr.f32.gmra.mxu0 %v8143
    %v8284 = vpop.f32.mrf.mxu0
    %v8285 = vadd.f32 1e-05, %v8284
    %v8286 = vpop.f32.mrf.mxu0
    %8287 = vmatprep.mubr.f32.mxu0 0.0
    %8288 = vmatmul.mubr.f32.gmra.mxu0 %v8146
    %v8289 = vpop.f32.mrf.mxu0
    %v8290 = vadd.f32 1e-05, %v8289
    %v8291 = vpop.f32.mrf.mxu0
    %8292 = vdwg.mxu0
    %v8293 = vrsqrt.pop %v8215
    %v8294 = vrsqrt.pop %v8220
    %v8295 = vrsqrt.pop %v8225
    %v8296 = vrsqrt.pop %v8230
    %v8297 = vrsqrt.pop %v8235
    %v8298 = vrsqrt.pop %v8240
    %v8299 = vrsqrt.pop %v8245
    %v8300 = vrsqrt.pop %v8250
    %v8301 = vrsqrt.pop %v8255
    %v8302 = vrsqrt.pop %v8260
    %v8303 = vrsqrt.pop %v8265
    %v8304 = vrsqrt.pop %v8270
    %v8305 = vrsqrt.pop %v8275
    %v8306 = vrsqrt.pop %v8280
    %v8307 = vrsqrt.pop %v8285
    %v8308 = vrsqrt.pop %v8290
    %v8309 = vmul.f32 %v7923, %v8293
    %v8310 = vmul.f32 %v7924, %v8294
    %v8311 = vmul.f32 %v7925, %v8295
    %v8312 = vmul.f32 %v7926, %v8296
    %v8313 = vmul.f32 %v7927, %v8297
    %v8314 = vmul.f32 %v7928, %v8298
    %v8315 = vmul.f32 %v7929, %v8299
    %v8316 = vmul.f32 %v7930, %v8300
    %v8317 = vmul.f32 %v7931, %v8301
    %v8318 = vmul.f32 %v7932, %v8302
    %v8319 = vmul.f32 %v7933, %v8303
    %v8320 = vmul.f32 %v7934, %v8304
    %v8321 = vmul.f32 %v7935, %v8305
    %v8322 = vmul.f32 %v7936, %v8306
    %v8323 = vmul.f32 %v7937, %v8307
    %v8324 = vmul.f32 %v7938, %v8308
    %v8326 = vlaneseq
    %v8327 = vshrl.u32 %v8326, 7
    %v8328 = vsub.s32 0, %v8327
    %v8329 = vrot.slane %v7510, %v8328
    %v8331 = vmul.f32 %v8309, %v8329
    %v8332 = vmul.f32 %v8310, %v8329
    %v8333 = vmul.f32 %v8311, %v8329
    %v8334 = vmul.f32 %v8312, %v8329
    %v8335 = vmul.f32 %v8313, %v8329
    %v8336 = vmul.f32 %v8314, %v8329
    %v8337 = vmul.f32 %v8315, %v8329
    %v8338 = vmul.f32 %v8316, %v8329
    %v8339 = vmul.f32 %v8317, %v8329
    %v8340 = vmul.f32 %v8318, %v8329
    %v8341 = vmul.f32 %v8319, %v8329
    %v8342 = vmul.f32 %v8320, %v8329
    %v8343 = vmul.f32 %v8321, %v8329
    %v8344 = vmul.f32 %v8322, %v8329
    %v8345 = vmul.f32 %v8323, %v8329
    %v8346 = vmul.f32 %v8324, %v8329
    %v8348 = vlaneseq
    %v8349 = vshrl.u32 %v8348, 7
    %v8350 = vsub.s32 0, %v8349
    %v8351 = vrot.slane %v7511, %v8350
    %v8353 = vadd.f32 %v8331, %v8351
    %v8354 = vadd.f32 %v8332, %v8351
    %v8355 = vadd.f32 %v8333, %v8351
    %v8356 = vadd.f32 %v8334, %v8351
    %v8357 = vadd.f32 %v8335, %v8351
    %v8358 = vadd.f32 %v8336, %v8351
    %v8359 = vadd.f32 %v8337, %v8351
    %v8360 = vadd.f32 %v8338, %v8351
    %v8361 = vadd.f32 %v8339, %v8351
    %v8362 = vadd.f32 %v8340, %v8351
    %v8363 = vadd.f32 %v8341, %v8351
    %v8364 = vadd.f32 %v8342, %v8351
    %v8365 = vadd.f32 %v8343, %v8351
    %v8366 = vadd.f32 %v8344, %v8351
    %v8367 = vadd.f32 %v8345, %v8351
    %v8368 = vadd.f32 %v8346, %v8351
    %v8369 = vmax.f32 %v8353, 0.0
    %v8370 = vmax.f32 %v8354, 0.0
    %v8371 = vmax.f32 %v8355, 0.0
    %v8372 = vmax.f32 %v8356, 0.0
    %v8373 = vmax.f32 %v8357, 0.0
    %v8374 = vmax.f32 %v8358, 0.0
    %v8375 = vmax.f32 %v8359, 0.0
    %v8376 = vmax.f32 %v8360, 0.0
    %v8377 = vmax.f32 %v8361, 0.0
    %v8378 = vmax.f32 %v8362, 0.0
    %v8379 = vmax.f32 %v8363, 0.0
    %v8380 = vmax.f32 %v8364, 0.0
    %v8381 = vmax.f32 %v8365, 0.0
    %v8382 = vmax.f32 %v8366, 0.0
    %v8383 = vmax.f32 %v8367, 0.0
    %v8384 = vmax.f32 %v8368, 0.0
    %v8385 = vpack.c.bf16 %v8370, %v8369
    %v8386 = vpack.c.bf16 %v8372, %v8371
    %v8387 = vpack.c.bf16 %v8374, %v8373
    %v8388 = vpack.c.bf16 %v8376, %v8375
    %v8389 = vpack.c.bf16 %v8378, %v8377
    %v8390 = vpack.c.bf16 %v8380, %v8379
    %v8391 = vpack.c.bf16 %v8382, %v8381
    %v8392 = vpack.c.bf16 %v8384, %v8383
    %v8394 = vshrl.u32 %v8385, 16
    %v8396 = vrot.slane %v8394, 3
    %v8397 = vshll.u32 %v8385, 16
    %v8399 = vrot.slane %v8397, 4
    %v8400 = vor.u32 %v8396, %v8399
    %v8402 = vshrl.u32 %v8386, 16
    %v8404 = vrot.slane %v8402, 3
    %v8405 = vshll.u32 %v8386, 16
    %v8407 = vrot.slane %v8405, 4
    %v8408 = vor.u32 %v8404, %v8407
    %v8409 = vsel %vm1016, %v8400, %v8408
    %v8411 = vshrl.u32 %v8387, 16
    %v8413 = vrot.slane %v8411, 3
    %v8414 = vshll.u32 %v8387, 16
    %v8416 = vrot.slane %v8414, 4
    %v8417 = vor.u32 %v8413, %v8416
    %v8418 = vsel %vm1016, %v8408, %v8417
    %v8420 = vshrl.u32 %v8388, 16
    %v8422 = vrot.slane %v8420, 3
    %v8423 = vshll.u32 %v8388, 16
    %v8425 = vrot.slane %v8423, 4
    %v8426 = vor.u32 %v8422, %v8425
    %v8427 = vsel %vm1016, %v8417, %v8426
    %v8429 = vshrl.u32 %v8389, 16
    %v8431 = vrot.slane %v8429, 3
    %v8432 = vshll.u32 %v8389, 16
    %v8434 = vrot.slane %v8432, 4
    %v8435 = vor.u32 %v8431, %v8434
    %v8436 = vsel %vm1016, %v8426, %v8435
    %v8438 = vshrl.u32 %v8390, 16
    %v8440 = vrot.slane %v8438, 3
    %v8441 = vshll.u32 %v8390, 16
    %v8443 = vrot.slane %v8441, 4
    %v8444 = vor.u32 %v8440, %v8443
    %v8445 = vsel %vm1016, %v8435, %v8444
    %v8447 = vshrl.u32 %v8391, 16
    %v8449 = vrot.slane %v8447, 3
    %v8450 = vshll.u32 %v8391, 16
    %v8452 = vrot.slane %v8450, 4
    %v8453 = vor.u32 %v8449, %v8452
    %v8454 = vsel %vm1016, %v8444, %v8453
    %v8456 = vshrl.u32 %v8392, 16
    %v8458 = vrot.slane %v8456, 3
    %v8459 = vshll.u32 %v8392, 16
    %v8461 = vrot.slane %v8459, 4
    %v8462 = vor.u32 %v8458, %v8461
    %v8463 = vsel %vm1016, %v8453, %v8462
    %v8473 = vsel %vm1098, 0, %v8400
    %v8474 = vsel %vm1098, %v8462, 0
    %v8475 = vmul.bf16 %v8473, %v1325
    %v8476 = vmul.bf16 %v8409, %v1326
    %v8477 = vmul.bf16 %v8418, %v1327
    %v8478 = vmul.bf16 %v8427, %v1328
    %v8479 = vmul.bf16 %v8436, %v1329
    %v8480 = vmul.bf16 %v8445, %v1330
    %v8481 = vmul.bf16 %v8454, %v1331
    %v8482 = vmul.bf16 %v8463, %v1332
    %v8483 = vmul.bf16 %v8473, %v1572
    %v8484 = vmul.bf16 %v8409, %v1580
    %v8485 = vmul.bf16 %v8418, %v1588
    %v8486 = vmul.bf16 %v8427, %v1596
    %v8487 = vmul.bf16 %v8436, %v1604
    %v8488 = vmul.bf16 %v8445, %v1612
    %v8489 = vmul.bf16 %v8454, %v1620
    %v8490 = vmul.bf16 %v8463, %v1628
    %v8491 = vmul.bf16 %v8474, %v1624
    %v8492 = vmul.bf16 %v8473, %v1864
    %v8493 = vmul.bf16 %v8409, %v1866
    %v8494 = vmul.bf16 %v8418, %v1868
    %v8495 = vmul.bf16 %v8427, %v1870
    %v8496 = vmul.bf16 %v8436, %v1872
    %v8497 = vmul.bf16 %v8445, %v1874
    %v8498 = vmul.bf16 %v8454, %v1876
    %v8499 = vmul.bf16 %v8463, %v1878
    %v8500 = vmul.bf16 %v8474, %v1877
    %v8501 = vmul.bf16 %v8473, %v2105
    %v8502 = vmul.bf16 %v8409, %v2106
    %v8503 = vmul.bf16 %v8418, %v2107
    %v8504 = vmul.bf16 %v8427, %v2108
    %v8505 = vmul.bf16 %v8436, %v2109
    %v8506 = vmul.bf16 %v8445, %v2110
    %v8507 = vmul.bf16 %v8454, %v2111
    %v8508 = vmul.bf16 %v8463, %v2112
    %v8509 = vmul.bf16 %v8474, %v2113
    %v8510 = vmul.bf16 %v8473, %v2355
    %v8511 = vmul.bf16 %v8409, %v2364
    %v8512 = vmul.bf16 %v8418, %v2373
    %v8513 = vmul.bf16 %v8427, %v2382
    %v8514 = vmul.bf16 %v8436, %v2391
    %v8515 = vmul.bf16 %v8445, %v2400
    %v8516 = vmul.bf16 %v8454, %v2409
    %v8517 = vmul.bf16 %v8463, %v2418
    %v8518 = vmul.bf16 %v8474, %v2417
    %v8519 = vmul.bf16 %v8473, %v2653
    %v8520 = vmul.bf16 %v8409, %v2655
    %v8521 = vmul.bf16 %v8418, %v2657
    %v8522 = vmul.bf16 %v8427, %v2659
    %v8523 = vmul.bf16 %v8436, %v2661
    %v8524 = vmul.bf16 %v8445, %v2663
    %v8525 = vmul.bf16 %v8454, %v2665
    %v8526 = vmul.bf16 %v8463, %v2667
    %v8527 = vmul.bf16 %v8474, %v2666
    %v8528 = vmul.bf16 %v8409, %v2894
    %v8529 = vmul.bf16 %v8418, %v2895
    %v8530 = vmul.bf16 %v8427, %v2896
    %v8531 = vmul.bf16 %v8436, %v2897
    %v8532 = vmul.bf16 %v8445, %v2898
    %v8533 = vmul.bf16 %v8454, %v2899
    %v8534 = vmul.bf16 %v8463, %v2900
    %v8535 = vmul.bf16 %v8474, %v2901
    %v8536 = vmul.bf16 %v8409, %v3140
    %v8537 = vmul.bf16 %v8418, %v3148
    %v8538 = vmul.bf16 %v8427, %v3156
    %v8539 = vmul.bf16 %v8436, %v3164
    %v8540 = vmul.bf16 %v8445, %v3172
    %v8541 = vmul.bf16 %v8454, %v3180
    %v8542 = vmul.bf16 %v8463, %v3188
    %v8543 = vmul.bf16 %v8474, %v3196
    %v8544 = vmul.bf16 %v8409, %v3431
    %v8545 = vmul.bf16 %v8418, %v3433
    %v8546 = vmul.bf16 %v8427, %v3435
    %v8547 = vmul.bf16 %v8436, %v3437
    %v8548 = vmul.bf16 %v8445, %v3439
    %v8549 = vmul.bf16 %v8454, %v3441
    %v8550 = vmul.bf16 %v8463, %v3443
    %v8551 = vmul.bf16 %v8474, %v3445
    %v8553 = vshrl.u32 %v8483, 16
    %v8555 = vshll.u32 %v8483, 16
    %v8557 = vrot.slane %v8555, 1
    %v8558 = vor.u32 %v8553, %v8557
    %v8560 = vshll.u32 %v8484, 16
    %v8562 = vrot.slane %v8560, 1
    %v8563 = vsel %vm3464, %v8558, %v8562
    %v8564 = vshrl.u32 %v8484, 16
    %v8566 = vor.u32 %v8564, %v8562
    %v8568 = vshll.u32 %v8485, 16
    %v8570 = vrot.slane %v8568, 1
    %v8571 = vsel %vm3464, %v8566, %v8570
    %v8572 = vshrl.u32 %v8485, 16
    %v8574 = vor.u32 %v8572, %v8570
    %v8576 = vshll.u32 %v8486, 16
    %v8578 = vrot.slane %v8576, 1
    %v8579 = vsel %vm3464, %v8574, %v8578
    %v8580 = vshrl.u32 %v8486, 16
    %v8582 = vor.u32 %v8580, %v8578
    %v8584 = vshll.u32 %v8487, 16
    %v8586 = vrot.slane %v8584, 1
    %v8587 = vsel %vm3464, %v8582, %v8586
    %v8588 = vshrl.u32 %v8487, 16
    %v8590 = vor.u32 %v8588, %v8586
    %v8592 = vshll.u32 %v8488, 16
    %v8594 = vrot.slane %v8592, 1
    %v8595 = vsel %vm3464, %v8590, %v8594
    %v8596 = vshrl.u32 %v8488, 16
    %v8598 = vor.u32 %v8596, %v8594
    %v8600 = vshll.u32 %v8489, 16
    %v8602 = vrot.slane %v8600, 1
    %v8603 = vsel %vm3464, %v8598, %v8602
    %v8604 = vshrl.u32 %v8489, 16
    %v8606 = vor.u32 %v8604, %v8602
    %v8608 = vshll.u32 %v8490, 16
    %v8610 = vrot.slane %v8608, 1
    %v8611 = vsel %vm3464, %v8606, %v8610
    %v8612 = vshrl.u32 %v8490, 16
    %v8614 = vor.u32 %v8612, %v8610
    %v8616 = vshll.u32 %v8491, 16
    %v8618 = vrot.slane %v8616, 1
    %v8619 = vsel %vm3464, %v8614, %v8618
    %8620 = vrot.lane.b32.xlu0 %v8563, 64
    %v8621 = vpop.permute.xlu0 %8620
    %8622 = vrot.lane.b32.xlu0 %v8571, 64
    %v8623 = vpop.permute.xlu0 %8622
    %8624 = vrot.lane.b32.xlu0 %v8579, 64
    %v8625 = vpop.permute.xlu0 %8624
    %8626 = vrot.lane.b32.xlu0 %v8587, 64
    %v8627 = vpop.permute.xlu0 %8626
    %8628 = vrot.lane.b32.xlu0 %v8595, 64
    %v8629 = vpop.permute.xlu0 %8628
    %8630 = vrot.lane.b32.xlu0 %v8603, 64
    %v8631 = vpop.permute.xlu0 %8630
    %8632 = vrot.lane.b32.xlu0 %v8611, 64
    %v8633 = vpop.permute.xlu0 %8632
    %8634 = vrot.lane.b32.xlu0 %v8619, 64
    %v8635 = vpop.permute.xlu0 %8634
    %v8645 = vrot.slane %v8492, 1
    %v8646 = vrot.slane %v8493, 1
    %v8647 = vsel %vm3558, %v8645, %v8646
    %v8648 = vrot.slane %v8494, 1
    %v8649 = vsel %vm3558, %v8646, %v8648
    %v8650 = vrot.slane %v8495, 1
    %v8651 = vsel %vm3558, %v8648, %v8650
    %v8652 = vrot.slane %v8496, 1
    %v8653 = vsel %vm3558, %v8650, %v8652
    %v8654 = vrot.slane %v8497, 1
    %v8655 = vsel %vm3558, %v8652, %v8654
    %v8656 = vrot.slane %v8498, 1
    %v8657 = vsel %vm3558, %v8654, %v8656
    %v8658 = vrot.slane %v8499, 1
    %v8659 = vsel %vm3558, %v8656, %v8658
    %v8660 = vrot.slane %v8500, 1
    %v8661 = vsel %vm3558, %v8658, %v8660
    %v8671 = vrot.slane %v8501, 4
    %v8672 = vrot.slane %v8502, 4
    %v8673 = vsel %vm3585, %v8671, %v8672
    %v8674 = vrot.slane %v8503, 4
    %v8675 = vsel %vm3585, %v8672, %v8674
    %v8676 = vrot.slane %v8504, 4
    %v8677 = vsel %vm3585, %v8674, %v8676
    %v8678 = vrot.slane %v8505, 4
    %v8679 = vsel %vm3585, %v8676, %v8678
    %v8680 = vrot.slane %v8506, 4
    %v8681 = vsel %vm3585, %v8678, %v8680
    %v8682 = vrot.slane %v8507, 4
    %v8683 = vsel %vm3585, %v8680, %v8682
    %v8684 = vrot.slane %v8508, 4
    %v8685 = vsel %vm3585, %v8682, %v8684
    %v8686 = vrot.slane %v8509, 4
    %v8687 = vsel %vm3585, %v8684, %v8686
    %8688 = vrot.lane.b32.xlu0 %v8673, 64
    %v8689 = vpop.permute.xlu0 %8688
    %8690 = vrot.lane.b32.xlu0 %v8675, 64
    %v8691 = vpop.permute.xlu0 %8690
    %8692 = vrot.lane.b32.xlu0 %v8677, 64
    %v8693 = vpop.permute.xlu0 %8692
    %8694 = vrot.lane.b32.xlu0 %v8679, 64
    %v8695 = vpop.permute.xlu0 %8694
    %8696 = vrot.lane.b32.xlu0 %v8681, 64
    %v8697 = vpop.permute.xlu0 %8696
    %8698 = vrot.lane.b32.xlu0 %v8683, 64
    %v8699 = vpop.permute.xlu0 %8698
    %8700 = vrot.lane.b32.xlu0 %v8685, 64
    %v8701 = vpop.permute.xlu0 %8700
    %8702 = vrot.lane.b32.xlu0 %v8687, 64
    %v8703 = vpop.permute.xlu0 %8702
    %v8705 = vshrl.u32 %v8510, 16
    %v8707 = vrot.slane %v8705, 4
    %v8708 = vshll.u32 %v8510, 16
    %v8710 = vrot.slane %v8708, 5
    %v8711 = vor.u32 %v8707, %v8710
    %v8713 = vshrl.u32 %v8511, 16
    %v8715 = vrot.slane %v8713, 4
    %v8716 = vshll.u32 %v8511, 16
    %v8718 = vrot.slane %v8716, 5
    %v8719 = vor.u32 %v8715, %v8718
    %v8720 = vsel %vm3619, %v8711, %v8719
    %v8722 = vshrl.u32 %v8512, 16
    %v8724 = vrot.slane %v8722, 4
    %v8725 = vshll.u32 %v8512, 16
    %v8727 = vrot.slane %v8725, 5
    %v8728 = vor.u32 %v8724, %v8727
    %v8729 = vsel %vm3619, %v8719, %v8728
    %v8731 = vshrl.u32 %v8513, 16
    %v8733 = vrot.slane %v8731, 4
    %v8734 = vshll.u32 %v8513, 16
    %v8736 = vrot.slane %v8734, 5
    %v8737 = vor.u32 %v8733, %v8736
    %v8738 = vsel %vm3619, %v8728, %v8737
    %v8740 = vshrl.u32 %v8514, 16
    %v8742 = vrot.slane %v8740, 4
    %v8743 = vshll.u32 %v8514, 16
    %v8745 = vrot.slane %v8743, 5
    %v8746 = vor.u32 %v8742, %v8745
    %v8747 = vsel %vm3619, %v8737, %v8746
    %v8749 = vshrl.u32 %v8515, 16
    %v8751 = vrot.slane %v8749, 4
    %v8752 = vshll.u32 %v8515, 16
    %v8754 = vrot.slane %v8752, 5
    %v8755 = vor.u32 %v8751, %v8754
    %v8756 = vsel %vm3619, %v8746, %v8755
    %v8758 = vshrl.u32 %v8516, 16
    %v8760 = vrot.slane %v8758, 4
    %v8761 = vshll.u32 %v8516, 16
    %v8763 = vrot.slane %v8761, 5
    %v8764 = vor.u32 %v8760, %v8763
    %v8765 = vsel %vm3619, %v8755, %v8764
    %v8767 = vshrl.u32 %v8517, 16
    %v8769 = vrot.slane %v8767, 4
    %v8770 = vshll.u32 %v8517, 16
    %v8772 = vrot.slane %v8770, 5
    %v8773 = vor.u32 %v8769, %v8772
    %v8774 = vsel %vm3619, %v8764, %v8773
    %v8776 = vshrl.u32 %v8518, 16
    %v8778 = vrot.slane %v8776, 4
    %v8779 = vshll.u32 %v8518, 16
    %v8781 = vrot.slane %v8779, 5
    %v8782 = vor.u32 %v8778, %v8781
    %v8783 = vsel %vm3619, %v8773, %v8782
    %v8793 = vrot.slane %v8519, 5
    %v8794 = vrot.slane %v8520, 5
    %v8795 = vsel %vm3709, %v8793, %v8794
    %v8796 = vrot.slane %v8521, 5
    %v8797 = vsel %vm3709, %v8794, %v8796
    %v8798 = vrot.slane %v8522, 5
    %v8799 = vsel %vm3709, %v8796, %v8798
    %v8800 = vrot.slane %v8523, 5
    %v8801 = vsel %vm3709, %v8798, %v8800
    %v8802 = vrot.slane %v8524, 5
    %v8803 = vsel %vm3709, %v8800, %v8802
    %v8804 = vrot.slane %v8525, 5
    %v8805 = vsel %vm3709, %v8802, %v8804
    %v8806 = vrot.slane %v8526, 5
    %v8807 = vsel %vm3709, %v8804, %v8806
    %v8808 = vrot.slane %v8527, 5
    %v8809 = vsel %vm3709, %v8806, %v8808
    %8810 = vrot.lane.b32.xlu0 %v8795, 64
    %v8811 = vpop.permute.xlu0 %8810
    %8812 = vrot.lane.b32.xlu0 %v8797, 64
    %v8813 = vpop.permute.xlu0 %8812
    %8814 = vrot.lane.b32.xlu0 %v8799, 64
    %v8815 = vpop.permute.xlu0 %8814
    %8816 = vrot.lane.b32.xlu0 %v8801, 64
    %v8817 = vpop.permute.xlu0 %8816
    %8818 = vrot.lane.b32.xlu0 %v8803, 64
    %v8819 = vpop.permute.xlu0 %8818
    %8820 = vrot.lane.b32.xlu0 %v8805, 64
    %v8821 = vpop.permute.xlu0 %8820
    %8822 = vrot.lane.b32.xlu0 %v8807, 64
    %v8823 = vpop.permute.xlu0 %8822
    %8824 = vrot.lane.b32.xlu0 %v8809, 64
    %v8825 = vpop.permute.xlu0 %8824
    %v8827 = vshrl.u32 %v8536, 16
    %v8829 = vshll.u32 %v8536, 16
    %v8831 = vrot.slane %v8829, 1
    %v8832 = vor.u32 %v8827, %v8831
    %v8834 = vshll.u32 %v8537, 16
    %v8836 = vrot.slane %v8834, 1
    %v8837 = vsel %vm3464, %v8832, %v8836
    %v8838 = vshrl.u32 %v8537, 16
    %v8840 = vor.u32 %v8838, %v8836
    %v8842 = vshll.u32 %v8538, 16
    %v8844 = vrot.slane %v8842, 1
    %v8845 = vsel %vm3464, %v8840, %v8844
    %v8846 = vshrl.u32 %v8538, 16
    %v8848 = vor.u32 %v8846, %v8844
    %v8850 = vshll.u32 %v8539, 16
    %v8852 = vrot.slane %v8850, 1
    %v8853 = vsel %vm3464, %v8848, %v8852
    %v8854 = vshrl.u32 %v8539, 16
    %v8856 = vor.u32 %v8854, %v8852
    %v8858 = vshll.u32 %v8540, 16
    %v8860 = vrot.slane %v8858, 1
    %v8861 = vsel %vm3464, %v8856, %v8860
    %v8862 = vshrl.u32 %v8540, 16
    %v8864 = vor.u32 %v8862, %v8860
    %v8866 = vshll.u32 %v8541, 16
    %v8868 = vrot.slane %v8866, 1
    %v8869 = vsel %vm3464, %v8864, %v8868
    %v8870 = vshrl.u32 %v8541, 16
    %v8872 = vor.u32 %v8870, %v8868
    %v8874 = vshll.u32 %v8542, 16
    %v8876 = vrot.slane %v8874, 1
    %v8877 = vsel %vm3464, %v8872, %v8876
    %v8878 = vshrl.u32 %v8542, 16
    %v8880 = vor.u32 %v8878, %v8876
    %v8882 = vshll.u32 %v8543, 16
    %v8884 = vrot.slane %v8882, 1
    %v8885 = vsel %vm3464, %v8880, %v8884
    %v8886 = vshrl.u32 %v8543, 16
    %v8888 = vor.u32 %v8886, %v8884
    %v8889 = vsel %vm3464, %v8888, %v3809
    %8890 = vrot.lane.b32.xlu0 %v8837, 64
    %v8891 = vpop.permute.xlu0 %8890
    %8892 = vrot.lane.b32.xlu0 %v8845, 64
    %v8893 = vpop.permute.xlu0 %8892
    %8894 = vrot.lane.b32.xlu0 %v8853, 64
    %v8895 = vpop.permute.xlu0 %8894
    %8896 = vrot.lane.b32.xlu0 %v8861, 64
    %v8897 = vpop.permute.xlu0 %8896
    %8898 = vrot.lane.b32.xlu0 %v8869, 64
    %v8899 = vpop.permute.xlu0 %8898
    %8900 = vrot.lane.b32.xlu0 %v8877, 64
    %v8901 = vpop.permute.xlu0 %8900
    %8902 = vrot.lane.b32.xlu0 %v8885, 64
    %v8903 = vpop.permute.xlu0 %8902
    %8904 = vrot.lane.b32.xlu0 %v8889, 64
    %v8905 = vpop.permute.xlu0 %8904
    %v8914 = vrot.slane %v8544, 1
    %v8915 = vrot.slane %v8545, 1
    %v8916 = vsel %vm3558, %v8914, %v8915
    %v8917 = vrot.slane %v8546, 1
    %v8918 = vsel %vm3558, %v8915, %v8917
    %v8919 = vrot.slane %v8547, 1
    %v8920 = vsel %vm3558, %v8917, %v8919
    %v8921 = vrot.slane %v8548, 1
    %v8922 = vsel %vm3558, %v8919, %v8921
    %v8923 = vrot.slane %v8549, 1
    %v8924 = vsel %vm3558, %v8921, %v8923
    %v8925 = vrot.slane %v8550, 1
    %v8926 = vsel %vm3558, %v8923, %v8925
    %v8927 = vrot.slane %v8551, 1
    %v8928 = vsel %vm3558, %v8925, %v8927
    %v8929 = vsel %vm3558, %v8927, %v3851
    %v8932 = vsel %vm352, %v8475, %v8621
    %v8936 = vsel %vm352, %v8476, %v8623
    %v8940 = vsel %vm352, %v8477, %v8625
    %v8944 = vsel %vm352, %v8478, %v8627
    %v8948 = vsel %vm352, %v8479, %v8629
    %v8952 = vsel %vm352, %v8480, %v8631
    %v8956 = vsel %vm352, %v8481, %v8633
    %v8960 = vsel %vm352, %v8482, %v8635
    %v8964 = vsel %vm352, %v8647, %v8689
    %v8968 = vsel %vm352, %v8649, %v8691
    %v8972 = vsel %vm352, %v8651, %v8693
    %v8976 = vsel %vm352, %v8653, %v8695
    %v8980 = vsel %vm352, %v8655, %v8697
    %v8984 = vsel %vm352, %v8657, %v8699
    %v8988 = vsel %vm352, %v8659, %v8701
    %v8992 = vsel %vm352, %v8661, %v8703
    %v8996 = vsel %vm352, %v8720, %v8811
    %v9000 = vsel %vm352, %v8729, %v8813
    %v9004 = vsel %vm352, %v8738, %v8815
    %v9008 = vsel %vm352, %v8747, %v8817
    %v9012 = vsel %vm352, %v8756, %v8819
    %v9016 = vsel %vm352, %v8765, %v8821
    %v9020 = vsel %vm352, %v8774, %v8823
    %v9024 = vsel %vm352, %v8783, %v8825
    %v9028 = vsel %vm352, %v8528, %v8891
    %v9032 = vsel %vm352, %v8529, %v8893
    %v9036 = vsel %vm352, %v8530, %v8895
    %v9040 = vsel %vm352, %v8531, %v8897
    %v9044 = vsel %vm352, %v8532, %v8899
    %v9048 = vsel %vm352, %v8533, %v8901
    %v9052 = vsel %vm352, %v8534, %v8903
    %v9056 = vsel %vm352, %v8535, %v8905
    %v9059 = vlaneseq
    %v9060 = vshrl.u32 %v9059, 7
    %v9061 = vsub.s32 0, %v9060
    %v9062 = vrot.slane %v7584, %v9061
    %v9136 = vunpack.c.l.b16 %v7512
    %v9137 = vunpack.c.l.b16 %v7513
    %v9138 = vunpack.c.l.b16 %v7514
    %v9139 = vunpack.c.l.b16 %v7515
    %v9140 = vunpack.c.l.b16 %v7516
    %v9141 = vunpack.c.l.b16 %v7517
    %v9142 = vunpack.c.l.b16 %v7518
    %v9143 = vunpack.c.l.b16 %v7519
    %v9144 = vunpack.c.l.b16 %v7520
    %v9145 = vunpack.c.l.b16 %v7521
    %v9146 = vunpack.c.l.b16 %v7522
    %v9147 = vunpack.c.l.b16 %v7523
    %v9148 = vunpack.c.l.b16 %v7524
    %v9149 = vunpack.c.l.b16 %v7525
    %v9150 = vunpack.c.l.b16 %v7526
    %v9151 = vunpack.c.l.b16 %v7527
    %v9152 = vunpack.c.l.b16 %v7528
    %v9153 = vunpack.c.l.b16 %v7529
    %v9154 = vunpack.c.l.b16 %v7530
    %v9155 = vunpack.c.l.b16 %v7531
    %v9156 = vunpack.c.l.b16 %v7532
    %v9157 = vunpack.c.l.b16 %v7533
    %v9158 = vunpack.c.l.b16 %v7534
    %v9159 = vunpack.c.l.b16 %v7535
    %v9160 = vunpack.c.l.b16 %v7536
    %v9161 = vunpack.c.l.b16 %v7537
    %v9162 = vunpack.c.l.b16 %v7538
    %v9163 = vunpack.c.l.b16 %v7539
    %v9164 = vunpack.c.l.b16 %v7540
    %v9165 = vunpack.c.l.b16 %v7541
    %v9166 = vunpack.c.l.b16 %v7542
    %v9167 = vunpack.c.l.b16 %v7543
    %v9168 = vunpack.c.l.b16 %v7544
    %v9169 = vunpack.c.l.b16 %v7545
    %v9170 = vunpack.c.l.b16 %v7546
    %v9171 = vunpack.c.l.b16 %v7547
    %v9172 = vunpack.c.l.b16 %v7548
    %v9173 = vunpack.c.l.b16 %v7549
    %v9174 = vunpack.c.l.b16 %v7550
    %v9175 = vunpack.c.l.b16 %v7551
    %v9176 = vunpack.c.l.b16 %v7552
    %v9177 = vunpack.c.l.b16 %v7553
    %v9178 = vunpack.c.l.b16 %v7554
    %v9179 = vunpack.c.l.b16 %v7555
    %v9180 = vunpack.c.l.b16 %v7556
    %v9181 = vunpack.c.l.b16 %v7557
    %v9182 = vunpack.c.l.b16 %v7558
    %v9183 = vunpack.c.l.b16 %v7559
    %v9184 = vunpack.c.l.b16 %v7560
    %v9185 = vunpack.c.l.b16 %v7561
    %v9186 = vunpack.c.l.b16 %v7562
    %v9187 = vunpack.c.l.b16 %v7563
    %v9188 = vunpack.c.l.b16 %v7564
    %v9189 = vunpack.c.l.b16 %v7565
    %v9190 = vunpack.c.l.b16 %v7566
    %v9191 = vunpack.c.l.b16 %v7567
    %v9192 = vunpack.c.l.b16 %v7568
    %v9193 = vunpack.c.l.b16 %v7569
    %v9194 = vunpack.c.l.b16 %v7570
    %v9195 = vunpack.c.l.b16 %v7571
    %v9196 = vunpack.c.l.b16 %v7572
    %v9197 = vunpack.c.l.b16 %v7573
    %v9198 = vunpack.c.l.b16 %v7574
    %v9199 = vunpack.c.l.b16 %v7575
    %v9200 = vunpack.c.l.b16 %v7576
    %v9201 = vunpack.c.l.b16 %v7577
    %v9202 = vunpack.c.l.b16 %v7578
    %v9203 = vunpack.c.l.b16 %v7579
    %v9204 = vunpack.c.l.b16 %v7580
    %v9205 = vunpack.c.l.b16 %v7581
    %v9206 = vunpack.c.l.b16 %v7582
    %v9207 = vunpack.c.l.b16 %v7583
    %v9208 = vpack.c.b16 %v9137, %v9136
    %v9209 = vpack.c.b16 %v9139, %v9138
    %v9210 = vpack.c.b16 %v9141, %v9140
    %v9211 = vpack.c.b16 %v9143, %v9142
    %v9212 = vpack.c.b16 %v9145, %v9144
    %v9213 = vpack.c.b16 %v9147, %v9146
    %v9214 = vpack.c.b16 %v9149, %v9148
    %v9215 = vpack.c.b16 %v9151, %v9150
    %v9216 = vpack.c.b16 %v9153, %v9152
    %v9217 = vpack.c.b16 %v9155, %v9154
    %v9218 = vpack.c.b16 %v9157, %v9156
    %v9219 = vpack.c.b16 %v9159, %v9158
    %v9220 = vpack.c.b16 %v9161, %v9160
    %v9221 = vpack.c.b16 %v9163, %v9162
    %v9222 = vpack.c.b16 %v9165, %v9164
    %v9223 = vpack.c.b16 %v9167, %v9166
    %v9224 = vpack.c.b16 %v9169, %v9168
    %v9225 = vpack.c.b16 %v9171, %v9170
    %v9226 = vpack.c.b16 %v9173, %v9172
    %v9227 = vpack.c.b16 %v9175, %v9174
    %v9228 = vpack.c.b16 %v9177, %v9176
    %v9229 = vpack.c.b16 %v9179, %v9178
    %v9230 = vpack.c.b16 %v9181, %v9180
    %v9231 = vpack.c.b16 %v9183, %v9182
    %v9232 = vpack.c.b16 %v9185, %v9184
    %v9233 = vpack.c.b16 %v9187, %v9186
    %v9234 = vpack.c.b16 %v9189, %v9188
    %v9235 = vpack.c.b16 %v9191, %v9190
    %v9236 = vpack.c.b16 %v9193, %v9192
    %v9237 = vpack.c.b16 %v9195, %v9194
    %v9238 = vpack.c.b16 %v9197, %v9196
    %v9239 = vpack.c.b16 %v9199, %v9198
    %v9240 = vpack.c.b16 %v9201, %v9200
    %v9241 = vpack.c.b16 %v9203, %v9202
    %v9242 = vpack.c.b16 %v9205, %v9204
    %v9243 = vpack.c.b16 %v9207, %v9206
    %v9281 = vsel %vm352, %v8916, 0
    %v9284 = vsel %vm352, %v8918, 0
    %v9287 = vsel %vm352, %v8920, 0
    %v9290 = vsel %vm352, %v8922, 0
    %v9293 = vsel %vm352, %v8924, 0
    %v9296 = vsel %vm352, %v8926, 0
    %v9299 = vsel %vm352, %v8928, 0
    %v9302 = vsel %vm352, %v8929, 0
    %9304 = vmatprep.subr.bf16.mxu0 0
    %9305 = vmatpush1.bf16.msra.mxu0 %v9215
    %9306 = vmatprep.subr.bf16.mxu0 0
    %9307 = vmatpush1.bf16.msra.mxu0 %v9214
    %9308 = vmatprep.subr.bf16.mxu0 0
    %9309 = vmatpush1.bf16.msra.mxu0 %v9213
    %9310 = vmatprep.subr.bf16.mxu0 0
    %9311 = vmatpush1.bf16.msra.mxu0 %v9212
    %9312 = vmatprep.subr.bf16.mxu0 0
    %9313 = vmatpush1.bf16.msra.mxu0 %v9211
    %9314 = vmatprep.subr.bf16.mxu0 0
    %9315 = vmatpush1.bf16.msra.mxu0 %v9210
    %9316 = vmatprep.subr.bf16.mxu0 0
    %9317 = vmatpush1.bf16.msra.mxu0 %v9209
    %9318 = vmatprep.subr.bf16.mxu0 0
    %9319 = vmatpush1.bf16.msra.mxu0 %v9208
    %9320 = vmatprep.subr.bf16.mxu0 0
    %9321 = vmatpush2.bf16.msra.mxu0 %v9223
    %9322 = vmatprep.subr.bf16.mxu0 0
    %9323 = vmatpush2.bf16.msra.mxu0 %v9222
    %9324 = vmatprep.subr.bf16.mxu0 0
    %9325 = vmatpush2.bf16.msra.mxu0 %v9221
    %9326 = vmatprep.subr.bf16.mxu0 0
    %9327 = vmatpush2.bf16.msra.mxu0 %v9220
    %9328 = vmatprep.subr.bf16.mxu0 0
    %9329 = vmatpush2.bf16.msra.mxu0 %v9219
    %9330 = vmatprep.subr.bf16.mxu0 0
    %9331 = vmatpush2.bf16.msra.mxu0 %v9218
    %9332 = vmatprep.subr.bf16.mxu0 0
    %9333 = vmatpush2.bf16.msra.mxu0 %v9217
    %9334 = vmatprep.subr.bf16.mxu0 0
    %9335 = vmatpush2.bf16.msra.mxu0 %v9216
    %9336 = vmatprep.mubr.bf16.mxu0 %v8964
    %9337 = vmatmul.mubr.bf16.gmra.mxu0 %v8932
    %v9338 = vpop.f32.mrf.mxu0
    %v9339 = vadd.f32 %v9062, %v9338
    %v9340 = vpop.f32.mrf.mxu0
    %v9341 = vpop.f32.mrf.mxu0
    %v9342 = vadd.f32 %v9062, %v9341
    %v9343 = vpop.f32.mrf.mxu0
    %9344 = vmatprep.mubr.bf16.mxu0 %v8968
    %9345 = vmatmul.mubr.bf16.gmra.mxu0 %v8936
    %v9346 = vpop.f32.mrf.mxu0
    %v9347 = vadd.f32 %v9062, %v9346
    %v9348 = vpop.f32.mrf.mxu0
    %v9349 = vpop.f32.mrf.mxu0
    %v9350 = vadd.f32 %v9062, %v9349
    %v9351 = vpop.f32.mrf.mxu0
    %9352 = vmatprep.mubr.bf16.mxu0 %v8972
    %9353 = vmatmul.mubr.bf16.gmra.mxu0 %v8940
    %v9354 = vpop.f32.mrf.mxu0
    %v9355 = vadd.f32 %v9062, %v9354
    %v9356 = vpop.f32.mrf.mxu0
    %v9357 = vpop.f32.mrf.mxu0
    %v9358 = vadd.f32 %v9062, %v9357
    %v9359 = vpop.f32.mrf.mxu0
    %9360 = vmatprep.mubr.bf16.mxu0 %v8976
    %9361 = vmatmul.mubr.bf16.gmra.mxu0 %v8944
    %v9362 = vpop.f32.mrf.mxu0
    %v9363 = vadd.f32 %v9062, %v9362
    %v9364 = vpop.f32.mrf.mxu0
    %v9365 = vpop.f32.mrf.mxu0
    %v9366 = vadd.f32 %v9062, %v9365
    %v9367 = vpop.f32.mrf.mxu0
    %9368 = vmatprep.mubr.bf16.mxu0 %v8980
    %9369 = vmatmul.mubr.bf16.gmra.mxu0 %v8948
    %v9370 = vpop.f32.mrf.mxu0
    %v9371 = vadd.f32 %v9062, %v9370
    %v9372 = vpop.f32.mrf.mxu0
    %v9373 = vpop.f32.mrf.mxu0
    %v9374 = vadd.f32 %v9062, %v9373
    %v9375 = vpop.f32.mrf.mxu0
    %9376 = vmatprep.mubr.bf16.mxu0 %v8984
    %9377 = vmatmul.mubr.bf16.gmra.mxu0 %v8952
    %v9378 = vpop.f32.mrf.mxu0
    %v9379 = vadd.f32 %v9062, %v9378
    %v9380 = vpop.f32.mrf.mxu0
    %v9381 = vpop.f32.mrf.mxu0
    %v9382 = vadd.f32 %v9062, %v9381
    %v9383 = vpop.f32.mrf.mxu0
    %9384 = vmatprep.mubr.bf16.mxu0 %v8988
    %9385 = vmatmul.mubr.bf16.gmra.mxu0 %v8956
    %v9386 = vpop.f32.mrf.mxu0
    %v9387 = vadd.f32 %v9062, %v9386
    %v9388 = vpop.f32.mrf.mxu0
    %v9389 = vpop.f32.mrf.mxu0
    %v9390 = vadd.f32 %v9062, %v9389
    %v9391 = vpop.f32.mrf.mxu0
    %9392 = vmatprep.mubr.bf16.mxu0 %v8992
    %9393 = vmatmul.mubr.bf16.gmra.mxu0 %v8960
    %v9394 = vpop.f32.mrf.mxu0
    %v9395 = vadd.f32 %v9062, %v9394
    %v9396 = vpop.f32.mrf.mxu0
    %v9397 = vpop.f32.mrf.mxu0
    %v9398 = vadd.f32 %v9062, %v9397
    %v9399 = vpop.f32.mrf.mxu0
    %9400 = vdwg.mxu0
    %9401 = vmatprep.subr.bf16.mxu0 0
    %9402 = vmatpush1.bf16.msra.mxu0 %v9231
    %9403 = vmatprep.subr.bf16.mxu0 0
    %9404 = vmatpush1.bf16.msra.mxu0 %v9230
    %9405 = vmatprep.subr.bf16.mxu0 0
    %9406 = vmatpush1.bf16.msra.mxu0 %v9229
    %9407 = vmatprep.subr.bf16.mxu0 0
    %9408 = vmatpush1.bf16.msra.mxu0 %v9228
    %9409 = vmatprep.subr.bf16.mxu0 0
    %9410 = vmatpush1.bf16.msra.mxu0 %v9227
    %9411 = vmatprep.subr.bf16.mxu0 0
    %9412 = vmatpush1.bf16.msra.mxu0 %v9226
    %9413 = vmatprep.subr.bf16.mxu0 0
    %9414 = vmatpush1.bf16.msra.mxu0 %v9225
    %9415 = vmatprep.subr.bf16.mxu0 0
    %9416 = vmatpush1.bf16.msra.mxu0 %v9224
    %9417 = vmatprep.subr.bf16.mxu0 0
    %9418 = vmatpush2.bf16.msra.mxu0 %v9239
    %9419 = vmatprep.subr.bf16.mxu0 0
    %9420 = vmatpush2.bf16.msra.mxu0 %v9238
    %9421 = vmatprep.subr.bf16.mxu0 0
    %9422 = vmatpush2.bf16.msra.mxu0 %v9237
    %9423 = vmatprep.subr.bf16.mxu0 0
    %9424 = vmatpush2.bf16.msra.mxu0 %v9236
    %9425 = vmatprep.subr.bf16.mxu0 0
    %9426 = vmatpush2.bf16.msra.mxu0 %v9235
    %9427 = vmatprep.subr.bf16.mxu0 0
    %9428 = vmatpush2.bf16.msra.mxu0 %v9234
    %9429 = vmatprep.subr.bf16.mxu0 0
    %9430 = vmatpush2.bf16.msra.mxu0 %v9233
    %9431 = vmatprep.subr.bf16.mxu0 0
    %9432 = vmatpush2.bf16.msra.mxu0 %v9232
    %9433 = vmatprep.mubr.bf16.mxu0 %v9028
    %9434 = vmatmul.mubr.bf16.gmra.mxu0 %v8996
    %v9435 = vpop.f32.mrf.mxu0
    %v9436 = vadd.f32 %v9339, %v9435
    %v9437 = vpop.f32.mrf.mxu0
    %v9438 = vpop.f32.mrf.mxu0
    %v9439 = vadd.f32 %v9342, %v9438
    %v9440 = vpop.f32.mrf.mxu0
    %9441 = vmatprep.mubr.bf16.mxu0 %v9032
    %9442 = vmatmul.mubr.bf16.gmra.mxu0 %v9000
    %v9443 = vpop.f32.mrf.mxu0
    %v9444 = vadd.f32 %v9347, %v9443
    %v9445 = vpop.f32.mrf.mxu0
    %v9446 = vpop.f32.mrf.mxu0
    %v9447 = vadd.f32 %v9350, %v9446
    %v9448 = vpop.f32.mrf.mxu0
    %9449 = vmatprep.mubr.bf16.mxu0 %v9036
    %9450 = vmatmul.mubr.bf16.gmra.mxu0 %v9004
    %v9451 = vpop.f32.mrf.mxu0
    %v9452 = vadd.f32 %v9355, %v9451
    %v9453 = vpop.f32.mrf.mxu0
    %v9454 = vpop.f32.mrf.mxu0
    %v9455 = vadd.f32 %v9358, %v9454
    %v9456 = vpop.f32.mrf.mxu0
    %9457 = vmatprep.mubr.bf16.mxu0 %v9040
    %9458 = vmatmul.mubr.bf16.gmra.mxu0 %v9008
    %v9459 = vpop.f32.mrf.mxu0
    %v9460 = vadd.f32 %v9363, %v9459
    %v9461 = vpop.f32.mrf.mxu0
    %v9462 = vpop.f32.mrf.mxu0
    %v9463 = vadd.f32 %v9366, %v9462
    %v9464 = vpop.f32.mrf.mxu0
    %9465 = vmatprep.mubr.bf16.mxu0 %v9044
    %9466 = vmatmul.mubr.bf16.gmra.mxu0 %v9012
    %v9467 = vpop.f32.mrf.mxu0
    %v9468 = vadd.f32 %v9371, %v9467
    %v9469 = vpop.f32.mrf.mxu0
    %v9470 = vpop.f32.mrf.mxu0
    %v9471 = vadd.f32 %v9374, %v9470
    %v9472 = vpop.f32.mrf.mxu0
    %9473 = vmatprep.mubr.bf16.mxu0 %v9048
    %9474 = vmatmul.mubr.bf16.gmra.mxu0 %v9016
    %v9475 = vpop.f32.mrf.mxu0
    %v9476 = vadd.f32 %v9379, %v9475
    %v9477 = vpop.f32.mrf.mxu0
    %v9478 = vpop.f32.mrf.mxu0
    %v9479 = vadd.f32 %v9382, %v9478
    %v9480 = vpop.f32.mrf.mxu0
    %9481 = vmatprep.mubr.bf16.mxu0 %v9052
    %9482 = vmatmul.mubr.bf16.gmra.mxu0 %v9020
    %v9483 = vpop.f32.mrf.mxu0
    %v9484 = vadd.f32 %v9387, %v9483
    %v9485 = vpop.f32.mrf.mxu0
    %v9486 = vpop.f32.mrf.mxu0
    %v9487 = vadd.f32 %v9390, %v9486
    %v9488 = vpop.f32.mrf.mxu0
    %9489 = vmatprep.mubr.bf16.mxu0 %v9056
    %9490 = vmatmul.mubr.bf16.gmra.mxu0 %v9024
    %v9491 = vpop.f32.mrf.mxu0
    %v9492 = vadd.f32 %v9395, %v9491
    %v9493 = vpop.f32.mrf.mxu0
    %v9494 = vpop.f32.mrf.mxu0
    %v9495 = vadd.f32 %v9398, %v9494
    %v9496 = vpop.f32.mrf.mxu0
    %9497 = vdwg.mxu0
    %9498 = vmatprep.subr.bf16.mxu0 0
    %9499 = vmatpush1.bf16.msra.mxu0 0
    %9500 = vmatprep.subr.bf16.mxu0 0
    %9501 = vmatpush1.bf16.msra.mxu0 0
    %9502 = vmatprep.subr.bf16.mxu0 0
    %9503 = vmatpush1.bf16.msra.mxu0 0
    %9504 = vmatprep.subr.bf16.mxu0 0
    %9505 = vmatpush1.bf16.msra.mxu0 0
    %9506 = vmatprep.subr.bf16.mxu0 0
    %9507 = vmatpush1.bf16.msra.mxu0 %v9243
    %9508 = vmatprep.subr.bf16.mxu0 0
    %9509 = vmatpush1.bf16.msra.mxu0 %v9242
    %9510 = vmatprep.subr.bf16.mxu0 0
    %9511 = vmatpush1.bf16.msra.mxu0 %v9241
    %9512 = vmatprep.subr.bf16.mxu0 0
    %9513 = vmatpush1.bf16.msra.mxu0 %v9240
    %9514 = vmatprep.subr.bf16.mxu0 0
    %9515 = vmatpush2.bf16.msra.mxu0 0
    %9516 = vmatprep.subr.bf16.mxu0 0
    %9517 = vmatpush2.bf16.msra.mxu0 0
    %9518 = vmatprep.subr.bf16.mxu0 0
    %9519 = vmatpush2.bf16.msra.mxu0 0
    %9520 = vmatprep.subr.bf16.mxu0 0
    %9521 = vmatpush2.bf16.msra.mxu0 0
    %9522 = vmatprep.subr.bf16.mxu0 0
    %9523 = vmatpush2.bf16.msra.mxu0 0
    %9524 = vmatprep.subr.bf16.mxu0 0
    %9525 = vmatpush2.bf16.msra.mxu0 0
    %9526 = vmatprep.subr.bf16.mxu0 0
    %9527 = vmatpush2.bf16.msra.mxu0 0
    %9528 = vmatprep.subr.bf16.mxu0 0
    %9529 = vmatpush2.bf16.msra.mxu0 0
    %9530 = vmatprep.mubr.bf16.mxu0 0
    %9531 = vmatmul.mubr.bf16.gmra.mxu0 %v9281
    %v9532 = vpop.f32.mrf.mxu0
    %v9533 = vadd.f32 %v9436, %v9532
    %v9534 = vpop.f32.mrf.mxu0
    %v9535 = vpop.f32.mrf.mxu0
    %v9536 = vadd.f32 %v9439, %v9535
    %v9537 = vpop.f32.mrf.mxu0
    %9538 = vmatprep.mubr.bf16.mxu0 0
    %9539 = vmatmul.mubr.bf16.gmra.mxu0 %v9284
    %v9540 = vpop.f32.mrf.mxu0
    %v9541 = vadd.f32 %v9444, %v9540
    %v9542 = vpop.f32.mrf.mxu0
    %v9543 = vpop.f32.mrf.mxu0
    %v9544 = vadd.f32 %v9447, %v9543
    %v9545 = vpop.f32.mrf.mxu0
    %9546 = vmatprep.mubr.bf16.mxu0 0
    %9547 = vmatmul.mubr.bf16.gmra.mxu0 %v9287
    %v9548 = vpop.f32.mrf.mxu0
    %v9549 = vadd.f32 %v9452, %v9548
    %v9550 = vpop.f32.mrf.mxu0
    %v9551 = vpop.f32.mrf.mxu0
    %v9552 = vadd.f32 %v9455, %v9551
    %v9553 = vpop.f32.mrf.mxu0
    %9554 = vmatprep.mubr.bf16.mxu0 0
    %9555 = vmatmul.mubr.bf16.gmra.mxu0 %v9290
    %v9556 = vpop.f32.mrf.mxu0
    %v9557 = vadd.f32 %v9460, %v9556
    %v9558 = vpop.f32.mrf.mxu0
    %v9559 = vpop.f32.mrf.mxu0
    %v9560 = vadd.f32 %v9463, %v9559
    %v9561 = vpop.f32.mrf.mxu0
    %9562 = vmatprep.mubr.bf16.mxu0 0
    %9563 = vmatmul.mubr.bf16.gmra.mxu0 %v9293
    %v9564 = vpop.f32.mrf.mxu0
    %v9565 = vadd.f32 %v9468, %v9564
    %v9566 = vpop.f32.mrf.mxu0
    %v9567 = vpop.f32.mrf.mxu0
    %v9568 = vadd.f32 %v9471, %v9567
    %v9569 = vpop.f32.mrf.mxu0
    %9570 = vmatprep.mubr.bf16.mxu0 0
    %9571 = vmatmul.mubr.bf16.gmra.mxu0 %v9296
    %v9572 = vpop.f32.mrf.mxu0
    %v9573 = vadd.f32 %v9476, %v9572
    %v9574 = vpop.f32.mrf.mxu0
    %v9575 = vpop.f32.mrf.mxu0
    %v9576 = vadd.f32 %v9479, %v9575
    %v9577 = vpop.f32.mrf.mxu0
    %9578 = vmatprep.mubr.bf16.mxu0 0
    %9579 = vmatmul.mubr.bf16.gmra.mxu0 %v9299
    %v9580 = vpop.f32.mrf.mxu0
    %v9581 = vadd.f32 %v9484, %v9580
    %v9582 = vpop.f32.mrf.mxu0
    %v9583 = vpop.f32.mrf.mxu0
    %v9584 = vadd.f32 %v9487, %v9583
    %v9585 = vpop.f32.mrf.mxu0
    %9586 = vmatprep.mubr.bf16.mxu0 0
    %9587 = vmatmul.mubr.bf16.gmra.mxu0 %v9302
    %v9588 = vpop.f32.mrf.mxu0
    %v9589 = vadd.f32 %v9492, %v9588
    %v9590 = vpop.f32.mrf.mxu0
    %v9591 = vpop.f32.mrf.mxu0
    %v9592 = vadd.f32 %v9495, %v9591
    %v9593 = vpop.f32.mrf.mxu0
    %9594 = vdwg.mxu0
    %v9595 = vadd.f32 %v9533, %v7448
    %v9596 = vadd.f32 %v9536, %v7451
    %v9597 = vadd.f32 %v9541, %v7456
    %v9598 = vadd.f32 %v9544, %v7459
    %v9599 = vadd.f32 %v9549, %v7464
    %v9600 = vadd.f32 %v9552, %v7467
    %v9601 = vadd.f32 %v9557, %v7472
    %v9602 = vadd.f32 %v9560, %v7475
    %v9603 = vadd.f32 %v9565, %v7480
    %v9604 = vadd.f32 %v9568, %v7483
    %v9605 = vadd.f32 %v9573, %v7488
    %v9606 = vadd.f32 %v9576, %v7491
    %v9607 = vadd.f32 %v9581, %v7496
    %v9608 = vadd.f32 %v9584, %v7499
    %v9609 = vadd.f32 %v9589, %v7504
    %v9610 = vadd.f32 %v9592, %v7507
    %9611 = vst.msk [vmem:[#allocation2] sm:$0xff] %vm352, %v9595
    %9612 = vst.msk [vmem:[#allocation2 + $0x8] sm:$0xff] %vm352, %v9596
    %9613 = vst.msk [vmem:[#allocation2 + $0x10] sm:$0xff] %vm352, %v9597
    %9614 = vst.msk [vmem:[#allocation2 + $0x18] sm:$0xff] %vm352, %v9598
    %9615 = vst.msk [vmem:[#allocation2 + $0x20] sm:$0xff] %vm352, %v9599
    %9616 = vst.msk [vmem:[#allocation2 + $0x28] sm:$0xff] %vm352, %v9600
    %9617 = vst.msk [vmem:[#allocation2 + $0x30] sm:$0xff] %vm352, %v9601
    %9618 = vst.msk [vmem:[#allocation2 + $0x38] sm:$0xff] %vm352, %v9602
    %9619 = vst.msk [vmem:[#allocation2 + $0x40] sm:$0xff] %vm352, %v9603
    %9620 = vst.msk [vmem:[#allocation2 + $0x48] sm:$0xff] %vm352, %v9604
    %9621 = vst.msk [vmem:[#allocation2 + $0x50] sm:$0xff] %vm352, %v9605
    %9622 = vst.msk [vmem:[#allocation2 + $0x58] sm:$0xff] %vm352, %v9606
    %9623 = vst.msk [vmem:[#allocation2 + $0x60] sm:$0xff] %vm352, %v9607
    %9624 = vst.msk [vmem:[#allocation2 + $0x68] sm:$0xff] %vm352, %v9608
    %9625 = vst.msk [vmem:[#allocation2 + $0x70] sm:$0xff] %vm352, %v9609
    %9626 = vst.msk [vmem:[#allocation2 + $0x78] sm:$0xff] %vm352, %v9610
    // Predicated region
    $region94: #{res_attention_pallas.1} parent=1 // pred_check
      _
    $region95: #{res_attention_pallas.1} parent=1 // pred_check_branch
      %9628 = sbr.rel (0) target = $region97
    $region96: #{res_attention_pallas.1} parent=1 // pred_region
      %s9630 = ssub.s32 2048, 2048
      %9631 = vsyncadd [#allocation3], %s9630
      %s9632 = sshll.u32 [#allocation2], 4
      %s9633 = int_to_ptr.vmem [resolvable:$true] %s9632
      %9638 = dma.vmem_to_hbm [thread:$0]  %s9633, 2048, %s23, [#allocation3], 128, 128, 8
    $region97: #{res_attention_pallas.1} parent=1 // pred_fallthru
      _
    // Predicated region
    $region98: #{res_attention_pallas.1} parent=1 // pred_check
      _
    $region99: #{res_attention_pallas.1} parent=1 // pred_check_branch
      %9640 = sbr.rel (0) target = $region101
    $region100: #{res_attention_pallas.1} parent=1 // pred_region
      %9641 = dma.done [#allocation3], 2048
    $region101: #{res_attention_pallas.1} parent=1 // pred_fallthru
      _
    %9642 = vsyncpa [#allocation3], 1

</llo_original>
